<compile_context>
chip_gen: v6e
topology: v6e:2x2x1
jax: 0.10.0
libtpu: 0.0.40
codegen_flags: <defaults>
</compile_context>

<pallas_src>
import jax
import jax.numpy as jnp
from jax.experimental import pallas as pl
from jax.experimental.pallas import tpu as pltpu


# ----------------------------------------------------------------------------
# In-kernel helper: training-mode BatchNorm (batch stats) + LeakyReLU(0.05)
# ----------------------------------------------------------------------------
def _bn_leaky(y, gamma, beta, eps=1e-5):
    m = y.shape[0]
    mean = jnp.sum(y, axis=0, keepdims=True) * (1.0 / m)
    cent = y - mean
    var = jnp.sum(cent * cent, axis=0, keepdims=True) * (1.0 / m)
    z = cent * (gamma * jax.lax.rsqrt(var + eps)) + beta
    return jnp.where(z > 0, z, 0.05 * z)


# ----------------------------------------------------------------------------
# Pallas kernels
# ----------------------------------------------------------------------------
def _conv_bn_leaky_kernel(x_ref, w_ref, b_ref, g_ref, be_ref, o_ref):
    # (M, K) @ (K, N) + bias, then BN(batch stats) + LeakyReLU, all in one block.
    y = jnp.dot(x_ref[...], w_ref[...], preferred_element_type=jnp.float32) + b_ref[...]
    o_ref[...] = _bn_leaky(y, g_ref[...], be_ref[...])


def _conv_bn_leaky_proj_kernel(x_ref, w_ref, b_ref, g_ref, be_ref,
                               wih_ref, bg_ref, o_ref):
    # Same as above, plus the LSTM input projection fused into the epilogue.
    y = jnp.dot(x_ref[...], w_ref[...], preferred_element_type=jnp.float32) + b_ref[...]
    z = _bn_leaky(y, g_ref[...], be_ref[...])
    o_ref[...] = jnp.dot(z, wih_ref[...], preferred_element_type=jnp.float32) + bg_ref[...]


def _lstm_kernel(xg_ref, whh_ref, out_ref):
    # xg_ref : (T, 4, N, H) = x @ W_ih^T + (b_ih + b_hh), gate-major (i, f, g, o)
    # whh_ref: (4, H, H)    per-gate recurrent weights, already (in, out)
    # out_ref: (T, N, H)    hidden state sequence
    t_len, _, n, hdim = xg_ref.shape
    whh = whh_ref[...]
    h = jnp.zeros((n, hdim), jnp.float32)
    c = jnp.zeros((n, hdim), jnp.float32)
    for t in range(t_len):      # static full unroll; T is small and known at trace time
        xt = xg_ref[t]          # (4, N, H), clean per-gate tiles (no mid-lane slicing)
        i_g = jax.nn.sigmoid(xt[0] + jnp.dot(h, whh[0], preferred_element_type=jnp.float32))
        f_g = jax.nn.sigmoid(xt[1] + jnp.dot(h, whh[1], preferred_element_type=jnp.float32))
        g_g = jnp.tanh(xt[2] + jnp.dot(h, whh[2], preferred_element_type=jnp.float32))
        o_g = jax.nn.sigmoid(xt[3] + jnp.dot(h, whh[3], preferred_element_type=jnp.float32))
        c = f_g * c + i_g * g_g
        h = o_g * jnp.tanh(c)
        out_ref[t] = h


# ----------------------------------------------------------------------------
# pallas_call wrappers: one full-extent block per call (everything fits in VMEM)
# ----------------------------------------------------------------------------
def _single_block_call(kernel, out_shape, *args):
    def zmap(nd):
        return lambda i, _nd=nd: (0,) * _nd

    return pl.pallas_call(
        kernel,
        out_shape=out_shape,
        grid=(1,),
        in_specs=[pl.BlockSpec(a.shape, zmap(a.ndim)) for a in args],
        out_specs=pl.BlockSpec(out_shape.shape, zmap(len(out_shape.shape))),
        compiler_params=pltpu.CompilerParams(dimension_semantics=("arbitrary",)),
    )(*args)


def conv_bn_leaky(x, w, b, gamma, beta):
    m, _ = x.shape
    n = w.shape[1]
    return _single_block_call(
        _conv_bn_leaky_kernel,
        jax.ShapeDtypeStruct((m, n), jnp.float32),
        x.astype(jnp.float32), w.astype(jnp.float32),
        b.reshape(1, n).astype(jnp.float32),
        gamma.reshape(1, n).astype(jnp.float32),
        beta.reshape(1, n).astype(jnp.float32),
    )


def conv_bn_leaky_proj(x, w, b, gamma, beta, wih_t, bgate):
    m, _ = x.shape
    n = w.shape[1]
    g4 = wih_t.shape[1]
    return _single_block_call(
        _conv_bn_leaky_proj_kernel,
        jax.ShapeDtypeStruct((m, g4), jnp.float32),
        x.astype(jnp.float32), w.astype(jnp.float32),
        b.reshape(1, n).astype(jnp.float32),
        gamma.reshape(1, n).astype(jnp.float32),
        beta.reshape(1, n).astype(jnp.float32),
        wih_t.astype(jnp.float32),
        bgate.reshape(1, g4).astype(jnp.float32),
    )


def lstm_forward(xg4, whh4):
    # xg4: (T, 4, N, H); whh4: (4, H, H) -> (T, N, H)
    t_len, _, n, hdim = xg4.shape
    return _single_block_call(
        _lstm_kernel,
        jax.ShapeDtypeStruct((t_len, n, hdim), jnp.float32),
        xg4.astype(jnp.float32), whh4.astype(jnp.float32),
    )


# ----------------------------------------------------------------------------
# Glue (im2col, parameter setup, shape plumbing) -- tiny arrays, left to XLA
# ----------------------------------------------------------------------------
def im2col_3x3(x):
    # x: (N, C, H, W) -> (N*H*W, C*9), 'same' padding, column order c*9+kh*3+kw
    n, c, h, w = x.shape
    xp = jnp.pad(x, ((0, 0), (0, 0), (1, 1), (1, 1)))
    cols = [xp[:, :, kh:kh + h, kw:kw + w] for kh in range(3) for kw in range(3)]
    p = jnp.stack(cols, axis=2)                      # (N, C, 9, H, W)
    return p.transpose(0, 3, 4, 1, 2).reshape(n * h * w, c * 9)


def init_params(key, num_temporal_filts, num_spatial_filts, num_out_feats, num_chans):
    F = num_temporal_filts
    SF = num_spatial_filts * F
    ks = jax.random.split(key, 22)

    def rnd(k, shape, scale):
        return scale * jax.random.normal(k, shape, dtype=jnp.float32)

    p = {}
    # temporal_block
    p['w1'] = rnd(ks[0], (F, 1, 9), 0.3)
    p['b1'] = rnd(ks[1], (F,), 0.1)
    p['g1'] = 1.0 + 0.1 * jax.random.normal(ks[2], (F,), dtype=jnp.float32)
    p['be1'] = rnd(ks[3], (F,), 0.1)
    p['w2'] = rnd(ks[4], (F, F, 9), 0.05)
    p['b2'] = rnd(ks[5], (F,), 0.1)
    p['g2'] = 1.0 + 0.1 * jax.random.normal(ks[6], (F,), dtype=jnp.float32)
    p['be2'] = rnd(ks[7], (F,), 0.1)
    # LSTM
    p['w_ih'] = rnd(ks[8], (4 * F, F), 0.1)
    p['w_hh'] = rnd(ks[9], (4 * F, F), 0.1)
    p['b_ih'] = rnd(ks[10], (4 * F,), 0.1)
    p['b_hh'] = rnd(ks[11], (4 * F,), 0.1)
    # spatial_block
    p['w3'] = rnd(ks[12], (SF, 1, 1, 3, 3), 0.2)        # grouped Conv3d
    p['b3'] = rnd(ks[13], (SF,), 0.1)
    p['g3'] = 1.0 + 0.1 * jax.random.normal(ks[14], (SF,), dtype=jnp.float32)
    p['be3'] = rnd(ks[15], (SF,), 0.1)
    p['w4'] = rnd(ks[16], (num_out_feats, SF, 1, 3, 3), 0.05)
    p['b4'] = rnd(ks[17], (num_out_feats,), 0.1)
    p['g4'] = 1.0 + 0.1 * jax.random.normal(ks[18], (num_out_feats,), dtype=jnp.float32)
    p['be4'] = rnd(ks[19], (num_out_feats,), 0.1)
    # final Linear(num_chans, 1)
    p['wl'] = rnd(ks[20], (1, num_chans), 0.2)
    p['bl'] = rnd(ks[21], (1,), 0.1)
    return p


def keynet_forward(params, x, num_temporal_filts=64, num_out_feats=22):
    B, Cin, Wlen, H, W = x.shape            # NCDHW, Cin == 1
    F = num_temporal_filts
    N0 = B * H * W
    x = x.astype(jnp.float32)

    # temporalizer: permute(0,3,4,1,2) + flatten(0..2) -> (B*H*W, 1, Wlen)
    tx1 = jnp.transpose(x, (0, 3, 4, 1, 2)).reshape(N0, Cin * Wlen)   # Cin == 1

    # --- temporal conv1: Conv1d(1, F, 9, stride=3) + BN + LeakyReLU (1 kernel) ---
    L1 = (Wlen - 9) // 3 + 1
    idx1 = jnp.arange(L1)[:, None] * 3 + jnp.arange(9)[None, :]
    patches1 = tx1[:, idx1].reshape(N0 * L1, 9)
    w1m = params['w1'].reshape(F, 9).T                                # (9, F)
    z1 = conv_bn_leaky(patches1, w1m, params['b1'], params['g1'], params['be1'])

    # --- temporal conv2 + BN + LeakyReLU + LSTM input projection (1 kernel) ---
    L2 = (L1 - 9) // 3 + 1
    z1_3d = z1.reshape(N0, L1, F)
    idx2 = jnp.arange(L2)[:, None] * 3 + jnp.arange(9)[None, :]
    patches2 = z1_3d[:, idx2, :].reshape(N0 * L2, 9 * F)              # col = k*F + c
    w2m = jnp.transpose(params['w2'], (2, 1, 0)).reshape(9 * F, F)
    wih_t = params['w_ih'].T                                          # (F, 4F) [i|f|g|o]
    xg = conv_bn_leaky_proj(patches2, w2m, params['b2'], params['g2'], params['be2'],
                            wih_t, params['b_ih'] + params['b_hh'])   # (N0*L2, 4F)

    # --- LSTM(F, F), batch_first, zero initial state (1 kernel, full recurrence) ---
    xg4 = xg.reshape(N0, L2, 4, F).transpose(1, 2, 0, 3)              # (L2, 4, N0, F)
    whh4 = params['w_hh'].reshape(4, F, F).transpose(0, 2, 1)         # (4, F, F)
    h_seq = lstm_forward(xg4, whh4)                                   # (L2, N0, F)

    # temporal_feats -> spatial block input (B*L2, F, H, W); conv depth = 1
    sp_in = h_seq.reshape(L2, B, H, W, F).transpose(1, 0, 4, 2, 3).reshape(B * L2, F, H, W)

    # --- spatial conv1: grouped Conv3d(F, 2F, (1,3,3), 'same', groups=F) (1 kernel) ---
    SF = params['b3'].shape[0]
    patches3 = im2col_3x3(sp_in)                                      # (B*L2*H*W, F*9)
    w3r = params['w3'].reshape(SF, 9)
    grp = jnp.arange(SF) // (SF // F)
    onehot = jax.nn.one_hot(grp, F, dtype=jnp.float32)                # (SF, F)
    w3m = jnp.einsum('ok,og->gko', w3r, onehot).reshape(F * 9, SF)
    z3 = conv_bn_leaky(patches3, w3m, params['b3'], params['g3'], params['be3'])

    # --- spatial conv2: Conv3d(2F, out, (1,3,3), 'same') (1 kernel) ---
    xin2 = z3.reshape(B * L2, H, W, SF).transpose(0, 3, 1, 2)
    patches4 = im2col_3x3(xin2)                                       # (BDHW, SF*9)
    w4m = jnp.transpose(params['w4'][:, :, 0], (1, 2, 3, 0)).reshape(SF * 9, num_out_feats)
    z4 = conv_bn_leaky(patches4, w4m, params['b4'], params['g4'], params['be4'])

    # --- Flatten(start_dim=3) + Linear(H*W, 1) + squeeze: ~7 KFLOP, left to XLA ---
    z4r = z4.reshape(B, L2, H * W, num_out_feats)                     # rows were (b,l,h,w)
    out = jnp.einsum('blsc,s->bcl', z4r, params['wl'][0].astype(jnp.float32)) + params['bl'][0]
    return jnp.squeeze(out[..., None])


# ----------------------------------------------------------------------------
if __name__ == "__main__":
    B, H, W, Wlen = 2, 4, 4, 69
    F, SPF, OUT = 64, 2, 22
    num_chans = H * W                       # Linear(num_chans, 1) => num_chans = H*W

    key = jax.random.PRNGKey(0)
    kx, kp = jax.random.split(key)
    x = jax.random.normal(kx, (B, 1, Wlen, H, W), dtype=jnp.float32)
    params = init_params(kp, F, SPF, OUT, num_chans)

    fwd = jax.jit(keynet_forward, static_argnums=(2, 3))
    out = jax.block_until_ready(fwd(params, x, F, OUT))

    L1 = (Wlen - 9) // 3 + 1
    L2 = (L1 - 9) // 3 + 1
    assert out.shape == (B, OUT, L2), out.shape
    assert bool(jnp.all(jnp.isfinite(out)))
    print("KERNEL_OK")
</pallas_src>

<mosaic_0001>
module attributes {stable_mosaic.version = 11 : i64} {
  func.func @_conv_bn_leaky_kernel(%arg0: i32, %arg1: memref<672x9xf32, #tpu.memory_space<vmem>>, %arg2: memref<9x64xf32, #tpu.memory_space<vmem>>, %arg3: memref<1x64xf32, #tpu.memory_space<vmem>>, %arg4: memref<1x64xf32, #tpu.memory_space<vmem>>, %arg5: memref<1x64xf32, #tpu.memory_space<vmem>>, %arg6: memref<672x64xf32, #tpu.memory_space<vmem>>) attributes {dimension_semantics = [#tpu.dimension_semantics<arbitrary>], iteration_bounds = array<i64: 1>, scalar_prefetch = 0 : i64, scratch_operands = 0 : i64, tpu.core_type = #tpu.core_type<tc>, window_params = [{pipeline_mode = #tpu.pipeline_mode<synchronous>, transform_indices = @transform_0, window_bounds = array<i64: 672, 9>}, {pipeline_mode = #tpu.pipeline_mode<synchronous>, transform_indices = @transform_1, window_bounds = array<i64: 9, 64>}, {pipeline_mode = #tpu.pipeline_mode<synchronous>, transform_indices = @transform_2, window_bounds = array<i64: 1, 64>}, {pipeline_mode = #tpu.pipeline_mode<synchronous>, transform_indices = @transform_3, window_bounds = array<i64: 1, 64>}, {pipeline_mode = #tpu.pipeline_mode<synchronous>, transform_indices = @transform_4, window_bounds = array<i64: 1, 64>}, {pipeline_mode = #tpu.pipeline_mode<synchronous>, transform_indices = @transform_5, window_bounds = array<i64: 672, 64>}]} {
    %c0 = arith.constant 0 : index
    %c0_0 = arith.constant 0 : index
    %0 = vector.load %arg1[%c0, %c0_0] : memref<672x9xf32, #tpu.memory_space<vmem>>, vector<672x9xf32>
    %c0_1 = arith.constant 0 : index
    %c0_2 = arith.constant 0 : index
    %1 = vector.load %arg2[%c0_1, %c0_2] : memref<9x64xf32, #tpu.memory_space<vmem>>, vector<9x64xf32>
    %cst = arith.constant dense<0.000000e+00> : vector<672x64xf32>
    %2 = tpu.matmul %0, %1, %cst {dimension_numbers = #tpu.dot_dimension_numbers<[1], [0], [0], [1], [0, 0, 1, 1], [], []>} : vector<672x9xf32>, vector<9x64xf32>, vector<672x64xf32> -> vector<672x64xf32>
    %c0_3 = arith.constant 0 : index
    %c0_4 = arith.constant 0 : index
    %3 = vector.load %arg3[%c0_3, %c0_4] : memref<1x64xf32, #tpu.memory_space<vmem>>, vector<1x64xf32>
    %4 = vector.broadcast %3 : vector<1x64xf32> to vector<672x64xf32>
    %5 = arith.addf %2, %4 : vector<672x64xf32>
    %c0_5 = arith.constant 0 : index
    %c0_6 = arith.constant 0 : index
    %6 = vector.load %arg4[%c0_5, %c0_6] : memref<1x64xf32, #tpu.memory_space<vmem>>, vector<1x64xf32>
    %c0_7 = arith.constant 0 : index
    %c0_8 = arith.constant 0 : index
    %7 = vector.load %arg5[%c0_7, %c0_8] : memref<1x64xf32, #tpu.memory_space<vmem>>, vector<1x64xf32>
    %cst_9 = arith.constant dense<0.000000e+00> : vector<64xf32>
    %8 = vector.multi_reduction <add>, %5, %cst_9 [0] : vector<672x64xf32> to vector<64xf32>
    %9 = vector.shape_cast %8 : vector<64xf32> to vector<1x64xf32>
    %cst_10 = arith.constant 0.00148809527 : f32
    %10 = vector.broadcast %cst_10 : f32 to vector<1x64xf32>
    %11 = arith.mulf %9, %10 : vector<1x64xf32>
    %12 = vector.broadcast %11 : vector<1x64xf32> to vector<672x64xf32>
    %13 = arith.subf %5, %12 : vector<672x64xf32>
    %14 = arith.mulf %13, %13 : vector<672x64xf32>
    %cst_11 = arith.constant dense<0.000000e+00> : vector<64xf32>
    %15 = vector.multi_reduction <add>, %14, %cst_11 [0] : vector<672x64xf32> to vector<64xf32>
    %16 = vector.shape_cast %15 : vector<64xf32> to vector<1x64xf32>
    %cst_12 = arith.constant 0.00148809527 : f32
    %17 = vector.broadcast %cst_12 : f32 to vector<1x64xf32>
    %18 = arith.mulf %16, %17 : vector<1x64xf32>
    %cst_13 = arith.constant 9.99999974E-6 : f32
    %19 = vector.broadcast %cst_13 : f32 to vector<1x64xf32>
    %20 = arith.addf %18, %19 : vector<1x64xf32>
    %21 = math.rsqrt %20 : vector<1x64xf32>
    %22 = arith.mulf %6, %21 : vector<1x64xf32>
    %23 = vector.broadcast %22 : vector<1x64xf32> to vector<672x64xf32>
    %24 = arith.mulf %13, %23 : vector<672x64xf32>
    %25 = vector.broadcast %7 : vector<1x64xf32> to vector<672x64xf32>
    %26 = arith.addf %24, %25 : vector<672x64xf32>
    %cst_14 = arith.constant 0.000000e+00 : f32
    %27 = vector.broadcast %cst_14 : f32 to vector<672x64xf32>
    %28 = arith.cmpf ogt, %26, %27 : vector<672x64xf32>
    %cst_15 = arith.constant 5.000000e-02 : f32
    %29 = vector.broadcast %cst_15 : f32 to vector<672x64xf32>
    %30 = arith.mulf %29, %26 : vector<672x64xf32>
    %31 = arith.select %28, %26, %30 : vector<672x64xi1>, vector<672x64xf32>
    %c0_16 = arith.constant 0 : index
    %c0_17 = arith.constant 0 : index
    %32 = vector.load %arg6[%c0_16, %c0_17] : memref<672x64xf32, #tpu.memory_space<vmem>>, vector<672x64xf32>
    tpu.vector_store %arg6[%c0_16, %c0_17], %31 {strides = array<i32>} : memref<672x64xf32, #tpu.memory_space<vmem>>, vector<672x64xf32>,
    return
  }
  func.func @transform_0(%arg0: i32) -> (i32, i32) {
    %c0_i32 = arith.constant 0 : i32
    %c0_i32_0 = arith.constant 0 : i32
    %c0_i32_1 = arith.constant 0 : i32
    return %c0_i32, %c0_i32_0 : i32, i32
  }
  func.func @transform_1(%arg0: i32) -> (i32, i32) {
    %c0_i32 = arith.constant 0 : i32
    %c0_i32_0 = arith.constant 0 : i32
    %c0_i32_1 = arith.constant 0 : i32
    return %c0_i32, %c0_i32_0 : i32, i32
  }
  func.func @transform_2(%arg0: i32) -> (i32, i32) {
    %c0_i32 = arith.constant 0 : i32
    %c0_i32_0 = arith.constant 0 : i32
    %c0_i32_1 = arith.constant 0 : i32
    return %c0_i32, %c0_i32_0 : i32, i32
  }
  func.func @transform_3(%arg0: i32) -> (i32, i32) {
    %c0_i32 = arith.constant 0 : i32
    %c0_i32_0 = arith.constant 0 : i32
    %c0_i32_1 = arith.constant 0 : i32
    return %c0_i32, %c0_i32_0 : i32, i32
  }
  func.func @transform_4(%arg0: i32) -> (i32, i32) {
    %c0_i32 = arith.constant 0 : i32
    %c0_i32_0 = arith.constant 0 : i32
    %c0_i32_1 = arith.constant 0 : i32
    return %c0_i32, %c0_i32_0 : i32, i32
  }
  func.func @transform_5(%arg0: i32) -> (i32, i32) {
    %c0_i32 = arith.constant 0 : i32
    %c0_i32_0 = arith.constant 0 : i32
    %c0_i32_1 = arith.constant 0 : i32
    return %c0_i32, %c0_i32_0 : i32, i32
  }
}

module attributes {stable_mosaic.version = 11 : i64} {
  func.func @_conv_bn_leaky_proj_kernel(%arg0: i32, %arg1: memref<160x576xf32, #tpu.memory_space<vmem>>, %arg2: memref<576x64xf32, #tpu.memory_space<vmem>>, %arg3: memref<1x64xf32, #tpu.memory_space<vmem>>, %arg4: memref<1x64xf32, #tpu.memory_space<vmem>>, %arg5: memref<1x64xf32, #tpu.memory_space<vmem>>, %arg6: memref<64x256xf32, #tpu.memory_space<vmem>>, %arg7: memref<1x256xf32, #tpu.memory_space<vmem>>, %arg8: memref<160x256xf32, #tpu.memory_space<vmem>>) attributes {dimension_semantics = [#tpu.dimension_semantics<arbitrary>], iteration_bounds = array<i64: 1>, scalar_prefetch = 0 : i64, scratch_operands = 0 : i64, tpu.core_type = #tpu.core_type<tc>, window_params = [{pipeline_mode = #tpu.pipeline_mode<synchronous>, transform_indices = @transform_0, window_bounds = array<i64: 160, 576>}, {pipeline_mode = #tpu.pipeline_mode<synchronous>, transform_indices = @transform_1, window_bounds = array<i64: 576, 64>}, {pipeline_mode = #tpu.pipeline_mode<synchronous>, transform_indices = @transform_2, window_bounds = array<i64: 1, 64>}, {pipeline_mode = #tpu.pipeline_mode<synchronous>, transform_indices = @transform_3, window_bounds = array<i64: 1, 64>}, {pipeline_mode = #tpu.pipeline_mode<synchronous>, transform_indices = @transform_4, window_bounds = array<i64: 1, 64>}, {pipeline_mode = #tpu.pipeline_mode<synchronous>, transform_indices = @transform_5, window_bounds = array<i64: 64, 256>}, {pipeline_mode = #tpu.pipeline_mode<synchronous>, transform_indices = @transform_6, window_bounds = array<i64: 1, 256>}, {pipeline_mode = #tpu.pipeline_mode<synchronous>, transform_indices = @transform_7, window_bounds = array<i64: 160, 256>}]} {
    %c0 = arith.constant 0 : index
    %c0_0 = arith.constant 0 : index
    %0 = vector.load %arg1[%c0, %c0_0] : memref<160x576xf32, #tpu.memory_space<vmem>>, vector<160x576xf32>
    %c0_1 = arith.constant 0 : index
    %c0_2 = arith.constant 0 : index
    %1 = vector.load %arg2[%c0_1, %c0_2] : memref<576x64xf32, #tpu.memory_space<vmem>>, vector<576x64xf32>
    %cst = arith.constant dense<0.000000e+00> : vector<160x64xf32>
    %2 = tpu.matmul %0, %1, %cst {dimension_numbers = #tpu.dot_dimension_numbers<[1], [0], [0], [1], [0, 0, 1, 1], [], []>} : vector<160x576xf32>, vector<576x64xf32>, vector<160x64xf32> -> vector<160x64xf32>
    %c0_3 = arith.constant 0 : index
    %c0_4 = arith.constant 0 : index
    %3 = vector.load %arg3[%c0_3, %c0_4] : memref<1x64xf32, #tpu.memory_space<vmem>>, vector<1x64xf32>
    %4 = vector.broadcast %3 : vector<1x64xf32> to vector<160x64xf32>
    %5 = arith.addf %2, %4 : vector<160x64xf32>
    %c0_5 = arith.constant 0 : index
    %c0_6 = arith.constant 0 : index
    %6 = vector.load %arg4[%c0_5, %c0_6] : memref<1x64xf32, #tpu.memory_space<vmem>>, vector<1x64xf32>
    %c0_7 = arith.constant 0 : index
    %c0_8 = arith.constant 0 : index
    %7 = vector.load %arg5[%c0_7, %c0_8] : memref<1x64xf32, #tpu.memory_space<vmem>>, vector<1x64xf32>
    %cst_9 = arith.constant dense<0.000000e+00> : vector<64xf32>
    %8 = vector.multi_reduction <add>, %5, %cst_9 [0] : vector<160x64xf32> to vector<64xf32>
    %9 = vector.shape_cast %8 : vector<64xf32> to vector<1x64xf32>
    %cst_10 = arith.constant 6.250000e-03 : f32
    %10 = vector.broadcast %cst_10 : f32 to vector<1x64xf32>
    %11 = arith.mulf %9, %10 : vector<1x64xf32>
    %12 = vector.broadcast %11 : vector<1x64xf32> to vector<160x64xf32>
    %13 = arith.subf %5, %12 : vector<160x64xf32>
    %14 = arith.mulf %13, %13 : vector<160x64xf32>
    %cst_11 = arith.constant dense<0.000000e+00> : vector<64xf32>
    %15 = vector.multi_reduction <add>, %14, %cst_11 [0] : vector<160x64xf32> to vector<64xf32>
    %16 = vector.shape_cast %15 : vector<64xf32> to vector<1x64xf32>
    %cst_12 = arith.constant 6.250000e-03 : f32
    %17 = vector.broadcast %cst_12 : f32 to vector<1x64xf32>
    %18 = arith.mulf %16, %17 : vector<1x64xf32>
    %cst_13 = arith.constant 9.99999974E-6 : f32
    %19 = vector.broadcast %cst_13 : f32 to vector<1x64xf32>
    %20 = arith.addf %18, %19 : vector<1x64xf32>
    %21 = math.rsqrt %20 : vector<1x64xf32>
    %22 = arith.mulf %6, %21 : vector<1x64xf32>
    %23 = vector.broadcast %22 : vector<1x64xf32> to vector<160x64xf32>
    %24 = arith.mulf %13, %23 : vector<160x64xf32>
    %25 = vector.broadcast %7 : vector<1x64xf32> to vector<160x64xf32>
    %26 = arith.addf %24, %25 : vector<160x64xf32>
    %cst_14 = arith.constant 0.000000e+00 : f32
    %27 = vector.broadcast %cst_14 : f32 to vector<160x64xf32>
    %28 = arith.cmpf ogt, %26, %27 : vector<160x64xf32>
    %cst_15 = arith.constant 5.000000e-02 : f32
    %29 = vector.broadcast %cst_15 : f32 to vector<160x64xf32>
    %30 = arith.mulf %29, %26 : vector<160x64xf32>
    %31 = arith.select %28, %26, %30 : vector<160x64xi1>, vector<160x64xf32>
    %c0_16 = arith.constant 0 : index
    %c0_17 = arith.constant 0 : index
    %32 = vector.load %arg6[%c0_16, %c0_17] : memref<64x256xf32, #tpu.memory_space<vmem>>, vector<64x256xf32>
    %cst_18 = arith.constant dense<0.000000e+00> : vector<160x256xf32>
    %33 = tpu.matmul %31, %32, %cst_18 {dimension_numbers = #tpu.dot_dimension_numbers<[1], [0], [0], [1], [0, 0, 1, 1], [], []>} : vector<160x64xf32>, vector<64x256xf32>, vector<160x256xf32> -> vector<160x256xf32>
    %c0_19 = arith.constant 0 : index
    %c0_20 = arith.constant 0 : index
    %34 = vector.load %arg7[%c0_19, %c0_20] : memref<1x256xf32, #tpu.memory_space<vmem>>, vector<1x256xf32>
    %35 = vector.broadcast %34 : vector<1x256xf32> to vector<160x256xf32>
    %36 = arith.addf %33, %35 : vector<160x256xf32>
    %c0_21 = arith.constant 0 : index
    %c0_22 = arith.constant 0 : index
    %37 = vector.load %arg8[%c0_21, %c0_22] : memref<160x256xf32, #tpu.memory_space<vmem>>, vector<160x256xf32>
    tpu.vector_store %arg8[%c0_21, %c0_22], %36 {strides = array<i32>} : memref<160x256xf32, #tpu.memory_space<vmem>>, vector<160x256xf32>,
    return
  }
  func.func @transform_0(%arg0: i32) -> (i32, i32) {
    %c0_i32 = arith.constant 0 : i32
    %c0_i32_0 = arith.constant 0 : i32
    %c0_i32_1 = arith.constant 0 : i32
    return %c0_i32, %c0_i32_0 : i32, i32
  }
  func.func @transform_1(%arg0: i32) -> (i32, i32) {
    %c0_i32 = arith.constant 0 : i32
    %c0_i32_0 = arith.constant 0 : i32
    %c0_i32_1 = arith.constant 0 : i32
    return %c0_i32, %c0_i32_0 : i32, i32
  }
  func.func @transform_2(%arg0: i32) -> (i32, i32) {
    %c0_i32 = arith.constant 0 : i32
    %c0_i32_0 = arith.constant 0 : i32
    %c0_i32_1 = arith.constant 0 : i32
    return %c0_i32, %c0_i32_0 : i32, i32
  }
  func.func @transform_3(%arg0: i32) -> (i32, i32) {
    %c0_i32 = arith.constant 0 : i32
    %c0_i32_0 = arith.constant 0 : i32
    %c0_i32_1 = arith.constant 0 : i32
    return %c0_i32, %c0_i32_0 : i32, i32
  }
  func.func @transform_4(%arg0: i32) -> (i32, i32) {
    %c0_i32 = arith.constant 0 : i32
    %c0_i32_0 = arith.constant 0 : i32
    %c0_i32_1 = arith.constant 0 : i32
    return %c0_i32, %c0_i32_0 : i32, i32
  }
  func.func @transform_5(%arg0: i32) -> (i32, i32) {
    %c0_i32 = arith.constant 0 : i32
    %c0_i32_0 = arith.constant 0 : i32
    %c0_i32_1 = arith.constant 0 : i32
    return %c0_i32, %c0_i32_0 : i32, i32
  }
  func.func @transform_6(%arg0: i32) -> (i32, i32) {
    %c0_i32 = arith.constant 0 : i32
    %c0_i32_0 = arith.constant 0 : i32
    %c0_i32_1 = arith.constant 0 : i32
    return %c0_i32, %c0_i32_0 : i32, i32
  }
  func.func @transform_7(%arg0: i32) -> (i32, i32) {
    %c0_i32 = arith.constant 0 : i32
    %c0_i32_0 = arith.constant 0 : i32
    %c0_i32_1 = arith.constant 0 : i32
    return %c0_i32, %c0_i32_0 : i32, i32
  }
}

module attributes {stable_mosaic.version = 11 : i64} {
  func.func @_lstm_kernel(%arg0: i32, %arg1: memref<5x4x32x64xf32, #tpu.memory_space<vmem>>, %arg2: memref<4x64x64xf32, #tpu.memory_space<vmem>>, %arg3: memref<5x32x64xf32, #tpu.memory_space<vmem>>) attributes {dimension_semantics = [#tpu.dimension_semantics<arbitrary>], iteration_bounds = array<i64: 1>, scalar_prefetch = 0 : i64, scratch_operands = 0 : i64, tpu.core_type = #tpu.core_type<tc>, window_params = [{pipeline_mode = #tpu.pipeline_mode<synchronous>, transform_indices = @transform_0, window_bounds = array<i64: 5, 4, 32, 64>}, {pipeline_mode = #tpu.pipeline_mode<synchronous>, transform_indices = @transform_1, window_bounds = array<i64: 4, 64, 64>}, {pipeline_mode = #tpu.pipeline_mode<synchronous>, transform_indices = @transform_2, window_bounds = array<i64: 5, 32, 64>}]} {
    %c0 = arith.constant 0 : index
    %c0_0 = arith.constant 0 : index
    %c0_1 = arith.constant 0 : index
    %0 = vector.load %arg2[%c0, %c0_0, %c0_1] : memref<4x64x64xf32, #tpu.memory_space<vmem>>, vector<4x64x64xf32>
    %cst = arith.constant 0.000000e+00 : f32
    %1 = vector.broadcast %cst : f32 to vector<32x64xf32>
    %cst_2 = arith.constant 0.000000e+00 : f32
    %2 = vector.broadcast %cst_2 : f32 to vector<32x64xf32>
    %c0_3 = arith.constant 0 : index
    %c0_4 = arith.constant 0 : index
    %c0_5 = arith.constant 0 : index
    %c0_6 = arith.constant 0 : index
    %3 = vector.load %arg1[%c0_3, %c0_4, %c0_5, %c0_6] : memref<5x4x32x64xf32, #tpu.memory_space<vmem>>, vector<1x4x32x64xf32>
    %4 = vector.shape_cast %3 : vector<1x4x32x64xf32> to vector<4x32x64xf32>
    %5 = vector.extract_strided_slice %4 {offsets = [0, 0, 0], sizes = [1, 32, 64], strides = [1, 1, 1]} : vector<4x32x64xf32> to vector<1x32x64xf32>
    %6 = vector.shape_cast %5 : vector<1x32x64xf32> to vector<32x64xf32>
    %7 = vector.extract_strided_slice %0 {offsets = [0, 0, 0], sizes = [1, 64, 64], strides = [1, 1, 1]} : vector<4x64x64xf32> to vector<1x64x64xf32>
    %8 = vector.shape_cast %7 : vector<1x64x64xf32> to vector<64x64xf32>
    %cst_7 = arith.constant dense<0.000000e+00> : vector<32x64xf32>
    %9 = tpu.matmul %1, %8, %cst_7 {dimension_numbers = #tpu.dot_dimension_numbers<[1], [0], [0], [1], [0, 0, 1, 1], [], []>} : vector<32x64xf32>, vector<64x64xf32>, vector<32x64xf32> -> vector<32x64xf32>
    %10 = arith.addf %6, %9 : vector<32x64xf32>
    %11 = arith.negf %10 : vector<32x64xf32>
    %12 = math.exp %11 : vector<32x64xf32>
    %cst_8 = arith.constant 1.000000e+00 : f32
    %13 = vector.broadcast %cst_8 : f32 to vector<32x64xf32>
    %14 = arith.addf %13, %12 : vector<32x64xf32>
    %15 = arith.divf %13, %14 : vector<32x64xf32>
    %16 = vector.extract_strided_slice %4 {offsets = [1, 0, 0], sizes = [1, 32, 64], strides = [1, 1, 1]} : vector<4x32x64xf32> to vector<1x32x64xf32>
    %17 = vector.shape_cast %16 : vector<1x32x64xf32> to vector<32x64xf32>
    %18 = vector.extract_strided_slice %0 {offsets = [1, 0, 0], sizes = [1, 64, 64], strides = [1, 1, 1]} : vector<4x64x64xf32> to vector<1x64x64xf32>
    %19 = vector.shape_cast %18 : vector<1x64x64xf32> to vector<64x64xf32>
    %cst_9 = arith.constant dense<0.000000e+00> : vector<32x64xf32>
    %20 = tpu.matmul %1, %19, %cst_9 {dimension_numbers = #tpu.dot_dimension_numbers<[1], [0], [0], [1], [0, 0, 1, 1], [], []>} : vector<32x64xf32>, vector<64x64xf32>, vector<32x64xf32> -> vector<32x64xf32>
    %21 = arith.addf %17, %20 : vector<32x64xf32>
    %22 = arith.negf %21 : vector<32x64xf32>
    %23 = math.exp %22 : vector<32x64xf32>
    %cst_10 = arith.constant 1.000000e+00 : f32
    %24 = vector.broadcast %cst_10 : f32 to vector<32x64xf32>
    %25 = arith.addf %24, %23 : vector<32x64xf32>
    %26 = arith.divf %24, %25 : vector<32x64xf32>
    %27 = vector.extract_strided_slice %4 {offsets = [2, 0, 0], sizes = [1, 32, 64], strides = [1, 1, 1]} : vector<4x32x64xf32> to vector<1x32x64xf32>
    %28 = vector.shape_cast %27 : vector<1x32x64xf32> to vector<32x64xf32>
    %29 = vector.extract_strided_slice %0 {offsets = [2, 0, 0], sizes = [1, 64, 64], strides = [1, 1, 1]} : vector<4x64x64xf32> to vector<1x64x64xf32>
    %30 = vector.shape_cast %29 : vector<1x64x64xf32> to vector<64x64xf32>
    %cst_11 = arith.constant dense<0.000000e+00> : vector<32x64xf32>
    %31 = tpu.matmul %1, %30, %cst_11 {dimension_numbers = #tpu.dot_dimension_numbers<[1], [0], [0], [1], [0, 0, 1, 1], [], []>} : vector<32x64xf32>, vector<64x64xf32>, vector<32x64xf32> -> vector<32x64xf32>
    %32 = arith.addf %28, %31 : vector<32x64xf32>
    %33 = math.tanh %32 : vector<32x64xf32>
    %34 = vector.extract_strided_slice %4 {offsets = [3, 0, 0], sizes = [1, 32, 64], strides = [1, 1, 1]} : vector<4x32x64xf32> to vector<1x32x64xf32>
    %35 = vector.shape_cast %34 : vector<1x32x64xf32> to vector<32x64xf32>
    %36 = vector.extract_strided_slice %0 {offsets = [3, 0, 0], sizes = [1, 64, 64], strides = [1, 1, 1]} : vector<4x64x64xf32> to vector<1x64x64xf32>
    %37 = vector.shape_cast %36 : vector<1x64x64xf32> to vector<64x64xf32>
    %cst_12 = arith.constant dense<0.000000e+00> : vector<32x64xf32>
    %38 = tpu.matmul %1, %37, %cst_12 {dimension_numbers = #tpu.dot_dimension_numbers<[1], [0], [0], [1], [0, 0, 1, 1], [], []>} : vector<32x64xf32>, vector<64x64xf32>, vector<32x64xf32> -> vector<32x64xf32>
    %39 = arith.addf %35, %38 : vector<32x64xf32>
    %40 = arith.negf %39 : vector<32x64xf32>
    %41 = math.exp %40 : vector<32x64xf32>
    %cst_13 = arith.constant 1.000000e+00 : f32
    %42 = vector.broadcast %cst_13 : f32 to vector<32x64xf32>
    %43 = arith.addf %42, %41 : vector<32x64xf32>
    %44 = arith.divf %42, %43 : vector<32x64xf32>
    %45 = arith.mulf %26, %2 : vector<32x64xf32>
    %46 = arith.mulf %15, %33 : vector<32x64xf32>
    %47 = arith.addf %45, %46 : vector<32x64xf32>
    %48 = math.tanh %47 : vector<32x64xf32>
    %49 = arith.mulf %44, %48 : vector<32x64xf32>
    %c0_14 = arith.constant 0 : index
    %c0_15 = arith.constant 0 : index
    %c0_16 = arith.constant 0 : index
    %50 = vector.load %arg3[%c0_14, %c0_15, %c0_16] : memref<5x32x64xf32, #tpu.memory_space<vmem>>, vector<1x32x64xf32>
    %51 = vector.shape_cast %50 : vector<1x32x64xf32> to vector<32x64xf32>
    %52 = vector.shape_cast %49 : vector<32x64xf32> to vector<1x32x64xf32>
    tpu.vector_store %arg3[%c0_14, %c0_15, %c0_16], %52 {strides = array<i32>} : memref<5x32x64xf32, #tpu.memory_space<vmem>>, vector<1x32x64xf32>,
    %c1 = arith.constant 1 : index
    %c0_17 = arith.constant 0 : index
    %c0_18 = arith.constant 0 : index
    %c0_19 = arith.constant 0 : index
    %53 = vector.load %arg1[%c1, %c0_17, %c0_18, %c0_19] : memref<5x4x32x64xf32, #tpu.memory_space<vmem>>, vector<1x4x32x64xf32>
    %54 = vector.shape_cast %53 : vector<1x4x32x64xf32> to vector<4x32x64xf32>
    %55 = vector.extract_strided_slice %54 {offsets = [0, 0, 0], sizes = [1, 32, 64], strides = [1, 1, 1]} : vector<4x32x64xf32> to vector<1x32x64xf32>
    %56 = vector.shape_cast %55 : vector<1x32x64xf32> to vector<32x64xf32>
    %57 = vector.extract_strided_slice %0 {offsets = [0, 0, 0], sizes = [1, 64, 64], strides = [1, 1, 1]} : vector<4x64x64xf32> to vector<1x64x64xf32>
    %58 = vector.shape_cast %57 : vector<1x64x64xf32> to vector<64x64xf32>
    %cst_20 = arith.constant dense<0.000000e+00> : vector<32x64xf32>
    %59 = tpu.matmul %49, %58, %cst_20 {dimension_numbers = #tpu.dot_dimension_numbers<[1], [0], [0], [1], [0, 0, 1, 1], [], []>} : vector<32x64xf32>, vector<64x64xf32>, vector<32x64xf32> -> vector<32x64xf32>
    %60 = arith.addf %56, %59 : vector<32x64xf32>
    %61 = arith.negf %60 : vector<32x64xf32>
    %62 = math.exp %61 : vector<32x64xf32>
    %cst_21 = arith.constant 1.000000e+00 : f32
    %63 = vector.broadcast %cst_21 : f32 to vector<32x64xf32>
    %64 = arith.addf %63, %62 : vector<32x64xf32>
    %65 = arith.divf %63, %64 : vector<32x64xf32>
    %66 = vector.extract_strided_slice %54 {offsets = [1, 0, 0], sizes = [1, 32, 64], strides = [1, 1, 1]} : vector<4x32x64xf32> to vector<1x32x64xf32>
    %67 = vector.shape_cast %66 : vector<1x32x64xf32> to vector<32x64xf32>
    %68 = vector.extract_strided_slice %0 {offsets = [1, 0, 0], sizes = [1, 64, 64], strides = [1, 1, 1]} : vector<4x64x64xf32> to vector<1x64x64xf32>
    %69 = vector.shape_cast %68 : vector<1x64x64xf32> to vector<64x64xf32>
    %cst_22 = arith.constant dense<0.000000e+00> : vector<32x64xf32>
    %70 = tpu.matmul %49, %69, %cst_22 {dimension_numbers = #tpu.dot_dimension_numbers<[1], [0], [0], [1], [0, 0, 1, 1], [], []>} : vector<32x64xf32>, vector<64x64xf32>, vector<32x64xf32> -> vector<32x64xf32>
    %71 = arith.addf %67, %70 : vector<32x64xf32>
    %72 = arith.negf %71 : vector<32x64xf32>
    %73 = math.exp %72 : vector<32x64xf32>
    %cst_23 = arith.constant 1.000000e+00 : f32
    %74 = vector.broadcast %cst_23 : f32 to vector<32x64xf32>
    %75 = arith.addf %74, %73 : vector<32x64xf32>
    %76 = arith.divf %74, %75 : vector<32x64xf32>
    %77 = vector.extract_strided_slice %54 {offsets = [2, 0, 0], sizes = [1, 32, 64], strides = [1, 1, 1]} : vector<4x32x64xf32> to vector<1x32x64xf32>
    %78 = vector.shape_cast %77 : vector<1x32x64xf32> to vector<32x64xf32>
    %79 = vector.extract_strided_slice %0 {offsets = [2, 0, 0], sizes = [1, 64, 64], strides = [1, 1, 1]} : vector<4x64x64xf32> to vector<1x64x64xf32>
    %80 = vector.shape_cast %79 : vector<1x64x64xf32> to vector<64x64xf32>
    %cst_24 = arith.constant dense<0.000000e+00> : vector<32x64xf32>
    %81 = tpu.matmul %49, %80, %cst_24 {dimension_numbers = #tpu.dot_dimension_numbers<[1], [0], [0], [1], [0, 0, 1, 1], [], []>} : vector<32x64xf32>, vector<64x64xf32>, vector<32x64xf32> -> vector<32x64xf32>
    %82 = arith.addf %78, %81 : vector<32x64xf32>
    %83 = math.tanh %82 : vector<32x64xf32>
    %84 = vector.extract_strided_slice %54 {offsets = [3, 0, 0], sizes = [1, 32, 64], strides = [1, 1, 1]} : vector<4x32x64xf32> to vector<1x32x64xf32>
    %85 = vector.shape_cast %84 : vector<1x32x64xf32> to vector<32x64xf32>
    %86 = vector.extract_strided_slice %0 {offsets = [3, 0, 0], sizes = [1, 64, 64], strides = [1, 1, 1]} : vector<4x64x64xf32> to vector<1x64x64xf32>
    %87 = vector.shape_cast %86 : vector<1x64x64xf32> to vector<64x64xf32>
    %cst_25 = arith.constant dense<0.000000e+00> : vector<32x64xf32>
    %88 = tpu.matmul %49, %87, %cst_25 {dimension_numbers = #tpu.dot_dimension_numbers<[1], [0], [0], [1], [0, 0, 1, 1], [], []>} : vector<32x64xf32>, vector<64x64xf32>, vector<32x64xf32> -> vector<32x64xf32>
    %89 = arith.addf %85, %88 : vector<32x64xf32>
    %90 = arith.negf %89 : vector<32x64xf32>
    %91 = math.exp %90 : vector<32x64xf32>
    %cst_26 = arith.constant 1.000000e+00 : f32
    %92 = vector.broadcast %cst_26 : f32 to vector<32x64xf32>
    %93 = arith.addf %92, %91 : vector<32x64xf32>
    %94 = arith.divf %92, %93 : vector<32x64xf32>
    %95 = arith.mulf %76, %47 : vector<32x64xf32>
    %96 = arith.mulf %65, %83 : vector<32x64xf32>
    %97 = arith.addf %95, %96 : vector<32x64xf32>
    %98 = math.tanh %97 : vector<32x64xf32>
    %99 = arith.mulf %94, %98 : vector<32x64xf32>
    %c1_27 = arith.constant 1 : index
    %c0_28 = arith.constant 0 : index
    %c0_29 = arith.constant 0 : index
    %100 = vector.load %arg3[%c1_27, %c0_28, %c0_29] : memref<5x32x64xf32, #tpu.memory_space<vmem>>, vector<1x32x64xf32>
    %101 = vector.shape_cast %100 : vector<1x32x64xf32> to vector<32x64xf32>
    %102 = vector.shape_cast %99 : vector<32x64xf32> to vector<1x32x64xf32>
    tpu.vector_store %arg3[%c1_27, %c0_28, %c0_29], %102 {strides = array<i32>} : memref<5x32x64xf32, #tpu.memory_space<vmem>>, vector<1x32x64xf32>,
    %c2 = arith.constant 2 : index
    %c0_30 = arith.constant 0 : index
    %c0_31 = arith.constant 0 : index
    %c0_32 = arith.constant 0 : index
    %103 = vector.load %arg1[%c2, %c0_30, %c0_31, %c0_32] : memref<5x4x32x64xf32, #tpu.memory_space<vmem>>, vector<1x4x32x64xf32>
    %104 = vector.shape_cast %103 : vector<1x4x32x64xf32> to vector<4x32x64xf32>
    %105 = vector.extract_strided_slice %104 {offsets = [0, 0, 0], sizes = [1, 32, 64], strides = [1, 1, 1]} : vector<4x32x64xf32> to vector<1x32x64xf32>
    %106 = vector.shape_cast %105 : vector<1x32x64xf32> to vector<32x64xf32>
    %107 = vector.extract_strided_slice %0 {offsets = [0, 0, 0], sizes = [1, 64, 64], strides = [1, 1, 1]} : vector<4x64x64xf32> to vector<1x64x64xf32>
    %108 = vector.shape_cast %107 : vector<1x64x64xf32> to vector<64x64xf32>
    %cst_33 = arith.constant dense<0.000000e+00> : vector<32x64xf32>
    %109 = tpu.matmul %99, %108, %cst_33 {dimension_numbers = #tpu.dot_dimension_numbers<[1], [0], [0], [1], [0, 0, 1, 1], [], []>} : vector<32x64xf32>, vector<64x64xf32>, vector<32x64xf32> -> vector<32x64xf32>
    %110 = arith.addf %106, %109 : vector<32x64xf32>
    %111 = arith.negf %110 : vector<32x64xf32>
    %112 = math.exp %111 : vector<32x64xf32>
    %cst_34 = arith.constant 1.000000e+00 : f32
    %113 = vector.broadcast %cst_34 : f32 to vector<32x64xf32>
    %114 = arith.addf %113, %112 : vector<32x64xf32>
    %115 = arith.divf %113, %114 : vector<32x64xf32>
    %116 = vector.extract_strided_slice %104 {offsets = [1, 0, 0], sizes = [1, 32, 64], strides = [1, 1, 1]} : vector<4x32x64xf32> to vector<1x32x64xf32>
    %117 = vector.shape_cast %116 : vector<1x32x64xf32> to vector<32x64xf32>
    %118 = vector.extract_strided_slice %0 {offsets = [1, 0, 0], sizes = [1, 64, 64], strides = [1, 1, 1]} : vector<4x64x64xf32> to vector<1x64x64xf32>
    %119 = vector.shape_cast %118 : vector<1x64x64xf32> to vector<64x64xf32>
    %cst_35 = arith.constant dense<0.000000e+00> : vector<32x64xf32>
    %120 = tpu.matmul %99, %119, %cst_35 {dimension_numbers = #tpu.dot_dimension_numbers<[1], [0], [0], [1], [0, 0, 1, 1], [], []>} : vector<32x64xf32>, vector<64x64xf32>, vector<32x64xf32> -> vector<32x64xf32>
    %121 = arith.addf %117, %120 : vector<32x64xf32>
    %122 = arith.negf %121 : vector<32x64xf32>
    %123 = math.exp %122 : vector<32x64xf32>
    %cst_36 = arith.constant 1.000000e+00 : f32
    %124 = vector.broadcast %cst_36 : f32 to vector<32x64xf32>
    %125 = arith.addf %124, %123 : vector<32x64xf32>
    %126 = arith.divf %124, %125 : vector<32x64xf32>
    %127 = vector.extract_strided_slice %104 {offsets = [2, 0, 0], sizes = [1, 32, 64], strides = [1, 1, 1]} : vector<4x32x64xf32> to vector<1x32x64xf32>
    %128 = vector.shape_cast %127 : vector<1x32x64xf32> to vector<32x64xf32>
    %129 = vector.extract_strided_slice %0 {offsets = [2, 0, 0], sizes = [1, 64, 64], strides = [1, 1, 1]} : vector<4x64x64xf32> to vector<1x64x64xf32>
    %130 = vector.shape_cast %129 : vector<1x64x64xf32> to vector<64x64xf32>
    %cst_37 = arith.constant dense<0.000000e+00> : vector<32x64xf32>
    %131 = tpu.matmul %99, %130, %cst_37 {dimension_numbers = #tpu.dot_dimension_numbers<[1], [0], [0], [1], [0, 0, 1, 1], [], []>} : vector<32x64xf32>, vector<64x64xf32>, vector<32x64xf32> -> vector<32x64xf32>
    %132 = arith.addf %128, %131 : vector<32x64xf32>
    %133 = math.tanh %132 : vector<32x64xf32>
    %134 = vector.extract_strided_slice %104 {offsets = [3, 0, 0], sizes = [1, 32, 64], strides = [1, 1, 1]} : vector<4x32x64xf32> to vector<1x32x64xf32>
    %135 = vector.shape_cast %134 : vector<1x32x64xf32> to vector<32x64xf32>
    %136 = vector.extract_strided_slice %0 {offsets = [3, 0, 0], sizes = [1, 64, 64], strides = [1, 1, 1]} : vector<4x64x64xf32> to vector<1x64x64xf32>
    %137 = vector.shape_cast %136 : vector<1x64x64xf32> to vector<64x64xf32>
    %cst_38 = arith.constant dense<0.000000e+00> : vector<32x64xf32>
    %138 = tpu.matmul %99, %137, %cst_38 {dimension_numbers = #tpu.dot_dimension_numbers<[1], [0], [0], [1], [0, 0, 1, 1], [], []>} : vector<32x64xf32>, vector<64x64xf32>, vector<32x64xf32> -> vector<32x64xf32>
    %139 = arith.addf %135, %138 : vector<32x64xf32>
    %140 = arith.negf %139 : vector<32x64xf32>
    %141 = math.exp %140 : vector<32x64xf32>
    %cst_39 = arith.constant 1.000000e+00 : f32
    %142 = vector.broadcast %cst_39 : f32 to vector<32x64xf32>
    %143 = arith.addf %142, %141 : vector<32x64xf32>
    %144 = arith.divf %142, %143 : vector<32x64xf32>
    %145 = arith.mulf %126, %97 : vector<32x64xf32>
    %146 = arith.mulf %115, %133 : vector<32x64xf32>
    %147 = arith.addf %145, %146 : vector<32x64xf32>
    %148 = math.tanh %147 : vector<32x64xf32>
    %149 = arith.mulf %144, %148 : vector<32x64xf32>
    %c2_40 = arith.constant 2 : index
    %c0_41 = arith.constant 0 : index
    %c0_42 = arith.constant 0 : index
    %150 = vector.load %arg3[%c2_40, %c0_41, %c0_42] : memref<5x32x64xf32, #tpu.memory_space<vmem>>, vector<1x32x64xf32>
    %151 = vector.shape_cast %150 : vector<1x32x64xf32> to vector<32x64xf32>
    %152 = vector.shape_cast %149 : vector<32x64xf32> to vector<1x32x64xf32>
    tpu.vector_store %arg3[%c2_40, %c0_41, %c0_42], %152 {strides = array<i32>} : memref<5x32x64xf32, #tpu.memory_space<vmem>>, vector<1x32x64xf32>,
    %c3 = arith.constant 3 : index
    %c0_43 = arith.constant 0 : index
    %c0_44 = arith.constant 0 : index
    %c0_45 = arith.constant 0 : index
    %153 = vector.load %arg1[%c3, %c0_43, %c0_44, %c0_45] : memref<5x4x32x64xf32, #tpu.memory_space<vmem>>, vector<1x4x32x64xf32>
    %154 = vector.shape_cast %153 : vector<1x4x32x64xf32> to vector<4x32x64xf32>
    %155 = vector.extract_strided_slice %154 {offsets = [0, 0, 0], sizes = [1, 32, 64], strides = [1, 1, 1]} : vector<4x32x64xf32> to vector<1x32x64xf32>
    %156 = vector.shape_cast %155 : vector<1x32x64xf32> to vector<32x64xf32>
    %157 = vector.extract_strided_slice %0 {offsets = [0, 0, 0], sizes = [1, 64, 64], strides = [1, 1, 1]} : vector<4x64x64xf32> to vector<1x64x64xf32>
    %158 = vector.shape_cast %157 : vector<1x64x64xf32> to vector<64x64xf32>
    %cst_46 = arith.constant dense<0.000000e+00> : vector<32x64xf32>
    %159 = tpu.matmul %149, %158, %cst_46 {dimension_numbers = #tpu.dot_dimension_numbers<[1], [0], [0], [1], [0, 0, 1, 1], [], []>} : vector<32x64xf32>, vector<64x64xf32>, vector<32x64xf32> -> vector<32x64xf32>
    %160 = arith.addf %156, %159 : vector<32x64xf32>
    %161 = arith.negf %160 : vector<32x64xf32>
    %162 = math.exp %161 : vector<32x64xf32>
    %cst_47 = arith.constant 1.000000e+00 : f32
    %163 = vector.broadcast %cst_47 : f32 to vector<32x64xf32>
    %164 = arith.addf %163, %162 : vector<32x64xf32>
    %165 = arith.divf %163, %164 : vector<32x64xf32>
    %166 = vector.extract_strided_slice %154 {offsets = [1, 0, 0], sizes = [1, 32, 64], strides = [1, 1, 1]} : vector<4x32x64xf32> to vector<1x32x64xf32>
    %167 = vector.shape_cast %166 : vector<1x32x64xf32> to vector<32x64xf32>
    %168 = vector.extract_strided_slice %0 {offsets = [1, 0, 0], sizes = [1, 64, 64], strides = [1, 1, 1]} : vector<4x64x64xf32> to vector<1x64x64xf32>
    %169 = vector.shape_cast %168 : vector<1x64x64xf32> to vector<64x64xf32>
    %cst_48 = arith.constant dense<0.000000e+00> : vector<32x64xf32>
    %170 = tpu.matmul %149, %169, %cst_48 {dimension_numbers = #tpu.dot_dimension_numbers<[1], [0], [0], [1], [0, 0, 1, 1], [], []>} : vector<32x64xf32>, vector<64x64xf32>, vector<32x64xf32> -> vector<32x64xf32>
    %171 = arith.addf %167, %170 : vector<32x64xf32>
    %172 = arith.negf %171 : vector<32x64xf32>
    %173 = math.exp %172 : vector<32x64xf32>
    %cst_49 = arith.constant 1.000000e+00 : f32
    %174 = vector.broadcast %cst_49 : f32 to vector<32x64xf32>
    %175 = arith.addf %174, %173 : vector<32x64xf32>
    %176 = arith.divf %174, %175 : vector<32x64xf32>
    %177 = vector.extract_strided_slice %154 {offsets = [2, 0, 0], sizes = [1, 32, 64], strides = [1, 1, 1]} : vector<4x32x64xf32> to vector<1x32x64xf32>
    %178 = vector.shape_cast %177 : vector<1x32x64xf32> to vector<32x64xf32>
    %179 = vector.extract_strided_slice %0 {offsets = [2, 0, 0], sizes = [1, 64, 64], strides = [1, 1, 1]} : vector<4x64x64xf32> to vector<1x64x64xf32>
    %180 = vector.shape_cast %179 : vector<1x64x64xf32> to vector<64x64xf32>
    %cst_50 = arith.constant dense<0.000000e+00> : vector<32x64xf32>
    %181 = tpu.matmul %149, %180, %cst_50 {dimension_numbers = #tpu.dot_dimension_numbers<[1], [0], [0], [1], [0, 0, 1, 1], [], []>} : vector<32x64xf32>, vector<64x64xf32>, vector<32x64xf32> -> vector<32x64xf32>
    %182 = arith.addf %178, %181 : vector<32x64xf32>
    %183 = math.tanh %182 : vector<32x64xf32>
    %184 = vector.extract_strided_slice %154 {offsets = [3, 0, 0], sizes = [1, 32, 64], strides = [1, 1, 1]} : vector<4x32x64xf32> to vector<1x32x64xf32>
    %185 = vector.shape_cast %184 : vector<1x32x64xf32> to vector<32x64xf32>
    %186 = vector.extract_strided_slice %0 {offsets = [3, 0, 0], sizes = [1, 64, 64], strides = [1, 1, 1]} : vector<4x64x64xf32> to vector<1x64x64xf32>
    %187 = vector.shape_cast %186 : vector<1x64x64xf32> to vector<64x64xf32>
    %cst_51 = arith.constant dense<0.000000e+00> : vector<32x64xf32>
    %188 = tpu.matmul %149, %187, %cst_51 {dimension_numbers = #tpu.dot_dimension_numbers<[1], [0], [0], [1], [0, 0, 1, 1], [], []>} : vector<32x64xf32>, vector<64x64xf32>, vector<32x64xf32> -> vector<32x64xf32>
    %189 = arith.addf %185, %188 : vector<32x64xf32>
    %190 = arith.negf %189 : vector<32x64xf32>
    %191 = math.exp %190 : vector<32x64xf32>
    %cst_52 = arith.constant 1.000000e+00 : f32
    %192 = vector.broadcast %cst_52 : f32 to vector<32x64xf32>
    %193 = arith.addf %192, %191 : vector<32x64xf32>
    %194 = arith.divf %192, %193 : vector<32x64xf32>
    %195 = arith.mulf %176, %147 : vector<32x64xf32>
    %196 = arith.mulf %165, %183 : vector<32x64xf32>
    %197 = arith.addf %195, %196 : vector<32x64xf32>
    %198 = math.tanh %197 : vector<32x64xf32>
    %199 = arith.mulf %194, %198 : vector<32x64xf32>
    %c3_53 = arith.constant 3 : index
    %c0_54 = arith.constant 0 : index
    %c0_55 = arith.constant 0 : index
    %200 = vector.load %arg3[%c3_53, %c0_54, %c0_55] : memref<5x32x64xf32, #tpu.memory_space<vmem>>, vector<1x32x64xf32>
    %201 = vector.shape_cast %200 : vector<1x32x64xf32> to vector<32x64xf32>
    %202 = vector.shape_cast %199 : vector<32x64xf32> to vector<1x32x64xf32>
    tpu.vector_store %arg3[%c3_53, %c0_54, %c0_55], %202 {strides = array<i32>} : memref<5x32x64xf32, #tpu.memory_space<vmem>>, vector<1x32x64xf32>,
    %c4 = arith.constant 4 : index
    %c0_56 = arith.constant 0 : index
    %c0_57 = arith.constant 0 : index
    %c0_58 = arith.constant 0 : index
    %203 = vector.load %arg1[%c4, %c0_56, %c0_57, %c0_58] : memref<5x4x32x64xf32, #tpu.memory_space<vmem>>, vector<1x4x32x64xf32>
    %204 = vector.shape_cast %203 : vector<1x4x32x64xf32> to vector<4x32x64xf32>
    %205 = vector.extract_strided_slice %204 {offsets = [0, 0, 0], sizes = [1, 32, 64], strides = [1, 1, 1]} : vector<4x32x64xf32> to vector<1x32x64xf32>
    %206 = vector.shape_cast %205 : vector<1x32x64xf32> to vector<32x64xf32>
    %207 = vector.extract_strided_slice %0 {offsets = [0, 0, 0], sizes = [1, 64, 64], strides = [1, 1, 1]} : vector<4x64x64xf32> to vector<1x64x64xf32>
    %208 = vector.shape_cast %207 : vector<1x64x64xf32> to vector<64x64xf32>
    %cst_59 = arith.constant dense<0.000000e+00> : vector<32x64xf32>
    %209 = tpu.matmul %199, %208, %cst_59 {dimension_numbers = #tpu.dot_dimension_numbers<[1], [0], [0], [1], [0, 0, 1, 1], [], []>} : vector<32x64xf32>, vector<64x64xf32>, vector<32x64xf32> -> vector<32x64xf32>
    %210 = arith.addf %206, %209 : vector<32x64xf32>
    %211 = arith.negf %210 : vector<32x64xf32>
    %212 = math.exp %211 : vector<32x64xf32>
    %cst_60 = arith.constant 1.000000e+00 : f32
    %213 = vector.broadcast %cst_60 : f32 to vector<32x64xf32>
    %214 = arith.addf %213, %212 : vector<32x64xf32>
    %215 = arith.divf %213, %214 : vector<32x64xf32>
    %216 = vector.extract_strided_slice %204 {offsets = [1, 0, 0], sizes = [1, 32, 64], strides = [1, 1, 1]} : vector<4x32x64xf32> to vector<1x32x64xf32>
    %217 = vector.shape_cast %216 : vector<1x32x64xf32> to vector<32x64xf32>
    %218 = vector.extract_strided_slice %0 {offsets = [1, 0, 0], sizes = [1, 64, 64], strides = [1, 1, 1]} : vector<4x64x64xf32> to vector<1x64x64xf32>
    %219 = vector.shape_cast %218 : vector<1x64x64xf32> to vector<64x64xf32>
    %cst_61 = arith.constant dense<0.000000e+00> : vector<32x64xf32>
    %220 = tpu.matmul %199, %219, %cst_61 {dimension_numbers = #tpu.dot_dimension_numbers<[1], [0], [0], [1], [0, 0, 1, 1], [], []>} : vector<32x64xf32>, vector<64x64xf32>, vector<32x64xf32> -> vector<32x64xf32>
    %221 = arith.addf %217, %220 : vector<32x64xf32>
    %222 = arith.negf %221 : vector<32x64xf32>
    %223 = math.exp %222 : vector<32x64xf32>
    %cst_62 = arith.constant 1.000000e+00 : f32
    %224 = vector.broadcast %cst_62 : f32 to vector<32x64xf32>
    %225 = arith.addf %224, %223 : vector<32x64xf32>
    %226 = arith.divf %224, %225 : vector<32x64xf32>
    %227 = vector.extract_strided_slice %204 {offsets = [2, 0, 0], sizes = [1, 32, 64], strides = [1, 1, 1]} : vector<4x32x64xf32> to vector<1x32x64xf32>
    %228 = vector.shape_cast %227 : vector<1x32x64xf32> to vector<32x64xf32>
    %229 = vector.extract_strided_slice %0 {offsets = [2, 0, 0], sizes = [1, 64, 64], strides = [1, 1, 1]} : vector<4x64x64xf32> to vector<1x64x64xf32>
    %230 = vector.shape_cast %229 : vector<1x64x64xf32> to vector<64x64xf32>
    %cst_63 = arith.constant dense<0.000000e+00> : vector<32x64xf32>
    %231 = tpu.matmul %199, %230, %cst_63 {dimension_numbers = #tpu.dot_dimension_numbers<[1], [0], [0], [1], [0, 0, 1, 1], [], []>} : vector<32x64xf32>, vector<64x64xf32>, vector<32x64xf32> -> vector<32x64xf32>
    %232 = arith.addf %228, %231 : vector<32x64xf32>
    %233 = math.tanh %232 : vector<32x64xf32>
    %234 = vector.extract_strided_slice %204 {offsets = [3, 0, 0], sizes = [1, 32, 64], strides = [1, 1, 1]} : vector<4x32x64xf32> to vector<1x32x64xf32>
    %235 = vector.shape_cast %234 : vector<1x32x64xf32> to vector<32x64xf32>
    %236 = vector.extract_strided_slice %0 {offsets = [3, 0, 0], sizes = [1, 64, 64], strides = [1, 1, 1]} : vector<4x64x64xf32> to vector<1x64x64xf32>
    %237 = vector.shape_cast %236 : vector<1x64x64xf32> to vector<64x64xf32>
    %cst_64 = arith.constant dense<0.000000e+00> : vector<32x64xf32>
    %238 = tpu.matmul %199, %237, %cst_64 {dimension_numbers = #tpu.dot_dimension_numbers<[1], [0], [0], [1], [0, 0, 1, 1], [], []>} : vector<32x64xf32>, vector<64x64xf32>, vector<32x64xf32> -> vector<32x64xf32>
    %239 = arith.addf %235, %238 : vector<32x64xf32>
    %240 = arith.negf %239 : vector<32x64xf32>
    %241 = math.exp %240 : vector<32x64xf32>
    %cst_65 = arith.constant 1.000000e+00 : f32
    %242 = vector.broadcast %cst_65 : f32 to vector<32x64xf32>
    %243 = arith.addf %242, %241 : vector<32x64xf32>
    %244 = arith.divf %242, %243 : vector<32x64xf32>
    %245 = arith.mulf %226, %197 : vector<32x64xf32>
    %246 = arith.mulf %215, %233 : vector<32x64xf32>
    %247 = arith.addf %245, %246 : vector<32x64xf32>
    %248 = math.tanh %247 : vector<32x64xf32>
    %249 = arith.mulf %244, %248 : vector<32x64xf32>
    %c4_66 = arith.constant 4 : index
    %c0_67 = arith.constant 0 : index
    %c0_68 = arith.constant 0 : index
    %250 = vector.load %arg3[%c4_66, %c0_67, %c0_68] : memref<5x32x64xf32, #tpu.memory_space<vmem>>, vector<1x32x64xf32>
    %251 = vector.shape_cast %250 : vector<1x32x64xf32> to vector<32x64xf32>
    %252 = vector.shape_cast %249 : vector<32x64xf32> to vector<1x32x64xf32>
    tpu.vector_store %arg3[%c4_66, %c0_67, %c0_68], %252 {strides = array<i32>} : memref<5x32x64xf32, #tpu.memory_space<vmem>>, vector<1x32x64xf32>,
    return
  }
  func.func @transform_0(%arg0: i32) -> (i32, i32, i32, i32) {
    %c0_i32 = arith.constant 0 : i32
    %c0_i32_0 = arith.constant 0 : i32
    %c0_i32_1 = arith.constant 0 : i32
    %c0_i32_2 = arith.constant 0 : i32
    %c0_i32_3 = arith.constant 0 : i32
    return %c0_i32, %c0_i32_0, %c0_i32_1, %c0_i32_2 : i32, i32, i32, i32
  }
  func.func @transform_1(%arg0: i32) -> (i32, i32, i32) {
    %c0_i32 = arith.constant 0 : i32
    %c0_i32_0 = arith.constant 0 : i32
    %c0_i32_1 = arith.constant 0 : i32
    %c0_i32_2 = arith.constant 0 : i32
    return %c0_i32, %c0_i32_0, %c0_i32_1 : i32, i32, i32
  }
  func.func @transform_2(%arg0: i32) -> (i32, i32, i32) {
    %c0_i32 = arith.constant 0 : i32
    %c0_i32_0 = arith.constant 0 : i32
    %c0_i32_1 = arith.constant 0 : i32
    %c0_i32_2 = arith.constant 0 : i32
    return %c0_i32, %c0_i32_0, %c0_i32_1 : i32, i32, i32
  }
}

module attributes {stable_mosaic.version = 11 : i64} {
  func.func @_conv_bn_leaky_kernel(%arg0: i32, %arg1: memref<160x576xf32, #tpu.memory_space<vmem>>, %arg2: memref<576x128xf32, #tpu.memory_space<vmem>>, %arg3: memref<1x128xf32, #tpu.memory_space<vmem>>, %arg4: memref<1x128xf32, #tpu.memory_space<vmem>>, %arg5: memref<1x128xf32, #tpu.memory_space<vmem>>, %arg6: memref<160x128xf32, #tpu.memory_space<vmem>>) attributes {dimension_semantics = [#tpu.dimension_semantics<arbitrary>], iteration_bounds = array<i64: 1>, scalar_prefetch = 0 : i64, scratch_operands = 0 : i64, tpu.core_type = #tpu.core_type<tc>, window_params = [{pipeline_mode = #tpu.pipeline_mode<synchronous>, transform_indices = @transform_0, window_bounds = array<i64: 160, 576>}, {pipeline_mode = #tpu.pipeline_mode<synchronous>, transform_indices = @transform_1, window_bounds = array<i64: 576, 128>}, {pipeline_mode = #tpu.pipeline_mode<synchronous>, transform_indices = @transform_2, window_bounds = array<i64: 1, 128>}, {pipeline_mode = #tpu.pipeline_mode<synchronous>, transform_indices = @transform_3, window_bounds = array<i64: 1, 128>}, {pipeline_mode = #tpu.pipeline_mode<synchronous>, transform_indices = @transform_4, window_bounds = array<i64: 1, 128>}, {pipeline_mode = #tpu.pipeline_mode<synchronous>, transform_indices = @transform_5, window_bounds = array<i64: 160, 128>}]} {
    %c0 = arith.constant 0 : index
    %c0_0 = arith.constant 0 : index
    %0 = vector.load %arg1[%c0, %c0_0] : memref<160x576xf32, #tpu.memory_space<vmem>>, vector<160x576xf32>
    %c0_1 = arith.constant 0 : index
    %c0_2 = arith.constant 0 : index
    %1 = vector.load %arg2[%c0_1, %c0_2] : memref<576x128xf32, #tpu.memory_space<vmem>>, vector<576x128xf32>
    %cst = arith.constant dense<0.000000e+00> : vector<160x128xf32>
    %2 = tpu.matmul %0, %1, %cst {dimension_numbers = #tpu.dot_dimension_numbers<[1], [0], [0], [1], [0, 0, 1, 1], [], []>} : vector<160x576xf32>, vector<576x128xf32>, vector<160x128xf32> -> vector<160x128xf32>
    %c0_3 = arith.constant 0 : index
    %c0_4 = arith.constant 0 : index
    %3 = vector.load %arg3[%c0_3, %c0_4] : memref<1x128xf32, #tpu.memory_space<vmem>>, vector<1x128xf32>
    %4 = vector.broadcast %3 : vector<1x128xf32> to vector<160x128xf32>
    %5 = arith.addf %2, %4 : vector<160x128xf32>
    %c0_5 = arith.constant 0 : index
    %c0_6 = arith.constant 0 : index
    %6 = vector.load %arg4[%c0_5, %c0_6] : memref<1x128xf32, #tpu.memory_space<vmem>>, vector<1x128xf32>
    %c0_7 = arith.constant 0 : index
    %c0_8 = arith.constant 0 : index
    %7 = vector.load %arg5[%c0_7, %c0_8] : memref<1x128xf32, #tpu.memory_space<vmem>>, vector<1x128xf32>
    %cst_9 = arith.constant dense<0.000000e+00> : vector<128xf32>
    %8 = vector.multi_reduction <add>, %5, %cst_9 [0] : vector<160x128xf32> to vector<128xf32>
    %9 = vector.shape_cast %8 : vector<128xf32> to vector<1x128xf32>
    %cst_10 = arith.constant 6.250000e-03 : f32
    %10 = vector.broadcast %cst_10 : f32 to vector<1x128xf32>
    %11 = arith.mulf %9, %10 : vector<1x128xf32>
    %12 = vector.broadcast %11 : vector<1x128xf32> to vector<160x128xf32>
    %13 = arith.subf %5, %12 : vector<160x128xf32>
    %14 = arith.mulf %13, %13 : vector<160x128xf32>
    %cst_11 = arith.constant dense<0.000000e+00> : vector<128xf32>
    %15 = vector.multi_reduction <add>, %14, %cst_11 [0] : vector<160x128xf32> to vector<128xf32>
    %16 = vector.shape_cast %15 : vector<128xf32> to vector<1x128xf32>
    %cst_12 = arith.constant 6.250000e-03 : f32
    %17 = vector.broadcast %cst_12 : f32 to vector<1x128xf32>
    %18 = arith.mulf %16, %17 : vector<1x128xf32>
    %cst_13 = arith.constant 9.99999974E-6 : f32
    %19 = vector.broadcast %cst_13 : f32 to vector<1x128xf32>
    %20 = arith.addf %18, %19 : vector<1x128xf32>
    %21 = math.rsqrt %20 : vector<1x128xf32>
    %22 = arith.mulf %6, %21 : vector<1x128xf32>
    %23 = vector.broadcast %22 : vector<1x128xf32> to vector<160x128xf32>
    %24 = arith.mulf %13, %23 : vector<160x128xf32>
    %25 = vector.broadcast %7 : vector<1x128xf32> to vector<160x128xf32>
    %26 = arith.addf %24, %25 : vector<160x128xf32>
    %cst_14 = arith.constant 0.000000e+00 : f32
    %27 = vector.broadcast %cst_14 : f32 to vector<160x128xf32>
    %28 = arith.cmpf ogt, %26, %27 : vector<160x128xf32>
    %cst_15 = arith.constant 5.000000e-02 : f32
    %29 = vector.broadcast %cst_15 : f32 to vector<160x128xf32>
    %30 = arith.mulf %29, %26 : vector<160x128xf32>
    %31 = arith.select %28, %26, %30 : vector<160x128xi1>, vector<160x128xf32>
    %c0_16 = arith.constant 0 : index
    %c0_17 = arith.constant 0 : index
    %32 = vector.load %arg6[%c0_16, %c0_17] : memref<160x128xf32, #tpu.memory_space<vmem>>, vector<160x128xf32>
    tpu.vector_store %arg6[%c0_16, %c0_17], %31 {strides = array<i32>} : memref<160x128xf32, #tpu.memory_space<vmem>>, vector<160x128xf32>,
    return
  }
  func.func @transform_0(%arg0: i32) -> (i32, i32) {
    %c0_i32 = arith.constant 0 : i32
    %c0_i32_0 = arith.constant 0 : i32
    %c0_i32_1 = arith.constant 0 : i32
    return %c0_i32, %c0_i32_0 : i32, i32
  }
  func.func @transform_1(%arg0: i32) -> (i32, i32) {
    %c0_i32 = arith.constant 0 : i32
    %c0_i32_0 = arith.constant 0 : i32
    %c0_i32_1 = arith.constant 0 : i32
    return %c0_i32, %c0_i32_0 : i32, i32
  }
  func.func @transform_2(%arg0: i32) -> (i32, i32) {
    %c0_i32 = arith.constant 0 : i32
    %c0_i32_0 = arith.constant 0 : i32
    %c0_i32_1 = arith.constant 0 : i32
    return %c0_i32, %c0_i32_0 : i32, i32
  }
  func.func @transform_3(%arg0: i32) -> (i32, i32) {
    %c0_i32 = arith.constant 0 : i32
    %c0_i32_0 = arith.constant 0 : i32
    %c0_i32_1 = arith.constant 0 : i32
    return %c0_i32, %c0_i32_0 : i32, i32
  }
  func.func @transform_4(%arg0: i32) -> (i32, i32) {
    %c0_i32 = arith.constant 0 : i32
    %c0_i32_0 = arith.constant 0 : i32
    %c0_i32_1 = arith.constant 0 : i32
    return %c0_i32, %c0_i32_0 : i32, i32
  }
  func.func @transform_5(%arg0: i32) -> (i32, i32) {
    %c0_i32 = arith.constant 0 : i32
    %c0_i32_0 = arith.constant 0 : i32
    %c0_i32_1 = arith.constant 0 : i32
    return %c0_i32, %c0_i32_0 : i32, i32
  }
}

module attributes {stable_mosaic.version = 11 : i64} {
  func.func @_conv_bn_leaky_kernel(%arg0: i32, %arg1: memref<160x1152xf32, #tpu.memory_space<vmem>>, %arg2: memref<1152x22xf32, #tpu.memory_space<vmem>>, %arg3: memref<1x22xf32, #tpu.memory_space<vmem>>, %arg4: memref<1x22xf32, #tpu.memory_space<vmem>>, %arg5: memref<1x22xf32, #tpu.memory_space<vmem>>, %arg6: memref<160x22xf32, #tpu.memory_space<vmem>>) attributes {dimension_semantics = [#tpu.dimension_semantics<arbitrary>], iteration_bounds = array<i64: 1>, scalar_prefetch = 0 : i64, scratch_operands = 0 : i64, tpu.core_type = #tpu.core_type<tc>, window_params = [{pipeline_mode = #tpu.pipeline_mode<synchronous>, transform_indices = @transform_0, window_bounds = array<i64: 160, 1152>}, {pipeline_mode = #tpu.pipeline_mode<synchronous>, transform_indices = @transform_1, window_bounds = array<i64: 1152, 22>}, {pipeline_mode = #tpu.pipeline_mode<synchronous>, transform_indices = @transform_2, window_bounds = array<i64: 1, 22>}, {pipeline_mode = #tpu.pipeline_mode<synchronous>, transform_indices = @transform_3, window_bounds = array<i64: 1, 22>}, {pipeline_mode = #tpu.pipeline_mode<synchronous>, transform_indices = @transform_4, window_bounds = array<i64: 1, 22>}, {pipeline_mode = #tpu.pipeline_mode<synchronous>, transform_indices = @transform_5, window_bounds = array<i64: 160, 22>}]} {
    %c0 = arith.constant 0 : index
    %c0_0 = arith.constant 0 : index
    %0 = vector.load %arg1[%c0, %c0_0] : memref<160x1152xf32, #tpu.memory_space<vmem>>, vector<160x1152xf32>
    %c0_1 = arith.constant 0 : index
    %c0_2 = arith.constant 0 : index
    %1 = vector.load %arg2[%c0_1, %c0_2] : memref<1152x22xf32, #tpu.memory_space<vmem>>, vector<1152x22xf32>
    %cst = arith.constant dense<0.000000e+00> : vector<160x22xf32>
    %2 = tpu.matmul %0, %1, %cst {dimension_numbers = #tpu.dot_dimension_numbers<[1], [0], [0], [1], [0, 0, 1, 1], [], []>} : vector<160x1152xf32>, vector<1152x22xf32>, vector<160x22xf32> -> vector<160x22xf32>
    %c0_3 = arith.constant 0 : index
    %c0_4 = arith.constant 0 : index
    %3 = vector.load %arg3[%c0_3, %c0_4] : memref<1x22xf32, #tpu.memory_space<vmem>>, vector<1x22xf32>
    %4 = vector.broadcast %3 : vector<1x22xf32> to vector<160x22xf32>
    %5 = arith.addf %2, %4 : vector<160x22xf32>
    %c0_5 = arith.constant 0 : index
    %c0_6 = arith.constant 0 : index
    %6 = vector.load %arg4[%c0_5, %c0_6] : memref<1x22xf32, #tpu.memory_space<vmem>>, vector<1x22xf32>
    %c0_7 = arith.constant 0 : index
    %c0_8 = arith.constant 0 : index
    %7 = vector.load %arg5[%c0_7, %c0_8] : memref<1x22xf32, #tpu.memory_space<vmem>>, vector<1x22xf32>
    %cst_9 = arith.constant dense<0.000000e+00> : vector<22xf32>
    %8 = vector.multi_reduction <add>, %5, %cst_9 [0] : vector<160x22xf32> to vector<22xf32>
    %9 = vector.shape_cast %8 : vector<22xf32> to vector<1x22xf32>
    %cst_10 = arith.constant 6.250000e-03 : f32
    %10 = vector.broadcast %cst_10 : f32 to vector<1x22xf32>
    %11 = arith.mulf %9, %10 : vector<1x22xf32>
    %12 = vector.broadcast %11 : vector<1x22xf32> to vector<160x22xf32>
    %13 = arith.subf %5, %12 : vector<160x22xf32>
    %14 = arith.mulf %13, %13 : vector<160x22xf32>
    %cst_11 = arith.constant dense<0.000000e+00> : vector<22xf32>
    %15 = vector.multi_reduction <add>, %14, %cst_11 [0] : vector<160x22xf32> to vector<22xf32>
    %16 = vector.shape_cast %15 : vector<22xf32> to vector<1x22xf32>
    %cst_12 = arith.constant 6.250000e-03 : f32
    %17 = vector.broadcast %cst_12 : f32 to vector<1x22xf32>
    %18 = arith.mulf %16, %17 : vector<1x22xf32>
    %cst_13 = arith.constant 9.99999974E-6 : f32
    %19 = vector.broadcast %cst_13 : f32 to vector<1x22xf32>
    %20 = arith.addf %18, %19 : vector<1x22xf32>
    %21 = math.rsqrt %20 : vector<1x22xf32>
    %22 = arith.mulf %6, %21 : vector<1x22xf32>
    %23 = vector.broadcast %22 : vector<1x22xf32> to vector<160x22xf32>
    %24 = arith.mulf %13, %23 : vector<160x22xf32>
    %25 = vector.broadcast %7 : vector<1x22xf32> to vector<160x22xf32>
    %26 = arith.addf %24, %25 : vector<160x22xf32>
    %cst_14 = arith.constant 0.000000e+00 : f32
    %27 = vector.broadcast %cst_14 : f32 to vector<160x22xf32>
    %28 = arith.cmpf ogt, %26, %27 : vector<160x22xf32>
    %cst_15 = arith.constant 5.000000e-02 : f32
    %29 = vector.broadcast %cst_15 : f32 to vector<160x22xf32>
    %30 = arith.mulf %29, %26 : vector<160x22xf32>
    %31 = arith.select %28, %26, %30 : vector<160x22xi1>, vector<160x22xf32>
    %c0_16 = arith.constant 0 : index
    %c0_17 = arith.constant 0 : index
    %32 = vector.load %arg6[%c0_16, %c0_17] : memref<160x22xf32, #tpu.memory_space<vmem>>, vector<160x22xf32>
    tpu.vector_store %arg6[%c0_16, %c0_17], %31 {strides = array<i32>} : memref<160x22xf32, #tpu.memory_space<vmem>>, vector<160x22xf32>,
    return
  }
  func.func @transform_0(%arg0: i32) -> (i32, i32) {
    %c0_i32 = arith.constant 0 : i32
    %c0_i32_0 = arith.constant 0 : i32
    %c0_i32_1 = arith.constant 0 : i32
    return %c0_i32, %c0_i32_0 : i32, i32
  }
  func.func @transform_1(%arg0: i32) -> (i32, i32) {
    %c0_i32 = arith.constant 0 : i32
    %c0_i32_0 = arith.constant 0 : i32
    %c0_i32_1 = arith.constant 0 : i32
    return %c0_i32, %c0_i32_0 : i32, i32
  }
  func.func @transform_2(%arg0: i32) -> (i32, i32) {
    %c0_i32 = arith.constant 0 : i32
    %c0_i32_0 = arith.constant 0 : i32
    %c0_i32_1 = arith.constant 0 : i32
    return %c0_i32, %c0_i32_0 : i32, i32
  }
  func.func @transform_3(%arg0: i32) -> (i32, i32) {
    %c0_i32 = arith.constant 0 : i32
    %c0_i32_0 = arith.constant 0 : i32
    %c0_i32_1 = arith.constant 0 : i32
    return %c0_i32, %c0_i32_0 : i32, i32
  }
  func.func @transform_4(%arg0: i32) -> (i32, i32) {
    %c0_i32 = arith.constant 0 : i32
    %c0_i32_0 = arith.constant 0 : i32
    %c0_i32_1 = arith.constant 0 : i32
    return %c0_i32, %c0_i32_0 : i32, i32
  }
  func.func @transform_5(%arg0: i32) -> (i32, i32) {
    %c0_i32 = arith.constant 0 : i32
    %c0_i32_0 = arith.constant 0 : i32
    %c0_i32_1 = arith.constant 0 : i32
    return %c0_i32, %c0_i32_0 : i32, i32
  }
}

</mosaic_0001>

<llo_original>
// kernel: keynet_forward.5
$region0: #{keynet_forward.5}
  #allocation0 [shape = 'u32[]', space=smem, size = 0x4, offset = 0x4, fixed_abs, tag = 'smem constant byte address 0x4 - core index']
  #allocation1 [shape = 'u32[144,128]{1,0:T(1,128)}', space=vmem, size = 0x12000, scoped, tag = 'internal scratch']
  %s0 = inlined_call_operand.vmem [shape: f32[672,9], index: 0, kind: input, shape index: {}]
  %s1 = inlined_call_operand.vmem [shape: f32[9,64], index: 1, kind: input, shape index: {}]
  %s2 = inlined_call_operand.hbm [shape: f32[1,64], index: 2, kind: input, shape index: {}]
  %s3 = inlined_call_operand.hbm [shape: f32[1,64], index: 3, kind: input, shape index: {}]
  %s4 = inlined_call_operand.hbm [shape: f32[1,64], index: 4, kind: input, shape index: {}]
  %s5 = inlined_call_operand.vmem [shape: f32[672,64], index: 5, kind: output, shape index: {}]
  %s6 = sld [smem:[#allocation0]]
  $region42: #{keynet_forward.5} parent=0
    _
  %s8 = ssub.s32 1, %s6
  %s9 = scalar_select 0, %s8, %s6
  $region1: #{keynet_forward.5} parent=0
    #allocation2 [shape = 'u8[512]{0}', space=vmem, size = 0x400, scoped, tag = 'input window, operand 2, single buffered']
    #allocation3 [shape = 's32[1]{0}', space=sflag, size = 0x4, scoped, tag = 'scoped memory for keynet_forward.5']
    #allocation4 [shape = 'u8[512]{0}', space=vmem, size = 0x400, scoped, tag = 'input window, operand 3, single buffered']
    #allocation5 [shape = 's32[1]{0}', space=sflag, size = 0x4, scoped, tag = 'scoped memory for keynet_forward.5']
    #allocation6 [shape = 'u8[512]{0}', space=vmem, size = 0x400, scoped, tag = 'input window, operand 4, single buffered']
    %10 = vsyncpa [#allocation3], 0
    %11 = vsyncpa [#allocation5], 0
    // Predicated region
    $region2: #{keynet_forward.5} parent=1 // pred_check
      _
    $region3: #{keynet_forward.5} parent=1 // pred_check_branch
      %13 = sbr.rel (0) target = $region5
    $region4: #{keynet_forward.5} parent=1 // pred_region
      _
    $region5: #{keynet_forward.5} parent=1 // pred_fallthru
      _
    // Predicated region
    $region6: #{keynet_forward.5} parent=1 // pred_check
      _
    $region7: #{keynet_forward.5} parent=1 // pred_check_branch
      %15 = sbr.rel (0) target = $region9
    $region8: #{keynet_forward.5} parent=1 // pred_region
      _
    $region9: #{keynet_forward.5} parent=1 // pred_fallthru
      _
    // Predicated region
    $region10: #{keynet_forward.5} parent=1 // pred_check
      _
    $region11: #{keynet_forward.5} parent=1 // pred_check_branch
      %17 = sbr.rel (0) target = $region13
    $region12: #{keynet_forward.5} parent=1 // pred_region
      %s19 = ssub.s32 16, 16
      %20 = vsyncadd [#allocation3], %s19
      %s22 = sshll.u32 [#allocation2], 4
      %s23 = int_to_ptr.vmem [resolvable:$true] %s22
      %25 = dma.hbm_to_vmem [thread:$0]  %s2, 16, %s23, [#allocation3]
    $region13: #{keynet_forward.5} parent=1 // pred_fallthru
      _
    // Predicated region
    $region14: #{keynet_forward.5} parent=1 // pred_check
      _
    $region15: #{keynet_forward.5} parent=1 // pred_check_branch
      %27 = sbr.rel (0) target = $region17
    $region16: #{keynet_forward.5} parent=1 // pred_region
      %s29 = ssub.s32 16, 16
      %30 = vsyncadd [#allocation5], %s29
      %s32 = sshll.u32 [#allocation4], 4
      %s33 = int_to_ptr.vmem [resolvable:$true] %s32
      %35 = dma.hbm_to_vmem [thread:$0]  %s3, 16, %s33, [#allocation5]
    $region17: #{keynet_forward.5} parent=1 // pred_fallthru
      _
    // Predicated region
    $region18: #{keynet_forward.5} parent=1 // pred_check
      _
    $region19: #{keynet_forward.5} parent=1 // pred_check_branch
      %37 = sbr.rel (0) target = $region21
    $region20: #{keynet_forward.5} parent=1 // pred_region
      %s39 = ssub.s32 16, 16
      %40 = vsyncadd [#allocation5], %s39
      %s42 = sshll.u32 [#allocation6], 4
      %s43 = int_to_ptr.vmem [resolvable:$true] %s42
      %45 = dma.hbm_to_vmem [thread:$0]  %s4, 16, %s43, [#allocation5]
    $region21: #{keynet_forward.5} parent=1 // pred_fallthru
      _
    // Predicated region
    $region22: #{keynet_forward.5} parent=1 // pred_check
      _
    $region23: #{keynet_forward.5} parent=1 // pred_check_branch
      %47 = sbr.rel (0) target = $region25
    $region24: #{keynet_forward.5} parent=1 // pred_region
      %48 = dma.done [#allocation3], 16
    $region25: #{keynet_forward.5} parent=1 // pred_fallthru
      _
    // Predicated region
    $region26: #{keynet_forward.5} parent=1 // pred_check
      _
    $region27: #{keynet_forward.5} parent=1 // pred_check_branch
      %50 = sbr.rel (0) target = $region29
    $region28: #{keynet_forward.5} parent=1 // pred_region
      %51 = dma.done [#allocation5], 16
    $region29: #{keynet_forward.5} parent=1 // pred_fallthru
      _
    // Predicated region
    $region30: #{keynet_forward.5} parent=1 // pred_check
      _
    $region31: #{keynet_forward.5} parent=1 // pred_check_branch
      %53 = sbr.rel (0) target = $region33
    $region32: #{keynet_forward.5} parent=1 // pred_region
      %54 = dma.done [#allocation5], 16
    $region33: #{keynet_forward.5} parent=1 // pred_fallthru
      _
    %v55 = vld [vmem:[%s0] sm:$0xff]
    %v56 = vld [vmem:[%s0 + $0x8] sm:$0xff]
    %v57 = vld [vmem:[%s0 + $0x10] sm:$0xff]
    %v58 = vld [vmem:[%s0 + $0x18] sm:$0xff]
    %v59 = vld [vmem:[%s0 + $0x20] sm:$0xff]
    %v60 = vld [vmem:[%s0 + $0x28] sm:$0xff]
    %v61 = vld [vmem:[%s0 + $0x30] sm:$0xff]
    %v62 = vld [vmem:[%s0 + $0x38] sm:$0xff]
    %v63 = vld [vmem:[%s0 + $0x40] sm:$0xff]
    %v64 = vld [vmem:[%s0 + $0x48] sm:$0xff]
    %v65 = vld [vmem:[%s0 + $0x50] sm:$0xff]
    %v66 = vld [vmem:[%s0 + $0x58] sm:$0xff]
    %v67 = vld [vmem:[%s0 + $0x60] sm:$0xff]
    %v68 = vld [vmem:[%s0 + $0x68] sm:$0xff]
    %v69 = vld [vmem:[%s0 + $0x70] sm:$0xff]
    %v70 = vld [vmem:[%s0 + $0x78] sm:$0xff]
    %v71 = vld [vmem:[%s0 + $0x80] sm:$0xff]
    %v72 = vld [vmem:[%s0 + $0x88] sm:$0xff]
    %v73 = vld [vmem:[%s0 + $0x90] sm:$0xff]
    %v74 = vld [vmem:[%s0 + $0x98] sm:$0xff]
    %v75 = vld [vmem:[%s0 + $0xa0] sm:$0xff]
    %v76 = vld [vmem:[%s0 + $0xa8] sm:$0xff]
    %v77 = vld [vmem:[%s0 + $0xb0] sm:$0xff]
    %v78 = vld [vmem:[%s0 + $0xb8] sm:$0xff]
    %v79 = vld [vmem:[%s0 + $0xc0] sm:$0xff]
    %v80 = vld [vmem:[%s0 + $0xc8] sm:$0xff]
    %v81 = vld [vmem:[%s0 + $0xd0] sm:$0xff]
    %v82 = vld [vmem:[%s0 + $0xd8] sm:$0xff]
    %v83 = vld [vmem:[%s0 + $0xe0] sm:$0xff]
    %v84 = vld [vmem:[%s0 + $0xe8] sm:$0xff]
    %v85 = vld [vmem:[%s0 + $0xf0] sm:$0xff]
    %v86 = vld [vmem:[%s0 + $0xf8] sm:$0xff]
    %v87 = vld [vmem:[%s0 + $0x100] sm:$0xff]
    %v88 = vld [vmem:[%s0 + $0x108] sm:$0xff]
    %v89 = vld [vmem:[%s0 + $0x110] sm:$0xff]
    %v90 = vld [vmem:[%s0 + $0x118] sm:$0xff]
    %v91 = vld [vmem:[%s0 + $0x120] sm:$0xff]
    %v92 = vld [vmem:[%s0 + $0x128] sm:$0xff]
    %v93 = vld [vmem:[%s0 + $0x130] sm:$0xff]
    %v94 = vld [vmem:[%s0 + $0x138] sm:$0xff]
    %v95 = vld [vmem:[%s0 + $0x140] sm:$0xff]
    %v96 = vld [vmem:[%s0 + $0x148] sm:$0xff]
    %v97 = vld [vmem:[%s0 + $0x150] sm:$0xff]
    %v98 = vld [vmem:[%s0 + $0x158] sm:$0xff]
    %v99 = vld [vmem:[%s0 + $0x160] sm:$0xff]
    %v100 = vld [vmem:[%s0 + $0x168] sm:$0xff]
    %v101 = vld [vmem:[%s0 + $0x170] sm:$0xff]
    %v102 = vld [vmem:[%s0 + $0x178] sm:$0xff]
    %v103 = vld [vmem:[%s0 + $0x180] sm:$0xff]
    %v104 = vld [vmem:[%s0 + $0x188] sm:$0xff]
    %v105 = vld [vmem:[%s0 + $0x190] sm:$0xff]
    %v106 = vld [vmem:[%s0 + $0x198] sm:$0xff]
    %v107 = vld [vmem:[%s0 + $0x1a0] sm:$0xff]
    %v108 = vld [vmem:[%s0 + $0x1a8] sm:$0xff]
    %v109 = vld [vmem:[%s0 + $0x1b0] sm:$0xff]
    %v110 = vld [vmem:[%s0 + $0x1b8] sm:$0xff]
    %v111 = vld [vmem:[%s0 + $0x1c0] sm:$0xff]
    %v112 = vld [vmem:[%s0 + $0x1c8] sm:$0xff]
    %v113 = vld [vmem:[%s0 + $0x1d0] sm:$0xff]
    %v114 = vld [vmem:[%s0 + $0x1d8] sm:$0xff]
    %v115 = vld [vmem:[%s0 + $0x1e0] sm:$0xff]
    %v116 = vld [vmem:[%s0 + $0x1e8] sm:$0xff]
    %v117 = vld [vmem:[%s0 + $0x1f0] sm:$0xff]
    %v118 = vld [vmem:[%s0 + $0x1f8] sm:$0xff]
    %v119 = vld [vmem:[%s0 + $0x200] sm:$0xff]
    %v120 = vld [vmem:[%s0 + $0x208] sm:$0xff]
    %v121 = vld [vmem:[%s0 + $0x210] sm:$0xff]
    %v122 = vld [vmem:[%s0 + $0x218] sm:$0xff]
    %v123 = vld [vmem:[%s0 + $0x220] sm:$0xff]
    %v124 = vld [vmem:[%s0 + $0x228] sm:$0xff]
    %v125 = vld [vmem:[%s0 + $0x230] sm:$0xff]
    %v126 = vld [vmem:[%s0 + $0x238] sm:$0xff]
    %v127 = vld [vmem:[%s0 + $0x240] sm:$0xff]
    %v128 = vld [vmem:[%s0 + $0x248] sm:$0xff]
    %v129 = vld [vmem:[%s0 + $0x250] sm:$0xff]
    %v130 = vld [vmem:[%s0 + $0x258] sm:$0xff]
    %v131 = vld [vmem:[%s0 + $0x260] sm:$0xff]
    %v132 = vld [vmem:[%s0 + $0x268] sm:$0xff]
    %v133 = vld [vmem:[%s0 + $0x270] sm:$0xff]
    %v134 = vld [vmem:[%s0 + $0x278] sm:$0xff]
    %v135 = vld [vmem:[%s0 + $0x280] sm:$0xff]
    %v136 = vld [vmem:[%s0 + $0x288] sm:$0xff]
    %v137 = vld [vmem:[%s0 + $0x290] sm:$0xff]
    %v138 = vld [vmem:[%s0 + $0x298] sm:$0xff]
    %v139 = vld [vmem:[%s1] sm:$0xff]
    %v140 = vld [vmem:[%s1 + $0x8] sm:$0x1]
    %v141 = vld [vmem:[#allocation2] sm:$0x1]
    %v143 = vlaneseq
    %v144 = vshrl.u32 %v143, 7
    %v145 = vsub.s32 0, %v144
    %v146 = vrot.slane %v141, %v145
    %vm148 = vcmask 72704
    %v150 = vsel %vm148, %v55, 0
    %v153 = vsel %vm148, %v56, 0
    %v156 = vsel %vm148, %v57, 0
    %v159 = vsel %vm148, %v58, 0
    %v162 = vsel %vm148, %v59, 0
    %v165 = vsel %vm148, %v60, 0
    %v168 = vsel %vm148, %v61, 0
    %v171 = vsel %vm148, %v62, 0
    %v174 = vsel %vm148, %v63, 0
    %v177 = vsel %vm148, %v64, 0
    %v180 = vsel %vm148, %v65, 0
    %v183 = vsel %vm148, %v66, 0
    %v186 = vsel %vm148, %v67, 0
    %v189 = vsel %vm148, %v68, 0
    %v192 = vsel %vm148, %v69, 0
    %v195 = vsel %vm148, %v70, 0
    %v198 = vsel %vm148, %v71, 0
    %v201 = vsel %vm148, %v72, 0
    %v204 = vsel %vm148, %v73, 0
    %v207 = vsel %vm148, %v74, 0
    %v210 = vsel %vm148, %v75, 0
    %v213 = vsel %vm148, %v76, 0
    %v216 = vsel %vm148, %v77, 0
    %v219 = vsel %vm148, %v78, 0
    %v222 = vsel %vm148, %v79, 0
    %v225 = vsel %vm148, %v80, 0
    %v228 = vsel %vm148, %v81, 0
    %v231 = vsel %vm148, %v82, 0
    %v234 = vsel %vm148, %v83, 0
    %v237 = vsel %vm148, %v84, 0
    %v240 = vsel %vm148, %v85, 0
    %v243 = vsel %vm148, %v86, 0
    %v246 = vsel %vm148, %v87, 0
    %v249 = vsel %vm148, %v88, 0
    %v252 = vsel %vm148, %v89, 0
    %v255 = vsel %vm148, %v90, 0
    %v258 = vsel %vm148, %v91, 0
    %v261 = vsel %vm148, %v92, 0
    %v264 = vsel %vm148, %v93, 0
    %v267 = vsel %vm148, %v94, 0
    %v270 = vsel %vm148, %v95, 0
    %v273 = vsel %vm148, %v96, 0
    %v276 = vsel %vm148, %v97, 0
    %v279 = vsel %vm148, %v98, 0
    %v282 = vsel %vm148, %v99, 0
    %v285 = vsel %vm148, %v100, 0
    %v288 = vsel %vm148, %v101, 0
    %v291 = vsel %vm148, %v102, 0
    %v294 = vsel %vm148, %v103, 0
    %v297 = vsel %vm148, %v104, 0
    %v300 = vsel %vm148, %v105, 0
    %v303 = vsel %vm148, %v106, 0
    %v306 = vsel %vm148, %v107, 0
    %v309 = vsel %vm148, %v108, 0
    %v312 = vsel %vm148, %v109, 0
    %v315 = vsel %vm148, %v110, 0
    %v318 = vsel %vm148, %v111, 0
    %v321 = vsel %vm148, %v112, 0
    %v324 = vsel %vm148, %v113, 0
    %v327 = vsel %vm148, %v114, 0
    %v330 = vsel %vm148, %v115, 0
    %v333 = vsel %vm148, %v116, 0
    %v336 = vsel %vm148, %v117, 0
    %v339 = vsel %vm148, %v118, 0
    %v342 = vsel %vm148, %v119, 0
    %v345 = vsel %vm148, %v120, 0
    %v348 = vsel %vm148, %v121, 0
    %v351 = vsel %vm148, %v122, 0
    %v354 = vsel %vm148, %v123, 0
    %v357 = vsel %vm148, %v124, 0
    %v360 = vsel %vm148, %v125, 0
    %v363 = vsel %vm148, %v126, 0
    %v366 = vsel %vm148, %v127, 0
    %v369 = vsel %vm148, %v128, 0
    %v372 = vsel %vm148, %v129, 0
    %v375 = vsel %vm148, %v130, 0
    %v378 = vsel %vm148, %v131, 0
    %v381 = vsel %vm148, %v132, 0
    %v384 = vsel %vm148, %v133, 0
    %v387 = vsel %vm148, %v134, 0
    %v390 = vsel %vm148, %v135, 0
    %v393 = vsel %vm148, %v136, 0
    %v396 = vsel %vm148, %v137, 0
    %v399 = vsel %vm148, %v138, 0
    %vm401 = vcmask 1040384
    %v403 = vsel %vm401, %v140, 0
    %405 = vmatprep.subr.mxu0 0.0
    %406 = vmatpush1.msra.mxu0 0.0
    %407 = vmatprep.subr.mxu0 0.0
    %408 = vmatpush1.msra.mxu0 0.0
    %409 = vmatprep.subr.mxu0 0.0
    %410 = vmatpush1.msra.mxu0 0.0
    %411 = vmatprep.subr.mxu0 0.0
    %412 = vmatpush1.msra.mxu0 0.0
    %413 = vmatprep.subr.mxu0 0.0
    %414 = vmatpush1.msra.mxu0 0.0
    %415 = vmatprep.subr.mxu0 0.0
    %416 = vmatpush1.msra.mxu0 0.0
    %417 = vmatprep.subr.mxu0 0.0
    %418 = vmatpush1.msra.mxu0 0.0
    %419 = vmatprep.subr.mxu0 0.0
    %420 = vmatpush1.msra.mxu0 0.0
    %421 = vmatprep.subr.mxu0 0.0
    %422 = vmatpush1.msra.mxu0 0.0
    %423 = vmatprep.subr.mxu0 0.0
    %424 = vmatpush1.msra.mxu0 0.0
    %425 = vmatprep.subr.mxu0 0.0
    %426 = vmatpush1.msra.mxu0 0.0
    %427 = vmatprep.subr.mxu0 0.0
    %428 = vmatpush1.msra.mxu0 0.0
    %429 = vmatprep.subr.mxu0 0.0
    %430 = vmatpush1.msra.mxu0 0.0
    %431 = vmatprep.subr.mxu0 0.0
    %432 = vmatpush1.msra.mxu0 0.0
    %433 = vmatprep.subr.mxu0 0.0
    %434 = vmatpush1.msra.mxu0 %v403
    %435 = vmatprep.subr.mxu0 0.0
    %436 = vmatpush1.msra.mxu0 %v139
    %437 = vmatprep.subr.mxu0 0.0
    %438 = vmatpush2.msra.mxu0 0.0
    %439 = vmatprep.subr.mxu0 0.0
    %440 = vmatpush2.msra.mxu0 0.0
    %441 = vmatprep.subr.mxu0 0.0
    %442 = vmatpush2.msra.mxu0 0.0
    %443 = vmatprep.subr.mxu0 0.0
    %444 = vmatpush2.msra.mxu0 0.0
    %445 = vmatprep.subr.mxu0 0.0
    %446 = vmatpush2.msra.mxu0 0.0
    %447 = vmatprep.subr.mxu0 0.0
    %448 = vmatpush2.msra.mxu0 0.0
    %449 = vmatprep.subr.mxu0 0.0
    %450 = vmatpush2.msra.mxu0 0.0
    %451 = vmatprep.subr.mxu0 0.0
    %452 = vmatpush2.msra.mxu0 0.0
    %453 = vmatprep.subr.mxu0 0.0
    %454 = vmatpush2.msra.mxu0 0.0
    %455 = vmatprep.subr.mxu0 0.0
    %456 = vmatpush2.msra.mxu0 0.0
    %457 = vmatprep.subr.mxu0 0.0
    %458 = vmatpush2.msra.mxu0 0.0
    %459 = vmatprep.subr.mxu0 0.0
    %460 = vmatpush2.msra.mxu0 0.0
    %461 = vmatprep.subr.mxu0 0.0
    %462 = vmatpush2.msra.mxu0 0.0
    %463 = vmatprep.subr.mxu0 0.0
    %464 = vmatpush2.msra.mxu0 0.0
    %465 = vmatprep.subr.mxu0 0.0
    %466 = vmatpush2.msra.mxu0 0.0
    %467 = vmatprep.subr.mxu0 0.0
    %468 = vmatpush2.msra.mxu0 0.0
    %469 = vmatprep.mubr.f32.mxu0 0.0
    %470 = vmatmul.mubr.f32.gmra.mxu0 %v150
    %v471 = vpop.f32.mrf.mxu0
    %v472 = vadd.f32 %v146, %v471
    %v473 = vpop.f32.mrf.mxu0
    %474 = vmatprep.mubr.f32.mxu0 0.0
    %475 = vmatmul.mubr.f32.gmra.mxu0 %v153
    %v476 = vpop.f32.mrf.mxu0
    %v477 = vadd.f32 %v146, %v476
    %v478 = vpop.f32.mrf.mxu0
    %479 = vmatprep.mubr.f32.mxu0 0.0
    %480 = vmatmul.mubr.f32.gmra.mxu0 %v156
    %v481 = vpop.f32.mrf.mxu0
    %v482 = vadd.f32 %v146, %v481
    %v483 = vpop.f32.mrf.mxu0
    %484 = vmatprep.mubr.f32.mxu0 0.0
    %485 = vmatmul.mubr.f32.gmra.mxu0 %v159
    %v486 = vpop.f32.mrf.mxu0
    %v487 = vadd.f32 %v146, %v486
    %v488 = vpop.f32.mrf.mxu0
    %489 = vmatprep.mubr.f32.mxu0 0.0
    %490 = vmatmul.mubr.f32.gmra.mxu0 %v162
    %v491 = vpop.f32.mrf.mxu0
    %v492 = vadd.f32 %v146, %v491
    %v493 = vpop.f32.mrf.mxu0
    %494 = vmatprep.mubr.f32.mxu0 0.0
    %495 = vmatmul.mubr.f32.gmra.mxu0 %v165
    %v496 = vpop.f32.mrf.mxu0
    %v497 = vadd.f32 %v146, %v496
    %v498 = vpop.f32.mrf.mxu0
    %499 = vmatprep.mubr.f32.mxu0 0.0
    %500 = vmatmul.mubr.f32.gmra.mxu0 %v168
    %v501 = vpop.f32.mrf.mxu0
    %v502 = vadd.f32 %v146, %v501
    %v503 = vpop.f32.mrf.mxu0
    %504 = vmatprep.mubr.f32.mxu0 0.0
    %505 = vmatmul.mubr.f32.gmra.mxu0 %v171
    %v506 = vpop.f32.mrf.mxu0
    %v507 = vadd.f32 %v146, %v506
    %v508 = vpop.f32.mrf.mxu0
    %509 = vmatprep.mubr.f32.mxu0 0.0
    %510 = vmatmul.mubr.f32.gmra.mxu0 %v174
    %v511 = vpop.f32.mrf.mxu0
    %v512 = vadd.f32 %v146, %v511
    %v513 = vpop.f32.mrf.mxu0
    %514 = vmatprep.mubr.f32.mxu0 0.0
    %515 = vmatmul.mubr.f32.gmra.mxu0 %v177
    %v516 = vpop.f32.mrf.mxu0
    %v517 = vadd.f32 %v146, %v516
    %v518 = vpop.f32.mrf.mxu0
    %519 = vmatprep.mubr.f32.mxu0 0.0
    %520 = vmatmul.mubr.f32.gmra.mxu0 %v180
    %v521 = vpop.f32.mrf.mxu0
    %v522 = vadd.f32 %v146, %v521
    %v523 = vpop.f32.mrf.mxu0
    %524 = vmatprep.mubr.f32.mxu0 0.0
    %525 = vmatmul.mubr.f32.gmra.mxu0 %v183
    %v526 = vpop.f32.mrf.mxu0
    %v527 = vadd.f32 %v146, %v526
    %v528 = vpop.f32.mrf.mxu0
    %529 = vmatprep.mubr.f32.mxu0 0.0
    %530 = vmatmul.mubr.f32.gmra.mxu0 %v186
    %v531 = vpop.f32.mrf.mxu0
    %v532 = vadd.f32 %v146, %v531
    %v533 = vpop.f32.mrf.mxu0
    %534 = vmatprep.mubr.f32.mxu0 0.0
    %535 = vmatmul.mubr.f32.gmra.mxu0 %v189
    %v536 = vpop.f32.mrf.mxu0
    %v537 = vadd.f32 %v146, %v536
    %v538 = vpop.f32.mrf.mxu0
    %539 = vmatprep.mubr.f32.mxu0 0.0
    %540 = vmatmul.mubr.f32.gmra.mxu0 %v192
    %v541 = vpop.f32.mrf.mxu0
    %v542 = vadd.f32 %v146, %v541
    %v543 = vpop.f32.mrf.mxu0
    %544 = vmatprep.mubr.f32.mxu0 0.0
    %545 = vmatmul.mubr.f32.gmra.mxu0 %v195
    %v546 = vpop.f32.mrf.mxu0
    %v547 = vadd.f32 %v146, %v546
    %v548 = vpop.f32.mrf.mxu0
    %549 = vmatprep.mubr.f32.mxu0 0.0
    %550 = vmatmul.mubr.f32.gmra.mxu0 %v198
    %v551 = vpop.f32.mrf.mxu0
    %v552 = vadd.f32 %v146, %v551
    %v553 = vpop.f32.mrf.mxu0
    %554 = vmatprep.mubr.f32.mxu0 0.0
    %555 = vmatmul.mubr.f32.gmra.mxu0 %v201
    %v556 = vpop.f32.mrf.mxu0
    %v557 = vadd.f32 %v146, %v556
    %v558 = vpop.f32.mrf.mxu0
    %559 = vmatprep.mubr.f32.mxu0 0.0
    %560 = vmatmul.mubr.f32.gmra.mxu0 %v204
    %v561 = vpop.f32.mrf.mxu0
    %v562 = vadd.f32 %v146, %v561
    %v563 = vpop.f32.mrf.mxu0
    %564 = vmatprep.mubr.f32.mxu0 0.0
    %565 = vmatmul.mubr.f32.gmra.mxu0 %v207
    %v566 = vpop.f32.mrf.mxu0
    %v567 = vadd.f32 %v146, %v566
    %v568 = vpop.f32.mrf.mxu0
    %569 = vmatprep.mubr.f32.mxu0 0.0
    %570 = vmatmul.mubr.f32.gmra.mxu0 %v210
    %v571 = vpop.f32.mrf.mxu0
    %v572 = vadd.f32 %v146, %v571
    %v573 = vpop.f32.mrf.mxu0
    %574 = vmatprep.mubr.f32.mxu0 0.0
    %575 = vmatmul.mubr.f32.gmra.mxu0 %v213
    %v576 = vpop.f32.mrf.mxu0
    %v577 = vadd.f32 %v146, %v576
    %v578 = vpop.f32.mrf.mxu0
    %579 = vmatprep.mubr.f32.mxu0 0.0
    %580 = vmatmul.mubr.f32.gmra.mxu0 %v216
    %v581 = vpop.f32.mrf.mxu0
    %v582 = vadd.f32 %v146, %v581
    %v583 = vpop.f32.mrf.mxu0
    %584 = vmatprep.mubr.f32.mxu0 0.0
    %585 = vmatmul.mubr.f32.gmra.mxu0 %v219
    %v586 = vpop.f32.mrf.mxu0
    %v587 = vadd.f32 %v146, %v586
    %v588 = vpop.f32.mrf.mxu0
    %589 = vmatprep.mubr.f32.mxu0 0.0
    %590 = vmatmul.mubr.f32.gmra.mxu0 %v222
    %v591 = vpop.f32.mrf.mxu0
    %v592 = vadd.f32 %v146, %v591
    %v593 = vpop.f32.mrf.mxu0
    %594 = vmatprep.mubr.f32.mxu0 0.0
    %595 = vmatmul.mubr.f32.gmra.mxu0 %v225
    %v596 = vpop.f32.mrf.mxu0
    %v597 = vadd.f32 %v146, %v596
    %v598 = vpop.f32.mrf.mxu0
    %599 = vmatprep.mubr.f32.mxu0 0.0
    %600 = vmatmul.mubr.f32.gmra.mxu0 %v228
    %v601 = vpop.f32.mrf.mxu0
    %v602 = vadd.f32 %v146, %v601
    %v603 = vpop.f32.mrf.mxu0
    %604 = vmatprep.mubr.f32.mxu0 0.0
    %605 = vmatmul.mubr.f32.gmra.mxu0 %v231
    %v606 = vpop.f32.mrf.mxu0
    %v607 = vadd.f32 %v146, %v606
    %v608 = vpop.f32.mrf.mxu0
    %609 = vmatprep.mubr.f32.mxu0 0.0
    %610 = vmatmul.mubr.f32.gmra.mxu0 %v234
    %v611 = vpop.f32.mrf.mxu0
    %v612 = vadd.f32 %v146, %v611
    %v613 = vpop.f32.mrf.mxu0
    %614 = vmatprep.mubr.f32.mxu0 0.0
    %615 = vmatmul.mubr.f32.gmra.mxu0 %v237
    %v616 = vpop.f32.mrf.mxu0
    %v617 = vadd.f32 %v146, %v616
    %v618 = vpop.f32.mrf.mxu0
    %619 = vmatprep.mubr.f32.mxu0 0.0
    %620 = vmatmul.mubr.f32.gmra.mxu0 %v240
    %v621 = vpop.f32.mrf.mxu0
    %v622 = vadd.f32 %v146, %v621
    %v623 = vpop.f32.mrf.mxu0
    %624 = vmatprep.mubr.f32.mxu0 0.0
    %625 = vmatmul.mubr.f32.gmra.mxu0 %v243
    %v626 = vpop.f32.mrf.mxu0
    %v627 = vadd.f32 %v146, %v626
    %v628 = vpop.f32.mrf.mxu0
    %629 = vmatprep.mubr.f32.mxu0 0.0
    %630 = vmatmul.mubr.f32.gmra.mxu0 %v246
    %v631 = vpop.f32.mrf.mxu0
    %v632 = vadd.f32 %v146, %v631
    %v633 = vpop.f32.mrf.mxu0
    %634 = vmatprep.mubr.f32.mxu0 0.0
    %635 = vmatmul.mubr.f32.gmra.mxu0 %v249
    %v636 = vpop.f32.mrf.mxu0
    %v637 = vadd.f32 %v146, %v636
    %v638 = vpop.f32.mrf.mxu0
    %639 = vmatprep.mubr.f32.mxu0 0.0
    %640 = vmatmul.mubr.f32.gmra.mxu0 %v252
    %v641 = vpop.f32.mrf.mxu0
    %v642 = vadd.f32 %v146, %v641
    %v643 = vpop.f32.mrf.mxu0
    %644 = vmatprep.mubr.f32.mxu0 0.0
    %645 = vmatmul.mubr.f32.gmra.mxu0 %v255
    %v646 = vpop.f32.mrf.mxu0
    %v647 = vadd.f32 %v146, %v646
    %v648 = vpop.f32.mrf.mxu0
    %649 = vmatprep.mubr.f32.mxu0 0.0
    %650 = vmatmul.mubr.f32.gmra.mxu0 %v258
    %v651 = vpop.f32.mrf.mxu0
    %v652 = vadd.f32 %v146, %v651
    %v653 = vpop.f32.mrf.mxu0
    %654 = vmatprep.mubr.f32.mxu0 0.0
    %655 = vmatmul.mubr.f32.gmra.mxu0 %v261
    %v656 = vpop.f32.mrf.mxu0
    %v657 = vadd.f32 %v146, %v656
    %v658 = vpop.f32.mrf.mxu0
    %659 = vmatprep.mubr.f32.mxu0 0.0
    %660 = vmatmul.mubr.f32.gmra.mxu0 %v264
    %v661 = vpop.f32.mrf.mxu0
    %v662 = vadd.f32 %v146, %v661
    %v663 = vpop.f32.mrf.mxu0
    %664 = vmatprep.mubr.f32.mxu0 0.0
    %665 = vmatmul.mubr.f32.gmra.mxu0 %v267
    %v666 = vpop.f32.mrf.mxu0
    %v667 = vadd.f32 %v146, %v666
    %v668 = vpop.f32.mrf.mxu0
    %669 = vmatprep.mubr.f32.mxu0 0.0
    %670 = vmatmul.mubr.f32.gmra.mxu0 %v270
    %v671 = vpop.f32.mrf.mxu0
    %v672 = vadd.f32 %v146, %v671
    %v673 = vpop.f32.mrf.mxu0
    %674 = vmatprep.mubr.f32.mxu0 0.0
    %675 = vmatmul.mubr.f32.gmra.mxu0 %v273
    %v676 = vpop.f32.mrf.mxu0
    %v677 = vadd.f32 %v146, %v676
    %v678 = vpop.f32.mrf.mxu0
    %679 = vmatprep.mubr.f32.mxu0 0.0
    %680 = vmatmul.mubr.f32.gmra.mxu0 %v276
    %v681 = vpop.f32.mrf.mxu0
    %v682 = vadd.f32 %v146, %v681
    %v683 = vpop.f32.mrf.mxu0
    %684 = vmatprep.mubr.f32.mxu0 0.0
    %685 = vmatmul.mubr.f32.gmra.mxu0 %v279
    %v686 = vpop.f32.mrf.mxu0
    %v687 = vadd.f32 %v146, %v686
    %v688 = vpop.f32.mrf.mxu0
    %689 = vmatprep.mubr.f32.mxu0 0.0
    %690 = vmatmul.mubr.f32.gmra.mxu0 %v282
    %v691 = vpop.f32.mrf.mxu0
    %v692 = vadd.f32 %v146, %v691
    %v693 = vpop.f32.mrf.mxu0
    %694 = vmatprep.mubr.f32.mxu0 0.0
    %695 = vmatmul.mubr.f32.gmra.mxu0 %v285
    %v696 = vpop.f32.mrf.mxu0
    %v697 = vadd.f32 %v146, %v696
    %v698 = vpop.f32.mrf.mxu0
    %699 = vmatprep.mubr.f32.mxu0 0.0
    %700 = vmatmul.mubr.f32.gmra.mxu0 %v288
    %v701 = vpop.f32.mrf.mxu0
    %v702 = vadd.f32 %v146, %v701
    %v703 = vpop.f32.mrf.mxu0
    %704 = vmatprep.mubr.f32.mxu0 0.0
    %705 = vmatmul.mubr.f32.gmra.mxu0 %v291
    %v706 = vpop.f32.mrf.mxu0
    %v707 = vadd.f32 %v146, %v706
    %v708 = vpop.f32.mrf.mxu0
    %709 = vmatprep.mubr.f32.mxu0 0.0
    %710 = vmatmul.mubr.f32.gmra.mxu0 %v294
    %v711 = vpop.f32.mrf.mxu0
    %v712 = vadd.f32 %v146, %v711
    %v713 = vpop.f32.mrf.mxu0
    %714 = vmatprep.mubr.f32.mxu0 0.0
    %715 = vmatmul.mubr.f32.gmra.mxu0 %v297
    %v716 = vpop.f32.mrf.mxu0
    %v717 = vadd.f32 %v146, %v716
    %v718 = vpop.f32.mrf.mxu0
    %719 = vmatprep.mubr.f32.mxu0 0.0
    %720 = vmatmul.mubr.f32.gmra.mxu0 %v300
    %v721 = vpop.f32.mrf.mxu0
    %v722 = vadd.f32 %v146, %v721
    %v723 = vpop.f32.mrf.mxu0
    %724 = vmatprep.mubr.f32.mxu0 0.0
    %725 = vmatmul.mubr.f32.gmra.mxu0 %v303
    %v726 = vpop.f32.mrf.mxu0
    %v727 = vadd.f32 %v146, %v726
    %v728 = vpop.f32.mrf.mxu0
    %729 = vmatprep.mubr.f32.mxu0 0.0
    %730 = vmatmul.mubr.f32.gmra.mxu0 %v306
    %v731 = vpop.f32.mrf.mxu0
    %v732 = vadd.f32 %v146, %v731
    %v733 = vpop.f32.mrf.mxu0
    %734 = vmatprep.mubr.f32.mxu0 0.0
    %735 = vmatmul.mubr.f32.gmra.mxu0 %v309
    %v736 = vpop.f32.mrf.mxu0
    %v737 = vadd.f32 %v146, %v736
    %v738 = vpop.f32.mrf.mxu0
    %739 = vmatprep.mubr.f32.mxu0 0.0
    %740 = vmatmul.mubr.f32.gmra.mxu0 %v312
    %v741 = vpop.f32.mrf.mxu0
    %v742 = vadd.f32 %v146, %v741
    %v743 = vpop.f32.mrf.mxu0
    %744 = vmatprep.mubr.f32.mxu0 0.0
    %745 = vmatmul.mubr.f32.gmra.mxu0 %v315
    %v746 = vpop.f32.mrf.mxu0
    %v747 = vadd.f32 %v146, %v746
    %v748 = vpop.f32.mrf.mxu0
    %749 = vmatprep.mubr.f32.mxu0 0.0
    %750 = vmatmul.mubr.f32.gmra.mxu0 %v318
    %v751 = vpop.f32.mrf.mxu0
    %v752 = vadd.f32 %v146, %v751
    %v753 = vpop.f32.mrf.mxu0
    %754 = vmatprep.mubr.f32.mxu0 0.0
    %755 = vmatmul.mubr.f32.gmra.mxu0 %v321
    %v756 = vpop.f32.mrf.mxu0
    %v757 = vadd.f32 %v146, %v756
    %v758 = vpop.f32.mrf.mxu0
    %759 = vmatprep.mubr.f32.mxu0 0.0
    %760 = vmatmul.mubr.f32.gmra.mxu0 %v324
    %v761 = vpop.f32.mrf.mxu0
    %v762 = vadd.f32 %v146, %v761
    %v763 = vpop.f32.mrf.mxu0
    %764 = vmatprep.mubr.f32.mxu0 0.0
    %765 = vmatmul.mubr.f32.gmra.mxu0 %v327
    %v766 = vpop.f32.mrf.mxu0
    %v767 = vadd.f32 %v146, %v766
    %v768 = vpop.f32.mrf.mxu0
    %769 = vmatprep.mubr.f32.mxu0 0.0
    %770 = vmatmul.mubr.f32.gmra.mxu0 %v330
    %v771 = vpop.f32.mrf.mxu0
    %v772 = vadd.f32 %v146, %v771
    %v773 = vpop.f32.mrf.mxu0
    %774 = vmatprep.mubr.f32.mxu0 0.0
    %775 = vmatmul.mubr.f32.gmra.mxu0 %v333
    %v776 = vpop.f32.mrf.mxu0
    %v777 = vadd.f32 %v146, %v776
    %v778 = vpop.f32.mrf.mxu0
    %779 = vmatprep.mubr.f32.mxu0 0.0
    %780 = vmatmul.mubr.f32.gmra.mxu0 %v336
    %v781 = vpop.f32.mrf.mxu0
    %v782 = vadd.f32 %v146, %v781
    %v783 = vpop.f32.mrf.mxu0
    %784 = vmatprep.mubr.f32.mxu0 0.0
    %785 = vmatmul.mubr.f32.gmra.mxu0 %v339
    %v786 = vpop.f32.mrf.mxu0
    %v787 = vadd.f32 %v146, %v786
    %v788 = vpop.f32.mrf.mxu0
    %789 = vmatprep.mubr.f32.mxu0 0.0
    %790 = vmatmul.mubr.f32.gmra.mxu0 %v342
    %v791 = vpop.f32.mrf.mxu0
    %v792 = vadd.f32 %v146, %v791
    %v793 = vpop.f32.mrf.mxu0
    %794 = vmatprep.mubr.f32.mxu0 0.0
    %795 = vmatmul.mubr.f32.gmra.mxu0 %v345
    %v796 = vpop.f32.mrf.mxu0
    %v797 = vadd.f32 %v146, %v796
    %v798 = vpop.f32.mrf.mxu0
    %799 = vmatprep.mubr.f32.mxu0 0.0
    %800 = vmatmul.mubr.f32.gmra.mxu0 %v348
    %v801 = vpop.f32.mrf.mxu0
    %v802 = vadd.f32 %v146, %v801
    %v803 = vpop.f32.mrf.mxu0
    %804 = vmatprep.mubr.f32.mxu0 0.0
    %805 = vmatmul.mubr.f32.gmra.mxu0 %v351
    %v806 = vpop.f32.mrf.mxu0
    %v807 = vadd.f32 %v146, %v806
    %v808 = vpop.f32.mrf.mxu0
    %809 = vmatprep.mubr.f32.mxu0 0.0
    %810 = vmatmul.mubr.f32.gmra.mxu0 %v354
    %v811 = vpop.f32.mrf.mxu0
    %v812 = vadd.f32 %v146, %v811
    %v813 = vpop.f32.mrf.mxu0
    %814 = vmatprep.mubr.f32.mxu0 0.0
    %815 = vmatmul.mubr.f32.gmra.mxu0 %v357
    %v816 = vpop.f32.mrf.mxu0
    %v817 = vadd.f32 %v146, %v816
    %v818 = vpop.f32.mrf.mxu0
    %819 = vmatprep.mubr.f32.mxu0 0.0
    %820 = vmatmul.mubr.f32.gmra.mxu0 %v360
    %v821 = vpop.f32.mrf.mxu0
    %v822 = vadd.f32 %v146, %v821
    %v823 = vpop.f32.mrf.mxu0
    %824 = vmatprep.mubr.f32.mxu0 0.0
    %825 = vmatmul.mubr.f32.gmra.mxu0 %v363
    %v826 = vpop.f32.mrf.mxu0
    %v827 = vadd.f32 %v146, %v826
    %v828 = vpop.f32.mrf.mxu0
    %829 = vmatprep.mubr.f32.mxu0 0.0
    %830 = vmatmul.mubr.f32.gmra.mxu0 %v366
    %v831 = vpop.f32.mrf.mxu0
    %v832 = vadd.f32 %v146, %v831
    %v833 = vpop.f32.mrf.mxu0
    %834 = vmatprep.mubr.f32.mxu0 0.0
    %835 = vmatmul.mubr.f32.gmra.mxu0 %v369
    %v836 = vpop.f32.mrf.mxu0
    %v837 = vadd.f32 %v146, %v836
    %v838 = vpop.f32.mrf.mxu0
    %839 = vmatprep.mubr.f32.mxu0 0.0
    %840 = vmatmul.mubr.f32.gmra.mxu0 %v372
    %v841 = vpop.f32.mrf.mxu0
    %v842 = vadd.f32 %v146, %v841
    %v843 = vpop.f32.mrf.mxu0
    %844 = vmatprep.mubr.f32.mxu0 0.0
    %845 = vmatmul.mubr.f32.gmra.mxu0 %v375
    %v846 = vpop.f32.mrf.mxu0
    %v847 = vadd.f32 %v146, %v846
    %v848 = vpop.f32.mrf.mxu0
    %849 = vmatprep.mubr.f32.mxu0 0.0
    %850 = vmatmul.mubr.f32.gmra.mxu0 %v378
    %v851 = vpop.f32.mrf.mxu0
    %v852 = vadd.f32 %v146, %v851
    %v853 = vpop.f32.mrf.mxu0
    %854 = vmatprep.mubr.f32.mxu0 0.0
    %855 = vmatmul.mubr.f32.gmra.mxu0 %v381
    %v856 = vpop.f32.mrf.mxu0
    %v857 = vadd.f32 %v146, %v856
    %v858 = vpop.f32.mrf.mxu0
    %859 = vmatprep.mubr.f32.mxu0 0.0
    %860 = vmatmul.mubr.f32.gmra.mxu0 %v384
    %v861 = vpop.f32.mrf.mxu0
    %v862 = vadd.f32 %v146, %v861
    %v863 = vpop.f32.mrf.mxu0
    %864 = vmatprep.mubr.f32.mxu0 0.0
    %865 = vmatmul.mubr.f32.gmra.mxu0 %v387
    %v866 = vpop.f32.mrf.mxu0
    %v867 = vadd.f32 %v146, %v866
    %v868 = vpop.f32.mrf.mxu0
    %869 = vmatprep.mubr.f32.mxu0 0.0
    %870 = vmatmul.mubr.f32.gmra.mxu0 %v390
    %v871 = vpop.f32.mrf.mxu0
    %v872 = vadd.f32 %v146, %v871
    %v873 = vpop.f32.mrf.mxu0
    %874 = vmatprep.mubr.f32.mxu0 0.0
    %875 = vmatmul.mubr.f32.gmra.mxu0 %v393
    %v876 = vpop.f32.mrf.mxu0
    %v877 = vadd.f32 %v146, %v876
    %v878 = vpop.f32.mrf.mxu0
    %879 = vmatprep.mubr.f32.mxu0 0.0
    %880 = vmatmul.mubr.f32.gmra.mxu0 %v396
    %v881 = vpop.f32.mrf.mxu0
    %v882 = vadd.f32 %v146, %v881
    %v883 = vpop.f32.mrf.mxu0
    %884 = vmatprep.mubr.f32.mxu0 0.0
    %885 = vmatmul.mubr.f32.gmra.mxu0 %v399
    %v886 = vpop.f32.mrf.mxu0
    %v887 = vadd.f32 %v146, %v886
    %v888 = vpop.f32.mrf.mxu0
    %889 = vdwg.mxu0
    %v890 = vld [vmem:[#allocation4] sm:$0x1]
    %v891 = vld [vmem:[#allocation6] sm:$0x1]
    %vm892 = vcmask 523264
    %v893 = vsel %vm892, %v472, 0.0
    %v894 = vsel %vm892, %v477, 0.0
    %v895 = vadd.f32 %v893, %v894
    %v896 = vsel %vm892, %v482, 0.0
    %v897 = vadd.f32 %v895, %v896
    %v898 = vsel %vm892, %v487, 0.0
    %v899 = vadd.f32 %v897, %v898
    %v900 = vsel %vm892, %v492, 0.0
    %v901 = vadd.f32 %v899, %v900
    %v902 = vsel %vm892, %v497, 0.0
    %v903 = vadd.f32 %v901, %v902
    %v904 = vsel %vm892, %v502, 0.0
    %v905 = vadd.f32 %v903, %v904
    %v906 = vsel %vm892, %v507, 0.0
    %v907 = vadd.f32 %v905, %v906
    %v908 = vsel %vm892, %v512, 0.0
    %v909 = vadd.f32 %v907, %v908
    %v910 = vsel %vm892, %v517, 0.0
    %v911 = vadd.f32 %v909, %v910
    %v912 = vsel %vm892, %v522, 0.0
    %v913 = vadd.f32 %v911, %v912
    %v914 = vsel %vm892, %v527, 0.0
    %v915 = vadd.f32 %v913, %v914
    %v916 = vsel %vm892, %v532, 0.0
    %v917 = vadd.f32 %v915, %v916
    %v918 = vsel %vm892, %v537, 0.0
    %v919 = vadd.f32 %v917, %v918
    %v920 = vsel %vm892, %v542, 0.0
    %v921 = vadd.f32 %v919, %v920
    %v922 = vsel %vm892, %v547, 0.0
    %v923 = vadd.f32 %v921, %v922
    %v924 = vsel %vm892, %v552, 0.0
    %v925 = vadd.f32 %v923, %v924
    %v926 = vsel %vm892, %v557, 0.0
    %v927 = vadd.f32 %v925, %v926
    %v928 = vsel %vm892, %v562, 0.0
    %v929 = vadd.f32 %v927, %v928
    %v930 = vsel %vm892, %v567, 0.0
    %v931 = vadd.f32 %v929, %v930
    %v932 = vsel %vm892, %v572, 0.0
    %v933 = vadd.f32 %v931, %v932
    %v934 = vsel %vm892, %v577, 0.0
    %v935 = vadd.f32 %v933, %v934
    %v936 = vsel %vm892, %v582, 0.0
    %v937 = vadd.f32 %v935, %v936
    %v938 = vsel %vm892, %v587, 0.0
    %v939 = vadd.f32 %v937, %v938
    %v940 = vsel %vm892, %v592, 0.0
    %v941 = vadd.f32 %v939, %v940
    %v942 = vsel %vm892, %v597, 0.0
    %v943 = vadd.f32 %v941, %v942
    %v944 = vsel %vm892, %v602, 0.0
    %v945 = vadd.f32 %v943, %v944
    %v946 = vsel %vm892, %v607, 0.0
    %v947 = vadd.f32 %v945, %v946
    %v948 = vsel %vm892, %v612, 0.0
    %v949 = vadd.f32 %v947, %v948
    %v950 = vsel %vm892, %v617, 0.0
    %v951 = vadd.f32 %v949, %v950
    %v952 = vsel %vm892, %v622, 0.0
    %v953 = vadd.f32 %v951, %v952
    %v954 = vsel %vm892, %v627, 0.0
    %v955 = vadd.f32 %v953, %v954
    %v956 = vsel %vm892, %v632, 0.0
    %v957 = vadd.f32 %v955, %v956
    %v958 = vsel %vm892, %v637, 0.0
    %v959 = vadd.f32 %v957, %v958
    %v960 = vsel %vm892, %v642, 0.0
    %v961 = vadd.f32 %v959, %v960
    %v962 = vsel %vm892, %v647, 0.0
    %v963 = vadd.f32 %v961, %v962
    %v964 = vsel %vm892, %v652, 0.0
    %v965 = vadd.f32 %v963, %v964
    %v966 = vsel %vm892, %v657, 0.0
    %v967 = vadd.f32 %v965, %v966
    %v968 = vsel %vm892, %v662, 0.0
    %v969 = vadd.f32 %v967, %v968
    %v970 = vsel %vm892, %v667, 0.0
    %v971 = vadd.f32 %v969, %v970
    %v972 = vsel %vm892, %v672, 0.0
    %v973 = vadd.f32 %v971, %v972
    %v974 = vsel %vm892, %v677, 0.0
    %v975 = vadd.f32 %v973, %v974
    %v976 = vsel %vm892, %v682, 0.0
    %v977 = vadd.f32 %v975, %v976
    %v978 = vsel %vm892, %v687, 0.0
    %v979 = vadd.f32 %v977, %v978
    %v980 = vsel %vm892, %v692, 0.0
    %v981 = vadd.f32 %v979, %v980
    %v982 = vsel %vm892, %v697, 0.0
    %v983 = vadd.f32 %v981, %v982
    %v984 = vsel %vm892, %v702, 0.0
    %v985 = vadd.f32 %v983, %v984
    %v986 = vsel %vm892, %v707, 0.0
    %v987 = vadd.f32 %v985, %v986
    %v988 = vsel %vm892, %v712, 0.0
    %v989 = vadd.f32 %v987, %v988
    %v990 = vsel %vm892, %v717, 0.0
    %v991 = vadd.f32 %v989, %v990
    %v992 = vsel %vm892, %v722, 0.0
    %v993 = vadd.f32 %v991, %v992
    %v994 = vsel %vm892, %v727, 0.0
    %v995 = vadd.f32 %v993, %v994
    %v996 = vsel %vm892, %v732, 0.0
    %v997 = vadd.f32 %v995, %v996
    %v998 = vsel %vm892, %v737, 0.0
    %v999 = vadd.f32 %v997, %v998
    %v1000 = vsel %vm892, %v742, 0.0
    %v1001 = vadd.f32 %v999, %v1000
    %v1002 = vsel %vm892, %v747, 0.0
    %v1003 = vadd.f32 %v1001, %v1002
    %v1004 = vsel %vm892, %v752, 0.0
    %v1005 = vadd.f32 %v1003, %v1004
    %v1006 = vsel %vm892, %v757, 0.0
    %v1007 = vadd.f32 %v1005, %v1006
    %v1008 = vsel %vm892, %v762, 0.0
    %v1009 = vadd.f32 %v1007, %v1008
    %v1010 = vsel %vm892, %v767, 0.0
    %v1011 = vadd.f32 %v1009, %v1010
    %v1012 = vsel %vm892, %v772, 0.0
    %v1013 = vadd.f32 %v1011, %v1012
    %v1014 = vsel %vm892, %v777, 0.0
    %v1015 = vadd.f32 %v1013, %v1014
    %v1016 = vsel %vm892, %v782, 0.0
    %v1017 = vadd.f32 %v1015, %v1016
    %v1018 = vsel %vm892, %v787, 0.0
    %v1019 = vadd.f32 %v1017, %v1018
    %v1020 = vsel %vm892, %v792, 0.0
    %v1021 = vadd.f32 %v1019, %v1020
    %v1022 = vsel %vm892, %v797, 0.0
    %v1023 = vadd.f32 %v1021, %v1022
    %v1024 = vsel %vm892, %v802, 0.0
    %v1025 = vadd.f32 %v1023, %v1024
    %v1026 = vsel %vm892, %v807, 0.0
    %v1027 = vadd.f32 %v1025, %v1026
    %v1028 = vsel %vm892, %v812, 0.0
    %v1029 = vadd.f32 %v1027, %v1028
    %v1030 = vsel %vm892, %v817, 0.0
    %v1031 = vadd.f32 %v1029, %v1030
    %v1032 = vsel %vm892, %v822, 0.0
    %v1033 = vadd.f32 %v1031, %v1032
    %v1034 = vsel %vm892, %v827, 0.0
    %v1035 = vadd.f32 %v1033, %v1034
    %v1036 = vsel %vm892, %v832, 0.0
    %v1037 = vadd.f32 %v1035, %v1036
    %v1038 = vsel %vm892, %v837, 0.0
    %v1039 = vadd.f32 %v1037, %v1038
    %v1040 = vsel %vm892, %v842, 0.0
    %v1041 = vadd.f32 %v1039, %v1040
    %v1042 = vsel %vm892, %v847, 0.0
    %v1043 = vadd.f32 %v1041, %v1042
    %v1044 = vsel %vm892, %v852, 0.0
    %v1045 = vadd.f32 %v1043, %v1044
    %v1046 = vsel %vm892, %v857, 0.0
    %v1047 = vadd.f32 %v1045, %v1046
    %v1048 = vsel %vm892, %v862, 0.0
    %v1049 = vadd.f32 %v1047, %v1048
    %v1050 = vsel %vm892, %v867, 0.0
    %v1051 = vadd.f32 %v1049, %v1050
    %v1052 = vsel %vm892, %v872, 0.0
    %v1053 = vadd.f32 %v1051, %v1052
    %v1054 = vsel %vm892, %v877, 0.0
    %v1055 = vadd.f32 %v1053, %v1054
    %v1056 = vsel %vm892, %v882, 0.0
    %v1057 = vadd.f32 %v1055, %v1056
    %v1058 = vsel %vm892, %v887, 0.0
    %v1059 = vadd.f32 %v1057, %v1058
    %v1060 = vrot.slane %v1059, 4
    %v1061 = vadd.f32 %v1059, %v1060
    %v1062 = vrot.slane %v1061, 2
    %v1063 = vadd.f32 %v1061, %v1062
    %v1064 = vrot.slane %v1063, 1
    %v1065 = vadd.f32 %v1063, %v1064
    %v1066 = vmul.f32 %v1065, 0.0014880953
    %v1067 = vsub.f32 %v472, %v1066
    %v1068 = vsub.f32 %v477, %v1066
    %v1069 = vsub.f32 %v482, %v1066
    %v1070 = vsub.f32 %v487, %v1066
    %v1071 = vsub.f32 %v492, %v1066
    %v1072 = vsub.f32 %v497, %v1066
    %v1073 = vsub.f32 %v502, %v1066
    %v1074 = vsub.f32 %v507, %v1066
    %v1075 = vsub.f32 %v512, %v1066
    %v1076 = vsub.f32 %v517, %v1066
    %v1077 = vsub.f32 %v522, %v1066
    %v1078 = vsub.f32 %v527, %v1066
    %v1079 = vsub.f32 %v532, %v1066
    %v1080 = vsub.f32 %v537, %v1066
    %v1081 = vsub.f32 %v542, %v1066
    %v1082 = vsub.f32 %v547, %v1066
    %v1083 = vsub.f32 %v552, %v1066
    %v1084 = vsub.f32 %v557, %v1066
    %v1085 = vsub.f32 %v562, %v1066
    %v1086 = vsub.f32 %v567, %v1066
    %v1087 = vsub.f32 %v572, %v1066
    %v1088 = vsub.f32 %v577, %v1066
    %v1089 = vsub.f32 %v582, %v1066
    %v1090 = vsub.f32 %v587, %v1066
    %v1091 = vsub.f32 %v592, %v1066
    %v1092 = vsub.f32 %v597, %v1066
    %v1093 = vsub.f32 %v602, %v1066
    %v1094 = vsub.f32 %v607, %v1066
    %v1095 = vsub.f32 %v612, %v1066
    %v1096 = vsub.f32 %v617, %v1066
    %v1097 = vsub.f32 %v622, %v1066
    %v1098 = vsub.f32 %v627, %v1066
    %v1099 = vsub.f32 %v632, %v1066
    %v1100 = vsub.f32 %v637, %v1066
    %v1101 = vsub.f32 %v642, %v1066
    %v1102 = vsub.f32 %v647, %v1066
    %v1103 = vsub.f32 %v652, %v1066
    %v1104 = vsub.f32 %v657, %v1066
    %v1105 = vsub.f32 %v662, %v1066
    %v1106 = vsub.f32 %v667, %v1066
    %v1107 = vsub.f32 %v672, %v1066
    %v1108 = vsub.f32 %v677, %v1066
    %v1109 = vsub.f32 %v682, %v1066
    %v1110 = vsub.f32 %v687, %v1066
    %v1111 = vsub.f32 %v692, %v1066
    %v1112 = vsub.f32 %v697, %v1066
    %v1113 = vsub.f32 %v702, %v1066
    %v1114 = vsub.f32 %v707, %v1066
    %v1115 = vsub.f32 %v712, %v1066
    %v1116 = vsub.f32 %v717, %v1066
    %v1117 = vsub.f32 %v722, %v1066
    %v1118 = vsub.f32 %v727, %v1066
    %v1119 = vsub.f32 %v732, %v1066
    %v1120 = vsub.f32 %v737, %v1066
    %v1121 = vsub.f32 %v742, %v1066
    %v1122 = vsub.f32 %v747, %v1066
    %v1123 = vsub.f32 %v752, %v1066
    %v1124 = vsub.f32 %v757, %v1066
    %v1125 = vsub.f32 %v762, %v1066
    %v1126 = vsub.f32 %v767, %v1066
    %v1127 = vsub.f32 %v772, %v1066
    %v1128 = vsub.f32 %v777, %v1066
    %v1129 = vsub.f32 %v782, %v1066
    %v1130 = vsub.f32 %v787, %v1066
    %v1131 = vsub.f32 %v792, %v1066
    %v1132 = vsub.f32 %v797, %v1066
    %v1133 = vsub.f32 %v802, %v1066
    %v1134 = vsub.f32 %v807, %v1066
    %v1135 = vsub.f32 %v812, %v1066
    %v1136 = vsub.f32 %v817, %v1066
    %v1137 = vsub.f32 %v822, %v1066
    %v1138 = vsub.f32 %v827, %v1066
    %v1139 = vsub.f32 %v832, %v1066
    %v1140 = vsub.f32 %v837, %v1066
    %v1141 = vsub.f32 %v842, %v1066
    %v1142 = vsub.f32 %v847, %v1066
    %v1143 = vsub.f32 %v852, %v1066
    %v1144 = vsub.f32 %v857, %v1066
    %v1145 = vsub.f32 %v862, %v1066
    %v1146 = vsub.f32 %v867, %v1066
    %v1147 = vsub.f32 %v872, %v1066
    %v1148 = vsub.f32 %v877, %v1066
    %v1149 = vsub.f32 %v882, %v1066
    %v1150 = vsub.f32 %v887, %v1066
    %v1151 = vmul.f32 %v1067, %v1067
    %v1152 = vmul.f32 %v1068, %v1068
    %v1153 = vmul.f32 %v1069, %v1069
    %v1154 = vmul.f32 %v1070, %v1070
    %v1155 = vmul.f32 %v1071, %v1071
    %v1156 = vmul.f32 %v1072, %v1072
    %v1157 = vmul.f32 %v1073, %v1073
    %v1158 = vmul.f32 %v1074, %v1074
    %v1159 = vmul.f32 %v1075, %v1075
    %v1160 = vmul.f32 %v1076, %v1076
    %v1161 = vmul.f32 %v1077, %v1077
    %v1162 = vmul.f32 %v1078, %v1078
    %v1163 = vmul.f32 %v1079, %v1079
    %v1164 = vmul.f32 %v1080, %v1080
    %v1165 = vmul.f32 %v1081, %v1081
    %v1166 = vmul.f32 %v1082, %v1082
    %v1167 = vmul.f32 %v1083, %v1083
    %v1168 = vmul.f32 %v1084, %v1084
    %v1169 = vmul.f32 %v1085, %v1085
    %v1170 = vmul.f32 %v1086, %v1086
    %v1171 = vmul.f32 %v1087, %v1087
    %v1172 = vmul.f32 %v1088, %v1088
    %v1173 = vmul.f32 %v1089, %v1089
    %v1174 = vmul.f32 %v1090, %v1090
    %v1175 = vmul.f32 %v1091, %v1091
    %v1176 = vmul.f32 %v1092, %v1092
    %v1177 = vmul.f32 %v1093, %v1093
    %v1178 = vmul.f32 %v1094, %v1094
    %v1179 = vmul.f32 %v1095, %v1095
    %v1180 = vmul.f32 %v1096, %v1096
    %v1181 = vmul.f32 %v1097, %v1097
    %v1182 = vmul.f32 %v1098, %v1098
    %v1183 = vmul.f32 %v1099, %v1099
    %v1184 = vmul.f32 %v1100, %v1100
    %v1185 = vmul.f32 %v1101, %v1101
    %v1186 = vmul.f32 %v1102, %v1102
    %v1187 = vmul.f32 %v1103, %v1103
    %v1188 = vmul.f32 %v1104, %v1104
    %v1189 = vmul.f32 %v1105, %v1105
    %v1190 = vmul.f32 %v1106, %v1106
    %v1191 = vmul.f32 %v1107, %v1107
    %v1192 = vmul.f32 %v1108, %v1108
    %v1193 = vmul.f32 %v1109, %v1109
    %v1194 = vmul.f32 %v1110, %v1110
    %v1195 = vmul.f32 %v1111, %v1111
    %v1196 = vmul.f32 %v1112, %v1112
    %v1197 = vmul.f32 %v1113, %v1113
    %v1198 = vmul.f32 %v1114, %v1114
    %v1199 = vmul.f32 %v1115, %v1115
    %v1200 = vmul.f32 %v1116, %v1116
    %v1201 = vmul.f32 %v1117, %v1117
    %v1202 = vmul.f32 %v1118, %v1118
    %v1203 = vmul.f32 %v1119, %v1119
    %v1204 = vmul.f32 %v1120, %v1120
    %v1205 = vmul.f32 %v1121, %v1121
    %v1206 = vmul.f32 %v1122, %v1122
    %v1207 = vmul.f32 %v1123, %v1123
    %v1208 = vmul.f32 %v1124, %v1124
    %v1209 = vmul.f32 %v1125, %v1125
    %v1210 = vmul.f32 %v1126, %v1126
    %v1211 = vmul.f32 %v1127, %v1127
    %v1212 = vmul.f32 %v1128, %v1128
    %v1213 = vmul.f32 %v1129, %v1129
    %v1214 = vmul.f32 %v1130, %v1130
    %v1215 = vmul.f32 %v1131, %v1131
    %v1216 = vmul.f32 %v1132, %v1132
    %v1217 = vmul.f32 %v1133, %v1133
    %v1218 = vmul.f32 %v1134, %v1134
    %v1219 = vmul.f32 %v1135, %v1135
    %v1220 = vmul.f32 %v1136, %v1136
    %v1221 = vmul.f32 %v1137, %v1137
    %v1222 = vmul.f32 %v1138, %v1138
    %v1223 = vmul.f32 %v1139, %v1139
    %v1224 = vmul.f32 %v1140, %v1140
    %v1225 = vmul.f32 %v1141, %v1141
    %v1226 = vmul.f32 %v1142, %v1142
    %v1227 = vmul.f32 %v1143, %v1143
    %v1228 = vmul.f32 %v1144, %v1144
    %v1229 = vmul.f32 %v1145, %v1145
    %v1230 = vmul.f32 %v1146, %v1146
    %v1231 = vmul.f32 %v1147, %v1147
    %v1232 = vmul.f32 %v1148, %v1148
    %v1233 = vmul.f32 %v1149, %v1149
    %v1234 = vmul.f32 %v1150, %v1150
    %v1235 = vsel %vm892, %v1151, 0.0
    %v1236 = vsel %vm892, %v1152, 0.0
    %v1237 = vadd.f32 %v1235, %v1236
    %v1238 = vsel %vm892, %v1153, 0.0
    %v1239 = vadd.f32 %v1237, %v1238
    %v1240 = vsel %vm892, %v1154, 0.0
    %v1241 = vadd.f32 %v1239, %v1240
    %v1242 = vsel %vm892, %v1155, 0.0
    %v1243 = vadd.f32 %v1241, %v1242
    %v1244 = vsel %vm892, %v1156, 0.0
    %v1245 = vadd.f32 %v1243, %v1244
    %v1246 = vsel %vm892, %v1157, 0.0
    %v1247 = vadd.f32 %v1245, %v1246
    %v1248 = vsel %vm892, %v1158, 0.0
    %v1249 = vadd.f32 %v1247, %v1248
    %v1250 = vsel %vm892, %v1159, 0.0
    %v1251 = vadd.f32 %v1249, %v1250
    %v1252 = vsel %vm892, %v1160, 0.0
    %v1253 = vadd.f32 %v1251, %v1252
    %v1254 = vsel %vm892, %v1161, 0.0
    %v1255 = vadd.f32 %v1253, %v1254
    %v1256 = vsel %vm892, %v1162, 0.0
    %v1257 = vadd.f32 %v1255, %v1256
    %v1258 = vsel %vm892, %v1163, 0.0
    %v1259 = vadd.f32 %v1257, %v1258
    %v1260 = vsel %vm892, %v1164, 0.0
    %v1261 = vadd.f32 %v1259, %v1260
    %v1262 = vsel %vm892, %v1165, 0.0
    %v1263 = vadd.f32 %v1261, %v1262
    %v1264 = vsel %vm892, %v1166, 0.0
    %v1265 = vadd.f32 %v1263, %v1264
    %v1266 = vsel %vm892, %v1167, 0.0
    %v1267 = vadd.f32 %v1265, %v1266
    %v1268 = vsel %vm892, %v1168, 0.0
    %v1269 = vadd.f32 %v1267, %v1268
    %v1270 = vsel %vm892, %v1169, 0.0
    %v1271 = vadd.f32 %v1269, %v1270
    %v1272 = vsel %vm892, %v1170, 0.0
    %v1273 = vadd.f32 %v1271, %v1272
    %v1274 = vsel %vm892, %v1171, 0.0
    %v1275 = vadd.f32 %v1273, %v1274
    %v1276 = vsel %vm892, %v1172, 0.0
    %v1277 = vadd.f32 %v1275, %v1276
    %v1278 = vsel %vm892, %v1173, 0.0
    %v1279 = vadd.f32 %v1277, %v1278
    %v1280 = vsel %vm892, %v1174, 0.0
    %v1281 = vadd.f32 %v1279, %v1280
    %v1282 = vsel %vm892, %v1175, 0.0
    %v1283 = vadd.f32 %v1281, %v1282
    %v1284 = vsel %vm892, %v1176, 0.0
    %v1285 = vadd.f32 %v1283, %v1284
    %v1286 = vsel %vm892, %v1177, 0.0
    %v1287 = vadd.f32 %v1285, %v1286
    %v1288 = vsel %vm892, %v1178, 0.0
    %v1289 = vadd.f32 %v1287, %v1288
    %v1290 = vsel %vm892, %v1179, 0.0
    %v1291 = vadd.f32 %v1289, %v1290
    %v1292 = vsel %vm892, %v1180, 0.0
    %v1293 = vadd.f32 %v1291, %v1292
    %v1294 = vsel %vm892, %v1181, 0.0
    %v1295 = vadd.f32 %v1293, %v1294
    %v1296 = vsel %vm892, %v1182, 0.0
    %v1297 = vadd.f32 %v1295, %v1296
    %v1298 = vsel %vm892, %v1183, 0.0
    %v1299 = vadd.f32 %v1297, %v1298
    %v1300 = vsel %vm892, %v1184, 0.0
    %v1301 = vadd.f32 %v1299, %v1300
    %v1302 = vsel %vm892, %v1185, 0.0
    %v1303 = vadd.f32 %v1301, %v1302
    %v1304 = vsel %vm892, %v1186, 0.0
    %v1305 = vadd.f32 %v1303, %v1304
    %v1306 = vsel %vm892, %v1187, 0.0
    %v1307 = vadd.f32 %v1305, %v1306
    %v1308 = vsel %vm892, %v1188, 0.0
    %v1309 = vadd.f32 %v1307, %v1308
    %v1310 = vsel %vm892, %v1189, 0.0
    %v1311 = vadd.f32 %v1309, %v1310
    %v1312 = vsel %vm892, %v1190, 0.0
    %v1313 = vadd.f32 %v1311, %v1312
    %v1314 = vsel %vm892, %v1191, 0.0
    %v1315 = vadd.f32 %v1313, %v1314
    %v1316 = vsel %vm892, %v1192, 0.0
    %v1317 = vadd.f32 %v1315, %v1316
    %v1318 = vsel %vm892, %v1193, 0.0
    %v1319 = vadd.f32 %v1317, %v1318
    %v1320 = vsel %vm892, %v1194, 0.0
    %v1321 = vadd.f32 %v1319, %v1320
    %v1322 = vsel %vm892, %v1195, 0.0
    %v1323 = vadd.f32 %v1321, %v1322
    %v1324 = vsel %vm892, %v1196, 0.0
    %v1325 = vadd.f32 %v1323, %v1324
    %v1326 = vsel %vm892, %v1197, 0.0
    %v1327 = vadd.f32 %v1325, %v1326
    %v1328 = vsel %vm892, %v1198, 0.0
    %v1329 = vadd.f32 %v1327, %v1328
    %v1330 = vsel %vm892, %v1199, 0.0
    %v1331 = vadd.f32 %v1329, %v1330
    %v1332 = vsel %vm892, %v1200, 0.0
    %v1333 = vadd.f32 %v1331, %v1332
    %v1334 = vsel %vm892, %v1201, 0.0
    %v1335 = vadd.f32 %v1333, %v1334
    %v1336 = vsel %vm892, %v1202, 0.0
    %v1337 = vadd.f32 %v1335, %v1336
    %v1338 = vsel %vm892, %v1203, 0.0
    %v1339 = vadd.f32 %v1337, %v1338
    %v1340 = vsel %vm892, %v1204, 0.0
    %v1341 = vadd.f32 %v1339, %v1340
    %v1342 = vsel %vm892, %v1205, 0.0
    %v1343 = vadd.f32 %v1341, %v1342
    %v1344 = vsel %vm892, %v1206, 0.0
    %v1345 = vadd.f32 %v1343, %v1344
    %v1346 = vsel %vm892, %v1207, 0.0
    %v1347 = vadd.f32 %v1345, %v1346
    %v1348 = vsel %vm892, %v1208, 0.0
    %v1349 = vadd.f32 %v1347, %v1348
    %v1350 = vsel %vm892, %v1209, 0.0
    %v1351 = vadd.f32 %v1349, %v1350
    %v1352 = vsel %vm892, %v1210, 0.0
    %v1353 = vadd.f32 %v1351, %v1352
    %v1354 = vsel %vm892, %v1211, 0.0
    %v1355 = vadd.f32 %v1353, %v1354
    %v1356 = vsel %vm892, %v1212, 0.0
    %v1357 = vadd.f32 %v1355, %v1356
    %v1358 = vsel %vm892, %v1213, 0.0
    %v1359 = vadd.f32 %v1357, %v1358
    %v1360 = vsel %vm892, %v1214, 0.0
    %v1361 = vadd.f32 %v1359, %v1360
    %v1362 = vsel %vm892, %v1215, 0.0
    %v1363 = vadd.f32 %v1361, %v1362
    %v1364 = vsel %vm892, %v1216, 0.0
    %v1365 = vadd.f32 %v1363, %v1364
    %v1366 = vsel %vm892, %v1217, 0.0
    %v1367 = vadd.f32 %v1365, %v1366
    %v1368 = vsel %vm892, %v1218, 0.0
    %v1369 = vadd.f32 %v1367, %v1368
    %v1370 = vsel %vm892, %v1219, 0.0
    %v1371 = vadd.f32 %v1369, %v1370
    %v1372 = vsel %vm892, %v1220, 0.0
    %v1373 = vadd.f32 %v1371, %v1372
    %v1374 = vsel %vm892, %v1221, 0.0
    %v1375 = vadd.f32 %v1373, %v1374
    %v1376 = vsel %vm892, %v1222, 0.0
    %v1377 = vadd.f32 %v1375, %v1376
    %v1378 = vsel %vm892, %v1223, 0.0
    %v1379 = vadd.f32 %v1377, %v1378
    %v1380 = vsel %vm892, %v1224, 0.0
    %v1381 = vadd.f32 %v1379, %v1380
    %v1382 = vsel %vm892, %v1225, 0.0
    %v1383 = vadd.f32 %v1381, %v1382
    %v1384 = vsel %vm892, %v1226, 0.0
    %v1385 = vadd.f32 %v1383, %v1384
    %v1386 = vsel %vm892, %v1227, 0.0
    %v1387 = vadd.f32 %v1385, %v1386
    %v1388 = vsel %vm892, %v1228, 0.0
    %v1389 = vadd.f32 %v1387, %v1388
    %v1390 = vsel %vm892, %v1229, 0.0
    %v1391 = vadd.f32 %v1389, %v1390
    %v1392 = vsel %vm892, %v1230, 0.0
    %v1393 = vadd.f32 %v1391, %v1392
    %v1394 = vsel %vm892, %v1231, 0.0
    %v1395 = vadd.f32 %v1393, %v1394
    %v1396 = vsel %vm892, %v1232, 0.0
    %v1397 = vadd.f32 %v1395, %v1396
    %v1398 = vsel %vm892, %v1233, 0.0
    %v1399 = vadd.f32 %v1397, %v1398
    %v1400 = vsel %vm892, %v1234, 0.0
    %v1401 = vadd.f32 %v1399, %v1400
    %v1402 = vrot.slane %v1401, 4
    %v1403 = vadd.f32 %v1401, %v1402
    %v1404 = vrot.slane %v1403, 2
    %v1405 = vadd.f32 %v1403, %v1404
    %v1406 = vrot.slane %v1405, 1
    %v1407 = vadd.f32 %v1405, %v1406
    %v1408 = vmul.f32 %v1407, 0.0014880953
    %v1409 = vadd.f32 %v1408, 1e-05
    %v1410 = vrsqrt.pop %v1409
    %v1411 = vmul.f32 %v890, %v1410
    %v1413 = vlaneseq
    %v1414 = vshrl.u32 %v1413, 7
    %v1415 = vsub.s32 0, %v1414
    %v1416 = vrot.slane %v1411, %v1415
    %v1418 = vmul.f32 %v1067, %v1416
    %v1419 = vmul.f32 %v1068, %v1416
    %v1420 = vmul.f32 %v1069, %v1416
    %v1421 = vmul.f32 %v1070, %v1416
    %v1422 = vmul.f32 %v1071, %v1416
    %v1423 = vmul.f32 %v1072, %v1416
    %v1424 = vmul.f32 %v1073, %v1416
    %v1425 = vmul.f32 %v1074, %v1416
    %v1426 = vmul.f32 %v1075, %v1416
    %v1427 = vmul.f32 %v1076, %v1416
    %v1428 = vmul.f32 %v1077, %v1416
    %v1429 = vmul.f32 %v1078, %v1416
    %v1430 = vmul.f32 %v1079, %v1416
    %v1431 = vmul.f32 %v1080, %v1416
    %v1432 = vmul.f32 %v1081, %v1416
    %v1433 = vmul.f32 %v1082, %v1416
    %v1434 = vmul.f32 %v1083, %v1416
    %v1435 = vmul.f32 %v1084, %v1416
    %v1436 = vmul.f32 %v1085, %v1416
    %v1437 = vmul.f32 %v1086, %v1416
    %v1438 = vmul.f32 %v1087, %v1416
    %v1439 = vmul.f32 %v1088, %v1416
    %v1440 = vmul.f32 %v1089, %v1416
    %v1441 = vmul.f32 %v1090, %v1416
    %v1442 = vmul.f32 %v1091, %v1416
    %v1443 = vmul.f32 %v1092, %v1416
    %v1444 = vmul.f32 %v1093, %v1416
    %v1445 = vmul.f32 %v1094, %v1416
    %v1446 = vmul.f32 %v1095, %v1416
    %v1447 = vmul.f32 %v1096, %v1416
    %v1448 = vmul.f32 %v1097, %v1416
    %v1449 = vmul.f32 %v1098, %v1416
    %v1450 = vmul.f32 %v1099, %v1416
    %v1451 = vmul.f32 %v1100, %v1416
    %v1452 = vmul.f32 %v1101, %v1416
    %v1453 = vmul.f32 %v1102, %v1416
    %v1454 = vmul.f32 %v1103, %v1416
    %v1455 = vmul.f32 %v1104, %v1416
    %v1456 = vmul.f32 %v1105, %v1416
    %v1457 = vmul.f32 %v1106, %v1416
    %v1458 = vmul.f32 %v1107, %v1416
    %v1459 = vmul.f32 %v1108, %v1416
    %v1460 = vmul.f32 %v1109, %v1416
    %v1461 = vmul.f32 %v1110, %v1416
    %v1462 = vmul.f32 %v1111, %v1416
    %v1463 = vmul.f32 %v1112, %v1416
    %v1464 = vmul.f32 %v1113, %v1416
    %v1465 = vmul.f32 %v1114, %v1416
    %v1466 = vmul.f32 %v1115, %v1416
    %v1467 = vmul.f32 %v1116, %v1416
    %v1468 = vmul.f32 %v1117, %v1416
    %v1469 = vmul.f32 %v1118, %v1416
    %v1470 = vmul.f32 %v1119, %v1416
    %v1471 = vmul.f32 %v1120, %v1416
    %v1472 = vmul.f32 %v1121, %v1416
    %v1473 = vmul.f32 %v1122, %v1416
    %v1474 = vmul.f32 %v1123, %v1416
    %v1475 = vmul.f32 %v1124, %v1416
    %v1476 = vmul.f32 %v1125, %v1416
    %v1477 = vmul.f32 %v1126, %v1416
    %v1478 = vmul.f32 %v1127, %v1416
    %v1479 = vmul.f32 %v1128, %v1416
    %v1480 = vmul.f32 %v1129, %v1416
    %v1481 = vmul.f32 %v1130, %v1416
    %v1482 = vmul.f32 %v1131, %v1416
    %v1483 = vmul.f32 %v1132, %v1416
    %v1484 = vmul.f32 %v1133, %v1416
    %v1485 = vmul.f32 %v1134, %v1416
    %v1486 = vmul.f32 %v1135, %v1416
    %v1487 = vmul.f32 %v1136, %v1416
    %v1488 = vmul.f32 %v1137, %v1416
    %v1489 = vmul.f32 %v1138, %v1416
    %v1490 = vmul.f32 %v1139, %v1416
    %v1491 = vmul.f32 %v1140, %v1416
    %v1492 = vmul.f32 %v1141, %v1416
    %v1493 = vmul.f32 %v1142, %v1416
    %v1494 = vmul.f32 %v1143, %v1416
    %v1495 = vmul.f32 %v1144, %v1416
    %v1496 = vmul.f32 %v1145, %v1416
    %v1497 = vmul.f32 %v1146, %v1416
    %v1498 = vmul.f32 %v1147, %v1416
    %v1499 = vmul.f32 %v1148, %v1416
    %v1500 = vmul.f32 %v1149, %v1416
    %v1501 = vmul.f32 %v1150, %v1416
    %v1503 = vlaneseq
    %v1504 = vshrl.u32 %v1503, 7
    %v1505 = vsub.s32 0, %v1504
    %v1506 = vrot.slane %v891, %v1505
    %v1508 = vadd.f32 %v1418, %v1506
    %v1509 = vadd.f32 %v1419, %v1506
    %v1510 = vadd.f32 %v1420, %v1506
    %v1511 = vadd.f32 %v1421, %v1506
    %v1512 = vadd.f32 %v1422, %v1506
    %v1513 = vadd.f32 %v1423, %v1506
    %v1514 = vadd.f32 %v1424, %v1506
    %v1515 = vadd.f32 %v1425, %v1506
    %v1516 = vadd.f32 %v1426, %v1506
    %v1517 = vadd.f32 %v1427, %v1506
    %v1518 = vadd.f32 %v1428, %v1506
    %v1519 = vadd.f32 %v1429, %v1506
    %v1520 = vadd.f32 %v1430, %v1506
    %v1521 = vadd.f32 %v1431, %v1506
    %v1522 = vadd.f32 %v1432, %v1506
    %v1523 = vadd.f32 %v1433, %v1506
    %v1524 = vadd.f32 %v1434, %v1506
    %v1525 = vadd.f32 %v1435, %v1506
    %v1526 = vadd.f32 %v1436, %v1506
    %v1527 = vadd.f32 %v1437, %v1506
    %v1528 = vadd.f32 %v1438, %v1506
    %v1529 = vadd.f32 %v1439, %v1506
    %v1530 = vadd.f32 %v1440, %v1506
    %v1531 = vadd.f32 %v1441, %v1506
    %v1532 = vadd.f32 %v1442, %v1506
    %v1533 = vadd.f32 %v1443, %v1506
    %v1534 = vadd.f32 %v1444, %v1506
    %v1535 = vadd.f32 %v1445, %v1506
    %v1536 = vadd.f32 %v1446, %v1506
    %v1537 = vadd.f32 %v1447, %v1506
    %v1538 = vadd.f32 %v1448, %v1506
    %v1539 = vadd.f32 %v1449, %v1506
    %v1540 = vadd.f32 %v1450, %v1506
    %v1541 = vadd.f32 %v1451, %v1506
    %v1542 = vadd.f32 %v1452, %v1506
    %v1543 = vadd.f32 %v1453, %v1506
    %v1544 = vadd.f32 %v1454, %v1506
    %v1545 = vadd.f32 %v1455, %v1506
    %v1546 = vadd.f32 %v1456, %v1506
    %v1547 = vadd.f32 %v1457, %v1506
    %v1548 = vadd.f32 %v1458, %v1506
    %v1549 = vadd.f32 %v1459, %v1506
    %v1550 = vadd.f32 %v1460, %v1506
    %v1551 = vadd.f32 %v1461, %v1506
    %v1552 = vadd.f32 %v1462, %v1506
    %v1553 = vadd.f32 %v1463, %v1506
    %v1554 = vadd.f32 %v1464, %v1506
    %v1555 = vadd.f32 %v1465, %v1506
    %v1556 = vadd.f32 %v1466, %v1506
    %v1557 = vadd.f32 %v1467, %v1506
    %v1558 = vadd.f32 %v1468, %v1506
    %v1559 = vadd.f32 %v1469, %v1506
    %v1560 = vadd.f32 %v1470, %v1506
    %v1561 = vadd.f32 %v1471, %v1506
    %v1562 = vadd.f32 %v1472, %v1506
    %v1563 = vadd.f32 %v1473, %v1506
    %v1564 = vadd.f32 %v1474, %v1506
    %v1565 = vadd.f32 %v1475, %v1506
    %v1566 = vadd.f32 %v1476, %v1506
    %v1567 = vadd.f32 %v1477, %v1506
    %v1568 = vadd.f32 %v1478, %v1506
    %v1569 = vadd.f32 %v1479, %v1506
    %v1570 = vadd.f32 %v1480, %v1506
    %v1571 = vadd.f32 %v1481, %v1506
    %v1572 = vadd.f32 %v1482, %v1506
    %v1573 = vadd.f32 %v1483, %v1506
    %v1574 = vadd.f32 %v1484, %v1506
    %v1575 = vadd.f32 %v1485, %v1506
    %v1576 = vadd.f32 %v1486, %v1506
    %v1577 = vadd.f32 %v1487, %v1506
    %v1578 = vadd.f32 %v1488, %v1506
    %v1579 = vadd.f32 %v1489, %v1506
    %v1580 = vadd.f32 %v1490, %v1506
    %v1581 = vadd.f32 %v1491, %v1506
    %v1582 = vadd.f32 %v1492, %v1506
    %v1583 = vadd.f32 %v1493, %v1506
    %v1584 = vadd.f32 %v1494, %v1506
    %v1585 = vadd.f32 %v1495, %v1506
    %v1586 = vadd.f32 %v1496, %v1506
    %v1587 = vadd.f32 %v1497, %v1506
    %v1588 = vadd.f32 %v1498, %v1506
    %v1589 = vadd.f32 %v1499, %v1506
    %v1590 = vadd.f32 %v1500, %v1506
    %v1591 = vadd.f32 %v1501, %v1506
    %vm1592 = vcmp.gt.f32.partialorder %v1508, 0.0
    %vm1593 = vcmp.gt.f32.partialorder %v1509, 0.0
    %vm1594 = vcmp.gt.f32.partialorder %v1510, 0.0
    %vm1595 = vcmp.gt.f32.partialorder %v1511, 0.0
    %vm1596 = vcmp.gt.f32.partialorder %v1512, 0.0
    %vm1597 = vcmp.gt.f32.partialorder %v1513, 0.0
    %vm1598 = vcmp.gt.f32.partialorder %v1514, 0.0
    %vm1599 = vcmp.gt.f32.partialorder %v1515, 0.0
    %vm1600 = vcmp.gt.f32.partialorder %v1516, 0.0
    %vm1601 = vcmp.gt.f32.partialorder %v1517, 0.0
    %vm1602 = vcmp.gt.f32.partialorder %v1518, 0.0
    %vm1603 = vcmp.gt.f32.partialorder %v1519, 0.0
    %vm1604 = vcmp.gt.f32.partialorder %v1520, 0.0
    %vm1605 = vcmp.gt.f32.partialorder %v1521, 0.0
    %vm1606 = vcmp.gt.f32.partialorder %v1522, 0.0
    %vm1607 = vcmp.gt.f32.partialorder %v1523, 0.0
    %vm1608 = vcmp.gt.f32.partialorder %v1524, 0.0
    %vm1609 = vcmp.gt.f32.partialorder %v1525, 0.0
    %vm1610 = vcmp.gt.f32.partialorder %v1526, 0.0
    %vm1611 = vcmp.gt.f32.partialorder %v1527, 0.0
    %vm1612 = vcmp.gt.f32.partialorder %v1528, 0.0
    %vm1613 = vcmp.gt.f32.partialorder %v1529, 0.0
    %vm1614 = vcmp.gt.f32.partialorder %v1530, 0.0
    %vm1615 = vcmp.gt.f32.partialorder %v1531, 0.0
    %vm1616 = vcmp.gt.f32.partialorder %v1532, 0.0
    %vm1617 = vcmp.gt.f32.partialorder %v1533, 0.0
    %vm1618 = vcmp.gt.f32.partialorder %v1534, 0.0
    %vm1619 = vcmp.gt.f32.partialorder %v1535, 0.0
    %vm1620 = vcmp.gt.f32.partialorder %v1536, 0.0
    %vm1621 = vcmp.gt.f32.partialorder %v1537, 0.0
    %vm1622 = vcmp.gt.f32.partialorder %v1538, 0.0
    %vm1623 = vcmp.gt.f32.partialorder %v1539, 0.0
    %vm1624 = vcmp.gt.f32.partialorder %v1540, 0.0
    %vm1625 = vcmp.gt.f32.partialorder %v1541, 0.0
    %vm1626 = vcmp.gt.f32.partialorder %v1542, 0.0
    %vm1627 = vcmp.gt.f32.partialorder %v1543, 0.0
    %vm1628 = vcmp.gt.f32.partialorder %v1544, 0.0
    %vm1629 = vcmp.gt.f32.partialorder %v1545, 0.0
    %vm1630 = vcmp.gt.f32.partialorder %v1546, 0.0
    %vm1631 = vcmp.gt.f32.partialorder %v1547, 0.0
    %vm1632 = vcmp.gt.f32.partialorder %v1548, 0.0
    %vm1633 = vcmp.gt.f32.partialorder %v1549, 0.0
    %vm1634 = vcmp.gt.f32.partialorder %v1550, 0.0
    %vm1635 = vcmp.gt.f32.partialorder %v1551, 0.0
    %vm1636 = vcmp.gt.f32.partialorder %v1552, 0.0
    %vm1637 = vcmp.gt.f32.partialorder %v1553, 0.0
    %vm1638 = vcmp.gt.f32.partialorder %v1554, 0.0
    %vm1639 = vcmp.gt.f32.partialorder %v1555, 0.0
    %vm1640 = vcmp.gt.f32.partialorder %v1556, 0.0
    %vm1641 = vcmp.gt.f32.partialorder %v1557, 0.0
    %vm1642 = vcmp.gt.f32.partialorder %v1558, 0.0
    %vm1643 = vcmp.gt.f32.partialorder %v1559, 0.0
    %vm1644 = vcmp.gt.f32.partialorder %v1560, 0.0
    %vm1645 = vcmp.gt.f32.partialorder %v1561, 0.0
    %vm1646 = vcmp.gt.f32.partialorder %v1562, 0.0
    %vm1647 = vcmp.gt.f32.partialorder %v1563, 0.0
    %vm1648 = vcmp.gt.f32.partialorder %v1564, 0.0
    %vm1649 = vcmp.gt.f32.partialorder %v1565, 0.0
    %vm1650 = vcmp.gt.f32.partialorder %v1566, 0.0
    %vm1651 = vcmp.gt.f32.partialorder %v1567, 0.0
    %vm1652 = vcmp.gt.f32.partialorder %v1568, 0.0
    %vm1653 = vcmp.gt.f32.partialorder %v1569, 0.0
    %vm1654 = vcmp.gt.f32.partialorder %v1570, 0.0
    %vm1655 = vcmp.gt.f32.partialorder %v1571, 0.0
    %vm1656 = vcmp.gt.f32.partialorder %v1572, 0.0
    %vm1657 = vcmp.gt.f32.partialorder %v1573, 0.0
    %vm1658 = vcmp.gt.f32.partialorder %v1574, 0.0
    %vm1659 = vcmp.gt.f32.partialorder %v1575, 0.0
    %vm1660 = vcmp.gt.f32.partialorder %v1576, 0.0
    %vm1661 = vcmp.gt.f32.partialorder %v1577, 0.0
    %vm1662 = vcmp.gt.f32.partialorder %v1578, 0.0
    %vm1663 = vcmp.gt.f32.partialorder %v1579, 0.0
    %vm1664 = vcmp.gt.f32.partialorder %v1580, 0.0
    %vm1665 = vcmp.gt.f32.partialorder %v1581, 0.0
    %vm1666 = vcmp.gt.f32.partialorder %v1582, 0.0
    %vm1667 = vcmp.gt.f32.partialorder %v1583, 0.0
    %vm1668 = vcmp.gt.f32.partialorder %v1584, 0.0
    %vm1669 = vcmp.gt.f32.partialorder %v1585, 0.0
    %vm1670 = vcmp.gt.f32.partialorder %v1586, 0.0
    %vm1671 = vcmp.gt.f32.partialorder %v1587, 0.0
    %vm1672 = vcmp.gt.f32.partialorder %v1588, 0.0
    %vm1673 = vcmp.gt.f32.partialorder %v1589, 0.0
    %vm1674 = vcmp.gt.f32.partialorder %v1590, 0.0
    %vm1675 = vcmp.gt.f32.partialorder %v1591, 0.0
    %v1676 = vmul.f32 %v1508, 0.05
    %v1677 = vmul.f32 %v1509, 0.05
    %v1678 = vmul.f32 %v1510, 0.05
    %v1679 = vmul.f32 %v1511, 0.05
    %v1680 = vmul.f32 %v1512, 0.05
    %v1681 = vmul.f32 %v1513, 0.05
    %v1682 = vmul.f32 %v1514, 0.05
    %v1683 = vmul.f32 %v1515, 0.05
    %v1684 = vmul.f32 %v1516, 0.05
    %v1685 = vmul.f32 %v1517, 0.05
    %v1686 = vmul.f32 %v1518, 0.05
    %v1687 = vmul.f32 %v1519, 0.05
    %v1688 = vmul.f32 %v1520, 0.05
    %v1689 = vmul.f32 %v1521, 0.05
    %v1690 = vmul.f32 %v1522, 0.05
    %v1691 = vmul.f32 %v1523, 0.05
    %v1692 = vmul.f32 %v1524, 0.05
    %v1693 = vmul.f32 %v1525, 0.05
    %v1694 = vmul.f32 %v1526, 0.05
    %v1695 = vmul.f32 %v1527, 0.05
    %v1696 = vmul.f32 %v1528, 0.05
    %v1697 = vmul.f32 %v1529, 0.05
    %v1698 = vmul.f32 %v1530, 0.05
    %v1699 = vmul.f32 %v1531, 0.05
    %v1700 = vmul.f32 %v1532, 0.05
    %v1701 = vmul.f32 %v1533, 0.05
    %v1702 = vmul.f32 %v1534, 0.05
    %v1703 = vmul.f32 %v1535, 0.05
    %v1704 = vmul.f32 %v1536, 0.05
    %v1705 = vmul.f32 %v1537, 0.05
    %v1706 = vmul.f32 %v1538, 0.05
    %v1707 = vmul.f32 %v1539, 0.05
    %v1708 = vmul.f32 %v1540, 0.05
    %v1709 = vmul.f32 %v1541, 0.05
    %v1710 = vmul.f32 %v1542, 0.05
    %v1711 = vmul.f32 %v1543, 0.05
    %v1712 = vmul.f32 %v1544, 0.05
    %v1713 = vmul.f32 %v1545, 0.05
    %v1714 = vmul.f32 %v1546, 0.05
    %v1715 = vmul.f32 %v1547, 0.05
    %v1716 = vmul.f32 %v1548, 0.05
    %v1717 = vmul.f32 %v1549, 0.05
    %v1718 = vmul.f32 %v1550, 0.05
    %v1719 = vmul.f32 %v1551, 0.05
    %v1720 = vmul.f32 %v1552, 0.05
    %v1721 = vmul.f32 %v1553, 0.05
    %v1722 = vmul.f32 %v1554, 0.05
    %v1723 = vmul.f32 %v1555, 0.05
    %v1724 = vmul.f32 %v1556, 0.05
    %v1725 = vmul.f32 %v1557, 0.05
    %v1726 = vmul.f32 %v1558, 0.05
    %v1727 = vmul.f32 %v1559, 0.05
    %v1728 = vmul.f32 %v1560, 0.05
    %v1729 = vmul.f32 %v1561, 0.05
    %v1730 = vmul.f32 %v1562, 0.05
    %v1731 = vmul.f32 %v1563, 0.05
    %v1732 = vmul.f32 %v1564, 0.05
    %v1733 = vmul.f32 %v1565, 0.05
    %v1734 = vmul.f32 %v1566, 0.05
    %v1735 = vmul.f32 %v1567, 0.05
    %v1736 = vmul.f32 %v1568, 0.05
    %v1737 = vmul.f32 %v1569, 0.05
    %v1738 = vmul.f32 %v1570, 0.05
    %v1739 = vmul.f32 %v1571, 0.05
    %v1740 = vmul.f32 %v1572, 0.05
    %v1741 = vmul.f32 %v1573, 0.05
    %v1742 = vmul.f32 %v1574, 0.05
    %v1743 = vmul.f32 %v1575, 0.05
    %v1744 = vmul.f32 %v1576, 0.05
    %v1745 = vmul.f32 %v1577, 0.05
    %v1746 = vmul.f32 %v1578, 0.05
    %v1747 = vmul.f32 %v1579, 0.05
    %v1748 = vmul.f32 %v1580, 0.05
    %v1749 = vmul.f32 %v1581, 0.05
    %v1750 = vmul.f32 %v1582, 0.05
    %v1751 = vmul.f32 %v1583, 0.05
    %v1752 = vmul.f32 %v1584, 0.05
    %v1753 = vmul.f32 %v1585, 0.05
    %v1754 = vmul.f32 %v1586, 0.05
    %v1755 = vmul.f32 %v1587, 0.05
    %v1756 = vmul.f32 %v1588, 0.05
    %v1757 = vmul.f32 %v1589, 0.05
    %v1758 = vmul.f32 %v1590, 0.05
    %v1759 = vmul.f32 %v1591, 0.05
    %v1760 = vsel %vm1592, %v1508, %v1676
    %v1761 = vsel %vm1593, %v1509, %v1677
    %v1762 = vsel %vm1594, %v1510, %v1678
    %v1763 = vsel %vm1595, %v1511, %v1679
    %v1764 = vsel %vm1596, %v1512, %v1680
    %v1765 = vsel %vm1597, %v1513, %v1681
    %v1766 = vsel %vm1598, %v1514, %v1682
    %v1767 = vsel %vm1599, %v1515, %v1683
    %v1768 = vsel %vm1600, %v1516, %v1684
    %v1769 = vsel %vm1601, %v1517, %v1685
    %v1770 = vsel %vm1602, %v1518, %v1686
    %v1771 = vsel %vm1603, %v1519, %v1687
    %v1772 = vsel %vm1604, %v1520, %v1688
    %v1773 = vsel %vm1605, %v1521, %v1689
    %v1774 = vsel %vm1606, %v1522, %v1690
    %v1775 = vsel %vm1607, %v1523, %v1691
    %v1776 = vsel %vm1608, %v1524, %v1692
    %v1777 = vsel %vm1609, %v1525, %v1693
    %v1778 = vsel %vm1610, %v1526, %v1694
    %v1779 = vsel %vm1611, %v1527, %v1695
    %v1780 = vsel %vm1612, %v1528, %v1696
    %v1781 = vsel %vm1613, %v1529, %v1697
    %v1782 = vsel %vm1614, %v1530, %v1698
    %v1783 = vsel %vm1615, %v1531, %v1699
    %v1784 = vsel %vm1616, %v1532, %v1700
    %v1785 = vsel %vm1617, %v1533, %v1701
    %v1786 = vsel %vm1618, %v1534, %v1702
    %v1787 = vsel %vm1619, %v1535, %v1703
    %v1788 = vsel %vm1620, %v1536, %v1704
    %v1789 = vsel %vm1621, %v1537, %v1705
    %v1790 = vsel %vm1622, %v1538, %v1706
    %v1791 = vsel %vm1623, %v1539, %v1707
    %v1792 = vsel %vm1624, %v1540, %v1708
    %v1793 = vsel %vm1625, %v1541, %v1709
    %v1794 = vsel %vm1626, %v1542, %v1710
    %v1795 = vsel %vm1627, %v1543, %v1711
    %v1796 = vsel %vm1628, %v1544, %v1712
    %v1797 = vsel %vm1629, %v1545, %v1713
    %v1798 = vsel %vm1630, %v1546, %v1714
    %v1799 = vsel %vm1631, %v1547, %v1715
    %v1800 = vsel %vm1632, %v1548, %v1716
    %v1801 = vsel %vm1633, %v1549, %v1717
    %v1802 = vsel %vm1634, %v1550, %v1718
    %v1803 = vsel %vm1635, %v1551, %v1719
    %v1804 = vsel %vm1636, %v1552, %v1720
    %v1805 = vsel %vm1637, %v1553, %v1721
    %v1806 = vsel %vm1638, %v1554, %v1722
    %v1807 = vsel %vm1639, %v1555, %v1723
    %v1808 = vsel %vm1640, %v1556, %v1724
    %v1809 = vsel %vm1641, %v1557, %v1725
    %v1810 = vsel %vm1642, %v1558, %v1726
    %v1811 = vsel %vm1643, %v1559, %v1727
    %v1812 = vsel %vm1644, %v1560, %v1728
    %v1813 = vsel %vm1645, %v1561, %v1729
    %v1814 = vsel %vm1646, %v1562, %v1730
    %v1815 = vsel %vm1647, %v1563, %v1731
    %v1816 = vsel %vm1648, %v1564, %v1732
    %v1817 = vsel %vm1649, %v1565, %v1733
    %v1818 = vsel %vm1650, %v1566, %v1734
    %v1819 = vsel %vm1651, %v1567, %v1735
    %v1820 = vsel %vm1652, %v1568, %v1736
    %v1821 = vsel %vm1653, %v1569, %v1737
    %v1822 = vsel %vm1654, %v1570, %v1738
    %v1823 = vsel %vm1655, %v1571, %v1739
    %v1824 = vsel %vm1656, %v1572, %v1740
    %v1825 = vsel %vm1657, %v1573, %v1741
    %v1826 = vsel %vm1658, %v1574, %v1742
    %v1827 = vsel %vm1659, %v1575, %v1743
    %v1828 = vsel %vm1660, %v1576, %v1744
    %v1829 = vsel %vm1661, %v1577, %v1745
    %v1830 = vsel %vm1662, %v1578, %v1746
    %v1831 = vsel %vm1663, %v1579, %v1747
    %v1832 = vsel %vm1664, %v1580, %v1748
    %v1833 = vsel %vm1665, %v1581, %v1749
    %v1834 = vsel %vm1666, %v1582, %v1750
    %v1835 = vsel %vm1667, %v1583, %v1751
    %v1836 = vsel %vm1668, %v1584, %v1752
    %v1837 = vsel %vm1669, %v1585, %v1753
    %v1838 = vsel %vm1670, %v1586, %v1754
    %v1839 = vsel %vm1671, %v1587, %v1755
    %v1840 = vsel %vm1672, %v1588, %v1756
    %v1841 = vsel %vm1673, %v1589, %v1757
    %v1842 = vsel %vm1674, %v1590, %v1758
    %v1843 = vsel %vm1675, %v1591, %v1759
    %1844 = vst.msk [vmem:[%s5] sm:$0xff] %vm892, %v1760
    %1845 = vst.msk [vmem:[%s5 + $0x8] sm:$0xff] %vm892, %v1761
    %1846 = vst.msk [vmem:[%s5 + $0x10] sm:$0xff] %vm892, %v1762
    %1847 = vst.msk [vmem:[%s5 + $0x18] sm:$0xff] %vm892, %v1763
    %1848 = vst.msk [vmem:[%s5 + $0x20] sm:$0xff] %vm892, %v1764
    %1849 = vst.msk [vmem:[%s5 + $0x28] sm:$0xff] %vm892, %v1765
    %1850 = vst.msk [vmem:[%s5 + $0x30] sm:$0xff] %vm892, %v1766
    %1851 = vst.msk [vmem:[%s5 + $0x38] sm:$0xff] %vm892, %v1767
    %1852 = vst.msk [vmem:[%s5 + $0x40] sm:$0xff] %vm892, %v1768
    %1853 = vst.msk [vmem:[%s5 + $0x48] sm:$0xff] %vm892, %v1769
    %1854 = vst.msk [vmem:[%s5 + $0x50] sm:$0xff] %vm892, %v1770
    %1855 = vst.msk [vmem:[%s5 + $0x58] sm:$0xff] %vm892, %v1771
    %1856 = vst.msk [vmem:[%s5 + $0x60] sm:$0xff] %vm892, %v1772
    %1857 = vst.msk [vmem:[%s5 + $0x68] sm:$0xff] %vm892, %v1773
    %1858 = vst.msk [vmem:[%s5 + $0x70] sm:$0xff] %vm892, %v1774
    %1859 = vst.msk [vmem:[%s5 + $0x78] sm:$0xff] %vm892, %v1775
    %1860 = vst.msk [vmem:[%s5 + $0x80] sm:$0xff] %vm892, %v1776
    %1861 = vst.msk [vmem:[%s5 + $0x88] sm:$0xff] %vm892, %v1777
    %1862 = vst.msk [vmem:[%s5 + $0x90] sm:$0xff] %vm892, %v1778
    %1863 = vst.msk [vmem:[%s5 + $0x98] sm:$0xff] %vm892, %v1779
    %1864 = vst.msk [vmem:[%s5 + $0xa0] sm:$0xff] %vm892, %v1780
    %1865 = vst.msk [vmem:[%s5 + $0xa8] sm:$0xff] %vm892, %v1781
    %1866 = vst.msk [vmem:[%s5 + $0xb0] sm:$0xff] %vm892, %v1782
    %1867 = vst.msk [vmem:[%s5 + $0xb8] sm:$0xff] %vm892, %v1783
    %1868 = vst.msk [vmem:[%s5 + $0xc0] sm:$0xff] %vm892, %v1784
    %1869 = vst.msk [vmem:[%s5 + $0xc8] sm:$0xff] %vm892, %v1785
    %1870 = vst.msk [vmem:[%s5 + $0xd0] sm:$0xff] %vm892, %v1786
    %1871 = vst.msk [vmem:[%s5 + $0xd8] sm:$0xff] %vm892, %v1787
    %1872 = vst.msk [vmem:[%s5 + $0xe0] sm:$0xff] %vm892, %v1788
    %1873 = vst.msk [vmem:[%s5 + $0xe8] sm:$0xff] %vm892, %v1789
    %1874 = vst.msk [vmem:[%s5 + $0xf0] sm:$0xff] %vm892, %v1790
    %1875 = vst.msk [vmem:[%s5 + $0xf8] sm:$0xff] %vm892, %v1791
    %1876 = vst.msk [vmem:[%s5 + $0x100] sm:$0xff] %vm892, %v1792
    %1877 = vst.msk [vmem:[%s5 + $0x108] sm:$0xff] %vm892, %v1793
    %1878 = vst.msk [vmem:[%s5 + $0x110] sm:$0xff] %vm892, %v1794
    %1879 = vst.msk [vmem:[%s5 + $0x118] sm:$0xff] %vm892, %v1795
    %1880 = vst.msk [vmem:[%s5 + $0x120] sm:$0xff] %vm892, %v1796
    %1881 = vst.msk [vmem:[%s5 + $0x128] sm:$0xff] %vm892, %v1797
    %1882 = vst.msk [vmem:[%s5 + $0x130] sm:$0xff] %vm892, %v1798
    %1883 = vst.msk [vmem:[%s5 + $0x138] sm:$0xff] %vm892, %v1799
    %1884 = vst.msk [vmem:[%s5 + $0x140] sm:$0xff] %vm892, %v1800
    %1885 = vst.msk [vmem:[%s5 + $0x148] sm:$0xff] %vm892, %v1801
    %1886 = vst.msk [vmem:[%s5 + $0x150] sm:$0xff] %vm892, %v1802
    %1887 = vst.msk [vmem:[%s5 + $0x158] sm:$0xff] %vm892, %v1803
    %1888 = vst.msk [vmem:[%s5 + $0x160] sm:$0xff] %vm892, %v1804
    %1889 = vst.msk [vmem:[%s5 + $0x168] sm:$0xff] %vm892, %v1805
    %1890 = vst.msk [vmem:[%s5 + $0x170] sm:$0xff] %vm892, %v1806
    %1891 = vst.msk [vmem:[%s5 + $0x178] sm:$0xff] %vm892, %v1807
    %1892 = vst.msk [vmem:[%s5 + $0x180] sm:$0xff] %vm892, %v1808
    %1893 = vst.msk [vmem:[%s5 + $0x188] sm:$0xff] %vm892, %v1809
    %1894 = vst.msk [vmem:[%s5 + $0x190] sm:$0xff] %vm892, %v1810
    %1895 = vst.msk [vmem:[%s5 + $0x198] sm:$0xff] %vm892, %v1811
    %1896 = vst.msk [vmem:[%s5 + $0x1a0] sm:$0xff] %vm892, %v1812
    %1897 = vst.msk [vmem:[%s5 + $0x1a8] sm:$0xff] %vm892, %v1813
    %1898 = vst.msk [vmem:[%s5 + $0x1b0] sm:$0xff] %vm892, %v1814
    %1899 = vst.msk [vmem:[%s5 + $0x1b8] sm:$0xff] %vm892, %v1815
    %1900 = vst.msk [vmem:[%s5 + $0x1c0] sm:$0xff] %vm892, %v1816
    %1901 = vst.msk [vmem:[%s5 + $0x1c8] sm:$0xff] %vm892, %v1817
    %1902 = vst.msk [vmem:[%s5 + $0x1d0] sm:$0xff] %vm892, %v1818
    %1903 = vst.msk [vmem:[%s5 + $0x1d8] sm:$0xff] %vm892, %v1819
    %1904 = vst.msk [vmem:[%s5 + $0x1e0] sm:$0xff] %vm892, %v1820
    %1905 = vst.msk [vmem:[%s5 + $0x1e8] sm:$0xff] %vm892, %v1821
    %1906 = vst.msk [vmem:[%s5 + $0x1f0] sm:$0xff] %vm892, %v1822
    %1907 = vst.msk [vmem:[%s5 + $0x1f8] sm:$0xff] %vm892, %v1823
    %1908 = vst.msk [vmem:[%s5 + $0x200] sm:$0xff] %vm892, %v1824
    %1909 = vst.msk [vmem:[%s5 + $0x208] sm:$0xff] %vm892, %v1825
    %1910 = vst.msk [vmem:[%s5 + $0x210] sm:$0xff] %vm892, %v1826
    %1911 = vst.msk [vmem:[%s5 + $0x218] sm:$0xff] %vm892, %v1827
    %1912 = vst.msk [vmem:[%s5 + $0x220] sm:$0xff] %vm892, %v1828
    %1913 = vst.msk [vmem:[%s5 + $0x228] sm:$0xff] %vm892, %v1829
    %1914 = vst.msk [vmem:[%s5 + $0x230] sm:$0xff] %vm892, %v1830
    %1915 = vst.msk [vmem:[%s5 + $0x238] sm:$0xff] %vm892, %v1831
    %1916 = vst.msk [vmem:[%s5 + $0x240] sm:$0xff] %vm892, %v1832
    %1917 = vst.msk [vmem:[%s5 + $0x248] sm:$0xff] %vm892, %v1833
    %1918 = vst.msk [vmem:[%s5 + $0x250] sm:$0xff] %vm892, %v1834
    %1919 = vst.msk [vmem:[%s5 + $0x258] sm:$0xff] %vm892, %v1835
    %1920 = vst.msk [vmem:[%s5 + $0x260] sm:$0xff] %vm892, %v1836
    %1921 = vst.msk [vmem:[%s5 + $0x268] sm:$0xff] %vm892, %v1837
    %1922 = vst.msk [vmem:[%s5 + $0x270] sm:$0xff] %vm892, %v1838
    %1923 = vst.msk [vmem:[%s5 + $0x278] sm:$0xff] %vm892, %v1839
    %1924 = vst.msk [vmem:[%s5 + $0x280] sm:$0xff] %vm892, %v1840
    %1925 = vst.msk [vmem:[%s5 + $0x288] sm:$0xff] %vm892, %v1841
    %1926 = vst.msk [vmem:[%s5 + $0x290] sm:$0xff] %vm892, %v1842
    %1927 = vst.msk [vmem:[%s5 + $0x298] sm:$0xff] %vm892, %v1843
    // Predicated region
    $region34: #{keynet_forward.5} parent=1 // pred_check
      _
    $region35: #{keynet_forward.5} parent=1 // pred_check_branch
      %1929 = sbr.rel (0) target = $region37
    $region36: #{keynet_forward.5} parent=1 // pred_region
      _
    $region37: #{keynet_forward.5} parent=1 // pred_fallthru
      _
    // Predicated region
    $region38: #{keynet_forward.5} parent=1 // pred_check
      _
    $region39: #{keynet_forward.5} parent=1 // pred_check_branch
      %1931 = sbr.rel (0) target = $region41
    $region40: #{keynet_forward.5} parent=1 // pred_region
      _
    $region41: #{keynet_forward.5} parent=1 // pred_fallthru
      _
    %1932 = vsyncpa [#allocation3], 1
    %1933 = vsyncpa [#allocation5], 1

// kernel: keynet_forward.6
$region0: #{keynet_forward.6}
  #allocation0 [shape = 'u32[]', space=smem, size = 0x4, offset = 0x4, fixed_abs, tag = 'smem constant byte address 0x4 - core index']
  #allocation1 [shape = 'u32[144,128]{1,0:T(1,128)}', space=vmem, size = 0x12000, scoped, tag = 'internal scratch']
  %s0 = inlined_call_operand.vmem [shape: f32[160,576], index: 0, kind: input, shape index: {}]
  %s1 = inlined_call_operand.vmem [shape: f32[576,64], index: 1, kind: input, shape index: {}]
  %s2 = inlined_call_operand.vmem [shape: f32[1,64], index: 2, kind: input, shape index: {}]
  %s3 = inlined_call_operand.vmem [shape: f32[1,64], index: 3, kind: input, shape index: {}]
  %s4 = inlined_call_operand.vmem [shape: f32[1,64], index: 4, kind: input, shape index: {}]
  %s5 = inlined_call_operand.vmem [shape: f32[64,256], index: 5, kind: input, shape index: {}]
  %s6 = inlined_call_operand.vmem [shape: f32[1,256], index: 6, kind: input, shape index: {}]
  %s7 = inlined_call_operand.vmem [shape: f32[160,256], index: 7, kind: output, shape index: {}]
  %s8 = sld [smem:[#allocation0]]
  $region38: #{keynet_forward.6} parent=0
    _
  %s10 = ssub.s32 1, %s8
  %s11 = scalar_select 0, %s10, %s8
  // Predicated region
  $region2: #{keynet_forward.6} parent=0 // pred_check
    _
  $region3: #{keynet_forward.6} parent=0 // pred_check_branch
    %13 = sbr.rel (0) target = $region5
  $region4: #{keynet_forward.6} parent=0 // pred_region
    _
  $region5: #{keynet_forward.6} parent=0 // pred_fallthru
    _
  // Predicated region
  $region6: #{keynet_forward.6} parent=0 // pred_check
    _
  $region7: #{keynet_forward.6} parent=0 // pred_check_branch
    %15 = sbr.rel (0) target = $region9
  $region8: #{keynet_forward.6} parent=0 // pred_region
    _
  $region9: #{keynet_forward.6} parent=0 // pred_fallthru
    _
  // Predicated region
  $region10: #{keynet_forward.6} parent=0 // pred_check
    _
  $region11: #{keynet_forward.6} parent=0 // pred_check_branch
    %17 = sbr.rel (0) target = $region13
  $region12: #{keynet_forward.6} parent=0 // pred_region
    _
  $region13: #{keynet_forward.6} parent=0 // pred_fallthru
    _
  // Predicated region
  $region14: #{keynet_forward.6} parent=0 // pred_check
    _
  $region15: #{keynet_forward.6} parent=0 // pred_check_branch
    %19 = sbr.rel (0) target = $region17
  $region16: #{keynet_forward.6} parent=0 // pred_region
    _
  $region17: #{keynet_forward.6} parent=0 // pred_fallthru
    _
  // Predicated region
  $region18: #{keynet_forward.6} parent=0 // pred_check
    _
  $region19: #{keynet_forward.6} parent=0 // pred_check_branch
    %21 = sbr.rel (0) target = $region21
  $region20: #{keynet_forward.6} parent=0 // pred_region
    _
  $region21: #{keynet_forward.6} parent=0 // pred_fallthru
    _
  // Predicated region
  $region22: #{keynet_forward.6} parent=0 // pred_check
    _
  $region23: #{keynet_forward.6} parent=0 // pred_check_branch
    %23 = sbr.rel (0) target = $region25
  $region24: #{keynet_forward.6} parent=0 // pred_region
    _
  $region25: #{keynet_forward.6} parent=0 // pred_fallthru
    _
  // Predicated region
  $region26: #{keynet_forward.6} parent=0 // pred_check
    _
  $region27: #{keynet_forward.6} parent=0 // pred_check_branch
    %25 = sbr.rel (0) target = $region29
  $region28: #{keynet_forward.6} parent=0 // pred_region
    _
  $region29: #{keynet_forward.6} parent=0 // pred_fallthru
    _
  %v26 = vld [vmem:[%s0] sm:$0xff]
  %v27 = vld [vmem:[%s0 + $0x8] sm:$0xff]
  %v28 = vld [vmem:[%s0 + $0x10] sm:$0xff]
  %v29 = vld [vmem:[%s0 + $0x18] sm:$0xff]
  %v30 = vld [vmem:[%s0 + $0x20] sm:$0xff]
  %v31 = vld [vmem:[%s0 + $0x28] sm:$0xff]
  %v32 = vld [vmem:[%s0 + $0x30] sm:$0xff]
  %v33 = vld [vmem:[%s0 + $0x38] sm:$0xff]
  %v34 = vld [vmem:[%s0 + $0x40] sm:$0xff]
  %v35 = vld [vmem:[%s0 + $0x48] sm:$0xff]
  %v36 = vld [vmem:[%s0 + $0x50] sm:$0xff]
  %v37 = vld [vmem:[%s0 + $0x58] sm:$0xff]
  %v38 = vld [vmem:[%s0 + $0x60] sm:$0xff]
  %v39 = vld [vmem:[%s0 + $0x68] sm:$0xff]
  %v40 = vld [vmem:[%s0 + $0x70] sm:$0xff]
  %v41 = vld [vmem:[%s0 + $0x78] sm:$0xff]
  %v42 = vld [vmem:[%s0 + $0x80] sm:$0xff]
  %v43 = vld [vmem:[%s0 + $0x88] sm:$0xff]
  %v44 = vld [vmem:[%s0 + $0x90] sm:$0xff]
  %v45 = vld [vmem:[%s0 + $0x98] sm:$0xff]
  %v46 = vld [vmem:[%s0 + $0xa0] sm:$0xff]
  %v47 = vld [vmem:[%s0 + $0xa8] sm:$0xff]
  %v48 = vld [vmem:[%s0 + $0xb0] sm:$0xff]
  %v49 = vld [vmem:[%s0 + $0xb8] sm:$0xff]
  %v50 = vld [vmem:[%s0 + $0xc0] sm:$0xff]
  %v51 = vld [vmem:[%s0 + $0xc8] sm:$0xff]
  %v52 = vld [vmem:[%s0 + $0xd0] sm:$0xff]
  %v53 = vld [vmem:[%s0 + $0xd8] sm:$0xff]
  %v54 = vld [vmem:[%s0 + $0xe0] sm:$0xff]
  %v55 = vld [vmem:[%s0 + $0xe8] sm:$0xff]
  %v56 = vld [vmem:[%s0 + $0xf0] sm:$0xff]
  %v57 = vld [vmem:[%s0 + $0xf8] sm:$0xff]
  %v58 = vld [vmem:[%s0 + $0x100] sm:$0xff]
  %v59 = vld [vmem:[%s0 + $0x108] sm:$0xff]
  %v60 = vld [vmem:[%s0 + $0x110] sm:$0xff]
  %v61 = vld [vmem:[%s0 + $0x118] sm:$0xff]
  %v62 = vld [vmem:[%s0 + $0x120] sm:$0xff]
  %v63 = vld [vmem:[%s0 + $0x128] sm:$0xff]
  %v64 = vld [vmem:[%s0 + $0x130] sm:$0xff]
  %v65 = vld [vmem:[%s0 + $0x138] sm:$0xff]
  %v66 = vld [vmem:[%s0 + $0x140] sm:$0xff]
  %v67 = vld [vmem:[%s0 + $0x148] sm:$0xff]
  %v68 = vld [vmem:[%s0 + $0x150] sm:$0xff]
  %v69 = vld [vmem:[%s0 + $0x158] sm:$0xff]
  %v70 = vld [vmem:[%s0 + $0x160] sm:$0xff]
  %v71 = vld [vmem:[%s0 + $0x168] sm:$0xff]
  %v72 = vld [vmem:[%s0 + $0x170] sm:$0xff]
  %v73 = vld [vmem:[%s0 + $0x178] sm:$0xff]
  %v74 = vld [vmem:[%s0 + $0x180] sm:$0xff]
  %v75 = vld [vmem:[%s0 + $0x188] sm:$0xff]
  %v76 = vld [vmem:[%s0 + $0x190] sm:$0xff]
  %v77 = vld [vmem:[%s0 + $0x198] sm:$0xff]
  %v78 = vld [vmem:[%s0 + $0x1a0] sm:$0xff]
  %v79 = vld [vmem:[%s0 + $0x1a8] sm:$0xff]
  %v80 = vld [vmem:[%s0 + $0x1b0] sm:$0xff]
  %v81 = vld [vmem:[%s0 + $0x1b8] sm:$0xff]
  %v82 = vld [vmem:[%s0 + $0x1c0] sm:$0xff]
  %v83 = vld [vmem:[%s0 + $0x1c8] sm:$0xff]
  %v84 = vld [vmem:[%s0 + $0x1d0] sm:$0xff]
  %v85 = vld [vmem:[%s0 + $0x1d8] sm:$0xff]
  %v86 = vld [vmem:[%s0 + $0x1e0] sm:$0xff]
  %v87 = vld [vmem:[%s0 + $0x1e8] sm:$0xff]
  %v88 = vld [vmem:[%s0 + $0x1f0] sm:$0xff]
  %v89 = vld [vmem:[%s0 + $0x1f8] sm:$0xff]
  %v90 = vld [vmem:[%s0 + $0x200] sm:$0xff]
  %v91 = vld [vmem:[%s0 + $0x208] sm:$0xff]
  %v92 = vld [vmem:[%s0 + $0x210] sm:$0xff]
  %v93 = vld [vmem:[%s0 + $0x218] sm:$0xff]
  %v94 = vld [vmem:[%s0 + $0x220] sm:$0xff]
  %v95 = vld [vmem:[%s0 + $0x228] sm:$0xff]
  %v96 = vld [vmem:[%s0 + $0x230] sm:$0xff]
  %v97 = vld [vmem:[%s0 + $0x238] sm:$0xff]
  %v98 = vld [vmem:[%s0 + $0x240] sm:$0xff]
  %v99 = vld [vmem:[%s0 + $0x248] sm:$0xff]
  %v100 = vld [vmem:[%s0 + $0x250] sm:$0xff]
  %v101 = vld [vmem:[%s0 + $0x258] sm:$0xff]
  %v102 = vld [vmem:[%s0 + $0x260] sm:$0xff]
  %v103 = vld [vmem:[%s0 + $0x268] sm:$0xff]
  %v104 = vld [vmem:[%s0 + $0x270] sm:$0xff]
  %v105 = vld [vmem:[%s0 + $0x278] sm:$0xff]
  %v106 = vld [vmem:[%s0 + $0x280] sm:$0xff]
  %v107 = vld [vmem:[%s0 + $0x288] sm:$0xff]
  %v108 = vld [vmem:[%s0 + $0x290] sm:$0xff]
  %v109 = vld [vmem:[%s0 + $0x298] sm:$0xff]
  %v110 = vld [vmem:[%s0 + $0x2a0] sm:$0xff]
  %v111 = vld [vmem:[%s0 + $0x2a8] sm:$0xff]
  %v112 = vld [vmem:[%s0 + $0x2b0] sm:$0xff]
  %v113 = vld [vmem:[%s0 + $0x2b8] sm:$0xff]
  %v114 = vld [vmem:[%s0 + $0x2c0] sm:$0xff]
  %v115 = vld [vmem:[%s0 + $0x2c8] sm:$0xff]
  %v116 = vld [vmem:[%s0 + $0x2d0] sm:$0xff]
  %v117 = vld [vmem:[%s0 + $0x2d8] sm:$0xff]
  %v118 = vld [vmem:[%s0 + $0x2e0] sm:$0xff]
  %v119 = vld [vmem:[%s0 + $0x2e8] sm:$0xff]
  %v120 = vld [vmem:[%s0 + $0x2f0] sm:$0xff]
  %v121 = vld [vmem:[%s0 + $0x2f8] sm:$0xff]
  %v122 = vld [vmem:[%s0 + $0x300] sm:$0xff]
  %v123 = vld [vmem:[%s0 + $0x308] sm:$0xff]
  %v124 = vld [vmem:[%s0 + $0x310] sm:$0xff]
  %v125 = vld [vmem:[%s0 + $0x318] sm:$0xff]
  %v126 = vld [vmem:[%s1] sm:$0xff]
  %v127 = vld [vmem:[%s1 + $0x8] sm:$0xff]
  %v128 = vld [vmem:[%s1 + $0x10] sm:$0xff]
  %v129 = vld [vmem:[%s1 + $0x18] sm:$0xff]
  %v130 = vld [vmem:[%s1 + $0x20] sm:$0xff]
  %v131 = vld [vmem:[%s1 + $0x28] sm:$0xff]
  %v132 = vld [vmem:[%s1 + $0x30] sm:$0xff]
  %v133 = vld [vmem:[%s1 + $0x38] sm:$0xff]
  %v134 = vld [vmem:[%s1 + $0x40] sm:$0xff]
  %v135 = vld [vmem:[%s1 + $0x48] sm:$0xff]
  %v136 = vld [vmem:[%s1 + $0x50] sm:$0xff]
  %v137 = vld [vmem:[%s1 + $0x58] sm:$0xff]
  %v138 = vld [vmem:[%s1 + $0x60] sm:$0xff]
  %v139 = vld [vmem:[%s1 + $0x68] sm:$0xff]
  %v140 = vld [vmem:[%s1 + $0x70] sm:$0xff]
  %v141 = vld [vmem:[%s1 + $0x78] sm:$0xff]
  %v142 = vld [vmem:[%s1 + $0x80] sm:$0xff]
  %v143 = vld [vmem:[%s1 + $0x88] sm:$0xff]
  %v144 = vld [vmem:[%s1 + $0x90] sm:$0xff]
  %v145 = vld [vmem:[%s1 + $0x98] sm:$0xff]
  %v146 = vld [vmem:[%s1 + $0xa0] sm:$0xff]
  %v147 = vld [vmem:[%s1 + $0xa8] sm:$0xff]
  %v148 = vld [vmem:[%s1 + $0xb0] sm:$0xff]
  %v149 = vld [vmem:[%s1 + $0xb8] sm:$0xff]
  %v150 = vld [vmem:[%s1 + $0xc0] sm:$0xff]
  %v151 = vld [vmem:[%s1 + $0xc8] sm:$0xff]
  %v152 = vld [vmem:[%s1 + $0xd0] sm:$0xff]
  %v153 = vld [vmem:[%s1 + $0xd8] sm:$0xff]
  %v154 = vld [vmem:[%s1 + $0xe0] sm:$0xff]
  %v155 = vld [vmem:[%s1 + $0xe8] sm:$0xff]
  %v156 = vld [vmem:[%s1 + $0xf0] sm:$0xff]
  %v157 = vld [vmem:[%s1 + $0xf8] sm:$0xff]
  %v158 = vld [vmem:[%s1 + $0x100] sm:$0xff]
  %v159 = vld [vmem:[%s1 + $0x108] sm:$0xff]
  %v160 = vld [vmem:[%s1 + $0x110] sm:$0xff]
  %v161 = vld [vmem:[%s1 + $0x118] sm:$0xff]
  %v162 = vld [vmem:[%s1 + $0x120] sm:$0xff]
  %v163 = vld [vmem:[%s1 + $0x128] sm:$0xff]
  %v164 = vld [vmem:[%s1 + $0x130] sm:$0xff]
  %v165 = vld [vmem:[%s1 + $0x138] sm:$0xff]
  %v166 = vld [vmem:[%s1 + $0x140] sm:$0xff]
  %v167 = vld [vmem:[%s1 + $0x148] sm:$0xff]
  %v168 = vld [vmem:[%s1 + $0x150] sm:$0xff]
  %v169 = vld [vmem:[%s1 + $0x158] sm:$0xff]
  %v170 = vld [vmem:[%s1 + $0x160] sm:$0xff]
  %v171 = vld [vmem:[%s1 + $0x168] sm:$0xff]
  %v172 = vld [vmem:[%s1 + $0x170] sm:$0xff]
  %v173 = vld [vmem:[%s1 + $0x178] sm:$0xff]
  %v174 = vld [vmem:[%s1 + $0x180] sm:$0xff]
  %v175 = vld [vmem:[%s1 + $0x188] sm:$0xff]
  %v176 = vld [vmem:[%s1 + $0x190] sm:$0xff]
  %v177 = vld [vmem:[%s1 + $0x198] sm:$0xff]
  %v178 = vld [vmem:[%s1 + $0x1a0] sm:$0xff]
  %v179 = vld [vmem:[%s1 + $0x1a8] sm:$0xff]
  %v180 = vld [vmem:[%s1 + $0x1b0] sm:$0xff]
  %v181 = vld [vmem:[%s1 + $0x1b8] sm:$0xff]
  %v182 = vld [vmem:[%s1 + $0x1c0] sm:$0xff]
  %v183 = vld [vmem:[%s1 + $0x1c8] sm:$0xff]
  %v184 = vld [vmem:[%s1 + $0x1d0] sm:$0xff]
  %v185 = vld [vmem:[%s1 + $0x1d8] sm:$0xff]
  %v186 = vld [vmem:[%s1 + $0x1e0] sm:$0xff]
  %v187 = vld [vmem:[%s1 + $0x1e8] sm:$0xff]
  %v188 = vld [vmem:[%s1 + $0x1f0] sm:$0xff]
  %v189 = vld [vmem:[%s1 + $0x1f8] sm:$0xff]
  %v190 = vld [vmem:[%s1 + $0x200] sm:$0xff]
  %v191 = vld [vmem:[%s1 + $0x208] sm:$0xff]
  %v192 = vld [vmem:[%s1 + $0x210] sm:$0xff]
  %v193 = vld [vmem:[%s1 + $0x218] sm:$0xff]
  %v194 = vld [vmem:[%s1 + $0x220] sm:$0xff]
  %v195 = vld [vmem:[%s1 + $0x228] sm:$0xff]
  %v196 = vld [vmem:[%s1 + $0x230] sm:$0xff]
  %v197 = vld [vmem:[%s1 + $0x238] sm:$0xff]
  %v198 = vld [vmem:[%s2] sm:$0x1]
  %v200 = vlaneseq
  %v201 = vshrl.u32 %v200, 7
  %v202 = vsub.s32 0, %v201
  %v203 = vrot.slane %v198, %v202
  %vm205 = vcmask 523264
  %v207 = vsel %vm205, %v30, 0
  %v210 = vsel %vm205, %v35, 0
  %v213 = vsel %vm205, %v40, 0
  %v216 = vsel %vm205, %v45, 0
  %v219 = vsel %vm205, %v50, 0
  %v222 = vsel %vm205, %v55, 0
  %v225 = vsel %vm205, %v60, 0
  %v228 = vsel %vm205, %v65, 0
  %v231 = vsel %vm205, %v70, 0
  %v234 = vsel %vm205, %v75, 0
  %v237 = vsel %vm205, %v80, 0
  %v240 = vsel %vm205, %v85, 0
  %v243 = vsel %vm205, %v90, 0
  %v246 = vsel %vm205, %v95, 0
  %v249 = vsel %vm205, %v100, 0
  %v252 = vsel %vm205, %v105, 0
  %v255 = vsel %vm205, %v110, 0
  %v258 = vsel %vm205, %v115, 0
  %v261 = vsel %vm205, %v120, 0
  %v264 = vsel %vm205, %v125, 0
  %266 = vmatprep.subr.mxu0 0.0
  %267 = vmatpush1.msra.mxu0 %v141
  %268 = vmatprep.subr.mxu0 0.0
  %269 = vmatpush1.msra.mxu0 %v140
  %270 = vmatprep.subr.mxu0 0.0
  %271 = vmatpush1.msra.mxu0 %v139
  %272 = vmatprep.subr.mxu0 0.0
  %273 = vmatpush1.msra.mxu0 %v138
  %274 = vmatprep.subr.mxu0 0.0
  %275 = vmatpush1.msra.mxu0 %v137
  %276 = vmatprep.subr.mxu0 0.0
  %277 = vmatpush1.msra.mxu0 %v136
  %278 = vmatprep.subr.mxu0 0.0
  %279 = vmatpush1.msra.mxu0 %v135
  %280 = vmatprep.subr.mxu0 0.0
  %281 = vmatpush1.msra.mxu0 %v134
  %282 = vmatprep.subr.mxu0 0.0
  %283 = vmatpush1.msra.mxu0 %v133
  %284 = vmatprep.subr.mxu0 0.0
  %285 = vmatpush1.msra.mxu0 %v132
  %286 = vmatprep.subr.mxu0 0.0
  %287 = vmatpush1.msra.mxu0 %v131
  %288 = vmatprep.subr.mxu0 0.0
  %289 = vmatpush1.msra.mxu0 %v130
  %290 = vmatprep.subr.mxu0 0.0
  %291 = vmatpush1.msra.mxu0 %v129
  %292 = vmatprep.subr.mxu0 0.0
  %293 = vmatpush1.msra.mxu0 %v128
  %294 = vmatprep.subr.mxu0 0.0
  %295 = vmatpush1.msra.mxu0 %v127
  %296 = vmatprep.subr.mxu0 0.0
  %297 = vmatpush1.msra.mxu0 %v126
  %298 = vmatprep.subr.mxu0 0.0
  %299 = vmatpush2.msra.mxu0 %v157
  %300 = vmatprep.subr.mxu0 0.0
  %301 = vmatpush2.msra.mxu0 %v156
  %302 = vmatprep.subr.mxu0 0.0
  %303 = vmatpush2.msra.mxu0 %v155
  %304 = vmatprep.subr.mxu0 0.0
  %305 = vmatpush2.msra.mxu0 %v154
  %306 = vmatprep.subr.mxu0 0.0
  %307 = vmatpush2.msra.mxu0 %v153
  %308 = vmatprep.subr.mxu0 0.0
  %309 = vmatpush2.msra.mxu0 %v152
  %310 = vmatprep.subr.mxu0 0.0
  %311 = vmatpush2.msra.mxu0 %v151
  %312 = vmatprep.subr.mxu0 0.0
  %313 = vmatpush2.msra.mxu0 %v150
  %314 = vmatprep.subr.mxu0 0.0
  %315 = vmatpush2.msra.mxu0 %v149
  %316 = vmatprep.subr.mxu0 0.0
  %317 = vmatpush2.msra.mxu0 %v148
  %318 = vmatprep.subr.mxu0 0.0
  %319 = vmatpush2.msra.mxu0 %v147
  %320 = vmatprep.subr.mxu0 0.0
  %321 = vmatpush2.msra.mxu0 %v146
  %322 = vmatprep.subr.mxu0 0.0
  %323 = vmatpush2.msra.mxu0 %v145
  %324 = vmatprep.subr.mxu0 0.0
  %325 = vmatpush2.msra.mxu0 %v144
  %326 = vmatprep.subr.mxu0 0.0
  %327 = vmatpush2.msra.mxu0 %v143
  %328 = vmatprep.subr.mxu0 0.0
  %329 = vmatpush2.msra.mxu0 %v142
  %330 = vmatprep.mubr.f32.mxu0 %v27
  %331 = vmatmul.mubr.f32.gmra.mxu0 %v26
  %v332 = vpop.f32.mrf.mxu0
  %v333 = vadd.f32 %v203, %v332
  %v334 = vpop.f32.mrf.mxu0
  %335 = vmatprep.mubr.f32.mxu0 %v32
  %336 = vmatmul.mubr.f32.gmra.mxu0 %v31
  %v337 = vpop.f32.mrf.mxu0
  %v338 = vadd.f32 %v203, %v337
  %v339 = vpop.f32.mrf.mxu0
  %340 = vmatprep.mubr.f32.mxu0 %v37
  %341 = vmatmul.mubr.f32.gmra.mxu0 %v36
  %v342 = vpop.f32.mrf.mxu0
  %v343 = vadd.f32 %v203, %v342
  %v344 = vpop.f32.mrf.mxu0
  %345 = vmatprep.mubr.f32.mxu0 %v42
  %346 = vmatmul.mubr.f32.gmra.mxu0 %v41
  %v347 = vpop.f32.mrf.mxu0
  %v348 = vadd.f32 %v203, %v347
  %v349 = vpop.f32.mrf.mxu0
  %350 = vmatprep.mubr.f32.mxu0 %v47
  %351 = vmatmul.mubr.f32.gmra.mxu0 %v46
  %v352 = vpop.f32.mrf.mxu0
  %v353 = vadd.f32 %v203, %v352
  %v354 = vpop.f32.mrf.mxu0
  %355 = vmatprep.mubr.f32.mxu0 %v52
  %356 = vmatmul.mubr.f32.gmra.mxu0 %v51
  %v357 = vpop.f32.mrf.mxu0
  %v358 = vadd.f32 %v203, %v357
  %v359 = vpop.f32.mrf.mxu0
  %360 = vmatprep.mubr.f32.mxu0 %v57
  %361 = vmatmul.mubr.f32.gmra.mxu0 %v56
  %v362 = vpop.f32.mrf.mxu0
  %v363 = vadd.f32 %v203, %v362
  %v364 = vpop.f32.mrf.mxu0
  %365 = vmatprep.mubr.f32.mxu0 %v62
  %366 = vmatmul.mubr.f32.gmra.mxu0 %v61
  %v367 = vpop.f32.mrf.mxu0
  %v368 = vadd.f32 %v203, %v367
  %v369 = vpop.f32.mrf.mxu0
  %370 = vmatprep.mubr.f32.mxu0 %v67
  %371 = vmatmul.mubr.f32.gmra.mxu0 %v66
  %v372 = vpop.f32.mrf.mxu0
  %v373 = vadd.f32 %v203, %v372
  %v374 = vpop.f32.mrf.mxu0
  %375 = vmatprep.mubr.f32.mxu0 %v72
  %376 = vmatmul.mubr.f32.gmra.mxu0 %v71
  %v377 = vpop.f32.mrf.mxu0
  %v378 = vadd.f32 %v203, %v377
  %v379 = vpop.f32.mrf.mxu0
  %380 = vmatprep.mubr.f32.mxu0 %v77
  %381 = vmatmul.mubr.f32.gmra.mxu0 %v76
  %v382 = vpop.f32.mrf.mxu0
  %v383 = vadd.f32 %v203, %v382
  %v384 = vpop.f32.mrf.mxu0
  %385 = vmatprep.mubr.f32.mxu0 %v82
  %386 = vmatmul.mubr.f32.gmra.mxu0 %v81
  %v387 = vpop.f32.mrf.mxu0
  %v388 = vadd.f32 %v203, %v387
  %v389 = vpop.f32.mrf.mxu0
  %390 = vmatprep.mubr.f32.mxu0 %v87
  %391 = vmatmul.mubr.f32.gmra.mxu0 %v86
  %v392 = vpop.f32.mrf.mxu0
  %v393 = vadd.f32 %v203, %v392
  %v394 = vpop.f32.mrf.mxu0
  %395 = vmatprep.mubr.f32.mxu0 %v92
  %396 = vmatmul.mubr.f32.gmra.mxu0 %v91
  %v397 = vpop.f32.mrf.mxu0
  %v398 = vadd.f32 %v203, %v397
  %v399 = vpop.f32.mrf.mxu0
  %400 = vmatprep.mubr.f32.mxu0 %v97
  %401 = vmatmul.mubr.f32.gmra.mxu0 %v96
  %v402 = vpop.f32.mrf.mxu0
  %v403 = vadd.f32 %v203, %v402
  %v404 = vpop.f32.mrf.mxu0
  %405 = vmatprep.mubr.f32.mxu0 %v102
  %406 = vmatmul.mubr.f32.gmra.mxu0 %v101
  %v407 = vpop.f32.mrf.mxu0
  %v408 = vadd.f32 %v203, %v407
  %v409 = vpop.f32.mrf.mxu0
  %410 = vmatprep.mubr.f32.mxu0 %v107
  %411 = vmatmul.mubr.f32.gmra.mxu0 %v106
  %v412 = vpop.f32.mrf.mxu0
  %v413 = vadd.f32 %v203, %v412
  %v414 = vpop.f32.mrf.mxu0
  %415 = vmatprep.mubr.f32.mxu0 %v112
  %416 = vmatmul.mubr.f32.gmra.mxu0 %v111
  %v417 = vpop.f32.mrf.mxu0
  %v418 = vadd.f32 %v203, %v417
  %v419 = vpop.f32.mrf.mxu0
  %420 = vmatprep.mubr.f32.mxu0 %v117
  %421 = vmatmul.mubr.f32.gmra.mxu0 %v116
  %v422 = vpop.f32.mrf.mxu0
  %v423 = vadd.f32 %v203, %v422
  %v424 = vpop.f32.mrf.mxu0
  %425 = vmatprep.mubr.f32.mxu0 %v122
  %426 = vmatmul.mubr.f32.gmra.mxu0 %v121
  %v427 = vpop.f32.mrf.mxu0
  %v428 = vadd.f32 %v203, %v427
  %v429 = vpop.f32.mrf.mxu0
  %430 = vdwg.mxu0
  %431 = vmatprep.subr.mxu0 0.0
  %432 = vmatpush1.msra.mxu0 %v173
  %433 = vmatprep.subr.mxu0 0.0
  %434 = vmatpush1.msra.mxu0 %v172
  %435 = vmatprep.subr.mxu0 0.0
  %436 = vmatpush1.msra.mxu0 %v171
  %437 = vmatprep.subr.mxu0 0.0
  %438 = vmatpush1.msra.mxu0 %v170
  %439 = vmatprep.subr.mxu0 0.0
  %440 = vmatpush1.msra.mxu0 %v169
  %441 = vmatprep.subr.mxu0 0.0
  %442 = vmatpush1.msra.mxu0 %v168
  %443 = vmatprep.subr.mxu0 0.0
  %444 = vmatpush1.msra.mxu0 %v167
  %445 = vmatprep.subr.mxu0 0.0
  %446 = vmatpush1.msra.mxu0 %v166
  %447 = vmatprep.subr.mxu0 0.0
  %448 = vmatpush1.msra.mxu0 %v165
  %449 = vmatprep.subr.mxu0 0.0
  %450 = vmatpush1.msra.mxu0 %v164
  %451 = vmatprep.subr.mxu0 0.0
  %452 = vmatpush1.msra.mxu0 %v163
  %453 = vmatprep.subr.mxu0 0.0
  %454 = vmatpush1.msra.mxu0 %v162
  %455 = vmatprep.subr.mxu0 0.0
  %456 = vmatpush1.msra.mxu0 %v161
  %457 = vmatprep.subr.mxu0 0.0
  %458 = vmatpush1.msra.mxu0 %v160
  %459 = vmatprep.subr.mxu0 0.0
  %460 = vmatpush1.msra.mxu0 %v159
  %461 = vmatprep.subr.mxu0 0.0
  %462 = vmatpush1.msra.mxu0 %v158
  %463 = vmatprep.subr.mxu0 0.0
  %464 = vmatpush2.msra.mxu0 %v189
  %465 = vmatprep.subr.mxu0 0.0
  %466 = vmatpush2.msra.mxu0 %v188
  %467 = vmatprep.subr.mxu0 0.0
  %468 = vmatpush2.msra.mxu0 %v187
  %469 = vmatprep.subr.mxu0 0.0
  %470 = vmatpush2.msra.mxu0 %v186
  %471 = vmatprep.subr.mxu0 0.0
  %472 = vmatpush2.msra.mxu0 %v185
  %473 = vmatprep.subr.mxu0 0.0
  %474 = vmatpush2.msra.mxu0 %v184
  %475 = vmatprep.subr.mxu0 0.0
  %476 = vmatpush2.msra.mxu0 %v183
  %477 = vmatprep.subr.mxu0 0.0
  %478 = vmatpush2.msra.mxu0 %v182
  %479 = vmatprep.subr.mxu0 0.0
  %480 = vmatpush2.msra.mxu0 %v181
  %481 = vmatprep.subr.mxu0 0.0
  %482 = vmatpush2.msra.mxu0 %v180
  %483 = vmatprep.subr.mxu0 0.0
  %484 = vmatpush2.msra.mxu0 %v179
  %485 = vmatprep.subr.mxu0 0.0
  %486 = vmatpush2.msra.mxu0 %v178
  %487 = vmatprep.subr.mxu0 0.0
  %488 = vmatpush2.msra.mxu0 %v177
  %489 = vmatprep.subr.mxu0 0.0
  %490 = vmatpush2.msra.mxu0 %v176
  %491 = vmatprep.subr.mxu0 0.0
  %492 = vmatpush2.msra.mxu0 %v175
  %493 = vmatprep.subr.mxu0 0.0
  %494 = vmatpush2.msra.mxu0 %v174
  %495 = vmatprep.mubr.f32.mxu0 %v29
  %496 = vmatmul.mubr.f32.gmra.mxu0 %v28
  %v497 = vpop.f32.mrf.mxu0
  %v498 = vadd.f32 %v333, %v497
  %v499 = vpop.f32.mrf.mxu0
  %500 = vmatprep.mubr.f32.mxu0 %v34
  %501 = vmatmul.mubr.f32.gmra.mxu0 %v33
  %v502 = vpop.f32.mrf.mxu0
  %v503 = vadd.f32 %v338, %v502
  %v504 = vpop.f32.mrf.mxu0
  %505 = vmatprep.mubr.f32.mxu0 %v39
  %506 = vmatmul.mubr.f32.gmra.mxu0 %v38
  %v507 = vpop.f32.mrf.mxu0
  %v508 = vadd.f32 %v343, %v507
  %v509 = vpop.f32.mrf.mxu0
  %510 = vmatprep.mubr.f32.mxu0 %v44
  %511 = vmatmul.mubr.f32.gmra.mxu0 %v43
  %v512 = vpop.f32.mrf.mxu0
  %v513 = vadd.f32 %v348, %v512
  %v514 = vpop.f32.mrf.mxu0
  %515 = vmatprep.mubr.f32.mxu0 %v49
  %516 = vmatmul.mubr.f32.gmra.mxu0 %v48
  %v517 = vpop.f32.mrf.mxu0
  %v518 = vadd.f32 %v353, %v517
  %v519 = vpop.f32.mrf.mxu0
  %520 = vmatprep.mubr.f32.mxu0 %v54
  %521 = vmatmul.mubr.f32.gmra.mxu0 %v53
  %v522 = vpop.f32.mrf.mxu0
  %v523 = vadd.f32 %v358, %v522
  %v524 = vpop.f32.mrf.mxu0
  %525 = vmatprep.mubr.f32.mxu0 %v59
  %526 = vmatmul.mubr.f32.gmra.mxu0 %v58
  %v527 = vpop.f32.mrf.mxu0
  %v528 = vadd.f32 %v363, %v527
  %v529 = vpop.f32.mrf.mxu0
  %530 = vmatprep.mubr.f32.mxu0 %v64
  %531 = vmatmul.mubr.f32.gmra.mxu0 %v63
  %v532 = vpop.f32.mrf.mxu0
  %v533 = vadd.f32 %v368, %v532
  %v534 = vpop.f32.mrf.mxu0
  %535 = vmatprep.mubr.f32.mxu0 %v69
  %536 = vmatmul.mubr.f32.gmra.mxu0 %v68
  %v537 = vpop.f32.mrf.mxu0
  %v538 = vadd.f32 %v373, %v537
  %v539 = vpop.f32.mrf.mxu0
  %540 = vmatprep.mubr.f32.mxu0 %v74
  %541 = vmatmul.mubr.f32.gmra.mxu0 %v73
  %v542 = vpop.f32.mrf.mxu0
  %v543 = vadd.f32 %v378, %v542
  %v544 = vpop.f32.mrf.mxu0
  %545 = vmatprep.mubr.f32.mxu0 %v79
  %546 = vmatmul.mubr.f32.gmra.mxu0 %v78
  %v547 = vpop.f32.mrf.mxu0
  %v548 = vadd.f32 %v383, %v547
  %v549 = vpop.f32.mrf.mxu0
  %550 = vmatprep.mubr.f32.mxu0 %v84
  %551 = vmatmul.mubr.f32.gmra.mxu0 %v83
  %v552 = vpop.f32.mrf.mxu0
  %v553 = vadd.f32 %v388, %v552
  %v554 = vpop.f32.mrf.mxu0
  %555 = vmatprep.mubr.f32.mxu0 %v89
  %556 = vmatmul.mubr.f32.gmra.mxu0 %v88
  %v557 = vpop.f32.mrf.mxu0
  %v558 = vadd.f32 %v393, %v557
  %v559 = vpop.f32.mrf.mxu0
  %560 = vmatprep.mubr.f32.mxu0 %v94
  %561 = vmatmul.mubr.f32.gmra.mxu0 %v93
  %v562 = vpop.f32.mrf.mxu0
  %v563 = vadd.f32 %v398, %v562
  %v564 = vpop.f32.mrf.mxu0
  %565 = vmatprep.mubr.f32.mxu0 %v99
  %566 = vmatmul.mubr.f32.gmra.mxu0 %v98
  %v567 = vpop.f32.mrf.mxu0
  %v568 = vadd.f32 %v403, %v567
  %v569 = vpop.f32.mrf.mxu0
  %570 = vmatprep.mubr.f32.mxu0 %v104
  %571 = vmatmul.mubr.f32.gmra.mxu0 %v103
  %v572 = vpop.f32.mrf.mxu0
  %v573 = vadd.f32 %v408, %v572
  %v574 = vpop.f32.mrf.mxu0
  %575 = vmatprep.mubr.f32.mxu0 %v109
  %576 = vmatmul.mubr.f32.gmra.mxu0 %v108
  %v577 = vpop.f32.mrf.mxu0
  %v578 = vadd.f32 %v413, %v577
  %v579 = vpop.f32.mrf.mxu0
  %580 = vmatprep.mubr.f32.mxu0 %v114
  %581 = vmatmul.mubr.f32.gmra.mxu0 %v113
  %v582 = vpop.f32.mrf.mxu0
  %v583 = vadd.f32 %v418, %v582
  %v584 = vpop.f32.mrf.mxu0
  %585 = vmatprep.mubr.f32.mxu0 %v119
  %586 = vmatmul.mubr.f32.gmra.mxu0 %v118
  %v587 = vpop.f32.mrf.mxu0
  %v588 = vadd.f32 %v423, %v587
  %v589 = vpop.f32.mrf.mxu0
  %590 = vmatprep.mubr.f32.mxu0 %v124
  %591 = vmatmul.mubr.f32.gmra.mxu0 %v123
  %v592 = vpop.f32.mrf.mxu0
  %v593 = vadd.f32 %v428, %v592
  %v594 = vpop.f32.mrf.mxu0
  %595 = vdwg.mxu0
  %596 = vmatprep.subr.mxu0 0.0
  %597 = vmatpush1.msra.mxu0 0.0
  %598 = vmatprep.subr.mxu0 0.0
  %599 = vmatpush1.msra.mxu0 0.0
  %600 = vmatprep.subr.mxu0 0.0
  %601 = vmatpush1.msra.mxu0 0.0
  %602 = vmatprep.subr.mxu0 0.0
  %603 = vmatpush1.msra.mxu0 0.0
  %604 = vmatprep.subr.mxu0 0.0
  %605 = vmatpush1.msra.mxu0 0.0
  %606 = vmatprep.subr.mxu0 0.0
  %607 = vmatpush1.msra.mxu0 0.0
  %608 = vmatprep.subr.mxu0 0.0
  %609 = vmatpush1.msra.mxu0 0.0
  %610 = vmatprep.subr.mxu0 0.0
  %611 = vmatpush1.msra.mxu0 0.0
  %612 = vmatprep.subr.mxu0 0.0
  %613 = vmatpush1.msra.mxu0 %v197
  %614 = vmatprep.subr.mxu0 0.0
  %615 = vmatpush1.msra.mxu0 %v196
  %616 = vmatprep.subr.mxu0 0.0
  %617 = vmatpush1.msra.mxu0 %v195
  %618 = vmatprep.subr.mxu0 0.0
  %619 = vmatpush1.msra.mxu0 %v194
  %620 = vmatprep.subr.mxu0 0.0
  %621 = vmatpush1.msra.mxu0 %v193
  %622 = vmatprep.subr.mxu0 0.0
  %623 = vmatpush1.msra.mxu0 %v192
  %624 = vmatprep.subr.mxu0 0.0
  %625 = vmatpush1.msra.mxu0 %v191
  %626 = vmatprep.subr.mxu0 0.0
  %627 = vmatpush1.msra.mxu0 %v190
  %628 = vmatprep.subr.mxu0 0.0
  %629 = vmatpush2.msra.mxu0 0.0
  %630 = vmatprep.subr.mxu0 0.0
  %631 = vmatpush2.msra.mxu0 0.0
  %632 = vmatprep.subr.mxu0 0.0
  %633 = vmatpush2.msra.mxu0 0.0
  %634 = vmatprep.subr.mxu0 0.0
  %635 = vmatpush2.msra.mxu0 0.0
  %636 = vmatprep.subr.mxu0 0.0
  %637 = vmatpush2.msra.mxu0 0.0
  %638 = vmatprep.subr.mxu0 0.0
  %639 = vmatpush2.msra.mxu0 0.0
  %640 = vmatprep.subr.mxu0 0.0
  %641 = vmatpush2.msra.mxu0 0.0
  %642 = vmatprep.subr.mxu0 0.0
  %643 = vmatpush2.msra.mxu0 0.0
  %644 = vmatprep.subr.mxu0 0.0
  %645 = vmatpush2.msra.mxu0 0.0
  %646 = vmatprep.subr.mxu0 0.0
  %647 = vmatpush2.msra.mxu0 0.0
  %648 = vmatprep.subr.mxu0 0.0
  %649 = vmatpush2.msra.mxu0 0.0
  %650 = vmatprep.subr.mxu0 0.0
  %651 = vmatpush2.msra.mxu0 0.0
  %652 = vmatprep.subr.mxu0 0.0
  %653 = vmatpush2.msra.mxu0 0.0
  %654 = vmatprep.subr.mxu0 0.0
  %655 = vmatpush2.msra.mxu0 0.0
  %656 = vmatprep.subr.mxu0 0.0
  %657 = vmatpush2.msra.mxu0 0.0
  %658 = vmatprep.subr.mxu0 0.0
  %659 = vmatpush2.msra.mxu0 0.0
  %660 = vmatprep.mubr.f32.mxu0 0.0
  %661 = vmatmul.mubr.f32.gmra.mxu0 %v207
  %v662 = vpop.f32.mrf.mxu0
  %v663 = vadd.f32 %v498, %v662
  %v664 = vpop.f32.mrf.mxu0
  %665 = vmatprep.mubr.f32.mxu0 0.0
  %666 = vmatmul.mubr.f32.gmra.mxu0 %v210
  %v667 = vpop.f32.mrf.mxu0
  %v668 = vadd.f32 %v503, %v667
  %v669 = vpop.f32.mrf.mxu0
  %670 = vmatprep.mubr.f32.mxu0 0.0
  %671 = vmatmul.mubr.f32.gmra.mxu0 %v213
  %v672 = vpop.f32.mrf.mxu0
  %v673 = vadd.f32 %v508, %v672
  %v674 = vpop.f32.mrf.mxu0
  %675 = vmatprep.mubr.f32.mxu0 0.0
  %676 = vmatmul.mubr.f32.gmra.mxu0 %v216
  %v677 = vpop.f32.mrf.mxu0
  %v678 = vadd.f32 %v513, %v677
  %v679 = vpop.f32.mrf.mxu0
  %680 = vmatprep.mubr.f32.mxu0 0.0
  %681 = vmatmul.mubr.f32.gmra.mxu0 %v219
  %v682 = vpop.f32.mrf.mxu0
  %v683 = vadd.f32 %v518, %v682
  %v684 = vpop.f32.mrf.mxu0
  %685 = vmatprep.mubr.f32.mxu0 0.0
  %686 = vmatmul.mubr.f32.gmra.mxu0 %v222
  %v687 = vpop.f32.mrf.mxu0
  %v688 = vadd.f32 %v523, %v687
  %v689 = vpop.f32.mrf.mxu0
  %690 = vmatprep.mubr.f32.mxu0 0.0
  %691 = vmatmul.mubr.f32.gmra.mxu0 %v225
  %v692 = vpop.f32.mrf.mxu0
  %v693 = vadd.f32 %v528, %v692
  %v694 = vpop.f32.mrf.mxu0
  %695 = vmatprep.mubr.f32.mxu0 0.0
  %696 = vmatmul.mubr.f32.gmra.mxu0 %v228
  %v697 = vpop.f32.mrf.mxu0
  %v698 = vadd.f32 %v533, %v697
  %v699 = vpop.f32.mrf.mxu0
  %700 = vmatprep.mubr.f32.mxu0 0.0
  %701 = vmatmul.mubr.f32.gmra.mxu0 %v231
  %v702 = vpop.f32.mrf.mxu0
  %v703 = vadd.f32 %v538, %v702
  %v704 = vpop.f32.mrf.mxu0
  %705 = vmatprep.mubr.f32.mxu0 0.0
  %706 = vmatmul.mubr.f32.gmra.mxu0 %v234
  %v707 = vpop.f32.mrf.mxu0
  %v708 = vadd.f32 %v543, %v707
  %v709 = vpop.f32.mrf.mxu0
  %710 = vmatprep.mubr.f32.mxu0 0.0
  %711 = vmatmul.mubr.f32.gmra.mxu0 %v237
  %v712 = vpop.f32.mrf.mxu0
  %v713 = vadd.f32 %v548, %v712
  %v714 = vpop.f32.mrf.mxu0
  %715 = vmatprep.mubr.f32.mxu0 0.0
  %716 = vmatmul.mubr.f32.gmra.mxu0 %v240
  %v717 = vpop.f32.mrf.mxu0
  %v718 = vadd.f32 %v553, %v717
  %v719 = vpop.f32.mrf.mxu0
  %720 = vmatprep.mubr.f32.mxu0 0.0
  %721 = vmatmul.mubr.f32.gmra.mxu0 %v243
  %v722 = vpop.f32.mrf.mxu0
  %v723 = vadd.f32 %v558, %v722
  %v724 = vpop.f32.mrf.mxu0
  %725 = vmatprep.mubr.f32.mxu0 0.0
  %726 = vmatmul.mubr.f32.gmra.mxu0 %v246
  %v727 = vpop.f32.mrf.mxu0
  %v728 = vadd.f32 %v563, %v727
  %v729 = vpop.f32.mrf.mxu0
  %730 = vmatprep.mubr.f32.mxu0 0.0
  %731 = vmatmul.mubr.f32.gmra.mxu0 %v249
  %v732 = vpop.f32.mrf.mxu0
  %v733 = vadd.f32 %v568, %v732
  %v734 = vpop.f32.mrf.mxu0
  %735 = vmatprep.mubr.f32.mxu0 0.0
  %736 = vmatmul.mubr.f32.gmra.mxu0 %v252
  %v737 = vpop.f32.mrf.mxu0
  %v738 = vadd.f32 %v573, %v737
  %v739 = vpop.f32.mrf.mxu0
  %740 = vmatprep.mubr.f32.mxu0 0.0
  %741 = vmatmul.mubr.f32.gmra.mxu0 %v255
  %v742 = vpop.f32.mrf.mxu0
  %v743 = vadd.f32 %v578, %v742
  %v744 = vpop.f32.mrf.mxu0
  %745 = vmatprep.mubr.f32.mxu0 0.0
  %746 = vmatmul.mubr.f32.gmra.mxu0 %v258
  %v747 = vpop.f32.mrf.mxu0
  %v748 = vadd.f32 %v583, %v747
  %v749 = vpop.f32.mrf.mxu0
  %750 = vmatprep.mubr.f32.mxu0 0.0
  %751 = vmatmul.mubr.f32.gmra.mxu0 %v261
  %v752 = vpop.f32.mrf.mxu0
  %v753 = vadd.f32 %v588, %v752
  %v754 = vpop.f32.mrf.mxu0
  %755 = vmatprep.mubr.f32.mxu0 0.0
  %756 = vmatmul.mubr.f32.gmra.mxu0 %v264
  %v757 = vpop.f32.mrf.mxu0
  %v758 = vadd.f32 %v593, %v757
  %v759 = vpop.f32.mrf.mxu0
  %760 = vdwg.mxu0
  %v761 = vld [vmem:[%s3] sm:$0x1]
  %v762 = vld [vmem:[%s4] sm:$0x1]
  %v763 = vsel %vm205, %v663, 0.0
  %v764 = vsel %vm205, %v668, 0.0
  %v765 = vadd.f32 %v763, %v764
  %v766 = vsel %vm205, %v673, 0.0
  %v767 = vadd.f32 %v765, %v766
  %v768 = vsel %vm205, %v678, 0.0
  %v769 = vadd.f32 %v767, %v768
  %v770 = vsel %vm205, %v683, 0.0
  %v771 = vadd.f32 %v769, %v770
  %v772 = vsel %vm205, %v688, 0.0
  %v773 = vadd.f32 %v771, %v772
  %v774 = vsel %vm205, %v693, 0.0
  %v775 = vadd.f32 %v773, %v774
  %v776 = vsel %vm205, %v698, 0.0
  %v777 = vadd.f32 %v775, %v776
  %v778 = vsel %vm205, %v703, 0.0
  %v779 = vadd.f32 %v777, %v778
  %v780 = vsel %vm205, %v708, 0.0
  %v781 = vadd.f32 %v779, %v780
  %v782 = vsel %vm205, %v713, 0.0
  %v783 = vadd.f32 %v781, %v782
  %v784 = vsel %vm205, %v718, 0.0
  %v785 = vadd.f32 %v783, %v784
  %v786 = vsel %vm205, %v723, 0.0
  %v787 = vadd.f32 %v785, %v786
  %v788 = vsel %vm205, %v728, 0.0
  %v789 = vadd.f32 %v787, %v788
  %v790 = vsel %vm205, %v733, 0.0
  %v791 = vadd.f32 %v789, %v790
  %v792 = vsel %vm205, %v738, 0.0
  %v793 = vadd.f32 %v791, %v792
  %v794 = vsel %vm205, %v743, 0.0
  %v795 = vadd.f32 %v793, %v794
  %v796 = vsel %vm205, %v748, 0.0
  %v797 = vadd.f32 %v795, %v796
  %v798 = vsel %vm205, %v753, 0.0
  %v799 = vadd.f32 %v797, %v798
  %v800 = vsel %vm205, %v758, 0.0
  %v801 = vadd.f32 %v799, %v800
  %v802 = vrot.slane %v801, 4
  %v803 = vadd.f32 %v801, %v802
  %v804 = vrot.slane %v803, 2
  %v805 = vadd.f32 %v803, %v804
  %v806 = vrot.slane %v805, 1
  %v807 = vadd.f32 %v805, %v806
  %v808 = vmul.f32 %v807, 0.00625
  %v809 = vsub.f32 %v663, %v808
  %v810 = vsub.f32 %v668, %v808
  %v811 = vsub.f32 %v673, %v808
  %v812 = vsub.f32 %v678, %v808
  %v813 = vsub.f32 %v683, %v808
  %v814 = vsub.f32 %v688, %v808
  %v815 = vsub.f32 %v693, %v808
  %v816 = vsub.f32 %v698, %v808
  %v817 = vsub.f32 %v703, %v808
  %v818 = vsub.f32 %v708, %v808
  %v819 = vsub.f32 %v713, %v808
  %v820 = vsub.f32 %v718, %v808
  %v821 = vsub.f32 %v723, %v808
  %v822 = vsub.f32 %v728, %v808
  %v823 = vsub.f32 %v733, %v808
  %v824 = vsub.f32 %v738, %v808
  %v825 = vsub.f32 %v743, %v808
  %v826 = vsub.f32 %v748, %v808
  %v827 = vsub.f32 %v753, %v808
  %v828 = vsub.f32 %v758, %v808
  %v829 = vmul.f32 %v809, %v809
  %v830 = vmul.f32 %v810, %v810
  %v831 = vmul.f32 %v811, %v811
  %v832 = vmul.f32 %v812, %v812
  %v833 = vmul.f32 %v813, %v813
  %v834 = vmul.f32 %v814, %v814
  %v835 = vmul.f32 %v815, %v815
  %v836 = vmul.f32 %v816, %v816
  %v837 = vmul.f32 %v817, %v817
  %v838 = vmul.f32 %v818, %v818
  %v839 = vmul.f32 %v819, %v819
  %v840 = vmul.f32 %v820, %v820
  %v841 = vmul.f32 %v821, %v821
  %v842 = vmul.f32 %v822, %v822
  %v843 = vmul.f32 %v823, %v823
  %v844 = vmul.f32 %v824, %v824
  %v845 = vmul.f32 %v825, %v825
  %v846 = vmul.f32 %v826, %v826
  %v847 = vmul.f32 %v827, %v827
  %v848 = vmul.f32 %v828, %v828
  %v849 = vsel %vm205, %v829, 0.0
  %v850 = vsel %vm205, %v830, 0.0
  %v851 = vadd.f32 %v849, %v850
  %v852 = vsel %vm205, %v831, 0.0
  %v853 = vadd.f32 %v851, %v852
  %v854 = vsel %vm205, %v832, 0.0
  %v855 = vadd.f32 %v853, %v854
  %v856 = vsel %vm205, %v833, 0.0
  %v857 = vadd.f32 %v855, %v856
  %v858 = vsel %vm205, %v834, 0.0
  %v859 = vadd.f32 %v857, %v858
  %v860 = vsel %vm205, %v835, 0.0
  %v861 = vadd.f32 %v859, %v860
  %v862 = vsel %vm205, %v836, 0.0
  %v863 = vadd.f32 %v861, %v862
  %v864 = vsel %vm205, %v837, 0.0
  %v865 = vadd.f32 %v863, %v864
  %v866 = vsel %vm205, %v838, 0.0
  %v867 = vadd.f32 %v865, %v866
  %v868 = vsel %vm205, %v839, 0.0
  %v869 = vadd.f32 %v867, %v868
  %v870 = vsel %vm205, %v840, 0.0
  %v871 = vadd.f32 %v869, %v870
  %v872 = vsel %vm205, %v841, 0.0
  %v873 = vadd.f32 %v871, %v872
  %v874 = vsel %vm205, %v842, 0.0
  %v875 = vadd.f32 %v873, %v874
  %v876 = vsel %vm205, %v843, 0.0
  %v877 = vadd.f32 %v875, %v876
  %v878 = vsel %vm205, %v844, 0.0
  %v879 = vadd.f32 %v877, %v878
  %v880 = vsel %vm205, %v845, 0.0
  %v881 = vadd.f32 %v879, %v880
  %v882 = vsel %vm205, %v846, 0.0
  %v883 = vadd.f32 %v881, %v882
  %v884 = vsel %vm205, %v847, 0.0
  %v885 = vadd.f32 %v883, %v884
  %v886 = vsel %vm205, %v848, 0.0
  %v887 = vadd.f32 %v885, %v886
  %v888 = vrot.slane %v887, 4
  %v889 = vadd.f32 %v887, %v888
  %v890 = vrot.slane %v889, 2
  %v891 = vadd.f32 %v889, %v890
  %v892 = vrot.slane %v891, 1
  %v893 = vadd.f32 %v891, %v892
  %v894 = vmul.f32 %v893, 0.00625
  %v895 = vadd.f32 %v894, 1e-05
  %v896 = vrsqrt.pop %v895
  %v897 = vmul.f32 %v761, %v896
  %v899 = vlaneseq
  %v900 = vshrl.u32 %v899, 7
  %v901 = vsub.s32 0, %v900
  %v902 = vrot.slane %v897, %v901
  %v904 = vmul.f32 %v809, %v902
  %v905 = vmul.f32 %v810, %v902
  %v906 = vmul.f32 %v811, %v902
  %v907 = vmul.f32 %v812, %v902
  %v908 = vmul.f32 %v813, %v902
  %v909 = vmul.f32 %v814, %v902
  %v910 = vmul.f32 %v815, %v902
  %v911 = vmul.f32 %v816, %v902
  %v912 = vmul.f32 %v817, %v902
  %v913 = vmul.f32 %v818, %v902
  %v914 = vmul.f32 %v819, %v902
  %v915 = vmul.f32 %v820, %v902
  %v916 = vmul.f32 %v821, %v902
  %v917 = vmul.f32 %v822, %v902
  %v918 = vmul.f32 %v823, %v902
  %v919 = vmul.f32 %v824, %v902
  %v920 = vmul.f32 %v825, %v902
  %v921 = vmul.f32 %v826, %v902
  %v922 = vmul.f32 %v827, %v902
  %v923 = vmul.f32 %v828, %v902
  %v925 = vlaneseq
  %v926 = vshrl.u32 %v925, 7
  %v927 = vsub.s32 0, %v926
  %v928 = vrot.slane %v762, %v927
  %v930 = vadd.f32 %v904, %v928
  %v931 = vadd.f32 %v905, %v928
  %v932 = vadd.f32 %v906, %v928
  %v933 = vadd.f32 %v907, %v928
  %v934 = vadd.f32 %v908, %v928
  %v935 = vadd.f32 %v909, %v928
  %v936 = vadd.f32 %v910, %v928
  %v937 = vadd.f32 %v911, %v928
  %v938 = vadd.f32 %v912, %v928
  %v939 = vadd.f32 %v913, %v928
  %v940 = vadd.f32 %v914, %v928
  %v941 = vadd.f32 %v915, %v928
  %v942 = vadd.f32 %v916, %v928
  %v943 = vadd.f32 %v917, %v928
  %v944 = vadd.f32 %v918, %v928
  %v945 = vadd.f32 %v919, %v928
  %v946 = vadd.f32 %v920, %v928
  %v947 = vadd.f32 %v921, %v928
  %v948 = vadd.f32 %v922, %v928
  %v949 = vadd.f32 %v923, %v928
  %vm950 = vcmp.gt.f32.partialorder %v930, 0.0
  %vm951 = vcmp.gt.f32.partialorder %v931, 0.0
  %vm952 = vcmp.gt.f32.partialorder %v932, 0.0
  %vm953 = vcmp.gt.f32.partialorder %v933, 0.0
  %vm954 = vcmp.gt.f32.partialorder %v934, 0.0
  %vm955 = vcmp.gt.f32.partialorder %v935, 0.0
  %vm956 = vcmp.gt.f32.partialorder %v936, 0.0
  %vm957 = vcmp.gt.f32.partialorder %v937, 0.0
  %vm958 = vcmp.gt.f32.partialorder %v938, 0.0
  %vm959 = vcmp.gt.f32.partialorder %v939, 0.0
  %vm960 = vcmp.gt.f32.partialorder %v940, 0.0
  %vm961 = vcmp.gt.f32.partialorder %v941, 0.0
  %vm962 = vcmp.gt.f32.partialorder %v942, 0.0
  %vm963 = vcmp.gt.f32.partialorder %v943, 0.0
  %vm964 = vcmp.gt.f32.partialorder %v944, 0.0
  %vm965 = vcmp.gt.f32.partialorder %v945, 0.0
  %vm966 = vcmp.gt.f32.partialorder %v946, 0.0
  %vm967 = vcmp.gt.f32.partialorder %v947, 0.0
  %vm968 = vcmp.gt.f32.partialorder %v948, 0.0
  %vm969 = vcmp.gt.f32.partialorder %v949, 0.0
  %v970 = vmul.f32 %v930, 0.05
  %v971 = vmul.f32 %v931, 0.05
  %v972 = vmul.f32 %v932, 0.05
  %v973 = vmul.f32 %v933, 0.05
  %v974 = vmul.f32 %v934, 0.05
  %v975 = vmul.f32 %v935, 0.05
  %v976 = vmul.f32 %v936, 0.05
  %v977 = vmul.f32 %v937, 0.05
  %v978 = vmul.f32 %v938, 0.05
  %v979 = vmul.f32 %v939, 0.05
  %v980 = vmul.f32 %v940, 0.05
  %v981 = vmul.f32 %v941, 0.05
  %v982 = vmul.f32 %v942, 0.05
  %v983 = vmul.f32 %v943, 0.05
  %v984 = vmul.f32 %v944, 0.05
  %v985 = vmul.f32 %v945, 0.05
  %v986 = vmul.f32 %v946, 0.05
  %v987 = vmul.f32 %v947, 0.05
  %v988 = vmul.f32 %v948, 0.05
  %v989 = vmul.f32 %v949, 0.05
  %v990 = vsel %vm950, %v930, %v970
  %v991 = vsel %vm951, %v931, %v971
  %v992 = vsel %vm952, %v932, %v972
  %v993 = vsel %vm953, %v933, %v973
  %v994 = vsel %vm954, %v934, %v974
  %v995 = vsel %vm955, %v935, %v975
  %v996 = vsel %vm956, %v936, %v976
  %v997 = vsel %vm957, %v937, %v977
  %v998 = vsel %vm958, %v938, %v978
  %v999 = vsel %vm959, %v939, %v979
  %v1000 = vsel %vm960, %v940, %v980
  %v1001 = vsel %vm961, %v941, %v981
  %v1002 = vsel %vm962, %v942, %v982
  %v1003 = vsel %vm963, %v943, %v983
  %v1004 = vsel %vm964, %v944, %v984
  %v1005 = vsel %vm965, %v945, %v985
  %v1006 = vsel %vm966, %v946, %v986
  %v1007 = vsel %vm967, %v947, %v987
  %v1008 = vsel %vm968, %v948, %v988
  %v1009 = vsel %vm969, %v949, %v989
  %v1010 = vld [vmem:[%s5] sm:$0xff]
  %v1011 = vld [vmem:[%s5 + $0x8] sm:$0xff]
  %v1012 = vld [vmem:[%s5 + $0x10] sm:$0xff]
  %v1013 = vld [vmem:[%s5 + $0x18] sm:$0xff]
  %v1014 = vld [vmem:[%s5 + $0x20] sm:$0xff]
  %v1015 = vld [vmem:[%s5 + $0x28] sm:$0xff]
  %v1016 = vld [vmem:[%s5 + $0x30] sm:$0xff]
  %v1017 = vld [vmem:[%s5 + $0x38] sm:$0xff]
  %v1018 = vld [vmem:[%s5 + $0x40] sm:$0xff]
  %v1019 = vld [vmem:[%s5 + $0x48] sm:$0xff]
  %v1020 = vld [vmem:[%s5 + $0x50] sm:$0xff]
  %v1021 = vld [vmem:[%s5 + $0x58] sm:$0xff]
  %v1022 = vld [vmem:[%s5 + $0x60] sm:$0xff]
  %v1023 = vld [vmem:[%s5 + $0x68] sm:$0xff]
  %v1024 = vld [vmem:[%s5 + $0x70] sm:$0xff]
  %v1025 = vld [vmem:[%s5 + $0x78] sm:$0xff]
  %v1026 = vld [vmem:[%s6] sm:$0x3]
  %v1028 = vlaneseq
  %v1029 = vshrl.u32 %v1028, 7
  %v1030 = vsub.s32 0, %v1029
  %v1031 = vrot.slane %v1026, %v1030
  %v1032 = vlaneseq
  %v1033 = vshrl.u32 %v1032, 7
  %v1034 = vsub.s32 1, %v1033
  %v1035 = vrot.slane %v1026, %v1034
  %v1039 = vsel %vm205, %v990, 0
  %v1042 = vsel %vm205, %v991, 0
  %v1045 = vsel %vm205, %v992, 0
  %v1048 = vsel %vm205, %v993, 0
  %v1051 = vsel %vm205, %v994, 0
  %v1054 = vsel %vm205, %v995, 0
  %v1057 = vsel %vm205, %v996, 0
  %v1060 = vsel %vm205, %v997, 0
  %v1063 = vsel %vm205, %v998, 0
  %v1066 = vsel %vm205, %v999, 0
  %v1069 = vsel %vm205, %v1000, 0
  %v1072 = vsel %vm205, %v1001, 0
  %v1075 = vsel %vm205, %v1002, 0
  %v1078 = vsel %vm205, %v1003, 0
  %v1081 = vsel %vm205, %v1004, 0
  %v1084 = vsel %vm205, %v1005, 0
  %v1087 = vsel %vm205, %v1006, 0
  %v1090 = vsel %vm205, %v1007, 0
  %v1093 = vsel %vm205, %v1008, 0
  %v1096 = vsel %vm205, %v1009, 0
  %1098 = vmatprep.subr.mxu0 0.0
  %1099 = vmatpush1.msra.mxu0 0.0
  %1100 = vmatprep.subr.mxu0 0.0
  %1101 = vmatpush1.msra.mxu0 0.0
  %1102 = vmatprep.subr.mxu0 0.0
  %1103 = vmatpush1.msra.mxu0 0.0
  %1104 = vmatprep.subr.mxu0 0.0
  %1105 = vmatpush1.msra.mxu0 0.0
  %1106 = vmatprep.subr.mxu0 0.0
  %1107 = vmatpush1.msra.mxu0 0.0
  %1108 = vmatprep.subr.mxu0 0.0
  %1109 = vmatpush1.msra.mxu0 0.0
  %1110 = vmatprep.subr.mxu0 0.0
  %1111 = vmatpush1.msra.mxu0 0.0
  %1112 = vmatprep.subr.mxu0 0.0
  %1113 = vmatpush1.msra.mxu0 0.0
  %1114 = vmatprep.subr.mxu0 %v1025
  %1115 = vmatpush1.msra.mxu0 %v1024
  %1116 = vmatprep.subr.mxu0 %v1023
  %1117 = vmatpush1.msra.mxu0 %v1022
  %1118 = vmatprep.subr.mxu0 %v1021
  %1119 = vmatpush1.msra.mxu0 %v1020
  %1120 = vmatprep.subr.mxu0 %v1019
  %1121 = vmatpush1.msra.mxu0 %v1018
  %1122 = vmatprep.subr.mxu0 %v1017
  %1123 = vmatpush1.msra.mxu0 %v1016
  %1124 = vmatprep.subr.mxu0 %v1015
  %1125 = vmatpush1.msra.mxu0 %v1014
  %1126 = vmatprep.subr.mxu0 %v1013
  %1127 = vmatpush1.msra.mxu0 %v1012
  %1128 = vmatprep.subr.mxu0 %v1011
  %1129 = vmatpush1.msra.mxu0 %v1010
  %1130 = vmatprep.subr.mxu0 0.0
  %1131 = vmatpush2.msra.mxu0 0.0
  %1132 = vmatprep.subr.mxu0 0.0
  %1133 = vmatpush2.msra.mxu0 0.0
  %1134 = vmatprep.subr.mxu0 0.0
  %1135 = vmatpush2.msra.mxu0 0.0
  %1136 = vmatprep.subr.mxu0 0.0
  %1137 = vmatpush2.msra.mxu0 0.0
  %1138 = vmatprep.subr.mxu0 0.0
  %1139 = vmatpush2.msra.mxu0 0.0
  %1140 = vmatprep.subr.mxu0 0.0
  %1141 = vmatpush2.msra.mxu0 0.0
  %1142 = vmatprep.subr.mxu0 0.0
  %1143 = vmatpush2.msra.mxu0 0.0
  %1144 = vmatprep.subr.mxu0 0.0
  %1145 = vmatpush2.msra.mxu0 0.0
  %1146 = vmatprep.subr.mxu0 0.0
  %1147 = vmatpush2.msra.mxu0 0.0
  %1148 = vmatprep.subr.mxu0 0.0
  %1149 = vmatpush2.msra.mxu0 0.0
  %1150 = vmatprep.subr.mxu0 0.0
  %1151 = vmatpush2.msra.mxu0 0.0
  %1152 = vmatprep.subr.mxu0 0.0
  %1153 = vmatpush2.msra.mxu0 0.0
  %1154 = vmatprep.subr.mxu0 0.0
  %1155 = vmatpush2.msra.mxu0 0.0
  %1156 = vmatprep.subr.mxu0 0.0
  %1157 = vmatpush2.msra.mxu0 0.0
  %1158 = vmatprep.subr.mxu0 0.0
  %1159 = vmatpush2.msra.mxu0 0.0
  %1160 = vmatprep.subr.mxu0 0.0
  %1161 = vmatpush2.msra.mxu0 0.0
  %1162 = vmatprep.mubr.f32.mxu0 0.0
  %1163 = vmatmul.mubr.f32.gmra.mxu0 %v1039
  %v1164 = vpop.f32.mrf.mxu0
  %v1165 = vadd.f32 %v1031, %v1164
  %v1166 = vpop.f32.mrf.mxu0
  %v1167 = vadd.f32 %v1035, %v1166
  %1168 = vmatprep.mubr.f32.mxu0 0.0
  %1169 = vmatmul.mubr.f32.gmra.mxu0 %v1042
  %v1170 = vpop.f32.mrf.mxu0
  %v1171 = vadd.f32 %v1031, %v1170
  %v1172 = vpop.f32.mrf.mxu0
  %v1173 = vadd.f32 %v1035, %v1172
  %1174 = vmatprep.mubr.f32.mxu0 0.0
  %1175 = vmatmul.mubr.f32.gmra.mxu0 %v1045
  %v1176 = vpop.f32.mrf.mxu0
  %v1177 = vadd.f32 %v1031, %v1176
  %v1178 = vpop.f32.mrf.mxu0
  %v1179 = vadd.f32 %v1035, %v1178
  %1180 = vmatprep.mubr.f32.mxu0 0.0
  %1181 = vmatmul.mubr.f32.gmra.mxu0 %v1048
  %v1182 = vpop.f32.mrf.mxu0
  %v1183 = vadd.f32 %v1031, %v1182
  %v1184 = vpop.f32.mrf.mxu0
  %v1185 = vadd.f32 %v1035, %v1184
  %1186 = vmatprep.mubr.f32.mxu0 0.0
  %1187 = vmatmul.mubr.f32.gmra.mxu0 %v1051
  %v1188 = vpop.f32.mrf.mxu0
  %v1189 = vadd.f32 %v1031, %v1188
  %v1190 = vpop.f32.mrf.mxu0
  %v1191 = vadd.f32 %v1035, %v1190
  %1192 = vmatprep.mubr.f32.mxu0 0.0
  %1193 = vmatmul.mubr.f32.gmra.mxu0 %v1054
  %v1194 = vpop.f32.mrf.mxu0
  %v1195 = vadd.f32 %v1031, %v1194
  %v1196 = vpop.f32.mrf.mxu0
  %v1197 = vadd.f32 %v1035, %v1196
  %1198 = vmatprep.mubr.f32.mxu0 0.0
  %1199 = vmatmul.mubr.f32.gmra.mxu0 %v1057
  %v1200 = vpop.f32.mrf.mxu0
  %v1201 = vadd.f32 %v1031, %v1200
  %v1202 = vpop.f32.mrf.mxu0
  %v1203 = vadd.f32 %v1035, %v1202
  %1204 = vmatprep.mubr.f32.mxu0 0.0
  %1205 = vmatmul.mubr.f32.gmra.mxu0 %v1060
  %v1206 = vpop.f32.mrf.mxu0
  %v1207 = vadd.f32 %v1031, %v1206
  %v1208 = vpop.f32.mrf.mxu0
  %v1209 = vadd.f32 %v1035, %v1208
  %1210 = vmatprep.mubr.f32.mxu0 0.0
  %1211 = vmatmul.mubr.f32.gmra.mxu0 %v1063
  %v1212 = vpop.f32.mrf.mxu0
  %v1213 = vadd.f32 %v1031, %v1212
  %v1214 = vpop.f32.mrf.mxu0
  %v1215 = vadd.f32 %v1035, %v1214
  %1216 = vmatprep.mubr.f32.mxu0 0.0
  %1217 = vmatmul.mubr.f32.gmra.mxu0 %v1066
  %v1218 = vpop.f32.mrf.mxu0
  %v1219 = vadd.f32 %v1031, %v1218
  %v1220 = vpop.f32.mrf.mxu0
  %v1221 = vadd.f32 %v1035, %v1220
  %1222 = vmatprep.mubr.f32.mxu0 0.0
  %1223 = vmatmul.mubr.f32.gmra.mxu0 %v1069
  %v1224 = vpop.f32.mrf.mxu0
  %v1225 = vadd.f32 %v1031, %v1224
  %v1226 = vpop.f32.mrf.mxu0
  %v1227 = vadd.f32 %v1035, %v1226
  %1228 = vmatprep.mubr.f32.mxu0 0.0
  %1229 = vmatmul.mubr.f32.gmra.mxu0 %v1072
  %v1230 = vpop.f32.mrf.mxu0
  %v1231 = vadd.f32 %v1031, %v1230
  %v1232 = vpop.f32.mrf.mxu0
  %v1233 = vadd.f32 %v1035, %v1232
  %1234 = vmatprep.mubr.f32.mxu0 0.0
  %1235 = vmatmul.mubr.f32.gmra.mxu0 %v1075
  %v1236 = vpop.f32.mrf.mxu0
  %v1237 = vadd.f32 %v1031, %v1236
  %v1238 = vpop.f32.mrf.mxu0
  %v1239 = vadd.f32 %v1035, %v1238
  %1240 = vmatprep.mubr.f32.mxu0 0.0
  %1241 = vmatmul.mubr.f32.gmra.mxu0 %v1078
  %v1242 = vpop.f32.mrf.mxu0
  %v1243 = vadd.f32 %v1031, %v1242
  %v1244 = vpop.f32.mrf.mxu0
  %v1245 = vadd.f32 %v1035, %v1244
  %1246 = vmatprep.mubr.f32.mxu0 0.0
  %1247 = vmatmul.mubr.f32.gmra.mxu0 %v1081
  %v1248 = vpop.f32.mrf.mxu0
  %v1249 = vadd.f32 %v1031, %v1248
  %v1250 = vpop.f32.mrf.mxu0
  %v1251 = vadd.f32 %v1035, %v1250
  %1252 = vmatprep.mubr.f32.mxu0 0.0
  %1253 = vmatmul.mubr.f32.gmra.mxu0 %v1084
  %v1254 = vpop.f32.mrf.mxu0
  %v1255 = vadd.f32 %v1031, %v1254
  %v1256 = vpop.f32.mrf.mxu0
  %v1257 = vadd.f32 %v1035, %v1256
  %1258 = vmatprep.mubr.f32.mxu0 0.0
  %1259 = vmatmul.mubr.f32.gmra.mxu0 %v1087
  %v1260 = vpop.f32.mrf.mxu0
  %v1261 = vadd.f32 %v1031, %v1260
  %v1262 = vpop.f32.mrf.mxu0
  %v1263 = vadd.f32 %v1035, %v1262
  %1264 = vmatprep.mubr.f32.mxu0 0.0
  %1265 = vmatmul.mubr.f32.gmra.mxu0 %v1090
  %v1266 = vpop.f32.mrf.mxu0
  %v1267 = vadd.f32 %v1031, %v1266
  %v1268 = vpop.f32.mrf.mxu0
  %v1269 = vadd.f32 %v1035, %v1268
  %1270 = vmatprep.mubr.f32.mxu0 0.0
  %1271 = vmatmul.mubr.f32.gmra.mxu0 %v1093
  %v1272 = vpop.f32.mrf.mxu0
  %v1273 = vadd.f32 %v1031, %v1272
  %v1274 = vpop.f32.mrf.mxu0
  %v1275 = vadd.f32 %v1035, %v1274
  %1276 = vmatprep.mubr.f32.mxu0 0.0
  %1277 = vmatmul.mubr.f32.gmra.mxu0 %v1096
  %v1278 = vpop.f32.mrf.mxu0
  %v1279 = vadd.f32 %v1031, %v1278
  %v1280 = vpop.f32.mrf.mxu0
  %v1281 = vadd.f32 %v1035, %v1280
  %1282 = vdwg.mxu0
  %1283 = vst [vmem:[%s7] sm:$0xff] %v1165
  %1284 = vst [vmem:[%s7 + $0x8] sm:$0xff] %v1167
  %1285 = vst [vmem:[%s7 + $0x10] sm:$0xff] %v1171
  %1286 = vst [vmem:[%s7 + $0x18] sm:$0xff] %v1173
  %1287 = vst [vmem:[%s7 + $0x20] sm:$0xff] %v1177
  %1288 = vst [vmem:[%s7 + $0x28] sm:$0xff] %v1179
  %1289 = vst [vmem:[%s7 + $0x30] sm:$0xff] %v1183
  %1290 = vst [vmem:[%s7 + $0x38] sm:$0xff] %v1185
  %1291 = vst [vmem:[%s7 + $0x40] sm:$0xff] %v1189
  %1292 = vst [vmem:[%s7 + $0x48] sm:$0xff] %v1191
  %1293 = vst [vmem:[%s7 + $0x50] sm:$0xff] %v1195
  %1294 = vst [vmem:[%s7 + $0x58] sm:$0xff] %v1197
  %1295 = vst [vmem:[%s7 + $0x60] sm:$0xff] %v1201
  %1296 = vst [vmem:[%s7 + $0x68] sm:$0xff] %v1203
  %1297 = vst [vmem:[%s7 + $0x70] sm:$0xff] %v1207
  %1298 = vst [vmem:[%s7 + $0x78] sm:$0xff] %v1209
  %1299 = vst [vmem:[%s7 + $0x80] sm:$0xff] %v1213
  %1300 = vst [vmem:[%s7 + $0x88] sm:$0xff] %v1215
  %1301 = vst [vmem:[%s7 + $0x90] sm:$0xff] %v1219
  %1302 = vst [vmem:[%s7 + $0x98] sm:$0xff] %v1221
  %1303 = vst [vmem:[%s7 + $0xa0] sm:$0xff] %v1225
  %1304 = vst [vmem:[%s7 + $0xa8] sm:$0xff] %v1227
  %1305 = vst [vmem:[%s7 + $0xb0] sm:$0xff] %v1231
  %1306 = vst [vmem:[%s7 + $0xb8] sm:$0xff] %v1233
  %1307 = vst [vmem:[%s7 + $0xc0] sm:$0xff] %v1237
  %1308 = vst [vmem:[%s7 + $0xc8] sm:$0xff] %v1239
  %1309 = vst [vmem:[%s7 + $0xd0] sm:$0xff] %v1243
  %1310 = vst [vmem:[%s7 + $0xd8] sm:$0xff] %v1245
  %1311 = vst [vmem:[%s7 + $0xe0] sm:$0xff] %v1249
  %1312 = vst [vmem:[%s7 + $0xe8] sm:$0xff] %v1251
  %1313 = vst [vmem:[%s7 + $0xf0] sm:$0xff] %v1255
  %1314 = vst [vmem:[%s7 + $0xf8] sm:$0xff] %v1257
  %1315 = vst [vmem:[%s7 + $0x100] sm:$0xff] %v1261
  %1316 = vst [vmem:[%s7 + $0x108] sm:$0xff] %v1263
  %1317 = vst [vmem:[%s7 + $0x110] sm:$0xff] %v1267
  %1318 = vst [vmem:[%s7 + $0x118] sm:$0xff] %v1269
  %1319 = vst [vmem:[%s7 + $0x120] sm:$0xff] %v1273
  %1320 = vst [vmem:[%s7 + $0x128] sm:$0xff] %v1275
  %1321 = vst [vmem:[%s7 + $0x130] sm:$0xff] %v1279
  %1322 = vst [vmem:[%s7 + $0x138] sm:$0xff] %v1281
  // Predicated region
  $region30: #{keynet_forward.6} parent=0 // pred_check
    _
  $region31: #{keynet_forward.6} parent=0 // pred_check_branch
    %1324 = sbr.rel (0) target = $region33
  $region32: #{keynet_forward.6} parent=0 // pred_region
    _
  $region33: #{keynet_forward.6} parent=0 // pred_fallthru
    _
  // Predicated region
  $region34: #{keynet_forward.6} parent=0 // pred_check
    _
  $region35: #{keynet_forward.6} parent=0 // pred_check_branch
    %1326 = sbr.rel (0) target = $region37
  $region36: #{keynet_forward.6} parent=0 // pred_region
    _
  $region37: #{keynet_forward.6} parent=0 // pred_fallthru
    _

// kernel: keynet_forward.7
$region0: #{keynet_forward.7}
  #allocation0 [shape = 'u32[]', space=smem, size = 0x4, offset = 0x4, fixed_abs, tag = 'smem constant byte address 0x4 - core index']
  #allocation1 [shape = 'u32[144,128]{1,0:T(1,128)}', space=vmem, size = 0x12000, scoped, tag = 'internal scratch']
  %s0 = inlined_call_operand.vmem [shape: f32[5,4,32,64], index: 0, kind: input, shape index: {}]
  %s1 = inlined_call_operand.vmem [shape: f32[4,64,64], index: 1, kind: input, shape index: {}]
  %s2 = inlined_call_operand.vmem [shape: f32[5,32,64], index: 2, kind: output, shape index: {}]
  %s3 = sld [smem:[#allocation0]]
  $region18: #{keynet_forward.7} parent=0
    _
  %s5 = ssub.s32 1, %s3
  %s6 = scalar_select 0, %s5, %s3
  // Predicated region
  $region2: #{keynet_forward.7} parent=0 // pred_check
    _
  $region3: #{keynet_forward.7} parent=0 // pred_check_branch
    %8 = sbr.rel (0) target = $region5
  $region4: #{keynet_forward.7} parent=0 // pred_region
    _
  $region5: #{keynet_forward.7} parent=0 // pred_fallthru
    _
  // Predicated region
  $region6: #{keynet_forward.7} parent=0 // pred_check
    _
  $region7: #{keynet_forward.7} parent=0 // pred_check_branch
    %10 = sbr.rel (0) target = $region9
  $region8: #{keynet_forward.7} parent=0 // pred_region
    _
  $region9: #{keynet_forward.7} parent=0 // pred_fallthru
    _
  %v11 = vld [vmem:[%s1] sm:$0xff]
  %v12 = vld [vmem:[%s1 + $0x8] sm:$0xff]
  %v13 = vld [vmem:[%s1 + $0x10] sm:$0xff]
  %v14 = vld [vmem:[%s1 + $0x18] sm:$0xff]
  %v15 = vld [vmem:[%s1 + $0x20] sm:$0xff]
  %v16 = vld [vmem:[%s1 + $0x28] sm:$0xff]
  %v17 = vld [vmem:[%s1 + $0x30] sm:$0xff]
  %v18 = vld [vmem:[%s1 + $0x38] sm:$0xff]
  %v19 = vld [vmem:[%s1 + $0x40] sm:$0xff]
  %v20 = vld [vmem:[%s1 + $0x48] sm:$0xff]
  %v21 = vld [vmem:[%s1 + $0x50] sm:$0xff]
  %v22 = vld [vmem:[%s1 + $0x58] sm:$0xff]
  %v23 = vld [vmem:[%s1 + $0x60] sm:$0xff]
  %v24 = vld [vmem:[%s1 + $0x68] sm:$0xff]
  %v25 = vld [vmem:[%s1 + $0x70] sm:$0xff]
  %v26 = vld [vmem:[%s1 + $0x78] sm:$0xff]
  %v27 = vld [vmem:[%s1 + $0x80] sm:$0xff]
  %v28 = vld [vmem:[%s1 + $0x88] sm:$0xff]
  %v29 = vld [vmem:[%s1 + $0x90] sm:$0xff]
  %v30 = vld [vmem:[%s1 + $0x98] sm:$0xff]
  %v31 = vld [vmem:[%s1 + $0xa0] sm:$0xff]
  %v32 = vld [vmem:[%s1 + $0xa8] sm:$0xff]
  %v33 = vld [vmem:[%s1 + $0xb0] sm:$0xff]
  %v34 = vld [vmem:[%s1 + $0xb8] sm:$0xff]
  %v35 = vld [vmem:[%s1 + $0xc0] sm:$0xff]
  %v36 = vld [vmem:[%s1 + $0xc8] sm:$0xff]
  %v37 = vld [vmem:[%s1 + $0xd0] sm:$0xff]
  %v38 = vld [vmem:[%s1 + $0xd8] sm:$0xff]
  %v39 = vld [vmem:[%s1 + $0xe0] sm:$0xff]
  %v40 = vld [vmem:[%s1 + $0xe8] sm:$0xff]
  %v41 = vld [vmem:[%s1 + $0xf0] sm:$0xff]
  %v42 = vld [vmem:[%s1 + $0xf8] sm:$0xff]
  %v43 = vld [vmem:[%s0] sm:$0xff]
  %v44 = vld [vmem:[%s0 + $0x8] sm:$0xff]
  %v45 = vld [vmem:[%s0 + $0x10] sm:$0xff]
  %v46 = vld [vmem:[%s0 + $0x18] sm:$0xff]
  %v47 = vld [vmem:[%s0 + $0x20] sm:$0xff]
  %v48 = vld [vmem:[%s0 + $0x28] sm:$0xff]
  %v49 = vld [vmem:[%s0 + $0x30] sm:$0xff]
  %v50 = vld [vmem:[%s0 + $0x38] sm:$0xff]
  %v51 = vld [vmem:[%s0 + $0x40] sm:$0xff]
  %v52 = vld [vmem:[%s0 + $0x48] sm:$0xff]
  %v53 = vld [vmem:[%s0 + $0x50] sm:$0xff]
  %v54 = vld [vmem:[%s0 + $0x58] sm:$0xff]
  %v55 = vld [vmem:[%s0 + $0x60] sm:$0xff]
  %v56 = vld [vmem:[%s0 + $0x68] sm:$0xff]
  %v57 = vld [vmem:[%s0 + $0x70] sm:$0xff]
  %v58 = vld [vmem:[%s0 + $0x78] sm:$0xff]
  %vm59 = vcmask 523264
  %v61 = vsel %vm59, 0.0, 0
  %63 = vmatprep.subr.mxu0 0.0
  %64 = vmatpush1.msra.mxu0 0.0
  %65 = vmatprep.subr.mxu0 0.0
  %66 = vmatpush1.msra.mxu0 0.0
  %67 = vmatprep.subr.mxu0 0.0
  %68 = vmatpush1.msra.mxu0 0.0
  %69 = vmatprep.subr.mxu0 0.0
  %70 = vmatpush1.msra.mxu0 0.0
  %71 = vmatprep.subr.mxu0 0.0
  %72 = vmatpush1.msra.mxu0 0.0
  %73 = vmatprep.subr.mxu0 0.0
  %74 = vmatpush1.msra.mxu0 0.0
  %75 = vmatprep.subr.mxu0 0.0
  %76 = vmatpush1.msra.mxu0 0.0
  %77 = vmatprep.subr.mxu0 0.0
  %78 = vmatpush1.msra.mxu0 0.0
  %79 = vmatprep.subr.mxu0 0.0
  %80 = vmatpush1.msra.mxu0 %v18
  %81 = vmatprep.subr.mxu0 0.0
  %82 = vmatpush1.msra.mxu0 %v17
  %83 = vmatprep.subr.mxu0 0.0
  %84 = vmatpush1.msra.mxu0 %v16
  %85 = vmatprep.subr.mxu0 0.0
  %86 = vmatpush1.msra.mxu0 %v15
  %87 = vmatprep.subr.mxu0 0.0
  %88 = vmatpush1.msra.mxu0 %v14
  %89 = vmatprep.subr.mxu0 0.0
  %90 = vmatpush1.msra.mxu0 %v13
  %91 = vmatprep.subr.mxu0 0.0
  %92 = vmatpush1.msra.mxu0 %v12
  %93 = vmatprep.subr.mxu0 0.0
  %94 = vmatpush1.msra.mxu0 %v11
  %95 = vmatprep.subr.mxu0 0.0
  %96 = vmatpush2.msra.mxu0 0.0
  %97 = vmatprep.subr.mxu0 0.0
  %98 = vmatpush2.msra.mxu0 0.0
  %99 = vmatprep.subr.mxu0 0.0
  %100 = vmatpush2.msra.mxu0 0.0
  %101 = vmatprep.subr.mxu0 0.0
  %102 = vmatpush2.msra.mxu0 0.0
  %103 = vmatprep.subr.mxu0 0.0
  %104 = vmatpush2.msra.mxu0 0.0
  %105 = vmatprep.subr.mxu0 0.0
  %106 = vmatpush2.msra.mxu0 0.0
  %107 = vmatprep.subr.mxu0 0.0
  %108 = vmatpush2.msra.mxu0 0.0
  %109 = vmatprep.subr.mxu0 0.0
  %110 = vmatpush2.msra.mxu0 0.0
  %111 = vmatprep.subr.mxu0 0.0
  %112 = vmatpush2.msra.mxu0 0.0
  %113 = vmatprep.subr.mxu0 0.0
  %114 = vmatpush2.msra.mxu0 0.0
  %115 = vmatprep.subr.mxu0 0.0
  %116 = vmatpush2.msra.mxu0 0.0
  %117 = vmatprep.subr.mxu0 0.0
  %118 = vmatpush2.msra.mxu0 0.0
  %119 = vmatprep.subr.mxu0 0.0
  %120 = vmatpush2.msra.mxu0 0.0
  %121 = vmatprep.subr.mxu0 0.0
  %122 = vmatpush2.msra.mxu0 0.0
  %123 = vmatprep.subr.mxu0 0.0
  %124 = vmatpush2.msra.mxu0 0.0
  %125 = vmatprep.subr.mxu0 0.0
  %126 = vmatpush2.msra.mxu0 0.0
  %127 = vmatprep.mubr.f32.mxu0 0.0
  %128 = vmatmul.mubr.f32.gmra.mxu0 %v61
  %v129 = vpop.f32.mrf.mxu0
  %v130 = vadd.f32 0.0, %v129
  %v131 = vpop.f32.mrf.mxu0
  %132 = vmatprep.mubr.f32.mxu0 0.0
  %133 = vmatmul.mubr.f32.gmra.mxu0 %v61
  %v134 = vpop.f32.mrf.mxu0
  %v135 = vadd.f32 0.0, %v134
  %v136 = vpop.f32.mrf.mxu0
  %137 = vmatprep.mubr.f32.mxu0 0.0
  %138 = vmatmul.mubr.f32.gmra.mxu0 %v61
  %v139 = vpop.f32.mrf.mxu0
  %v140 = vadd.f32 0.0, %v139
  %v141 = vpop.f32.mrf.mxu0
  %142 = vmatprep.mubr.f32.mxu0 0.0
  %143 = vmatmul.mubr.f32.gmra.mxu0 %v61
  %v144 = vpop.f32.mrf.mxu0
  %v145 = vadd.f32 0.0, %v144
  %v146 = vpop.f32.mrf.mxu0
  %147 = vdwg.mxu0
  %v148 = vadd.f32 %v43, %v130
  %v149 = vadd.f32 %v44, %v135
  %v150 = vadd.f32 %v45, %v140
  %v151 = vadd.f32 %v46, %v145
  %v152 = vxor.u32 %v148, 2147483648
  %v153 = vxor.u32 %v149, 2147483648
  %v154 = vxor.u32 %v150, 2147483648
  %v155 = vxor.u32 %v151, 2147483648
  %v156 = vmul.f32 %v152, 1.442695
  %v157 = vpow.pop %v156
  %v158 = vmul.f32 %v153, 1.442695
  %v159 = vpow.pop %v158
  %v160 = vmul.f32 %v154, 1.442695
  %v161 = vpow.pop %v160
  %v162 = vmul.f32 %v155, 1.442695
  %v163 = vpow.pop %v162
  %v164 = vadd.f32 %v157, 1.0
  %v165 = vadd.f32 %v159, 1.0
  %v166 = vadd.f32 %v161, 1.0
  %v167 = vadd.f32 %v163, 1.0
  %v168 = vrcp.pop %v164
  %v169 = vmul.f32 1.0, %v168
  %v170 = vrcp.pop %v165
  %v171 = vmul.f32 1.0, %v170
  %v172 = vrcp.pop %v166
  %v173 = vmul.f32 1.0, %v172
  %v174 = vrcp.pop %v167
  %v175 = vmul.f32 1.0, %v174
  %176 = vmatprep.subr.mxu0 0.0
  %177 = vmatpush1.msra.mxu0 0.0
  %178 = vmatprep.subr.mxu0 0.0
  %179 = vmatpush1.msra.mxu0 0.0
  %180 = vmatprep.subr.mxu0 0.0
  %181 = vmatpush1.msra.mxu0 0.0
  %182 = vmatprep.subr.mxu0 0.0
  %183 = vmatpush1.msra.mxu0 0.0
  %184 = vmatprep.subr.mxu0 0.0
  %185 = vmatpush1.msra.mxu0 0.0
  %186 = vmatprep.subr.mxu0 0.0
  %187 = vmatpush1.msra.mxu0 0.0
  %188 = vmatprep.subr.mxu0 0.0
  %189 = vmatpush1.msra.mxu0 0.0
  %190 = vmatprep.subr.mxu0 0.0
  %191 = vmatpush1.msra.mxu0 0.0
  %192 = vmatprep.subr.mxu0 0.0
  %193 = vmatpush1.msra.mxu0 %v26
  %194 = vmatprep.subr.mxu0 0.0
  %195 = vmatpush1.msra.mxu0 %v25
  %196 = vmatprep.subr.mxu0 0.0
  %197 = vmatpush1.msra.mxu0 %v24
  %198 = vmatprep.subr.mxu0 0.0
  %199 = vmatpush1.msra.mxu0 %v23
  %200 = vmatprep.subr.mxu0 0.0
  %201 = vmatpush1.msra.mxu0 %v22
  %202 = vmatprep.subr.mxu0 0.0
  %203 = vmatpush1.msra.mxu0 %v21
  %204 = vmatprep.subr.mxu0 0.0
  %205 = vmatpush1.msra.mxu0 %v20
  %206 = vmatprep.subr.mxu0 0.0
  %207 = vmatpush1.msra.mxu0 %v19
  %208 = vmatprep.subr.mxu0 0.0
  %209 = vmatpush2.msra.mxu0 0.0
  %210 = vmatprep.subr.mxu0 0.0
  %211 = vmatpush2.msra.mxu0 0.0
  %212 = vmatprep.subr.mxu0 0.0
  %213 = vmatpush2.msra.mxu0 0.0
  %214 = vmatprep.subr.mxu0 0.0
  %215 = vmatpush2.msra.mxu0 0.0
  %216 = vmatprep.subr.mxu0 0.0
  %217 = vmatpush2.msra.mxu0 0.0
  %218 = vmatprep.subr.mxu0 0.0
  %219 = vmatpush2.msra.mxu0 0.0
  %220 = vmatprep.subr.mxu0 0.0
  %221 = vmatpush2.msra.mxu0 0.0
  %222 = vmatprep.subr.mxu0 0.0
  %223 = vmatpush2.msra.mxu0 0.0
  %224 = vmatprep.subr.mxu0 0.0
  %225 = vmatpush2.msra.mxu0 0.0
  %226 = vmatprep.subr.mxu0 0.0
  %227 = vmatpush2.msra.mxu0 0.0
  %228 = vmatprep.subr.mxu0 0.0
  %229 = vmatpush2.msra.mxu0 0.0
  %230 = vmatprep.subr.mxu0 0.0
  %231 = vmatpush2.msra.mxu0 0.0
  %232 = vmatprep.subr.mxu0 0.0
  %233 = vmatpush2.msra.mxu0 0.0
  %234 = vmatprep.subr.mxu0 0.0
  %235 = vmatpush2.msra.mxu0 0.0
  %236 = vmatprep.subr.mxu0 0.0
  %237 = vmatpush2.msra.mxu0 0.0
  %238 = vmatprep.subr.mxu0 0.0
  %239 = vmatpush2.msra.mxu0 0.0
  %240 = vmatprep.mubr.f32.mxu0 0.0
  %241 = vmatmul.mubr.f32.gmra.mxu0 %v61
  %v242 = vpop.f32.mrf.mxu0
  %v243 = vadd.f32 0.0, %v242
  %v244 = vpop.f32.mrf.mxu0
  %245 = vmatprep.mubr.f32.mxu0 0.0
  %246 = vmatmul.mubr.f32.gmra.mxu0 %v61
  %v247 = vpop.f32.mrf.mxu0
  %v248 = vadd.f32 0.0, %v247
  %v249 = vpop.f32.mrf.mxu0
  %250 = vmatprep.mubr.f32.mxu0 0.0
  %251 = vmatmul.mubr.f32.gmra.mxu0 %v61
  %v252 = vpop.f32.mrf.mxu0
  %v253 = vadd.f32 0.0, %v252
  %v254 = vpop.f32.mrf.mxu0
  %255 = vmatprep.mubr.f32.mxu0 0.0
  %256 = vmatmul.mubr.f32.gmra.mxu0 %v61
  %v257 = vpop.f32.mrf.mxu0
  %v258 = vadd.f32 0.0, %v257
  %v259 = vpop.f32.mrf.mxu0
  %260 = vdwg.mxu0
  %v261 = vadd.f32 %v47, %v243
  %v262 = vadd.f32 %v48, %v248
  %v263 = vadd.f32 %v49, %v253
  %v264 = vadd.f32 %v50, %v258
  %v265 = vxor.u32 %v261, 2147483648
  %v266 = vxor.u32 %v262, 2147483648
  %v267 = vxor.u32 %v263, 2147483648
  %v268 = vxor.u32 %v264, 2147483648
  %v269 = vmul.f32 %v265, 1.442695
  %v270 = vpow.pop %v269
  %v271 = vmul.f32 %v266, 1.442695
  %v272 = vpow.pop %v271
  %v273 = vmul.f32 %v267, 1.442695
  %v274 = vpow.pop %v273
  %v275 = vmul.f32 %v268, 1.442695
  %v276 = vpow.pop %v275
  %v277 = vadd.f32 %v270, 1.0
  %v278 = vadd.f32 %v272, 1.0
  %v279 = vadd.f32 %v274, 1.0
  %v280 = vadd.f32 %v276, 1.0
  %v281 = vrcp.pop %v277
  %v282 = vmul.f32 1.0, %v281
  %v283 = vrcp.pop %v278
  %v284 = vmul.f32 1.0, %v283
  %v285 = vrcp.pop %v279
  %v286 = vmul.f32 1.0, %v285
  %v287 = vrcp.pop %v280
  %v288 = vmul.f32 1.0, %v287
  %289 = vmatprep.subr.mxu0 0.0
  %290 = vmatpush1.msra.mxu0 0.0
  %291 = vmatprep.subr.mxu0 0.0
  %292 = vmatpush1.msra.mxu0 0.0
  %293 = vmatprep.subr.mxu0 0.0
  %294 = vmatpush1.msra.mxu0 0.0
  %295 = vmatprep.subr.mxu0 0.0
  %296 = vmatpush1.msra.mxu0 0.0
  %297 = vmatprep.subr.mxu0 0.0
  %298 = vmatpush1.msra.mxu0 0.0
  %299 = vmatprep.subr.mxu0 0.0
  %300 = vmatpush1.msra.mxu0 0.0
  %301 = vmatprep.subr.mxu0 0.0
  %302 = vmatpush1.msra.mxu0 0.0
  %303 = vmatprep.subr.mxu0 0.0
  %304 = vmatpush1.msra.mxu0 0.0
  %305 = vmatprep.subr.mxu0 0.0
  %306 = vmatpush1.msra.mxu0 %v34
  %307 = vmatprep.subr.mxu0 0.0
  %308 = vmatpush1.msra.mxu0 %v33
  %309 = vmatprep.subr.mxu0 0.0
  %310 = vmatpush1.msra.mxu0 %v32
  %311 = vmatprep.subr.mxu0 0.0
  %312 = vmatpush1.msra.mxu0 %v31
  %313 = vmatprep.subr.mxu0 0.0
  %314 = vmatpush1.msra.mxu0 %v30
  %315 = vmatprep.subr.mxu0 0.0
  %316 = vmatpush1.msra.mxu0 %v29
  %317 = vmatprep.subr.mxu0 0.0
  %318 = vmatpush1.msra.mxu0 %v28
  %319 = vmatprep.subr.mxu0 0.0
  %320 = vmatpush1.msra.mxu0 %v27
  %321 = vmatprep.subr.mxu0 0.0
  %322 = vmatpush2.msra.mxu0 0.0
  %323 = vmatprep.subr.mxu0 0.0
  %324 = vmatpush2.msra.mxu0 0.0
  %325 = vmatprep.subr.mxu0 0.0
  %326 = vmatpush2.msra.mxu0 0.0
  %327 = vmatprep.subr.mxu0 0.0
  %328 = vmatpush2.msra.mxu0 0.0
  %329 = vmatprep.subr.mxu0 0.0
  %330 = vmatpush2.msra.mxu0 0.0
  %331 = vmatprep.subr.mxu0 0.0
  %332 = vmatpush2.msra.mxu0 0.0
  %333 = vmatprep.subr.mxu0 0.0
  %334 = vmatpush2.msra.mxu0 0.0
  %335 = vmatprep.subr.mxu0 0.0
  %336 = vmatpush2.msra.mxu0 0.0
  %337 = vmatprep.subr.mxu0 0.0
  %338 = vmatpush2.msra.mxu0 0.0
  %339 = vmatprep.subr.mxu0 0.0
  %340 = vmatpush2.msra.mxu0 0.0
  %341 = vmatprep.subr.mxu0 0.0
  %342 = vmatpush2.msra.mxu0 0.0
  %343 = vmatprep.subr.mxu0 0.0
  %344 = vmatpush2.msra.mxu0 0.0
  %345 = vmatprep.subr.mxu0 0.0
  %346 = vmatpush2.msra.mxu0 0.0
  %347 = vmatprep.subr.mxu0 0.0
  %348 = vmatpush2.msra.mxu0 0.0
  %349 = vmatprep.subr.mxu0 0.0
  %350 = vmatpush2.msra.mxu0 0.0
  %351 = vmatprep.subr.mxu0 0.0
  %352 = vmatpush2.msra.mxu0 0.0
  %353 = vmatprep.mubr.f32.mxu0 0.0
  %354 = vmatmul.mubr.f32.gmra.mxu0 %v61
  %v355 = vpop.f32.mrf.mxu0
  %v356 = vadd.f32 0.0, %v355
  %v357 = vpop.f32.mrf.mxu0
  %358 = vmatprep.mubr.f32.mxu0 0.0
  %359 = vmatmul.mubr.f32.gmra.mxu0 %v61
  %v360 = vpop.f32.mrf.mxu0
  %v361 = vadd.f32 0.0, %v360
  %v362 = vpop.f32.mrf.mxu0
  %363 = vmatprep.mubr.f32.mxu0 0.0
  %364 = vmatmul.mubr.f32.gmra.mxu0 %v61
  %v365 = vpop.f32.mrf.mxu0
  %v366 = vadd.f32 0.0, %v365
  %v367 = vpop.f32.mrf.mxu0
  %368 = vmatprep.mubr.f32.mxu0 0.0
  %369 = vmatmul.mubr.f32.gmra.mxu0 %v61
  %v370 = vpop.f32.mrf.mxu0
  %v371 = vadd.f32 0.0, %v370
  %v372 = vpop.f32.mrf.mxu0
  %373 = vdwg.mxu0
  %v374 = vadd.f32 %v51, %v356
  %v375 = vadd.f32 %v52, %v361
  %v376 = vadd.f32 %v53, %v366
  %v377 = vadd.f32 %v54, %v371
  %v378 = vtanh.pop %v374
  %v379 = vtanh.pop %v375
  %v380 = vtanh.pop %v376
  %v381 = vtanh.pop %v377
  %382 = vmatprep.subr.mxu0 0.0
  %383 = vmatpush1.msra.mxu0 0.0
  %384 = vmatprep.subr.mxu0 0.0
  %385 = vmatpush1.msra.mxu0 0.0
  %386 = vmatprep.subr.mxu0 0.0
  %387 = vmatpush1.msra.mxu0 0.0
  %388 = vmatprep.subr.mxu0 0.0
  %389 = vmatpush1.msra.mxu0 0.0
  %390 = vmatprep.subr.mxu0 0.0
  %391 = vmatpush1.msra.mxu0 0.0
  %392 = vmatprep.subr.mxu0 0.0
  %393 = vmatpush1.msra.mxu0 0.0
  %394 = vmatprep.subr.mxu0 0.0
  %395 = vmatpush1.msra.mxu0 0.0
  %396 = vmatprep.subr.mxu0 0.0
  %397 = vmatpush1.msra.mxu0 0.0
  %398 = vmatprep.subr.mxu0 0.0
  %399 = vmatpush1.msra.mxu0 %v42
  %400 = vmatprep.subr.mxu0 0.0
  %401 = vmatpush1.msra.mxu0 %v41
  %402 = vmatprep.subr.mxu0 0.0
  %403 = vmatpush1.msra.mxu0 %v40
  %404 = vmatprep.subr.mxu0 0.0
  %405 = vmatpush1.msra.mxu0 %v39
  %406 = vmatprep.subr.mxu0 0.0
  %407 = vmatpush1.msra.mxu0 %v38
  %408 = vmatprep.subr.mxu0 0.0
  %409 = vmatpush1.msra.mxu0 %v37
  %410 = vmatprep.subr.mxu0 0.0
  %411 = vmatpush1.msra.mxu0 %v36
  %412 = vmatprep.subr.mxu0 0.0
  %413 = vmatpush1.msra.mxu0 %v35
  %414 = vmatprep.subr.mxu0 0.0
  %415 = vmatpush2.msra.mxu0 0.0
  %416 = vmatprep.subr.mxu0 0.0
  %417 = vmatpush2.msra.mxu0 0.0
  %418 = vmatprep.subr.mxu0 0.0
  %419 = vmatpush2.msra.mxu0 0.0
  %420 = vmatprep.subr.mxu0 0.0
  %421 = vmatpush2.msra.mxu0 0.0
  %422 = vmatprep.subr.mxu0 0.0
  %423 = vmatpush2.msra.mxu0 0.0
  %424 = vmatprep.subr.mxu0 0.0
  %425 = vmatpush2.msra.mxu0 0.0
  %426 = vmatprep.subr.mxu0 0.0
  %427 = vmatpush2.msra.mxu0 0.0
  %428 = vmatprep.subr.mxu0 0.0
  %429 = vmatpush2.msra.mxu0 0.0
  %430 = vmatprep.subr.mxu0 0.0
  %431 = vmatpush2.msra.mxu0 0.0
  %432 = vmatprep.subr.mxu0 0.0
  %433 = vmatpush2.msra.mxu0 0.0
  %434 = vmatprep.subr.mxu0 0.0
  %435 = vmatpush2.msra.mxu0 0.0
  %436 = vmatprep.subr.mxu0 0.0
  %437 = vmatpush2.msra.mxu0 0.0
  %438 = vmatprep.subr.mxu0 0.0
  %439 = vmatpush2.msra.mxu0 0.0
  %440 = vmatprep.subr.mxu0 0.0
  %441 = vmatpush2.msra.mxu0 0.0
  %442 = vmatprep.subr.mxu0 0.0
  %443 = vmatpush2.msra.mxu0 0.0
  %444 = vmatprep.subr.mxu0 0.0
  %445 = vmatpush2.msra.mxu0 0.0
  %446 = vmatprep.mubr.f32.mxu0 0.0
  %447 = vmatmul.mubr.f32.gmra.mxu0 %v61
  %v448 = vpop.f32.mrf.mxu0
  %v449 = vadd.f32 0.0, %v448
  %v450 = vpop.f32.mrf.mxu0
  %451 = vmatprep.mubr.f32.mxu0 0.0
  %452 = vmatmul.mubr.f32.gmra.mxu0 %v61
  %v453 = vpop.f32.mrf.mxu0
  %v454 = vadd.f32 0.0, %v453
  %v455 = vpop.f32.mrf.mxu0
  %456 = vmatprep.mubr.f32.mxu0 0.0
  %457 = vmatmul.mubr.f32.gmra.mxu0 %v61
  %v458 = vpop.f32.mrf.mxu0
  %v459 = vadd.f32 0.0, %v458
  %v460 = vpop.f32.mrf.mxu0
  %461 = vmatprep.mubr.f32.mxu0 0.0
  %462 = vmatmul.mubr.f32.gmra.mxu0 %v61
  %v463 = vpop.f32.mrf.mxu0
  %v464 = vadd.f32 0.0, %v463
  %v465 = vpop.f32.mrf.mxu0
  %466 = vdwg.mxu0
  %v467 = vadd.f32 %v55, %v449
  %v468 = vadd.f32 %v56, %v454
  %v469 = vadd.f32 %v57, %v459
  %v470 = vadd.f32 %v58, %v464
  %v471 = vxor.u32 %v467, 2147483648
  %v472 = vxor.u32 %v468, 2147483648
  %v473 = vxor.u32 %v469, 2147483648
  %v474 = vxor.u32 %v470, 2147483648
  %v475 = vmul.f32 %v471, 1.442695
  %v476 = vpow.pop %v475
  %v477 = vmul.f32 %v472, 1.442695
  %v478 = vpow.pop %v477
  %v479 = vmul.f32 %v473, 1.442695
  %v480 = vpow.pop %v479
  %v481 = vmul.f32 %v474, 1.442695
  %v482 = vpow.pop %v481
  %v483 = vadd.f32 %v476, 1.0
  %v484 = vadd.f32 %v478, 1.0
  %v485 = vadd.f32 %v480, 1.0
  %v486 = vadd.f32 %v482, 1.0
  %v487 = vrcp.pop %v483
  %v488 = vmul.f32 1.0, %v487
  %v489 = vrcp.pop %v484
  %v490 = vmul.f32 1.0, %v489
  %v491 = vrcp.pop %v485
  %v492 = vmul.f32 1.0, %v491
  %v493 = vrcp.pop %v486
  %v494 = vmul.f32 1.0, %v493
  %v495 = vmul.f32 %v282, 0.0
  %v496 = vmul.f32 %v284, 0.0
  %v497 = vmul.f32 %v286, 0.0
  %v498 = vmul.f32 %v288, 0.0
  %v499 = vmul.f32 %v169, %v378
  %v500 = vmul.f32 %v171, %v379
  %v501 = vmul.f32 %v173, %v380
  %v502 = vmul.f32 %v175, %v381
  %v503 = vadd.f32 %v495, %v499
  %v504 = vadd.f32 %v496, %v500
  %v505 = vadd.f32 %v497, %v501
  %v506 = vadd.f32 %v498, %v502
  %v507 = vtanh.pop %v503
  %v508 = vtanh.pop %v504
  %v509 = vtanh.pop %v505
  %v510 = vtanh.pop %v506
  %v511 = vmul.f32 %v488, %v507
  %v512 = vmul.f32 %v490, %v508
  %v513 = vmul.f32 %v492, %v509
  %v514 = vmul.f32 %v494, %v510
  %515 = vst.msk [vmem:[%s2] sm:$0xff] %vm59, %v511
  %516 = vst.msk [vmem:[%s2 + $0x8] sm:$0xff] %vm59, %v512
  %517 = vst.msk [vmem:[%s2 + $0x10] sm:$0xff] %vm59, %v513
  %518 = vst.msk [vmem:[%s2 + $0x18] sm:$0xff] %vm59, %v514
  %s519 = scalar_lea.vmem %s0, 128
  %v520 = vld [vmem:[%s519] sm:$0xff]
  %v521 = vld [vmem:[%s519 + $0x8] sm:$0xff]
  %v522 = vld [vmem:[%s519 + $0x10] sm:$0xff]
  %v523 = vld [vmem:[%s519 + $0x18] sm:$0xff]
  %v524 = vld [vmem:[%s519 + $0x20] sm:$0xff]
  %v525 = vld [vmem:[%s519 + $0x28] sm:$0xff]
  %v526 = vld [vmem:[%s519 + $0x30] sm:$0xff]
  %v527 = vld [vmem:[%s519 + $0x38] sm:$0xff]
  %v528 = vld [vmem:[%s519 + $0x40] sm:$0xff]
  %v529 = vld [vmem:[%s519 + $0x48] sm:$0xff]
  %v530 = vld [vmem:[%s519 + $0x50] sm:$0xff]
  %v531 = vld [vmem:[%s519 + $0x58] sm:$0xff]
  %v532 = vld [vmem:[%s519 + $0x60] sm:$0xff]
  %v533 = vld [vmem:[%s519 + $0x68] sm:$0xff]
  %v534 = vld [vmem:[%s519 + $0x70] sm:$0xff]
  %v535 = vld [vmem:[%s519 + $0x78] sm:$0xff]
  %v537 = vsel %vm59, %v511, 0
  %v540 = vsel %vm59, %v512, 0
  %v543 = vsel %vm59, %v513, 0
  %v546 = vsel %vm59, %v514, 0
  %548 = vmatprep.subr.mxu0 0.0
  %549 = vmatpush1.msra.mxu0 0.0
  %550 = vmatprep.subr.mxu0 0.0
  %551 = vmatpush1.msra.mxu0 0.0
  %552 = vmatprep.subr.mxu0 0.0
  %553 = vmatpush1.msra.mxu0 0.0
  %554 = vmatprep.subr.mxu0 0.0
  %555 = vmatpush1.msra.mxu0 0.0
  %556 = vmatprep.subr.mxu0 0.0
  %557 = vmatpush1.msra.mxu0 0.0
  %558 = vmatprep.subr.mxu0 0.0
  %559 = vmatpush1.msra.mxu0 0.0
  %560 = vmatprep.subr.mxu0 0.0
  %561 = vmatpush1.msra.mxu0 0.0
  %562 = vmatprep.subr.mxu0 0.0
  %563 = vmatpush1.msra.mxu0 0.0
  %564 = vmatprep.subr.mxu0 0.0
  %565 = vmatpush1.msra.mxu0 %v18
  %566 = vmatprep.subr.mxu0 0.0
  %567 = vmatpush1.msra.mxu0 %v17
  %568 = vmatprep.subr.mxu0 0.0
  %569 = vmatpush1.msra.mxu0 %v16
  %570 = vmatprep.subr.mxu0 0.0
  %571 = vmatpush1.msra.mxu0 %v15
  %572 = vmatprep.subr.mxu0 0.0
  %573 = vmatpush1.msra.mxu0 %v14
  %574 = vmatprep.subr.mxu0 0.0
  %575 = vmatpush1.msra.mxu0 %v13
  %576 = vmatprep.subr.mxu0 0.0
  %577 = vmatpush1.msra.mxu0 %v12
  %578 = vmatprep.subr.mxu0 0.0
  %579 = vmatpush1.msra.mxu0 %v11
  %580 = vmatprep.subr.mxu0 0.0
  %581 = vmatpush2.msra.mxu0 0.0
  %582 = vmatprep.subr.mxu0 0.0
  %583 = vmatpush2.msra.mxu0 0.0
  %584 = vmatprep.subr.mxu0 0.0
  %585 = vmatpush2.msra.mxu0 0.0
  %586 = vmatprep.subr.mxu0 0.0
  %587 = vmatpush2.msra.mxu0 0.0
  %588 = vmatprep.subr.mxu0 0.0
  %589 = vmatpush2.msra.mxu0 0.0
  %590 = vmatprep.subr.mxu0 0.0
  %591 = vmatpush2.msra.mxu0 0.0
  %592 = vmatprep.subr.mxu0 0.0
  %593 = vmatpush2.msra.mxu0 0.0
  %594 = vmatprep.subr.mxu0 0.0
  %595 = vmatpush2.msra.mxu0 0.0
  %596 = vmatprep.subr.mxu0 0.0
  %597 = vmatpush2.msra.mxu0 0.0
  %598 = vmatprep.subr.mxu0 0.0
  %599 = vmatpush2.msra.mxu0 0.0
  %600 = vmatprep.subr.mxu0 0.0
  %601 = vmatpush2.msra.mxu0 0.0
  %602 = vmatprep.subr.mxu0 0.0
  %603 = vmatpush2.msra.mxu0 0.0
  %604 = vmatprep.subr.mxu0 0.0
  %605 = vmatpush2.msra.mxu0 0.0
  %606 = vmatprep.subr.mxu0 0.0
  %607 = vmatpush2.msra.mxu0 0.0
  %608 = vmatprep.subr.mxu0 0.0
  %609 = vmatpush2.msra.mxu0 0.0
  %610 = vmatprep.subr.mxu0 0.0
  %611 = vmatpush2.msra.mxu0 0.0
  %612 = vmatprep.mubr.f32.mxu0 0.0
  %613 = vmatmul.mubr.f32.gmra.mxu0 %v537
  %v614 = vpop.f32.mrf.mxu0
  %v615 = vadd.f32 0.0, %v614
  %v616 = vpop.f32.mrf.mxu0
  %617 = vmatprep.mubr.f32.mxu0 0.0
  %618 = vmatmul.mubr.f32.gmra.mxu0 %v540
  %v619 = vpop.f32.mrf.mxu0
  %v620 = vadd.f32 0.0, %v619
  %v621 = vpop.f32.mrf.mxu0
  %622 = vmatprep.mubr.f32.mxu0 0.0
  %623 = vmatmul.mubr.f32.gmra.mxu0 %v543
  %v624 = vpop.f32.mrf.mxu0
  %v625 = vadd.f32 0.0, %v624
  %v626 = vpop.f32.mrf.mxu0
  %627 = vmatprep.mubr.f32.mxu0 0.0
  %628 = vmatmul.mubr.f32.gmra.mxu0 %v546
  %v629 = vpop.f32.mrf.mxu0
  %v630 = vadd.f32 0.0, %v629
  %v631 = vpop.f32.mrf.mxu0
  %632 = vdwg.mxu0
  %v633 = vadd.f32 %v520, %v615
  %v634 = vadd.f32 %v521, %v620
  %v635 = vadd.f32 %v522, %v625
  %v636 = vadd.f32 %v523, %v630
  %v637 = vxor.u32 %v633, 2147483648
  %v638 = vxor.u32 %v634, 2147483648
  %v639 = vxor.u32 %v635, 2147483648
  %v640 = vxor.u32 %v636, 2147483648
  %v641 = vmul.f32 %v637, 1.442695
  %v642 = vpow.pop %v641
  %v643 = vmul.f32 %v638, 1.442695
  %v644 = vpow.pop %v643
  %v645 = vmul.f32 %v639, 1.442695
  %v646 = vpow.pop %v645
  %v647 = vmul.f32 %v640, 1.442695
  %v648 = vpow.pop %v647
  %v649 = vadd.f32 %v642, 1.0
  %v650 = vadd.f32 %v644, 1.0
  %v651 = vadd.f32 %v646, 1.0
  %v652 = vadd.f32 %v648, 1.0
  %v653 = vrcp.pop %v649
  %v654 = vmul.f32 1.0, %v653
  %v655 = vrcp.pop %v650
  %v656 = vmul.f32 1.0, %v655
  %v657 = vrcp.pop %v651
  %v658 = vmul.f32 1.0, %v657
  %v659 = vrcp.pop %v652
  %v660 = vmul.f32 1.0, %v659
  %661 = vmatprep.subr.mxu0 0.0
  %662 = vmatpush1.msra.mxu0 0.0
  %663 = vmatprep.subr.mxu0 0.0
  %664 = vmatpush1.msra.mxu0 0.0
  %665 = vmatprep.subr.mxu0 0.0
  %666 = vmatpush1.msra.mxu0 0.0
  %667 = vmatprep.subr.mxu0 0.0
  %668 = vmatpush1.msra.mxu0 0.0
  %669 = vmatprep.subr.mxu0 0.0
  %670 = vmatpush1.msra.mxu0 0.0
  %671 = vmatprep.subr.mxu0 0.0
  %672 = vmatpush1.msra.mxu0 0.0
  %673 = vmatprep.subr.mxu0 0.0
  %674 = vmatpush1.msra.mxu0 0.0
  %675 = vmatprep.subr.mxu0 0.0
  %676 = vmatpush1.msra.mxu0 0.0
  %677 = vmatprep.subr.mxu0 0.0
  %678 = vmatpush1.msra.mxu0 %v26
  %679 = vmatprep.subr.mxu0 0.0
  %680 = vmatpush1.msra.mxu0 %v25
  %681 = vmatprep.subr.mxu0 0.0
  %682 = vmatpush1.msra.mxu0 %v24
  %683 = vmatprep.subr.mxu0 0.0
  %684 = vmatpush1.msra.mxu0 %v23
  %685 = vmatprep.subr.mxu0 0.0
  %686 = vmatpush1.msra.mxu0 %v22
  %687 = vmatprep.subr.mxu0 0.0
  %688 = vmatpush1.msra.mxu0 %v21
  %689 = vmatprep.subr.mxu0 0.0
  %690 = vmatpush1.msra.mxu0 %v20
  %691 = vmatprep.subr.mxu0 0.0
  %692 = vmatpush1.msra.mxu0 %v19
  %693 = vmatprep.subr.mxu0 0.0
  %694 = vmatpush2.msra.mxu0 0.0
  %695 = vmatprep.subr.mxu0 0.0
  %696 = vmatpush2.msra.mxu0 0.0
  %697 = vmatprep.subr.mxu0 0.0
  %698 = vmatpush2.msra.mxu0 0.0
  %699 = vmatprep.subr.mxu0 0.0
  %700 = vmatpush2.msra.mxu0 0.0
  %701 = vmatprep.subr.mxu0 0.0
  %702 = vmatpush2.msra.mxu0 0.0
  %703 = vmatprep.subr.mxu0 0.0
  %704 = vmatpush2.msra.mxu0 0.0
  %705 = vmatprep.subr.mxu0 0.0
  %706 = vmatpush2.msra.mxu0 0.0
  %707 = vmatprep.subr.mxu0 0.0
  %708 = vmatpush2.msra.mxu0 0.0
  %709 = vmatprep.subr.mxu0 0.0
  %710 = vmatpush2.msra.mxu0 0.0
  %711 = vmatprep.subr.mxu0 0.0
  %712 = vmatpush2.msra.mxu0 0.0
  %713 = vmatprep.subr.mxu0 0.0
  %714 = vmatpush2.msra.mxu0 0.0
  %715 = vmatprep.subr.mxu0 0.0
  %716 = vmatpush2.msra.mxu0 0.0
  %717 = vmatprep.subr.mxu0 0.0
  %718 = vmatpush2.msra.mxu0 0.0
  %719 = vmatprep.subr.mxu0 0.0
  %720 = vmatpush2.msra.mxu0 0.0
  %721 = vmatprep.subr.mxu0 0.0
  %722 = vmatpush2.msra.mxu0 0.0
  %723 = vmatprep.subr.mxu0 0.0
  %724 = vmatpush2.msra.mxu0 0.0
  %725 = vmatprep.mubr.f32.mxu0 0.0
  %726 = vmatmul.mubr.f32.gmra.mxu0 %v537
  %v727 = vpop.f32.mrf.mxu0
  %v728 = vadd.f32 0.0, %v727
  %v729 = vpop.f32.mrf.mxu0
  %730 = vmatprep.mubr.f32.mxu0 0.0
  %731 = vmatmul.mubr.f32.gmra.mxu0 %v540
  %v732 = vpop.f32.mrf.mxu0
  %v733 = vadd.f32 0.0, %v732
  %v734 = vpop.f32.mrf.mxu0
  %735 = vmatprep.mubr.f32.mxu0 0.0
  %736 = vmatmul.mubr.f32.gmra.mxu0 %v543
  %v737 = vpop.f32.mrf.mxu0
  %v738 = vadd.f32 0.0, %v737
  %v739 = vpop.f32.mrf.mxu0
  %740 = vmatprep.mubr.f32.mxu0 0.0
  %741 = vmatmul.mubr.f32.gmra.mxu0 %v546
  %v742 = vpop.f32.mrf.mxu0
  %v743 = vadd.f32 0.0, %v742
  %v744 = vpop.f32.mrf.mxu0
  %745 = vdwg.mxu0
  %v746 = vadd.f32 %v524, %v728
  %v747 = vadd.f32 %v525, %v733
  %v748 = vadd.f32 %v526, %v738
  %v749 = vadd.f32 %v527, %v743
  %v750 = vxor.u32 %v746, 2147483648
  %v751 = vxor.u32 %v747, 2147483648
  %v752 = vxor.u32 %v748, 2147483648
  %v753 = vxor.u32 %v749, 2147483648
  %v754 = vmul.f32 %v750, 1.442695
  %v755 = vpow.pop %v754
  %v756 = vmul.f32 %v751, 1.442695
  %v757 = vpow.pop %v756
  %v758 = vmul.f32 %v752, 1.442695
  %v759 = vpow.pop %v758
  %v760 = vmul.f32 %v753, 1.442695
  %v761 = vpow.pop %v760
  %v762 = vadd.f32 %v755, 1.0
  %v763 = vadd.f32 %v757, 1.0
  %v764 = vadd.f32 %v759, 1.0
  %v765 = vadd.f32 %v761, 1.0
  %v766 = vrcp.pop %v762
  %v767 = vmul.f32 1.0, %v766
  %v768 = vrcp.pop %v763
  %v769 = vmul.f32 1.0, %v768
  %v770 = vrcp.pop %v764
  %v771 = vmul.f32 1.0, %v770
  %v772 = vrcp.pop %v765
  %v773 = vmul.f32 1.0, %v772
  %774 = vmatprep.subr.mxu0 0.0
  %775 = vmatpush1.msra.mxu0 0.0
  %776 = vmatprep.subr.mxu0 0.0
  %777 = vmatpush1.msra.mxu0 0.0
  %778 = vmatprep.subr.mxu0 0.0
  %779 = vmatpush1.msra.mxu0 0.0
  %780 = vmatprep.subr.mxu0 0.0
  %781 = vmatpush1.msra.mxu0 0.0
  %782 = vmatprep.subr.mxu0 0.0
  %783 = vmatpush1.msra.mxu0 0.0
  %784 = vmatprep.subr.mxu0 0.0
  %785 = vmatpush1.msra.mxu0 0.0
  %786 = vmatprep.subr.mxu0 0.0
  %787 = vmatpush1.msra.mxu0 0.0
  %788 = vmatprep.subr.mxu0 0.0
  %789 = vmatpush1.msra.mxu0 0.0
  %790 = vmatprep.subr.mxu0 0.0
  %791 = vmatpush1.msra.mxu0 %v34
  %792 = vmatprep.subr.mxu0 0.0
  %793 = vmatpush1.msra.mxu0 %v33
  %794 = vmatprep.subr.mxu0 0.0
  %795 = vmatpush1.msra.mxu0 %v32
  %796 = vmatprep.subr.mxu0 0.0
  %797 = vmatpush1.msra.mxu0 %v31
  %798 = vmatprep.subr.mxu0 0.0
  %799 = vmatpush1.msra.mxu0 %v30
  %800 = vmatprep.subr.mxu0 0.0
  %801 = vmatpush1.msra.mxu0 %v29
  %802 = vmatprep.subr.mxu0 0.0
  %803 = vmatpush1.msra.mxu0 %v28
  %804 = vmatprep.subr.mxu0 0.0
  %805 = vmatpush1.msra.mxu0 %v27
  %806 = vmatprep.subr.mxu0 0.0
  %807 = vmatpush2.msra.mxu0 0.0
  %808 = vmatprep.subr.mxu0 0.0
  %809 = vmatpush2.msra.mxu0 0.0
  %810 = vmatprep.subr.mxu0 0.0
  %811 = vmatpush2.msra.mxu0 0.0
  %812 = vmatprep.subr.mxu0 0.0
  %813 = vmatpush2.msra.mxu0 0.0
  %814 = vmatprep.subr.mxu0 0.0
  %815 = vmatpush2.msra.mxu0 0.0
  %816 = vmatprep.subr.mxu0 0.0
  %817 = vmatpush2.msra.mxu0 0.0
  %818 = vmatprep.subr.mxu0 0.0
  %819 = vmatpush2.msra.mxu0 0.0
  %820 = vmatprep.subr.mxu0 0.0
  %821 = vmatpush2.msra.mxu0 0.0
  %822 = vmatprep.subr.mxu0 0.0
  %823 = vmatpush2.msra.mxu0 0.0
  %824 = vmatprep.subr.mxu0 0.0
  %825 = vmatpush2.msra.mxu0 0.0
  %826 = vmatprep.subr.mxu0 0.0
  %827 = vmatpush2.msra.mxu0 0.0
  %828 = vmatprep.subr.mxu0 0.0
  %829 = vmatpush2.msra.mxu0 0.0
  %830 = vmatprep.subr.mxu0 0.0
  %831 = vmatpush2.msra.mxu0 0.0
  %832 = vmatprep.subr.mxu0 0.0
  %833 = vmatpush2.msra.mxu0 0.0
  %834 = vmatprep.subr.mxu0 0.0
  %835 = vmatpush2.msra.mxu0 0.0
  %836 = vmatprep.subr.mxu0 0.0
  %837 = vmatpush2.msra.mxu0 0.0
  %838 = vmatprep.mubr.f32.mxu0 0.0
  %839 = vmatmul.mubr.f32.gmra.mxu0 %v537
  %v840 = vpop.f32.mrf.mxu0
  %v841 = vadd.f32 0.0, %v840
  %v842 = vpop.f32.mrf.mxu0
  %843 = vmatprep.mubr.f32.mxu0 0.0
  %844 = vmatmul.mubr.f32.gmra.mxu0 %v540
  %v845 = vpop.f32.mrf.mxu0
  %v846 = vadd.f32 0.0, %v845
  %v847 = vpop.f32.mrf.mxu0
  %848 = vmatprep.mubr.f32.mxu0 0.0
  %849 = vmatmul.mubr.f32.gmra.mxu0 %v543
  %v850 = vpop.f32.mrf.mxu0
  %v851 = vadd.f32 0.0, %v850
  %v852 = vpop.f32.mrf.mxu0
  %853 = vmatprep.mubr.f32.mxu0 0.0
  %854 = vmatmul.mubr.f32.gmra.mxu0 %v546
  %v855 = vpop.f32.mrf.mxu0
  %v856 = vadd.f32 0.0, %v855
  %v857 = vpop.f32.mrf.mxu0
  %858 = vdwg.mxu0
  %v859 = vadd.f32 %v528, %v841
  %v860 = vadd.f32 %v529, %v846
  %v861 = vadd.f32 %v530, %v851
  %v862 = vadd.f32 %v531, %v856
  %v863 = vtanh.pop %v859
  %v864 = vtanh.pop %v860
  %v865 = vtanh.pop %v861
  %v866 = vtanh.pop %v862
  %867 = vmatprep.subr.mxu0 0.0
  %868 = vmatpush1.msra.mxu0 0.0
  %869 = vmatprep.subr.mxu0 0.0
  %870 = vmatpush1.msra.mxu0 0.0
  %871 = vmatprep.subr.mxu0 0.0
  %872 = vmatpush1.msra.mxu0 0.0
  %873 = vmatprep.subr.mxu0 0.0
  %874 = vmatpush1.msra.mxu0 0.0
  %875 = vmatprep.subr.mxu0 0.0
  %876 = vmatpush1.msra.mxu0 0.0
  %877 = vmatprep.subr.mxu0 0.0
  %878 = vmatpush1.msra.mxu0 0.0
  %879 = vmatprep.subr.mxu0 0.0
  %880 = vmatpush1.msra.mxu0 0.0
  %881 = vmatprep.subr.mxu0 0.0
  %882 = vmatpush1.msra.mxu0 0.0
  %883 = vmatprep.subr.mxu0 0.0
  %884 = vmatpush1.msra.mxu0 %v42
  %885 = vmatprep.subr.mxu0 0.0
  %886 = vmatpush1.msra.mxu0 %v41
  %887 = vmatprep.subr.mxu0 0.0
  %888 = vmatpush1.msra.mxu0 %v40
  %889 = vmatprep.subr.mxu0 0.0
  %890 = vmatpush1.msra.mxu0 %v39
  %891 = vmatprep.subr.mxu0 0.0
  %892 = vmatpush1.msra.mxu0 %v38
  %893 = vmatprep.subr.mxu0 0.0
  %894 = vmatpush1.msra.mxu0 %v37
  %895 = vmatprep.subr.mxu0 0.0
  %896 = vmatpush1.msra.mxu0 %v36
  %897 = vmatprep.subr.mxu0 0.0
  %898 = vmatpush1.msra.mxu0 %v35
  %899 = vmatprep.subr.mxu0 0.0
  %900 = vmatpush2.msra.mxu0 0.0
  %901 = vmatprep.subr.mxu0 0.0
  %902 = vmatpush2.msra.mxu0 0.0
  %903 = vmatprep.subr.mxu0 0.0
  %904 = vmatpush2.msra.mxu0 0.0
  %905 = vmatprep.subr.mxu0 0.0
  %906 = vmatpush2.msra.mxu0 0.0
  %907 = vmatprep.subr.mxu0 0.0
  %908 = vmatpush2.msra.mxu0 0.0
  %909 = vmatprep.subr.mxu0 0.0
  %910 = vmatpush2.msra.mxu0 0.0
  %911 = vmatprep.subr.mxu0 0.0
  %912 = vmatpush2.msra.mxu0 0.0
  %913 = vmatprep.subr.mxu0 0.0
  %914 = vmatpush2.msra.mxu0 0.0
  %915 = vmatprep.subr.mxu0 0.0
  %916 = vmatpush2.msra.mxu0 0.0
  %917 = vmatprep.subr.mxu0 0.0
  %918 = vmatpush2.msra.mxu0 0.0
  %919 = vmatprep.subr.mxu0 0.0
  %920 = vmatpush2.msra.mxu0 0.0
  %921 = vmatprep.subr.mxu0 0.0
  %922 = vmatpush2.msra.mxu0 0.0
  %923 = vmatprep.subr.mxu0 0.0
  %924 = vmatpush2.msra.mxu0 0.0
  %925 = vmatprep.subr.mxu0 0.0
  %926 = vmatpush2.msra.mxu0 0.0
  %927 = vmatprep.subr.mxu0 0.0
  %928 = vmatpush2.msra.mxu0 0.0
  %929 = vmatprep.subr.mxu0 0.0
  %930 = vmatpush2.msra.mxu0 0.0
  %931 = vmatprep.mubr.f32.mxu0 0.0
  %932 = vmatmul.mubr.f32.gmra.mxu0 %v537
  %v933 = vpop.f32.mrf.mxu0
  %v934 = vadd.f32 0.0, %v933
  %v935 = vpop.f32.mrf.mxu0
  %936 = vmatprep.mubr.f32.mxu0 0.0
  %937 = vmatmul.mubr.f32.gmra.mxu0 %v540
  %v938 = vpop.f32.mrf.mxu0
  %v939 = vadd.f32 0.0, %v938
  %v940 = vpop.f32.mrf.mxu0
  %941 = vmatprep.mubr.f32.mxu0 0.0
  %942 = vmatmul.mubr.f32.gmra.mxu0 %v543
  %v943 = vpop.f32.mrf.mxu0
  %v944 = vadd.f32 0.0, %v943
  %v945 = vpop.f32.mrf.mxu0
  %946 = vmatprep.mubr.f32.mxu0 0.0
  %947 = vmatmul.mubr.f32.gmra.mxu0 %v546
  %v948 = vpop.f32.mrf.mxu0
  %v949 = vadd.f32 0.0, %v948
  %v950 = vpop.f32.mrf.mxu0
  %951 = vdwg.mxu0
  %v952 = vadd.f32 %v532, %v934
  %v953 = vadd.f32 %v533, %v939
  %v954 = vadd.f32 %v534, %v944
  %v955 = vadd.f32 %v535, %v949
  %v956 = vxor.u32 %v952, 2147483648
  %v957 = vxor.u32 %v953, 2147483648
  %v958 = vxor.u32 %v954, 2147483648
  %v959 = vxor.u32 %v955, 2147483648
  %v960 = vmul.f32 %v956, 1.442695
  %v961 = vpow.pop %v960
  %v962 = vmul.f32 %v957, 1.442695
  %v963 = vpow.pop %v962
  %v964 = vmul.f32 %v958, 1.442695
  %v965 = vpow.pop %v964
  %v966 = vmul.f32 %v959, 1.442695
  %v967 = vpow.pop %v966
  %v968 = vadd.f32 %v961, 1.0
  %v969 = vadd.f32 %v963, 1.0
  %v970 = vadd.f32 %v965, 1.0
  %v971 = vadd.f32 %v967, 1.0
  %v972 = vrcp.pop %v968
  %v973 = vmul.f32 1.0, %v972
  %v974 = vrcp.pop %v969
  %v975 = vmul.f32 1.0, %v974
  %v976 = vrcp.pop %v970
  %v977 = vmul.f32 1.0, %v976
  %v978 = vrcp.pop %v971
  %v979 = vmul.f32 1.0, %v978
  %v980 = vmul.f32 %v767, %v503
  %v981 = vmul.f32 %v769, %v504
  %v982 = vmul.f32 %v771, %v505
  %v983 = vmul.f32 %v773, %v506
  %v984 = vmul.f32 %v654, %v863
  %v985 = vmul.f32 %v656, %v864
  %v986 = vmul.f32 %v658, %v865
  %v987 = vmul.f32 %v660, %v866
  %v988 = vadd.f32 %v980, %v984
  %v989 = vadd.f32 %v981, %v985
  %v990 = vadd.f32 %v982, %v986
  %v991 = vadd.f32 %v983, %v987
  %v992 = vtanh.pop %v988
  %v993 = vtanh.pop %v989
  %v994 = vtanh.pop %v990
  %v995 = vtanh.pop %v991
  %v996 = vmul.f32 %v973, %v992
  %v997 = vmul.f32 %v975, %v993
  %v998 = vmul.f32 %v977, %v994
  %v999 = vmul.f32 %v979, %v995
  %s1000 = scalar_lea.vmem %s2, 32
  %1001 = vst.msk [vmem:[%s1000] sm:$0xff] %vm59, %v996
  %1002 = vst.msk [vmem:[%s1000 + $0x8] sm:$0xff] %vm59, %v997
  %1003 = vst.msk [vmem:[%s1000 + $0x10] sm:$0xff] %vm59, %v998
  %1004 = vst.msk [vmem:[%s1000 + $0x18] sm:$0xff] %vm59, %v999
  %s1005 = scalar_lea.vmem %s0, 256
  %v1006 = vld [vmem:[%s1005] sm:$0xff]
  %v1007 = vld [vmem:[%s1005 + $0x8] sm:$0xff]
  %v1008 = vld [vmem:[%s1005 + $0x10] sm:$0xff]
  %v1009 = vld [vmem:[%s1005 + $0x18] sm:$0xff]
  %v1010 = vld [vmem:[%s1005 + $0x20] sm:$0xff]
  %v1011 = vld [vmem:[%s1005 + $0x28] sm:$0xff]
  %v1012 = vld [vmem:[%s1005 + $0x30] sm:$0xff]
  %v1013 = vld [vmem:[%s1005 + $0x38] sm:$0xff]
  %v1014 = vld [vmem:[%s1005 + $0x40] sm:$0xff]
  %v1015 = vld [vmem:[%s1005 + $0x48] sm:$0xff]
  %v1016 = vld [vmem:[%s1005 + $0x50] sm:$0xff]
  %v1017 = vld [vmem:[%s1005 + $0x58] sm:$0xff]
  %v1018 = vld [vmem:[%s1005 + $0x60] sm:$0xff]
  %v1019 = vld [vmem:[%s1005 + $0x68] sm:$0xff]
  %v1020 = vld [vmem:[%s1005 + $0x70] sm:$0xff]
  %v1021 = vld [vmem:[%s1005 + $0x78] sm:$0xff]
  %v1023 = vsel %vm59, %v996, 0
  %v1026 = vsel %vm59, %v997, 0
  %v1029 = vsel %vm59, %v998, 0
  %v1032 = vsel %vm59, %v999, 0
  %1034 = vmatprep.subr.mxu0 0.0
  %1035 = vmatpush1.msra.mxu0 0.0
  %1036 = vmatprep.subr.mxu0 0.0
  %1037 = vmatpush1.msra.mxu0 0.0
  %1038 = vmatprep.subr.mxu0 0.0
  %1039 = vmatpush1.msra.mxu0 0.0
  %1040 = vmatprep.subr.mxu0 0.0
  %1041 = vmatpush1.msra.mxu0 0.0
  %1042 = vmatprep.subr.mxu0 0.0
  %1043 = vmatpush1.msra.mxu0 0.0
  %1044 = vmatprep.subr.mxu0 0.0
  %1045 = vmatpush1.msra.mxu0 0.0
  %1046 = vmatprep.subr.mxu0 0.0
  %1047 = vmatpush1.msra.mxu0 0.0
  %1048 = vmatprep.subr.mxu0 0.0
  %1049 = vmatpush1.msra.mxu0 0.0
  %1050 = vmatprep.subr.mxu0 0.0
  %1051 = vmatpush1.msra.mxu0 %v18
  %1052 = vmatprep.subr.mxu0 0.0
  %1053 = vmatpush1.msra.mxu0 %v17
  %1054 = vmatprep.subr.mxu0 0.0
  %1055 = vmatpush1.msra.mxu0 %v16
  %1056 = vmatprep.subr.mxu0 0.0
  %1057 = vmatpush1.msra.mxu0 %v15
  %1058 = vmatprep.subr.mxu0 0.0
  %1059 = vmatpush1.msra.mxu0 %v14
  %1060 = vmatprep.subr.mxu0 0.0
  %1061 = vmatpush1.msra.mxu0 %v13
  %1062 = vmatprep.subr.mxu0 0.0
  %1063 = vmatpush1.msra.mxu0 %v12
  %1064 = vmatprep.subr.mxu0 0.0
  %1065 = vmatpush1.msra.mxu0 %v11
  %1066 = vmatprep.subr.mxu0 0.0
  %1067 = vmatpush2.msra.mxu0 0.0
  %1068 = vmatprep.subr.mxu0 0.0
  %1069 = vmatpush2.msra.mxu0 0.0
  %1070 = vmatprep.subr.mxu0 0.0
  %1071 = vmatpush2.msra.mxu0 0.0
  %1072 = vmatprep.subr.mxu0 0.0
  %1073 = vmatpush2.msra.mxu0 0.0
  %1074 = vmatprep.subr.mxu0 0.0
  %1075 = vmatpush2.msra.mxu0 0.0
  %1076 = vmatprep.subr.mxu0 0.0
  %1077 = vmatpush2.msra.mxu0 0.0
  %1078 = vmatprep.subr.mxu0 0.0
  %1079 = vmatpush2.msra.mxu0 0.0
  %1080 = vmatprep.subr.mxu0 0.0
  %1081 = vmatpush2.msra.mxu0 0.0
  %1082 = vmatprep.subr.mxu0 0.0
  %1083 = vmatpush2.msra.mxu0 0.0
  %1084 = vmatprep.subr.mxu0 0.0
  %1085 = vmatpush2.msra.mxu0 0.0
  %1086 = vmatprep.subr.mxu0 0.0
  %1087 = vmatpush2.msra.mxu0 0.0
  %1088 = vmatprep.subr.mxu0 0.0
  %1089 = vmatpush2.msra.mxu0 0.0
  %1090 = vmatprep.subr.mxu0 0.0
  %1091 = vmatpush2.msra.mxu0 0.0
  %1092 = vmatprep.subr.mxu0 0.0
  %1093 = vmatpush2.msra.mxu0 0.0
  %1094 = vmatprep.subr.mxu0 0.0
  %1095 = vmatpush2.msra.mxu0 0.0
  %1096 = vmatprep.subr.mxu0 0.0
  %1097 = vmatpush2.msra.mxu0 0.0
  %1098 = vmatprep.mubr.f32.mxu0 0.0
  %1099 = vmatmul.mubr.f32.gmra.mxu0 %v1023
  %v1100 = vpop.f32.mrf.mxu0
  %v1101 = vadd.f32 0.0, %v1100
  %v1102 = vpop.f32.mrf.mxu0
  %1103 = vmatprep.mubr.f32.mxu0 0.0
  %1104 = vmatmul.mubr.f32.gmra.mxu0 %v1026
  %v1105 = vpop.f32.mrf.mxu0
  %v1106 = vadd.f32 0.0, %v1105
  %v1107 = vpop.f32.mrf.mxu0
  %1108 = vmatprep.mubr.f32.mxu0 0.0
  %1109 = vmatmul.mubr.f32.gmra.mxu0 %v1029
  %v1110 = vpop.f32.mrf.mxu0
  %v1111 = vadd.f32 0.0, %v1110
  %v1112 = vpop.f32.mrf.mxu0
  %1113 = vmatprep.mubr.f32.mxu0 0.0
  %1114 = vmatmul.mubr.f32.gmra.mxu0 %v1032
  %v1115 = vpop.f32.mrf.mxu0
  %v1116 = vadd.f32 0.0, %v1115
  %v1117 = vpop.f32.mrf.mxu0
  %1118 = vdwg.mxu0
  %v1119 = vadd.f32 %v1006, %v1101
  %v1120 = vadd.f32 %v1007, %v1106
  %v1121 = vadd.f32 %v1008, %v1111
  %v1122 = vadd.f32 %v1009, %v1116
  %v1123 = vxor.u32 %v1119, 2147483648
  %v1124 = vxor.u32 %v1120, 2147483648
  %v1125 = vxor.u32 %v1121, 2147483648
  %v1126 = vxor.u32 %v1122, 2147483648
  %v1127 = vmul.f32 %v1123, 1.442695
  %v1128 = vpow.pop %v1127
  %v1129 = vmul.f32 %v1124, 1.442695
  %v1130 = vpow.pop %v1129
  %v1131 = vmul.f32 %v1125, 1.442695
  %v1132 = vpow.pop %v1131
  %v1133 = vmul.f32 %v1126, 1.442695
  %v1134 = vpow.pop %v1133
  %v1135 = vadd.f32 %v1128, 1.0
  %v1136 = vadd.f32 %v1130, 1.0
  %v1137 = vadd.f32 %v1132, 1.0
  %v1138 = vadd.f32 %v1134, 1.0
  %v1139 = vrcp.pop %v1135
  %v1140 = vmul.f32 1.0, %v1139
  %v1141 = vrcp.pop %v1136
  %v1142 = vmul.f32 1.0, %v1141
  %v1143 = vrcp.pop %v1137
  %v1144 = vmul.f32 1.0, %v1143
  %v1145 = vrcp.pop %v1138
  %v1146 = vmul.f32 1.0, %v1145
  %1147 = vmatprep.subr.mxu0 0.0
  %1148 = vmatpush1.msra.mxu0 0.0
  %1149 = vmatprep.subr.mxu0 0.0
  %1150 = vmatpush1.msra.mxu0 0.0
  %1151 = vmatprep.subr.mxu0 0.0
  %1152 = vmatpush1.msra.mxu0 0.0
  %1153 = vmatprep.subr.mxu0 0.0
  %1154 = vmatpush1.msra.mxu0 0.0
  %1155 = vmatprep.subr.mxu0 0.0
  %1156 = vmatpush1.msra.mxu0 0.0
  %1157 = vmatprep.subr.mxu0 0.0
  %1158 = vmatpush1.msra.mxu0 0.0
  %1159 = vmatprep.subr.mxu0 0.0
  %1160 = vmatpush1.msra.mxu0 0.0
  %1161 = vmatprep.subr.mxu0 0.0
  %1162 = vmatpush1.msra.mxu0 0.0
  %1163 = vmatprep.subr.mxu0 0.0
  %1164 = vmatpush1.msra.mxu0 %v26
  %1165 = vmatprep.subr.mxu0 0.0
  %1166 = vmatpush1.msra.mxu0 %v25
  %1167 = vmatprep.subr.mxu0 0.0
  %1168 = vmatpush1.msra.mxu0 %v24
  %1169 = vmatprep.subr.mxu0 0.0
  %1170 = vmatpush1.msra.mxu0 %v23
  %1171 = vmatprep.subr.mxu0 0.0
  %1172 = vmatpush1.msra.mxu0 %v22
  %1173 = vmatprep.subr.mxu0 0.0
  %1174 = vmatpush1.msra.mxu0 %v21
  %1175 = vmatprep.subr.mxu0 0.0
  %1176 = vmatpush1.msra.mxu0 %v20
  %1177 = vmatprep.subr.mxu0 0.0
  %1178 = vmatpush1.msra.mxu0 %v19
  %1179 = vmatprep.subr.mxu0 0.0
  %1180 = vmatpush2.msra.mxu0 0.0
  %1181 = vmatprep.subr.mxu0 0.0
  %1182 = vmatpush2.msra.mxu0 0.0
  %1183 = vmatprep.subr.mxu0 0.0
  %1184 = vmatpush2.msra.mxu0 0.0
  %1185 = vmatprep.subr.mxu0 0.0
  %1186 = vmatpush2.msra.mxu0 0.0
  %1187 = vmatprep.subr.mxu0 0.0
  %1188 = vmatpush2.msra.mxu0 0.0
  %1189 = vmatprep.subr.mxu0 0.0
  %1190 = vmatpush2.msra.mxu0 0.0
  %1191 = vmatprep.subr.mxu0 0.0
  %1192 = vmatpush2.msra.mxu0 0.0
  %1193 = vmatprep.subr.mxu0 0.0
  %1194 = vmatpush2.msra.mxu0 0.0
  %1195 = vmatprep.subr.mxu0 0.0
  %1196 = vmatpush2.msra.mxu0 0.0
  %1197 = vmatprep.subr.mxu0 0.0
  %1198 = vmatpush2.msra.mxu0 0.0
  %1199 = vmatprep.subr.mxu0 0.0
  %1200 = vmatpush2.msra.mxu0 0.0
  %1201 = vmatprep.subr.mxu0 0.0
  %1202 = vmatpush2.msra.mxu0 0.0
  %1203 = vmatprep.subr.mxu0 0.0
  %1204 = vmatpush2.msra.mxu0 0.0
  %1205 = vmatprep.subr.mxu0 0.0
  %1206 = vmatpush2.msra.mxu0 0.0
  %1207 = vmatprep.subr.mxu0 0.0
  %1208 = vmatpush2.msra.mxu0 0.0
  %1209 = vmatprep.subr.mxu0 0.0
  %1210 = vmatpush2.msra.mxu0 0.0
  %1211 = vmatprep.mubr.f32.mxu0 0.0
  %1212 = vmatmul.mubr.f32.gmra.mxu0 %v1023
  %v1213 = vpop.f32.mrf.mxu0
  %v1214 = vadd.f32 0.0, %v1213
  %v1215 = vpop.f32.mrf.mxu0
  %1216 = vmatprep.mubr.f32.mxu0 0.0
  %1217 = vmatmul.mubr.f32.gmra.mxu0 %v1026
  %v1218 = vpop.f32.mrf.mxu0
  %v1219 = vadd.f32 0.0, %v1218
  %v1220 = vpop.f32.mrf.mxu0
  %1221 = vmatprep.mubr.f32.mxu0 0.0
  %1222 = vmatmul.mubr.f32.gmra.mxu0 %v1029
  %v1223 = vpop.f32.mrf.mxu0
  %v1224 = vadd.f32 0.0, %v1223
  %v1225 = vpop.f32.mrf.mxu0
  %1226 = vmatprep.mubr.f32.mxu0 0.0
  %1227 = vmatmul.mubr.f32.gmra.mxu0 %v1032
  %v1228 = vpop.f32.mrf.mxu0
  %v1229 = vadd.f32 0.0, %v1228
  %v1230 = vpop.f32.mrf.mxu0
  %1231 = vdwg.mxu0
  %v1232 = vadd.f32 %v1010, %v1214
  %v1233 = vadd.f32 %v1011, %v1219
  %v1234 = vadd.f32 %v1012, %v1224
  %v1235 = vadd.f32 %v1013, %v1229
  %v1236 = vxor.u32 %v1232, 2147483648
  %v1237 = vxor.u32 %v1233, 2147483648
  %v1238 = vxor.u32 %v1234, 2147483648
  %v1239 = vxor.u32 %v1235, 2147483648
  %v1240 = vmul.f32 %v1236, 1.442695
  %v1241 = vpow.pop %v1240
  %v1242 = vmul.f32 %v1237, 1.442695
  %v1243 = vpow.pop %v1242
  %v1244 = vmul.f32 %v1238, 1.442695
  %v1245 = vpow.pop %v1244
  %v1246 = vmul.f32 %v1239, 1.442695
  %v1247 = vpow.pop %v1246
  %v1248 = vadd.f32 %v1241, 1.0
  %v1249 = vadd.f32 %v1243, 1.0
  %v1250 = vadd.f32 %v1245, 1.0
  %v1251 = vadd.f32 %v1247, 1.0
  %v1252 = vrcp.pop %v1248
  %v1253 = vmul.f32 1.0, %v1252
  %v1254 = vrcp.pop %v1249
  %v1255 = vmul.f32 1.0, %v1254
  %v1256 = vrcp.pop %v1250
  %v1257 = vmul.f32 1.0, %v1256
  %v1258 = vrcp.pop %v1251
  %v1259 = vmul.f32 1.0, %v1258
  %1260 = vmatprep.subr.mxu0 0.0
  %1261 = vmatpush1.msra.mxu0 0.0
  %1262 = vmatprep.subr.mxu0 0.0
  %1263 = vmatpush1.msra.mxu0 0.0
  %1264 = vmatprep.subr.mxu0 0.0
  %1265 = vmatpush1.msra.mxu0 0.0
  %1266 = vmatprep.subr.mxu0 0.0
  %1267 = vmatpush1.msra.mxu0 0.0
  %1268 = vmatprep.subr.mxu0 0.0
  %1269 = vmatpush1.msra.mxu0 0.0
  %1270 = vmatprep.subr.mxu0 0.0
  %1271 = vmatpush1.msra.mxu0 0.0
  %1272 = vmatprep.subr.mxu0 0.0
  %1273 = vmatpush1.msra.mxu0 0.0
  %1274 = vmatprep.subr.mxu0 0.0
  %1275 = vmatpush1.msra.mxu0 0.0
  %1276 = vmatprep.subr.mxu0 0.0
  %1277 = vmatpush1.msra.mxu0 %v34
  %1278 = vmatprep.subr.mxu0 0.0
  %1279 = vmatpush1.msra.mxu0 %v33
  %1280 = vmatprep.subr.mxu0 0.0
  %1281 = vmatpush1.msra.mxu0 %v32
  %1282 = vmatprep.subr.mxu0 0.0
  %1283 = vmatpush1.msra.mxu0 %v31
  %1284 = vmatprep.subr.mxu0 0.0
  %1285 = vmatpush1.msra.mxu0 %v30
  %1286 = vmatprep.subr.mxu0 0.0
  %1287 = vmatpush1.msra.mxu0 %v29
  %1288 = vmatprep.subr.mxu0 0.0
  %1289 = vmatpush1.msra.mxu0 %v28
  %1290 = vmatprep.subr.mxu0 0.0
  %1291 = vmatpush1.msra.mxu0 %v27
  %1292 = vmatprep.subr.mxu0 0.0
  %1293 = vmatpush2.msra.mxu0 0.0
  %1294 = vmatprep.subr.mxu0 0.0
  %1295 = vmatpush2.msra.mxu0 0.0
  %1296 = vmatprep.subr.mxu0 0.0
  %1297 = vmatpush2.msra.mxu0 0.0
  %1298 = vmatprep.subr.mxu0 0.0
  %1299 = vmatpush2.msra.mxu0 0.0
  %1300 = vmatprep.subr.mxu0 0.0
  %1301 = vmatpush2.msra.mxu0 0.0
  %1302 = vmatprep.subr.mxu0 0.0
  %1303 = vmatpush2.msra.mxu0 0.0
  %1304 = vmatprep.subr.mxu0 0.0
  %1305 = vmatpush2.msra.mxu0 0.0
  %1306 = vmatprep.subr.mxu0 0.0
  %1307 = vmatpush2.msra.mxu0 0.0
  %1308 = vmatprep.subr.mxu0 0.0
  %1309 = vmatpush2.msra.mxu0 0.0
  %1310 = vmatprep.subr.mxu0 0.0
  %1311 = vmatpush2.msra.mxu0 0.0
  %1312 = vmatprep.subr.mxu0 0.0
  %1313 = vmatpush2.msra.mxu0 0.0
  %1314 = vmatprep.subr.mxu0 0.0
  %1315 = vmatpush2.msra.mxu0 0.0
  %1316 = vmatprep.subr.mxu0 0.0
  %1317 = vmatpush2.msra.mxu0 0.0
  %1318 = vmatprep.subr.mxu0 0.0
  %1319 = vmatpush2.msra.mxu0 0.0
  %1320 = vmatprep.subr.mxu0 0.0
  %1321 = vmatpush2.msra.mxu0 0.0
  %1322 = vmatprep.subr.mxu0 0.0
  %1323 = vmatpush2.msra.mxu0 0.0
  %1324 = vmatprep.mubr.f32.mxu0 0.0
  %1325 = vmatmul.mubr.f32.gmra.mxu0 %v1023
  %v1326 = vpop.f32.mrf.mxu0
  %v1327 = vadd.f32 0.0, %v1326
  %v1328 = vpop.f32.mrf.mxu0
  %1329 = vmatprep.mubr.f32.mxu0 0.0
  %1330 = vmatmul.mubr.f32.gmra.mxu0 %v1026
  %v1331 = vpop.f32.mrf.mxu0
  %v1332 = vadd.f32 0.0, %v1331
  %v1333 = vpop.f32.mrf.mxu0
  %1334 = vmatprep.mubr.f32.mxu0 0.0
  %1335 = vmatmul.mubr.f32.gmra.mxu0 %v1029
  %v1336 = vpop.f32.mrf.mxu0
  %v1337 = vadd.f32 0.0, %v1336
  %v1338 = vpop.f32.mrf.mxu0
  %1339 = vmatprep.mubr.f32.mxu0 0.0
  %1340 = vmatmul.mubr.f32.gmra.mxu0 %v1032
  %v1341 = vpop.f32.mrf.mxu0
  %v1342 = vadd.f32 0.0, %v1341
  %v1343 = vpop.f32.mrf.mxu0
  %1344 = vdwg.mxu0
  %v1345 = vadd.f32 %v1014, %v1327
  %v1346 = vadd.f32 %v1015, %v1332
  %v1347 = vadd.f32 %v1016, %v1337
  %v1348 = vadd.f32 %v1017, %v1342
  %v1349 = vtanh.pop %v1345
  %v1350 = vtanh.pop %v1346
  %v1351 = vtanh.pop %v1347
  %v1352 = vtanh.pop %v1348
  %1353 = vmatprep.subr.mxu0 0.0
  %1354 = vmatpush1.msra.mxu0 0.0
  %1355 = vmatprep.subr.mxu0 0.0
  %1356 = vmatpush1.msra.mxu0 0.0
  %1357 = vmatprep.subr.mxu0 0.0
  %1358 = vmatpush1.msra.mxu0 0.0
  %1359 = vmatprep.subr.mxu0 0.0
  %1360 = vmatpush1.msra.mxu0 0.0
  %1361 = vmatprep.subr.mxu0 0.0
  %1362 = vmatpush1.msra.mxu0 0.0
  %1363 = vmatprep.subr.mxu0 0.0
  %1364 = vmatpush1.msra.mxu0 0.0
  %1365 = vmatprep.subr.mxu0 0.0
  %1366 = vmatpush1.msra.mxu0 0.0
  %1367 = vmatprep.subr.mxu0 0.0
  %1368 = vmatpush1.msra.mxu0 0.0
  %1369 = vmatprep.subr.mxu0 0.0
  %1370 = vmatpush1.msra.mxu0 %v42
  %1371 = vmatprep.subr.mxu0 0.0
  %1372 = vmatpush1.msra.mxu0 %v41
  %1373 = vmatprep.subr.mxu0 0.0
  %1374 = vmatpush1.msra.mxu0 %v40
  %1375 = vmatprep.subr.mxu0 0.0
  %1376 = vmatpush1.msra.mxu0 %v39
  %1377 = vmatprep.subr.mxu0 0.0
  %1378 = vmatpush1.msra.mxu0 %v38
  %1379 = vmatprep.subr.mxu0 0.0
  %1380 = vmatpush1.msra.mxu0 %v37
  %1381 = vmatprep.subr.mxu0 0.0
  %1382 = vmatpush1.msra.mxu0 %v36
  %1383 = vmatprep.subr.mxu0 0.0
  %1384 = vmatpush1.msra.mxu0 %v35
  %1385 = vmatprep.subr.mxu0 0.0
  %1386 = vmatpush2.msra.mxu0 0.0
  %1387 = vmatprep.subr.mxu0 0.0
  %1388 = vmatpush2.msra.mxu0 0.0
  %1389 = vmatprep.subr.mxu0 0.0
  %1390 = vmatpush2.msra.mxu0 0.0
  %1391 = vmatprep.subr.mxu0 0.0
  %1392 = vmatpush2.msra.mxu0 0.0
  %1393 = vmatprep.subr.mxu0 0.0
  %1394 = vmatpush2.msra.mxu0 0.0
  %1395 = vmatprep.subr.mxu0 0.0
  %1396 = vmatpush2.msra.mxu0 0.0
  %1397 = vmatprep.subr.mxu0 0.0
  %1398 = vmatpush2.msra.mxu0 0.0
  %1399 = vmatprep.subr.mxu0 0.0
  %1400 = vmatpush2.msra.mxu0 0.0
  %1401 = vmatprep.subr.mxu0 0.0
  %1402 = vmatpush2.msra.mxu0 0.0
  %1403 = vmatprep.subr.mxu0 0.0
  %1404 = vmatpush2.msra.mxu0 0.0
  %1405 = vmatprep.subr.mxu0 0.0
  %1406 = vmatpush2.msra.mxu0 0.0
  %1407 = vmatprep.subr.mxu0 0.0
  %1408 = vmatpush2.msra.mxu0 0.0
  %1409 = vmatprep.subr.mxu0 0.0
  %1410 = vmatpush2.msra.mxu0 0.0
  %1411 = vmatprep.subr.mxu0 0.0
  %1412 = vmatpush2.msra.mxu0 0.0
  %1413 = vmatprep.subr.mxu0 0.0
  %1414 = vmatpush2.msra.mxu0 0.0
  %1415 = vmatprep.subr.mxu0 0.0
  %1416 = vmatpush2.msra.mxu0 0.0
  %1417 = vmatprep.mubr.f32.mxu0 0.0
  %1418 = vmatmul.mubr.f32.gmra.mxu0 %v1023
  %v1419 = vpop.f32.mrf.mxu0
  %v1420 = vadd.f32 0.0, %v1419
  %v1421 = vpop.f32.mrf.mxu0
  %1422 = vmatprep.mubr.f32.mxu0 0.0
  %1423 = vmatmul.mubr.f32.gmra.mxu0 %v1026
  %v1424 = vpop.f32.mrf.mxu0
  %v1425 = vadd.f32 0.0, %v1424
  %v1426 = vpop.f32.mrf.mxu0
  %1427 = vmatprep.mubr.f32.mxu0 0.0
  %1428 = vmatmul.mubr.f32.gmra.mxu0 %v1029
  %v1429 = vpop.f32.mrf.mxu0
  %v1430 = vadd.f32 0.0, %v1429
  %v1431 = vpop.f32.mrf.mxu0
  %1432 = vmatprep.mubr.f32.mxu0 0.0
  %1433 = vmatmul.mubr.f32.gmra.mxu0 %v1032
  %v1434 = vpop.f32.mrf.mxu0
  %v1435 = vadd.f32 0.0, %v1434
  %v1436 = vpop.f32.mrf.mxu0
  %1437 = vdwg.mxu0
  %v1438 = vadd.f32 %v1018, %v1420
  %v1439 = vadd.f32 %v1019, %v1425
  %v1440 = vadd.f32 %v1020, %v1430
  %v1441 = vadd.f32 %v1021, %v1435
  %v1442 = vxor.u32 %v1438, 2147483648
  %v1443 = vxor.u32 %v1439, 2147483648
  %v1444 = vxor.u32 %v1440, 2147483648
  %v1445 = vxor.u32 %v1441, 2147483648
  %v1446 = vmul.f32 %v1442, 1.442695
  %v1447 = vpow.pop %v1446
  %v1448 = vmul.f32 %v1443, 1.442695
  %v1449 = vpow.pop %v1448
  %v1450 = vmul.f32 %v1444, 1.442695
  %v1451 = vpow.pop %v1450
  %v1452 = vmul.f32 %v1445, 1.442695
  %v1453 = vpow.pop %v1452
  %v1454 = vadd.f32 %v1447, 1.0
  %v1455 = vadd.f32 %v1449, 1.0
  %v1456 = vadd.f32 %v1451, 1.0
  %v1457 = vadd.f32 %v1453, 1.0
  %v1458 = vrcp.pop %v1454
  %v1459 = vmul.f32 1.0, %v1458
  %v1460 = vrcp.pop %v1455
  %v1461 = vmul.f32 1.0, %v1460
  %v1462 = vrcp.pop %v1456
  %v1463 = vmul.f32 1.0, %v1462
  %v1464 = vrcp.pop %v1457
  %v1465 = vmul.f32 1.0, %v1464
  %v1466 = vmul.f32 %v1253, %v988
  %v1467 = vmul.f32 %v1255, %v989
  %v1468 = vmul.f32 %v1257, %v990
  %v1469 = vmul.f32 %v1259, %v991
  %v1470 = vmul.f32 %v1140, %v1349
  %v1471 = vmul.f32 %v1142, %v1350
  %v1472 = vmul.f32 %v1144, %v1351
  %v1473 = vmul.f32 %v1146, %v1352
  %v1474 = vadd.f32 %v1466, %v1470
  %v1475 = vadd.f32 %v1467, %v1471
  %v1476 = vadd.f32 %v1468, %v1472
  %v1477 = vadd.f32 %v1469, %v1473
  %v1478 = vtanh.pop %v1474
  %v1479 = vtanh.pop %v1475
  %v1480 = vtanh.pop %v1476
  %v1481 = vtanh.pop %v1477
  %v1482 = vmul.f32 %v1459, %v1478
  %v1483 = vmul.f32 %v1461, %v1479
  %v1484 = vmul.f32 %v1463, %v1480
  %v1485 = vmul.f32 %v1465, %v1481
  %s1486 = scalar_lea.vmem %s2, 64
  %1487 = vst.msk [vmem:[%s1486] sm:$0xff] %vm59, %v1482
  %1488 = vst.msk [vmem:[%s1486 + $0x8] sm:$0xff] %vm59, %v1483
  %1489 = vst.msk [vmem:[%s1486 + $0x10] sm:$0xff] %vm59, %v1484
  %1490 = vst.msk [vmem:[%s1486 + $0x18] sm:$0xff] %vm59, %v1485
  %s1491 = scalar_lea.vmem %s0, 384
  %v1492 = vld [vmem:[%s1491] sm:$0xff]
  %v1493 = vld [vmem:[%s1491 + $0x8] sm:$0xff]
  %v1494 = vld [vmem:[%s1491 + $0x10] sm:$0xff]
  %v1495 = vld [vmem:[%s1491 + $0x18] sm:$0xff]
  %v1496 = vld [vmem:[%s1491 + $0x20] sm:$0xff]
  %v1497 = vld [vmem:[%s1491 + $0x28] sm:$0xff]
  %v1498 = vld [vmem:[%s1491 + $0x30] sm:$0xff]
  %v1499 = vld [vmem:[%s1491 + $0x38] sm:$0xff]
  %v1500 = vld [vmem:[%s1491 + $0x40] sm:$0xff]
  %v1501 = vld [vmem:[%s1491 + $0x48] sm:$0xff]
  %v1502 = vld [vmem:[%s1491 + $0x50] sm:$0xff]
  %v1503 = vld [vmem:[%s1491 + $0x58] sm:$0xff]
  %v1504 = vld [vmem:[%s1491 + $0x60] sm:$0xff]
  %v1505 = vld [vmem:[%s1491 + $0x68] sm:$0xff]
  %v1506 = vld [vmem:[%s1491 + $0x70] sm:$0xff]
  %v1507 = vld [vmem:[%s1491 + $0x78] sm:$0xff]
  %v1509 = vsel %vm59, %v1482, 0
  %v1512 = vsel %vm59, %v1483, 0
  %v1515 = vsel %vm59, %v1484, 0
  %v1518 = vsel %vm59, %v1485, 0
  %1520 = vmatprep.subr.mxu0 0.0
  %1521 = vmatpush1.msra.mxu0 0.0
  %1522 = vmatprep.subr.mxu0 0.0
  %1523 = vmatpush1.msra.mxu0 0.0
  %1524 = vmatprep.subr.mxu0 0.0
  %1525 = vmatpush1.msra.mxu0 0.0
  %1526 = vmatprep.subr.mxu0 0.0
  %1527 = vmatpush1.msra.mxu0 0.0
  %1528 = vmatprep.subr.mxu0 0.0
  %1529 = vmatpush1.msra.mxu0 0.0
  %1530 = vmatprep.subr.mxu0 0.0
  %1531 = vmatpush1.msra.mxu0 0.0
  %1532 = vmatprep.subr.mxu0 0.0
  %1533 = vmatpush1.msra.mxu0 0.0
  %1534 = vmatprep.subr.mxu0 0.0
  %1535 = vmatpush1.msra.mxu0 0.0
  %1536 = vmatprep.subr.mxu0 0.0
  %1537 = vmatpush1.msra.mxu0 %v18
  %1538 = vmatprep.subr.mxu0 0.0
  %1539 = vmatpush1.msra.mxu0 %v17
  %1540 = vmatprep.subr.mxu0 0.0
  %1541 = vmatpush1.msra.mxu0 %v16
  %1542 = vmatprep.subr.mxu0 0.0
  %1543 = vmatpush1.msra.mxu0 %v15
  %1544 = vmatprep.subr.mxu0 0.0
  %1545 = vmatpush1.msra.mxu0 %v14
  %1546 = vmatprep.subr.mxu0 0.0
  %1547 = vmatpush1.msra.mxu0 %v13
  %1548 = vmatprep.subr.mxu0 0.0
  %1549 = vmatpush1.msra.mxu0 %v12
  %1550 = vmatprep.subr.mxu0 0.0
  %1551 = vmatpush1.msra.mxu0 %v11
  %1552 = vmatprep.subr.mxu0 0.0
  %1553 = vmatpush2.msra.mxu0 0.0
  %1554 = vmatprep.subr.mxu0 0.0
  %1555 = vmatpush2.msra.mxu0 0.0
  %1556 = vmatprep.subr.mxu0 0.0
  %1557 = vmatpush2.msra.mxu0 0.0
  %1558 = vmatprep.subr.mxu0 0.0
  %1559 = vmatpush2.msra.mxu0 0.0
  %1560 = vmatprep.subr.mxu0 0.0
  %1561 = vmatpush2.msra.mxu0 0.0
  %1562 = vmatprep.subr.mxu0 0.0
  %1563 = vmatpush2.msra.mxu0 0.0
  %1564 = vmatprep.subr.mxu0 0.0
  %1565 = vmatpush2.msra.mxu0 0.0
  %1566 = vmatprep.subr.mxu0 0.0
  %1567 = vmatpush2.msra.mxu0 0.0
  %1568 = vmatprep.subr.mxu0 0.0
  %1569 = vmatpush2.msra.mxu0 0.0
  %1570 = vmatprep.subr.mxu0 0.0
  %1571 = vmatpush2.msra.mxu0 0.0
  %1572 = vmatprep.subr.mxu0 0.0
  %1573 = vmatpush2.msra.mxu0 0.0
  %1574 = vmatprep.subr.mxu0 0.0
  %1575 = vmatpush2.msra.mxu0 0.0
  %1576 = vmatprep.subr.mxu0 0.0
  %1577 = vmatpush2.msra.mxu0 0.0
  %1578 = vmatprep.subr.mxu0 0.0
  %1579 = vmatpush2.msra.mxu0 0.0
  %1580 = vmatprep.subr.mxu0 0.0
  %1581 = vmatpush2.msra.mxu0 0.0
  %1582 = vmatprep.subr.mxu0 0.0
  %1583 = vmatpush2.msra.mxu0 0.0
  %1584 = vmatprep.mubr.f32.mxu0 0.0
  %1585 = vmatmul.mubr.f32.gmra.mxu0 %v1509
  %v1586 = vpop.f32.mrf.mxu0
  %v1587 = vadd.f32 0.0, %v1586
  %v1588 = vpop.f32.mrf.mxu0
  %1589 = vmatprep.mubr.f32.mxu0 0.0
  %1590 = vmatmul.mubr.f32.gmra.mxu0 %v1512
  %v1591 = vpop.f32.mrf.mxu0
  %v1592 = vadd.f32 0.0, %v1591
  %v1593 = vpop.f32.mrf.mxu0
  %1594 = vmatprep.mubr.f32.mxu0 0.0
  %1595 = vmatmul.mubr.f32.gmra.mxu0 %v1515
  %v1596 = vpop.f32.mrf.mxu0
  %v1597 = vadd.f32 0.0, %v1596
  %v1598 = vpop.f32.mrf.mxu0
  %1599 = vmatprep.mubr.f32.mxu0 0.0
  %1600 = vmatmul.mubr.f32.gmra.mxu0 %v1518
  %v1601 = vpop.f32.mrf.mxu0
  %v1602 = vadd.f32 0.0, %v1601
  %v1603 = vpop.f32.mrf.mxu0
  %1604 = vdwg.mxu0
  %v1605 = vadd.f32 %v1492, %v1587
  %v1606 = vadd.f32 %v1493, %v1592
  %v1607 = vadd.f32 %v1494, %v1597
  %v1608 = vadd.f32 %v1495, %v1602
  %v1609 = vxor.u32 %v1605, 2147483648
  %v1610 = vxor.u32 %v1606, 2147483648
  %v1611 = vxor.u32 %v1607, 2147483648
  %v1612 = vxor.u32 %v1608, 2147483648
  %v1613 = vmul.f32 %v1609, 1.442695
  %v1614 = vpow.pop %v1613
  %v1615 = vmul.f32 %v1610, 1.442695
  %v1616 = vpow.pop %v1615
  %v1617 = vmul.f32 %v1611, 1.442695
  %v1618 = vpow.pop %v1617
  %v1619 = vmul.f32 %v1612, 1.442695
  %v1620 = vpow.pop %v1619
  %v1621 = vadd.f32 %v1614, 1.0
  %v1622 = vadd.f32 %v1616, 1.0
  %v1623 = vadd.f32 %v1618, 1.0
  %v1624 = vadd.f32 %v1620, 1.0
  %v1625 = vrcp.pop %v1621
  %v1626 = vmul.f32 1.0, %v1625
  %v1627 = vrcp.pop %v1622
  %v1628 = vmul.f32 1.0, %v1627
  %v1629 = vrcp.pop %v1623
  %v1630 = vmul.f32 1.0, %v1629
  %v1631 = vrcp.pop %v1624
  %v1632 = vmul.f32 1.0, %v1631
  %1633 = vmatprep.subr.mxu0 0.0
  %1634 = vmatpush1.msra.mxu0 0.0
  %1635 = vmatprep.subr.mxu0 0.0
  %1636 = vmatpush1.msra.mxu0 0.0
  %1637 = vmatprep.subr.mxu0 0.0
  %1638 = vmatpush1.msra.mxu0 0.0
  %1639 = vmatprep.subr.mxu0 0.0
  %1640 = vmatpush1.msra.mxu0 0.0
  %1641 = vmatprep.subr.mxu0 0.0
  %1642 = vmatpush1.msra.mxu0 0.0
  %1643 = vmatprep.subr.mxu0 0.0
  %1644 = vmatpush1.msra.mxu0 0.0
  %1645 = vmatprep.subr.mxu0 0.0
  %1646 = vmatpush1.msra.mxu0 0.0
  %1647 = vmatprep.subr.mxu0 0.0
  %1648 = vmatpush1.msra.mxu0 0.0
  %1649 = vmatprep.subr.mxu0 0.0
  %1650 = vmatpush1.msra.mxu0 %v26
  %1651 = vmatprep.subr.mxu0 0.0
  %1652 = vmatpush1.msra.mxu0 %v25
  %1653 = vmatprep.subr.mxu0 0.0
  %1654 = vmatpush1.msra.mxu0 %v24
  %1655 = vmatprep.subr.mxu0 0.0
  %1656 = vmatpush1.msra.mxu0 %v23
  %1657 = vmatprep.subr.mxu0 0.0
  %1658 = vmatpush1.msra.mxu0 %v22
  %1659 = vmatprep.subr.mxu0 0.0
  %1660 = vmatpush1.msra.mxu0 %v21
  %1661 = vmatprep.subr.mxu0 0.0
  %1662 = vmatpush1.msra.mxu0 %v20
  %1663 = vmatprep.subr.mxu0 0.0
  %1664 = vmatpush1.msra.mxu0 %v19
  %1665 = vmatprep.subr.mxu0 0.0
  %1666 = vmatpush2.msra.mxu0 0.0
  %1667 = vmatprep.subr.mxu0 0.0
  %1668 = vmatpush2.msra.mxu0 0.0
  %1669 = vmatprep.subr.mxu0 0.0
  %1670 = vmatpush2.msra.mxu0 0.0
  %1671 = vmatprep.subr.mxu0 0.0
  %1672 = vmatpush2.msra.mxu0 0.0
  %1673 = vmatprep.subr.mxu0 0.0
  %1674 = vmatpush2.msra.mxu0 0.0
  %1675 = vmatprep.subr.mxu0 0.0
  %1676 = vmatpush2.msra.mxu0 0.0
  %1677 = vmatprep.subr.mxu0 0.0
  %1678 = vmatpush2.msra.mxu0 0.0
  %1679 = vmatprep.subr.mxu0 0.0
  %1680 = vmatpush2.msra.mxu0 0.0
  %1681 = vmatprep.subr.mxu0 0.0
  %1682 = vmatpush2.msra.mxu0 0.0
  %1683 = vmatprep.subr.mxu0 0.0
  %1684 = vmatpush2.msra.mxu0 0.0
  %1685 = vmatprep.subr.mxu0 0.0
  %1686 = vmatpush2.msra.mxu0 0.0
  %1687 = vmatprep.subr.mxu0 0.0
  %1688 = vmatpush2.msra.mxu0 0.0
  %1689 = vmatprep.subr.mxu0 0.0
  %1690 = vmatpush2.msra.mxu0 0.0
  %1691 = vmatprep.subr.mxu0 0.0
  %1692 = vmatpush2.msra.mxu0 0.0
  %1693 = vmatprep.subr.mxu0 0.0
  %1694 = vmatpush2.msra.mxu0 0.0
  %1695 = vmatprep.subr.mxu0 0.0
  %1696 = vmatpush2.msra.mxu0 0.0
  %1697 = vmatprep.mubr.f32.mxu0 0.0
  %1698 = vmatmul.mubr.f32.gmra.mxu0 %v1509
  %v1699 = vpop.f32.mrf.mxu0
  %v1700 = vadd.f32 0.0, %v1699
  %v1701 = vpop.f32.mrf.mxu0
  %1702 = vmatprep.mubr.f32.mxu0 0.0
  %1703 = vmatmul.mubr.f32.gmra.mxu0 %v1512
  %v1704 = vpop.f32.mrf.mxu0
  %v1705 = vadd.f32 0.0, %v1704
  %v1706 = vpop.f32.mrf.mxu0
  %1707 = vmatprep.mubr.f32.mxu0 0.0
  %1708 = vmatmul.mubr.f32.gmra.mxu0 %v1515
  %v1709 = vpop.f32.mrf.mxu0
  %v1710 = vadd.f32 0.0, %v1709
  %v1711 = vpop.f32.mrf.mxu0
  %1712 = vmatprep.mubr.f32.mxu0 0.0
  %1713 = vmatmul.mubr.f32.gmra.mxu0 %v1518
  %v1714 = vpop.f32.mrf.mxu0
  %v1715 = vadd.f32 0.0, %v1714
  %v1716 = vpop.f32.mrf.mxu0
  %1717 = vdwg.mxu0
  %v1718 = vadd.f32 %v1496, %v1700
  %v1719 = vadd.f32 %v1497, %v1705
  %v1720 = vadd.f32 %v1498, %v1710
  %v1721 = vadd.f32 %v1499, %v1715
  %v1722 = vxor.u32 %v1718, 2147483648
  %v1723 = vxor.u32 %v1719, 2147483648
  %v1724 = vxor.u32 %v1720, 2147483648
  %v1725 = vxor.u32 %v1721, 2147483648
  %v1726 = vmul.f32 %v1722, 1.442695
  %v1727 = vpow.pop %v1726
  %v1728 = vmul.f32 %v1723, 1.442695
  %v1729 = vpow.pop %v1728
  %v1730 = vmul.f32 %v1724, 1.442695
  %v1731 = vpow.pop %v1730
  %v1732 = vmul.f32 %v1725, 1.442695
  %v1733 = vpow.pop %v1732
  %v1734 = vadd.f32 %v1727, 1.0
  %v1735 = vadd.f32 %v1729, 1.0
  %v1736 = vadd.f32 %v1731, 1.0
  %v1737 = vadd.f32 %v1733, 1.0
  %v1738 = vrcp.pop %v1734
  %v1739 = vmul.f32 1.0, %v1738
  %v1740 = vrcp.pop %v1735
  %v1741 = vmul.f32 1.0, %v1740
  %v1742 = vrcp.pop %v1736
  %v1743 = vmul.f32 1.0, %v1742
  %v1744 = vrcp.pop %v1737
  %v1745 = vmul.f32 1.0, %v1744
  %1746 = vmatprep.subr.mxu0 0.0
  %1747 = vmatpush1.msra.mxu0 0.0
  %1748 = vmatprep.subr.mxu0 0.0
  %1749 = vmatpush1.msra.mxu0 0.0
  %1750 = vmatprep.subr.mxu0 0.0
  %1751 = vmatpush1.msra.mxu0 0.0
  %1752 = vmatprep.subr.mxu0 0.0
  %1753 = vmatpush1.msra.mxu0 0.0
  %1754 = vmatprep.subr.mxu0 0.0
  %1755 = vmatpush1.msra.mxu0 0.0
  %1756 = vmatprep.subr.mxu0 0.0
  %1757 = vmatpush1.msra.mxu0 0.0
  %1758 = vmatprep.subr.mxu0 0.0
  %1759 = vmatpush1.msra.mxu0 0.0
  %1760 = vmatprep.subr.mxu0 0.0
  %1761 = vmatpush1.msra.mxu0 0.0
  %1762 = vmatprep.subr.mxu0 0.0
  %1763 = vmatpush1.msra.mxu0 %v34
  %1764 = vmatprep.subr.mxu0 0.0
  %1765 = vmatpush1.msra.mxu0 %v33
  %1766 = vmatprep.subr.mxu0 0.0
  %1767 = vmatpush1.msra.mxu0 %v32
  %1768 = vmatprep.subr.mxu0 0.0
  %1769 = vmatpush1.msra.mxu0 %v31
  %1770 = vmatprep.subr.mxu0 0.0
  %1771 = vmatpush1.msra.mxu0 %v30
  %1772 = vmatprep.subr.mxu0 0.0
  %1773 = vmatpush1.msra.mxu0 %v29
  %1774 = vmatprep.subr.mxu0 0.0
  %1775 = vmatpush1.msra.mxu0 %v28
  %1776 = vmatprep.subr.mxu0 0.0
  %1777 = vmatpush1.msra.mxu0 %v27
  %1778 = vmatprep.subr.mxu0 0.0
  %1779 = vmatpush2.msra.mxu0 0.0
  %1780 = vmatprep.subr.mxu0 0.0
  %1781 = vmatpush2.msra.mxu0 0.0
  %1782 = vmatprep.subr.mxu0 0.0
  %1783 = vmatpush2.msra.mxu0 0.0
  %1784 = vmatprep.subr.mxu0 0.0
  %1785 = vmatpush2.msra.mxu0 0.0
  %1786 = vmatprep.subr.mxu0 0.0
  %1787 = vmatpush2.msra.mxu0 0.0
  %1788 = vmatprep.subr.mxu0 0.0
  %1789 = vmatpush2.msra.mxu0 0.0
  %1790 = vmatprep.subr.mxu0 0.0
  %1791 = vmatpush2.msra.mxu0 0.0
  %1792 = vmatprep.subr.mxu0 0.0
  %1793 = vmatpush2.msra.mxu0 0.0
  %1794 = vmatprep.subr.mxu0 0.0
  %1795 = vmatpush2.msra.mxu0 0.0
  %1796 = vmatprep.subr.mxu0 0.0
  %1797 = vmatpush2.msra.mxu0 0.0
  %1798 = vmatprep.subr.mxu0 0.0
  %1799 = vmatpush2.msra.mxu0 0.0
  %1800 = vmatprep.subr.mxu0 0.0
  %1801 = vmatpush2.msra.mxu0 0.0
  %1802 = vmatprep.subr.mxu0 0.0
  %1803 = vmatpush2.msra.mxu0 0.0
  %1804 = vmatprep.subr.mxu0 0.0
  %1805 = vmatpush2.msra.mxu0 0.0
  %1806 = vmatprep.subr.mxu0 0.0
  %1807 = vmatpush2.msra.mxu0 0.0
  %1808 = vmatprep.subr.mxu0 0.0
  %1809 = vmatpush2.msra.mxu0 0.0
  %1810 = vmatprep.mubr.f32.mxu0 0.0
  %1811 = vmatmul.mubr.f32.gmra.mxu0 %v1509
  %v1812 = vpop.f32.mrf.mxu0
  %v1813 = vadd.f32 0.0, %v1812
  %v1814 = vpop.f32.mrf.mxu0
  %1815 = vmatprep.mubr.f32.mxu0 0.0
  %1816 = vmatmul.mubr.f32.gmra.mxu0 %v1512
  %v1817 = vpop.f32.mrf.mxu0
  %v1818 = vadd.f32 0.0, %v1817
  %v1819 = vpop.f32.mrf.mxu0
  %1820 = vmatprep.mubr.f32.mxu0 0.0
  %1821 = vmatmul.mubr.f32.gmra.mxu0 %v1515
  %v1822 = vpop.f32.mrf.mxu0
  %v1823 = vadd.f32 0.0, %v1822
  %v1824 = vpop.f32.mrf.mxu0
  %1825 = vmatprep.mubr.f32.mxu0 0.0
  %1826 = vmatmul.mubr.f32.gmra.mxu0 %v1518
  %v1827 = vpop.f32.mrf.mxu0
  %v1828 = vadd.f32 0.0, %v1827
  %v1829 = vpop.f32.mrf.mxu0
  %1830 = vdwg.mxu0
  %v1831 = vadd.f32 %v1500, %v1813
  %v1832 = vadd.f32 %v1501, %v1818
  %v1833 = vadd.f32 %v1502, %v1823
  %v1834 = vadd.f32 %v1503, %v1828
  %v1835 = vtanh.pop %v1831
  %v1836 = vtanh.pop %v1832
  %v1837 = vtanh.pop %v1833
  %v1838 = vtanh.pop %v1834
  %1839 = vmatprep.subr.mxu0 0.0
  %1840 = vmatpush1.msra.mxu0 0.0
  %1841 = vmatprep.subr.mxu0 0.0
  %1842 = vmatpush1.msra.mxu0 0.0
  %1843 = vmatprep.subr.mxu0 0.0
  %1844 = vmatpush1.msra.mxu0 0.0
  %1845 = vmatprep.subr.mxu0 0.0
  %1846 = vmatpush1.msra.mxu0 0.0
  %1847 = vmatprep.subr.mxu0 0.0
  %1848 = vmatpush1.msra.mxu0 0.0
  %1849 = vmatprep.subr.mxu0 0.0
  %1850 = vmatpush1.msra.mxu0 0.0
  %1851 = vmatprep.subr.mxu0 0.0
  %1852 = vmatpush1.msra.mxu0 0.0
  %1853 = vmatprep.subr.mxu0 0.0
  %1854 = vmatpush1.msra.mxu0 0.0
  %1855 = vmatprep.subr.mxu0 0.0
  %1856 = vmatpush1.msra.mxu0 %v42
  %1857 = vmatprep.subr.mxu0 0.0
  %1858 = vmatpush1.msra.mxu0 %v41
  %1859 = vmatprep.subr.mxu0 0.0
  %1860 = vmatpush1.msra.mxu0 %v40
  %1861 = vmatprep.subr.mxu0 0.0
  %1862 = vmatpush1.msra.mxu0 %v39
  %1863 = vmatprep.subr.mxu0 0.0
  %1864 = vmatpush1.msra.mxu0 %v38
  %1865 = vmatprep.subr.mxu0 0.0
  %1866 = vmatpush1.msra.mxu0 %v37
  %1867 = vmatprep.subr.mxu0 0.0
  %1868 = vmatpush1.msra.mxu0 %v36
  %1869 = vmatprep.subr.mxu0 0.0
  %1870 = vmatpush1.msra.mxu0 %v35
  %1871 = vmatprep.subr.mxu0 0.0
  %1872 = vmatpush2.msra.mxu0 0.0
  %1873 = vmatprep.subr.mxu0 0.0
  %1874 = vmatpush2.msra.mxu0 0.0
  %1875 = vmatprep.subr.mxu0 0.0
  %1876 = vmatpush2.msra.mxu0 0.0
  %1877 = vmatprep.subr.mxu0 0.0
  %1878 = vmatpush2.msra.mxu0 0.0
  %1879 = vmatprep.subr.mxu0 0.0
  %1880 = vmatpush2.msra.mxu0 0.0
  %1881 = vmatprep.subr.mxu0 0.0
  %1882 = vmatpush2.msra.mxu0 0.0
  %1883 = vmatprep.subr.mxu0 0.0
  %1884 = vmatpush2.msra.mxu0 0.0
  %1885 = vmatprep.subr.mxu0 0.0
  %1886 = vmatpush2.msra.mxu0 0.0
  %1887 = vmatprep.subr.mxu0 0.0
  %1888 = vmatpush2.msra.mxu0 0.0
  %1889 = vmatprep.subr.mxu0 0.0
  %1890 = vmatpush2.msra.mxu0 0.0
  %1891 = vmatprep.subr.mxu0 0.0
  %1892 = vmatpush2.msra.mxu0 0.0
  %1893 = vmatprep.subr.mxu0 0.0
  %1894 = vmatpush2.msra.mxu0 0.0
  %1895 = vmatprep.subr.mxu0 0.0
  %1896 = vmatpush2.msra.mxu0 0.0
  %1897 = vmatprep.subr.mxu0 0.0
  %1898 = vmatpush2.msra.mxu0 0.0
  %1899 = vmatprep.subr.mxu0 0.0
  %1900 = vmatpush2.msra.mxu0 0.0
  %1901 = vmatprep.subr.mxu0 0.0
  %1902 = vmatpush2.msra.mxu0 0.0
  %1903 = vmatprep.mubr.f32.mxu0 0.0
  %1904 = vmatmul.mubr.f32.gmra.mxu0 %v1509
  %v1905 = vpop.f32.mrf.mxu0
  %v1906 = vadd.f32 0.0, %v1905
  %v1907 = vpop.f32.mrf.mxu0
  %1908 = vmatprep.mubr.f32.mxu0 0.0
  %1909 = vmatmul.mubr.f32.gmra.mxu0 %v1512
  %v1910 = vpop.f32.mrf.mxu0
  %v1911 = vadd.f32 0.0, %v1910
  %v1912 = vpop.f32.mrf.mxu0
  %1913 = vmatprep.mubr.f32.mxu0 0.0
  %1914 = vmatmul.mubr.f32.gmra.mxu0 %v1515
  %v1915 = vpop.f32.mrf.mxu0
  %v1916 = vadd.f32 0.0, %v1915
  %v1917 = vpop.f32.mrf.mxu0
  %1918 = vmatprep.mubr.f32.mxu0 0.0
  %1919 = vmatmul.mubr.f32.gmra.mxu0 %v1518
  %v1920 = vpop.f32.mrf.mxu0
  %v1921 = vadd.f32 0.0, %v1920
  %v1922 = vpop.f32.mrf.mxu0
  %1923 = vdwg.mxu0
  %v1924 = vadd.f32 %v1504, %v1906
  %v1925 = vadd.f32 %v1505, %v1911
  %v1926 = vadd.f32 %v1506, %v1916
  %v1927 = vadd.f32 %v1507, %v1921
  %v1928 = vxor.u32 %v1924, 2147483648
  %v1929 = vxor.u32 %v1925, 2147483648
  %v1930 = vxor.u32 %v1926, 2147483648
  %v1931 = vxor.u32 %v1927, 2147483648
  %v1932 = vmul.f32 %v1928, 1.442695
  %v1933 = vpow.pop %v1932
  %v1934 = vmul.f32 %v1929, 1.442695
  %v1935 = vpow.pop %v1934
  %v1936 = vmul.f32 %v1930, 1.442695
  %v1937 = vpow.pop %v1936
  %v1938 = vmul.f32 %v1931, 1.442695
  %v1939 = vpow.pop %v1938
  %v1940 = vadd.f32 %v1933, 1.0
  %v1941 = vadd.f32 %v1935, 1.0
  %v1942 = vadd.f32 %v1937, 1.0
  %v1943 = vadd.f32 %v1939, 1.0
  %v1944 = vrcp.pop %v1940
  %v1945 = vmul.f32 1.0, %v1944
  %v1946 = vrcp.pop %v1941
  %v1947 = vmul.f32 1.0, %v1946
  %v1948 = vrcp.pop %v1942
  %v1949 = vmul.f32 1.0, %v1948
  %v1950 = vrcp.pop %v1943
  %v1951 = vmul.f32 1.0, %v1950
  %v1952 = vmul.f32 %v1739, %v1474
  %v1953 = vmul.f32 %v1741, %v1475
  %v1954 = vmul.f32 %v1743, %v1476
  %v1955 = vmul.f32 %v1745, %v1477
  %v1956 = vmul.f32 %v1626, %v1835
  %v1957 = vmul.f32 %v1628, %v1836
  %v1958 = vmul.f32 %v1630, %v1837
  %v1959 = vmul.f32 %v1632, %v1838
  %v1960 = vadd.f32 %v1952, %v1956
  %v1961 = vadd.f32 %v1953, %v1957
  %v1962 = vadd.f32 %v1954, %v1958
  %v1963 = vadd.f32 %v1955, %v1959
  %v1964 = vtanh.pop %v1960
  %v1965 = vtanh.pop %v1961
  %v1966 = vtanh.pop %v1962
  %v1967 = vtanh.pop %v1963
  %v1968 = vmul.f32 %v1945, %v1964
  %v1969 = vmul.f32 %v1947, %v1965
  %v1970 = vmul.f32 %v1949, %v1966
  %v1971 = vmul.f32 %v1951, %v1967
  %s1972 = scalar_lea.vmem %s2, 96
  %1973 = vst.msk [vmem:[%s1972] sm:$0xff] %vm59, %v1968
  %1974 = vst.msk [vmem:[%s1972 + $0x8] sm:$0xff] %vm59, %v1969
  %1975 = vst.msk [vmem:[%s1972 + $0x10] sm:$0xff] %vm59, %v1970
  %1976 = vst.msk [vmem:[%s1972 + $0x18] sm:$0xff] %vm59, %v1971
  %s1977 = scalar_lea.vmem %s0, 512
  %v1978 = vld [vmem:[%s1977] sm:$0xff]
  %v1979 = vld [vmem:[%s1977 + $0x8] sm:$0xff]
  %v1980 = vld [vmem:[%s1977 + $0x10] sm:$0xff]
  %v1981 = vld [vmem:[%s1977 + $0x18] sm:$0xff]
  %v1982 = vld [vmem:[%s1977 + $0x20] sm:$0xff]
  %v1983 = vld [vmem:[%s1977 + $0x28] sm:$0xff]
  %v1984 = vld [vmem:[%s1977 + $0x30] sm:$0xff]
  %v1985 = vld [vmem:[%s1977 + $0x38] sm:$0xff]
  %v1986 = vld [vmem:[%s1977 + $0x40] sm:$0xff]
  %v1987 = vld [vmem:[%s1977 + $0x48] sm:$0xff]
  %v1988 = vld [vmem:[%s1977 + $0x50] sm:$0xff]
  %v1989 = vld [vmem:[%s1977 + $0x58] sm:$0xff]
  %v1990 = vld [vmem:[%s1977 + $0x60] sm:$0xff]
  %v1991 = vld [vmem:[%s1977 + $0x68] sm:$0xff]
  %v1992 = vld [vmem:[%s1977 + $0x70] sm:$0xff]
  %v1993 = vld [vmem:[%s1977 + $0x78] sm:$0xff]
  %v1995 = vsel %vm59, %v1968, 0
  %v1998 = vsel %vm59, %v1969, 0
  %v2001 = vsel %vm59, %v1970, 0
  %v2004 = vsel %vm59, %v1971, 0
  %2006 = vmatprep.subr.mxu0 0.0
  %2007 = vmatpush1.msra.mxu0 0.0
  %2008 = vmatprep.subr.mxu0 0.0
  %2009 = vmatpush1.msra.mxu0 0.0
  %2010 = vmatprep.subr.mxu0 0.0
  %2011 = vmatpush1.msra.mxu0 0.0
  %2012 = vmatprep.subr.mxu0 0.0
  %2013 = vmatpush1.msra.mxu0 0.0
  %2014 = vmatprep.subr.mxu0 0.0
  %2015 = vmatpush1.msra.mxu0 0.0
  %2016 = vmatprep.subr.mxu0 0.0
  %2017 = vmatpush1.msra.mxu0 0.0
  %2018 = vmatprep.subr.mxu0 0.0
  %2019 = vmatpush1.msra.mxu0 0.0
  %2020 = vmatprep.subr.mxu0 0.0
  %2021 = vmatpush1.msra.mxu0 0.0
  %2022 = vmatprep.subr.mxu0 0.0
  %2023 = vmatpush1.msra.mxu0 %v18
  %2024 = vmatprep.subr.mxu0 0.0
  %2025 = vmatpush1.msra.mxu0 %v17
  %2026 = vmatprep.subr.mxu0 0.0
  %2027 = vmatpush1.msra.mxu0 %v16
  %2028 = vmatprep.subr.mxu0 0.0
  %2029 = vmatpush1.msra.mxu0 %v15
  %2030 = vmatprep.subr.mxu0 0.0
  %2031 = vmatpush1.msra.mxu0 %v14
  %2032 = vmatprep.subr.mxu0 0.0
  %2033 = vmatpush1.msra.mxu0 %v13
  %2034 = vmatprep.subr.mxu0 0.0
  %2035 = vmatpush1.msra.mxu0 %v12
  %2036 = vmatprep.subr.mxu0 0.0
  %2037 = vmatpush1.msra.mxu0 %v11
  %2038 = vmatprep.subr.mxu0 0.0
  %2039 = vmatpush2.msra.mxu0 0.0
  %2040 = vmatprep.subr.mxu0 0.0
  %2041 = vmatpush2.msra.mxu0 0.0
  %2042 = vmatprep.subr.mxu0 0.0
  %2043 = vmatpush2.msra.mxu0 0.0
  %2044 = vmatprep.subr.mxu0 0.0
  %2045 = vmatpush2.msra.mxu0 0.0
  %2046 = vmatprep.subr.mxu0 0.0
  %2047 = vmatpush2.msra.mxu0 0.0
  %2048 = vmatprep.subr.mxu0 0.0
  %2049 = vmatpush2.msra.mxu0 0.0
  %2050 = vmatprep.subr.mxu0 0.0
  %2051 = vmatpush2.msra.mxu0 0.0
  %2052 = vmatprep.subr.mxu0 0.0
  %2053 = vmatpush2.msra.mxu0 0.0
  %2054 = vmatprep.subr.mxu0 0.0
  %2055 = vmatpush2.msra.mxu0 0.0
  %2056 = vmatprep.subr.mxu0 0.0
  %2057 = vmatpush2.msra.mxu0 0.0
  %2058 = vmatprep.subr.mxu0 0.0
  %2059 = vmatpush2.msra.mxu0 0.0
  %2060 = vmatprep.subr.mxu0 0.0
  %2061 = vmatpush2.msra.mxu0 0.0
  %2062 = vmatprep.subr.mxu0 0.0
  %2063 = vmatpush2.msra.mxu0 0.0
  %2064 = vmatprep.subr.mxu0 0.0
  %2065 = vmatpush2.msra.mxu0 0.0
  %2066 = vmatprep.subr.mxu0 0.0
  %2067 = vmatpush2.msra.mxu0 0.0
  %2068 = vmatprep.subr.mxu0 0.0
  %2069 = vmatpush2.msra.mxu0 0.0
  %2070 = vmatprep.mubr.f32.mxu0 0.0
  %2071 = vmatmul.mubr.f32.gmra.mxu0 %v1995
  %v2072 = vpop.f32.mrf.mxu0
  %v2073 = vadd.f32 0.0, %v2072
  %v2074 = vpop.f32.mrf.mxu0
  %2075 = vmatprep.mubr.f32.mxu0 0.0
  %2076 = vmatmul.mubr.f32.gmra.mxu0 %v1998
  %v2077 = vpop.f32.mrf.mxu0
  %v2078 = vadd.f32 0.0, %v2077
  %v2079 = vpop.f32.mrf.mxu0
  %2080 = vmatprep.mubr.f32.mxu0 0.0
  %2081 = vmatmul.mubr.f32.gmra.mxu0 %v2001
  %v2082 = vpop.f32.mrf.mxu0
  %v2083 = vadd.f32 0.0, %v2082
  %v2084 = vpop.f32.mrf.mxu0
  %2085 = vmatprep.mubr.f32.mxu0 0.0
  %2086 = vmatmul.mubr.f32.gmra.mxu0 %v2004
  %v2087 = vpop.f32.mrf.mxu0
  %v2088 = vadd.f32 0.0, %v2087
  %v2089 = vpop.f32.mrf.mxu0
  %2090 = vdwg.mxu0
  %v2091 = vadd.f32 %v1978, %v2073
  %v2092 = vadd.f32 %v1979, %v2078
  %v2093 = vadd.f32 %v1980, %v2083
  %v2094 = vadd.f32 %v1981, %v2088
  %v2095 = vxor.u32 %v2091, 2147483648
  %v2096 = vxor.u32 %v2092, 2147483648
  %v2097 = vxor.u32 %v2093, 2147483648
  %v2098 = vxor.u32 %v2094, 2147483648
  %v2099 = vmul.f32 %v2095, 1.442695
  %v2100 = vpow.pop %v2099
  %v2101 = vmul.f32 %v2096, 1.442695
  %v2102 = vpow.pop %v2101
  %v2103 = vmul.f32 %v2097, 1.442695
  %v2104 = vpow.pop %v2103
  %v2105 = vmul.f32 %v2098, 1.442695
  %v2106 = vpow.pop %v2105
  %v2107 = vadd.f32 %v2100, 1.0
  %v2108 = vadd.f32 %v2102, 1.0
  %v2109 = vadd.f32 %v2104, 1.0
  %v2110 = vadd.f32 %v2106, 1.0
  %v2111 = vrcp.pop %v2107
  %v2112 = vmul.f32 1.0, %v2111
  %v2113 = vrcp.pop %v2108
  %v2114 = vmul.f32 1.0, %v2113
  %v2115 = vrcp.pop %v2109
  %v2116 = vmul.f32 1.0, %v2115
  %v2117 = vrcp.pop %v2110
  %v2118 = vmul.f32 1.0, %v2117
  %2119 = vmatprep.subr.mxu0 0.0
  %2120 = vmatpush1.msra.mxu0 0.0
  %2121 = vmatprep.subr.mxu0 0.0
  %2122 = vmatpush1.msra.mxu0 0.0
  %2123 = vmatprep.subr.mxu0 0.0
  %2124 = vmatpush1.msra.mxu0 0.0
  %2125 = vmatprep.subr.mxu0 0.0
  %2126 = vmatpush1.msra.mxu0 0.0
  %2127 = vmatprep.subr.mxu0 0.0
  %2128 = vmatpush1.msra.mxu0 0.0
  %2129 = vmatprep.subr.mxu0 0.0
  %2130 = vmatpush1.msra.mxu0 0.0
  %2131 = vmatprep.subr.mxu0 0.0
  %2132 = vmatpush1.msra.mxu0 0.0
  %2133 = vmatprep.subr.mxu0 0.0
  %2134 = vmatpush1.msra.mxu0 0.0
  %2135 = vmatprep.subr.mxu0 0.0
  %2136 = vmatpush1.msra.mxu0 %v26
  %2137 = vmatprep.subr.mxu0 0.0
  %2138 = vmatpush1.msra.mxu0 %v25
  %2139 = vmatprep.subr.mxu0 0.0
  %2140 = vmatpush1.msra.mxu0 %v24
  %2141 = vmatprep.subr.mxu0 0.0
  %2142 = vmatpush1.msra.mxu0 %v23
  %2143 = vmatprep.subr.mxu0 0.0
  %2144 = vmatpush1.msra.mxu0 %v22
  %2145 = vmatprep.subr.mxu0 0.0
  %2146 = vmatpush1.msra.mxu0 %v21
  %2147 = vmatprep.subr.mxu0 0.0
  %2148 = vmatpush1.msra.mxu0 %v20
  %2149 = vmatprep.subr.mxu0 0.0
  %2150 = vmatpush1.msra.mxu0 %v19
  %2151 = vmatprep.subr.mxu0 0.0
  %2152 = vmatpush2.msra.mxu0 0.0
  %2153 = vmatprep.subr.mxu0 0.0
  %2154 = vmatpush2.msra.mxu0 0.0
  %2155 = vmatprep.subr.mxu0 0.0
  %2156 = vmatpush2.msra.mxu0 0.0
  %2157 = vmatprep.subr.mxu0 0.0
  %2158 = vmatpush2.msra.mxu0 0.0
  %2159 = vmatprep.subr.mxu0 0.0
  %2160 = vmatpush2.msra.mxu0 0.0
  %2161 = vmatprep.subr.mxu0 0.0
  %2162 = vmatpush2.msra.mxu0 0.0
  %2163 = vmatprep.subr.mxu0 0.0
  %2164 = vmatpush2.msra.mxu0 0.0
  %2165 = vmatprep.subr.mxu0 0.0
  %2166 = vmatpush2.msra.mxu0 0.0
  %2167 = vmatprep.subr.mxu0 0.0
  %2168 = vmatpush2.msra.mxu0 0.0
  %2169 = vmatprep.subr.mxu0 0.0
  %2170 = vmatpush2.msra.mxu0 0.0
  %2171 = vmatprep.subr.mxu0 0.0
  %2172 = vmatpush2.msra.mxu0 0.0
  %2173 = vmatprep.subr.mxu0 0.0
  %2174 = vmatpush2.msra.mxu0 0.0
  %2175 = vmatprep.subr.mxu0 0.0
  %2176 = vmatpush2.msra.mxu0 0.0
  %2177 = vmatprep.subr.mxu0 0.0
  %2178 = vmatpush2.msra.mxu0 0.0
  %2179 = vmatprep.subr.mxu0 0.0
  %2180 = vmatpush2.msra.mxu0 0.0
  %2181 = vmatprep.subr.mxu0 0.0
  %2182 = vmatpush2.msra.mxu0 0.0
  %2183 = vmatprep.mubr.f32.mxu0 0.0
  %2184 = vmatmul.mubr.f32.gmra.mxu0 %v1995
  %v2185 = vpop.f32.mrf.mxu0
  %v2186 = vadd.f32 0.0, %v2185
  %v2187 = vpop.f32.mrf.mxu0
  %2188 = vmatprep.mubr.f32.mxu0 0.0
  %2189 = vmatmul.mubr.f32.gmra.mxu0 %v1998
  %v2190 = vpop.f32.mrf.mxu0
  %v2191 = vadd.f32 0.0, %v2190
  %v2192 = vpop.f32.mrf.mxu0
  %2193 = vmatprep.mubr.f32.mxu0 0.0
  %2194 = vmatmul.mubr.f32.gmra.mxu0 %v2001
  %v2195 = vpop.f32.mrf.mxu0
  %v2196 = vadd.f32 0.0, %v2195
  %v2197 = vpop.f32.mrf.mxu0
  %2198 = vmatprep.mubr.f32.mxu0 0.0
  %2199 = vmatmul.mubr.f32.gmra.mxu0 %v2004
  %v2200 = vpop.f32.mrf.mxu0
  %v2201 = vadd.f32 0.0, %v2200
  %v2202 = vpop.f32.mrf.mxu0
  %2203 = vdwg.mxu0
  %v2204 = vadd.f32 %v1982, %v2186
  %v2205 = vadd.f32 %v1983, %v2191
  %v2206 = vadd.f32 %v1984, %v2196
  %v2207 = vadd.f32 %v1985, %v2201
  %v2208 = vxor.u32 %v2204, 2147483648
  %v2209 = vxor.u32 %v2205, 2147483648
  %v2210 = vxor.u32 %v2206, 2147483648
  %v2211 = vxor.u32 %v2207, 2147483648
  %v2212 = vmul.f32 %v2208, 1.442695
  %v2213 = vpow.pop %v2212
  %v2214 = vmul.f32 %v2209, 1.442695
  %v2215 = vpow.pop %v2214
  %v2216 = vmul.f32 %v2210, 1.442695
  %v2217 = vpow.pop %v2216
  %v2218 = vmul.f32 %v2211, 1.442695
  %v2219 = vpow.pop %v2218
  %v2220 = vadd.f32 %v2213, 1.0
  %v2221 = vadd.f32 %v2215, 1.0
  %v2222 = vadd.f32 %v2217, 1.0
  %v2223 = vadd.f32 %v2219, 1.0
  %v2224 = vrcp.pop %v2220
  %v2225 = vmul.f32 1.0, %v2224
  %v2226 = vrcp.pop %v2221
  %v2227 = vmul.f32 1.0, %v2226
  %v2228 = vrcp.pop %v2222
  %v2229 = vmul.f32 1.0, %v2228
  %v2230 = vrcp.pop %v2223
  %v2231 = vmul.f32 1.0, %v2230
  %2232 = vmatprep.subr.mxu0 0.0
  %2233 = vmatpush1.msra.mxu0 0.0
  %2234 = vmatprep.subr.mxu0 0.0
  %2235 = vmatpush1.msra.mxu0 0.0
  %2236 = vmatprep.subr.mxu0 0.0
  %2237 = vmatpush1.msra.mxu0 0.0
  %2238 = vmatprep.subr.mxu0 0.0
  %2239 = vmatpush1.msra.mxu0 0.0
  %2240 = vmatprep.subr.mxu0 0.0
  %2241 = vmatpush1.msra.mxu0 0.0
  %2242 = vmatprep.subr.mxu0 0.0
  %2243 = vmatpush1.msra.mxu0 0.0
  %2244 = vmatprep.subr.mxu0 0.0
  %2245 = vmatpush1.msra.mxu0 0.0
  %2246 = vmatprep.subr.mxu0 0.0
  %2247 = vmatpush1.msra.mxu0 0.0
  %2248 = vmatprep.subr.mxu0 0.0
  %2249 = vmatpush1.msra.mxu0 %v34
  %2250 = vmatprep.subr.mxu0 0.0
  %2251 = vmatpush1.msra.mxu0 %v33
  %2252 = vmatprep.subr.mxu0 0.0
  %2253 = vmatpush1.msra.mxu0 %v32
  %2254 = vmatprep.subr.mxu0 0.0
  %2255 = vmatpush1.msra.mxu0 %v31
  %2256 = vmatprep.subr.mxu0 0.0
  %2257 = vmatpush1.msra.mxu0 %v30
  %2258 = vmatprep.subr.mxu0 0.0
  %2259 = vmatpush1.msra.mxu0 %v29
  %2260 = vmatprep.subr.mxu0 0.0
  %2261 = vmatpush1.msra.mxu0 %v28
  %2262 = vmatprep.subr.mxu0 0.0
  %2263 = vmatpush1.msra.mxu0 %v27
  %2264 = vmatprep.subr.mxu0 0.0
  %2265 = vmatpush2.msra.mxu0 0.0
  %2266 = vmatprep.subr.mxu0 0.0
  %2267 = vmatpush2.msra.mxu0 0.0
  %2268 = vmatprep.subr.mxu0 0.0
  %2269 = vmatpush2.msra.mxu0 0.0
  %2270 = vmatprep.subr.mxu0 0.0
  %2271 = vmatpush2.msra.mxu0 0.0
  %2272 = vmatprep.subr.mxu0 0.0
  %2273 = vmatpush2.msra.mxu0 0.0
  %2274 = vmatprep.subr.mxu0 0.0
  %2275 = vmatpush2.msra.mxu0 0.0
  %2276 = vmatprep.subr.mxu0 0.0
  %2277 = vmatpush2.msra.mxu0 0.0
  %2278 = vmatprep.subr.mxu0 0.0
  %2279 = vmatpush2.msra.mxu0 0.0
  %2280 = vmatprep.subr.mxu0 0.0
  %2281 = vmatpush2.msra.mxu0 0.0
  %2282 = vmatprep.subr.mxu0 0.0
  %2283 = vmatpush2.msra.mxu0 0.0
  %2284 = vmatprep.subr.mxu0 0.0
  %2285 = vmatpush2.msra.mxu0 0.0
  %2286 = vmatprep.subr.mxu0 0.0
  %2287 = vmatpush2.msra.mxu0 0.0
  %2288 = vmatprep.subr.mxu0 0.0
  %2289 = vmatpush2.msra.mxu0 0.0
  %2290 = vmatprep.subr.mxu0 0.0
  %2291 = vmatpush2.msra.mxu0 0.0
  %2292 = vmatprep.subr.mxu0 0.0
  %2293 = vmatpush2.msra.mxu0 0.0
  %2294 = vmatprep.subr.mxu0 0.0
  %2295 = vmatpush2.msra.mxu0 0.0
  %2296 = vmatprep.mubr.f32.mxu0 0.0
  %2297 = vmatmul.mubr.f32.gmra.mxu0 %v1995
  %v2298 = vpop.f32.mrf.mxu0
  %v2299 = vadd.f32 0.0, %v2298
  %v2300 = vpop.f32.mrf.mxu0
  %2301 = vmatprep.mubr.f32.mxu0 0.0
  %2302 = vmatmul.mubr.f32.gmra.mxu0 %v1998
  %v2303 = vpop.f32.mrf.mxu0
  %v2304 = vadd.f32 0.0, %v2303
  %v2305 = vpop.f32.mrf.mxu0
  %2306 = vmatprep.mubr.f32.mxu0 0.0
  %2307 = vmatmul.mubr.f32.gmra.mxu0 %v2001
  %v2308 = vpop.f32.mrf.mxu0
  %v2309 = vadd.f32 0.0, %v2308
  %v2310 = vpop.f32.mrf.mxu0
  %2311 = vmatprep.mubr.f32.mxu0 0.0
  %2312 = vmatmul.mubr.f32.gmra.mxu0 %v2004
  %v2313 = vpop.f32.mrf.mxu0
  %v2314 = vadd.f32 0.0, %v2313
  %v2315 = vpop.f32.mrf.mxu0
  %2316 = vdwg.mxu0
  %v2317 = vadd.f32 %v1986, %v2299
  %v2318 = vadd.f32 %v1987, %v2304
  %v2319 = vadd.f32 %v1988, %v2309
  %v2320 = vadd.f32 %v1989, %v2314
  %v2321 = vtanh.pop %v2317
  %v2322 = vtanh.pop %v2318
  %v2323 = vtanh.pop %v2319
  %v2324 = vtanh.pop %v2320
  %2325 = vmatprep.subr.mxu0 0.0
  %2326 = vmatpush1.msra.mxu0 0.0
  %2327 = vmatprep.subr.mxu0 0.0
  %2328 = vmatpush1.msra.mxu0 0.0
  %2329 = vmatprep.subr.mxu0 0.0
  %2330 = vmatpush1.msra.mxu0 0.0
  %2331 = vmatprep.subr.mxu0 0.0
  %2332 = vmatpush1.msra.mxu0 0.0
  %2333 = vmatprep.subr.mxu0 0.0
  %2334 = vmatpush1.msra.mxu0 0.0
  %2335 = vmatprep.subr.mxu0 0.0
  %2336 = vmatpush1.msra.mxu0 0.0
  %2337 = vmatprep.subr.mxu0 0.0
  %2338 = vmatpush1.msra.mxu0 0.0
  %2339 = vmatprep.subr.mxu0 0.0
  %2340 = vmatpush1.msra.mxu0 0.0
  %2341 = vmatprep.subr.mxu0 0.0
  %2342 = vmatpush1.msra.mxu0 %v42
  %2343 = vmatprep.subr.mxu0 0.0
  %2344 = vmatpush1.msra.mxu0 %v41
  %2345 = vmatprep.subr.mxu0 0.0
  %2346 = vmatpush1.msra.mxu0 %v40
  %2347 = vmatprep.subr.mxu0 0.0
  %2348 = vmatpush1.msra.mxu0 %v39
  %2349 = vmatprep.subr.mxu0 0.0
  %2350 = vmatpush1.msra.mxu0 %v38
  %2351 = vmatprep.subr.mxu0 0.0
  %2352 = vmatpush1.msra.mxu0 %v37
  %2353 = vmatprep.subr.mxu0 0.0
  %2354 = vmatpush1.msra.mxu0 %v36
  %2355 = vmatprep.subr.mxu0 0.0
  %2356 = vmatpush1.msra.mxu0 %v35
  %2357 = vmatprep.subr.mxu0 0.0
  %2358 = vmatpush2.msra.mxu0 0.0
  %2359 = vmatprep.subr.mxu0 0.0
  %2360 = vmatpush2.msra.mxu0 0.0
  %2361 = vmatprep.subr.mxu0 0.0
  %2362 = vmatpush2.msra.mxu0 0.0
  %2363 = vmatprep.subr.mxu0 0.0
  %2364 = vmatpush2.msra.mxu0 0.0
  %2365 = vmatprep.subr.mxu0 0.0
  %2366 = vmatpush2.msra.mxu0 0.0
  %2367 = vmatprep.subr.mxu0 0.0
  %2368 = vmatpush2.msra.mxu0 0.0
  %2369 = vmatprep.subr.mxu0 0.0
  %2370 = vmatpush2.msra.mxu0 0.0
  %2371 = vmatprep.subr.mxu0 0.0
  %2372 = vmatpush2.msra.mxu0 0.0
  %2373 = vmatprep.subr.mxu0 0.0
  %2374 = vmatpush2.msra.mxu0 0.0
  %2375 = vmatprep.subr.mxu0 0.0
  %2376 = vmatpush2.msra.mxu0 0.0
  %2377 = vmatprep.subr.mxu0 0.0
  %2378 = vmatpush2.msra.mxu0 0.0
  %2379 = vmatprep.subr.mxu0 0.0
  %2380 = vmatpush2.msra.mxu0 0.0
  %2381 = vmatprep.subr.mxu0 0.0
  %2382 = vmatpush2.msra.mxu0 0.0
  %2383 = vmatprep.subr.mxu0 0.0
  %2384 = vmatpush2.msra.mxu0 0.0
  %2385 = vmatprep.subr.mxu0 0.0
  %2386 = vmatpush2.msra.mxu0 0.0
  %2387 = vmatprep.subr.mxu0 0.0
  %2388 = vmatpush2.msra.mxu0 0.0
  %2389 = vmatprep.mubr.f32.mxu0 0.0
  %2390 = vmatmul.mubr.f32.gmra.mxu0 %v1995
  %v2391 = vpop.f32.mrf.mxu0
  %v2392 = vadd.f32 0.0, %v2391
  %v2393 = vpop.f32.mrf.mxu0
  %2394 = vmatprep.mubr.f32.mxu0 0.0
  %2395 = vmatmul.mubr.f32.gmra.mxu0 %v1998
  %v2396 = vpop.f32.mrf.mxu0
  %v2397 = vadd.f32 0.0, %v2396
  %v2398 = vpop.f32.mrf.mxu0
  %2399 = vmatprep.mubr.f32.mxu0 0.0
  %2400 = vmatmul.mubr.f32.gmra.mxu0 %v2001
  %v2401 = vpop.f32.mrf.mxu0
  %v2402 = vadd.f32 0.0, %v2401
  %v2403 = vpop.f32.mrf.mxu0
  %2404 = vmatprep.mubr.f32.mxu0 0.0
  %2405 = vmatmul.mubr.f32.gmra.mxu0 %v2004
  %v2406 = vpop.f32.mrf.mxu0
  %v2407 = vadd.f32 0.0, %v2406
  %v2408 = vpop.f32.mrf.mxu0
  %2409 = vdwg.mxu0
  %v2410 = vadd.f32 %v1990, %v2392
  %v2411 = vadd.f32 %v1991, %v2397
  %v2412 = vadd.f32 %v1992, %v2402
  %v2413 = vadd.f32 %v1993, %v2407
  %v2414 = vxor.u32 %v2410, 2147483648
  %v2415 = vxor.u32 %v2411, 2147483648
  %v2416 = vxor.u32 %v2412, 2147483648
  %v2417 = vxor.u32 %v2413, 2147483648
  %v2418 = vmul.f32 %v2414, 1.442695
  %v2419 = vpow.pop %v2418
  %v2420 = vmul.f32 %v2415, 1.442695
  %v2421 = vpow.pop %v2420
  %v2422 = vmul.f32 %v2416, 1.442695
  %v2423 = vpow.pop %v2422
  %v2424 = vmul.f32 %v2417, 1.442695
  %v2425 = vpow.pop %v2424
  %v2426 = vadd.f32 %v2419, 1.0
  %v2427 = vadd.f32 %v2421, 1.0
  %v2428 = vadd.f32 %v2423, 1.0
  %v2429 = vadd.f32 %v2425, 1.0
  %v2430 = vrcp.pop %v2426
  %v2431 = vmul.f32 1.0, %v2430
  %v2432 = vrcp.pop %v2427
  %v2433 = vmul.f32 1.0, %v2432
  %v2434 = vrcp.pop %v2428
  %v2435 = vmul.f32 1.0, %v2434
  %v2436 = vrcp.pop %v2429
  %v2437 = vmul.f32 1.0, %v2436
  %v2438 = vmul.f32 %v2225, %v1960
  %v2439 = vmul.f32 %v2227, %v1961
  %v2440 = vmul.f32 %v2229, %v1962
  %v2441 = vmul.f32 %v2231, %v1963
  %v2442 = vmul.f32 %v2112, %v2321
  %v2443 = vmul.f32 %v2114, %v2322
  %v2444 = vmul.f32 %v2116, %v2323
  %v2445 = vmul.f32 %v2118, %v2324
  %v2446 = vadd.f32 %v2438, %v2442
  %v2447 = vadd.f32 %v2439, %v2443
  %v2448 = vadd.f32 %v2440, %v2444
  %v2449 = vadd.f32 %v2441, %v2445
  %v2450 = vtanh.pop %v2446
  %v2451 = vtanh.pop %v2447
  %v2452 = vtanh.pop %v2448
  %v2453 = vtanh.pop %v2449
  %v2454 = vmul.f32 %v2431, %v2450
  %v2455 = vmul.f32 %v2433, %v2451
  %v2456 = vmul.f32 %v2435, %v2452
  %v2457 = vmul.f32 %v2437, %v2453
  %s2458 = scalar_lea.vmem %s2, 128
  %2459 = vst.msk [vmem:[%s2458] sm:$0xff] %vm59, %v2454
  %2460 = vst.msk [vmem:[%s2458 + $0x8] sm:$0xff] %vm59, %v2455
  %2461 = vst.msk [vmem:[%s2458 + $0x10] sm:$0xff] %vm59, %v2456
  %2462 = vst.msk [vmem:[%s2458 + $0x18] sm:$0xff] %vm59, %v2457
  // Predicated region
  $region10: #{keynet_forward.7} parent=0 // pred_check
    _
  $region11: #{keynet_forward.7} parent=0 // pred_check_branch
    %2464 = sbr.rel (0) target = $region13
  $region12: #{keynet_forward.7} parent=0 // pred_region
    _
  $region13: #{keynet_forward.7} parent=0 // pred_fallthru
    _
  // Predicated region
  $region14: #{keynet_forward.7} parent=0 // pred_check
    _
  $region15: #{keynet_forward.7} parent=0 // pred_check_branch
    %2466 = sbr.rel (0) target = $region17
  $region16: #{keynet_forward.7} parent=0 // pred_region
    _
  $region17: #{keynet_forward.7} parent=0 // pred_fallthru
    _

// kernel: keynet_forward.8
$region0: #{keynet_forward.8}
  #allocation0 [shape = 'u32[]', space=smem, size = 0x4, offset = 0x4, fixed_abs, tag = 'smem constant byte address 0x4 - core index']
  #allocation1 [shape = 'u32[144,128]{1,0:T(1,128)}', space=vmem, size = 0x12000, scoped, tag = 'internal scratch']
  %s0 = inlined_call_operand.vmem [shape: f32[160,576], index: 0, kind: input, shape index: {}]
  %s1 = inlined_call_operand.vmem [shape: f32[576,128], index: 1, kind: input, shape index: {}]
  %s2 = inlined_call_operand.vmem [shape: f32[1,128], index: 2, kind: input, shape index: {}]
  %s3 = inlined_call_operand.vmem [shape: f32[1,128], index: 3, kind: input, shape index: {}]
  %s4 = inlined_call_operand.vmem [shape: f32[1,128], index: 4, kind: input, shape index: {}]
  %s5 = inlined_call_operand.vmem [shape: f32[160,128], index: 5, kind: output, shape index: {}]
  %s6 = sld [smem:[#allocation0]]
  $region30: #{keynet_forward.8} parent=0
    _
  %s8 = ssub.s32 1, %s6
  %s9 = scalar_select 0, %s8, %s6
  // Predicated region
  $region2: #{keynet_forward.8} parent=0 // pred_check
    _
  $region3: #{keynet_forward.8} parent=0 // pred_check_branch
    %11 = sbr.rel (0) target = $region5
  $region4: #{keynet_forward.8} parent=0 // pred_region
    _
  $region5: #{keynet_forward.8} parent=0 // pred_fallthru
    _
  // Predicated region
  $region6: #{keynet_forward.8} parent=0 // pred_check
    _
  $region7: #{keynet_forward.8} parent=0 // pred_check_branch
    %13 = sbr.rel (0) target = $region9
  $region8: #{keynet_forward.8} parent=0 // pred_region
    _
  $region9: #{keynet_forward.8} parent=0 // pred_fallthru
    _
  // Predicated region
  $region10: #{keynet_forward.8} parent=0 // pred_check
    _
  $region11: #{keynet_forward.8} parent=0 // pred_check_branch
    %15 = sbr.rel (0) target = $region13
  $region12: #{keynet_forward.8} parent=0 // pred_region
    _
  $region13: #{keynet_forward.8} parent=0 // pred_fallthru
    _
  // Predicated region
  $region14: #{keynet_forward.8} parent=0 // pred_check
    _
  $region15: #{keynet_forward.8} parent=0 // pred_check_branch
    %17 = sbr.rel (0) target = $region17
  $region16: #{keynet_forward.8} parent=0 // pred_region
    _
  $region17: #{keynet_forward.8} parent=0 // pred_fallthru
    _
  // Predicated region
  $region18: #{keynet_forward.8} parent=0 // pred_check
    _
  $region19: #{keynet_forward.8} parent=0 // pred_check_branch
    %19 = sbr.rel (0) target = $region21
  $region20: #{keynet_forward.8} parent=0 // pred_region
    _
  $region21: #{keynet_forward.8} parent=0 // pred_fallthru
    _
  %v20 = vld [vmem:[%s0] sm:$0xff]
  %v21 = vld [vmem:[%s0 + $0x8] sm:$0xff]
  %v22 = vld [vmem:[%s0 + $0x10] sm:$0xff]
  %v23 = vld [vmem:[%s0 + $0x18] sm:$0xff]
  %v24 = vld [vmem:[%s0 + $0x20] sm:$0xff]
  %v25 = vld [vmem:[%s0 + $0x28] sm:$0xff]
  %v26 = vld [vmem:[%s0 + $0x30] sm:$0xff]
  %v27 = vld [vmem:[%s0 + $0x38] sm:$0xff]
  %v28 = vld [vmem:[%s0 + $0x40] sm:$0xff]
  %v29 = vld [vmem:[%s0 + $0x48] sm:$0xff]
  %v30 = vld [vmem:[%s0 + $0x50] sm:$0xff]
  %v31 = vld [vmem:[%s0 + $0x58] sm:$0xff]
  %v32 = vld [vmem:[%s0 + $0x60] sm:$0xff]
  %v33 = vld [vmem:[%s0 + $0x68] sm:$0xff]
  %v34 = vld [vmem:[%s0 + $0x70] sm:$0xff]
  %v35 = vld [vmem:[%s0 + $0x78] sm:$0xff]
  %v36 = vld [vmem:[%s0 + $0x80] sm:$0xff]
  %v37 = vld [vmem:[%s0 + $0x88] sm:$0xff]
  %v38 = vld [vmem:[%s0 + $0x90] sm:$0xff]
  %v39 = vld [vmem:[%s0 + $0x98] sm:$0xff]
  %v40 = vld [vmem:[%s0 + $0xa0] sm:$0xff]
  %v41 = vld [vmem:[%s0 + $0xa8] sm:$0xff]
  %v42 = vld [vmem:[%s0 + $0xb0] sm:$0xff]
  %v43 = vld [vmem:[%s0 + $0xb8] sm:$0xff]
  %v44 = vld [vmem:[%s0 + $0xc0] sm:$0xff]
  %v45 = vld [vmem:[%s0 + $0xc8] sm:$0xff]
  %v46 = vld [vmem:[%s0 + $0xd0] sm:$0xff]
  %v47 = vld [vmem:[%s0 + $0xd8] sm:$0xff]
  %v48 = vld [vmem:[%s0 + $0xe0] sm:$0xff]
  %v49 = vld [vmem:[%s0 + $0xe8] sm:$0xff]
  %v50 = vld [vmem:[%s0 + $0xf0] sm:$0xff]
  %v51 = vld [vmem:[%s0 + $0xf8] sm:$0xff]
  %v52 = vld [vmem:[%s0 + $0x100] sm:$0xff]
  %v53 = vld [vmem:[%s0 + $0x108] sm:$0xff]
  %v54 = vld [vmem:[%s0 + $0x110] sm:$0xff]
  %v55 = vld [vmem:[%s0 + $0x118] sm:$0xff]
  %v56 = vld [vmem:[%s0 + $0x120] sm:$0xff]
  %v57 = vld [vmem:[%s0 + $0x128] sm:$0xff]
  %v58 = vld [vmem:[%s0 + $0x130] sm:$0xff]
  %v59 = vld [vmem:[%s0 + $0x138] sm:$0xff]
  %v60 = vld [vmem:[%s0 + $0x140] sm:$0xff]
  %v61 = vld [vmem:[%s0 + $0x148] sm:$0xff]
  %v62 = vld [vmem:[%s0 + $0x150] sm:$0xff]
  %v63 = vld [vmem:[%s0 + $0x158] sm:$0xff]
  %v64 = vld [vmem:[%s0 + $0x160] sm:$0xff]
  %v65 = vld [vmem:[%s0 + $0x168] sm:$0xff]
  %v66 = vld [vmem:[%s0 + $0x170] sm:$0xff]
  %v67 = vld [vmem:[%s0 + $0x178] sm:$0xff]
  %v68 = vld [vmem:[%s0 + $0x180] sm:$0xff]
  %v69 = vld [vmem:[%s0 + $0x188] sm:$0xff]
  %v70 = vld [vmem:[%s0 + $0x190] sm:$0xff]
  %v71 = vld [vmem:[%s0 + $0x198] sm:$0xff]
  %v72 = vld [vmem:[%s0 + $0x1a0] sm:$0xff]
  %v73 = vld [vmem:[%s0 + $0x1a8] sm:$0xff]
  %v74 = vld [vmem:[%s0 + $0x1b0] sm:$0xff]
  %v75 = vld [vmem:[%s0 + $0x1b8] sm:$0xff]
  %v76 = vld [vmem:[%s0 + $0x1c0] sm:$0xff]
  %v77 = vld [vmem:[%s0 + $0x1c8] sm:$0xff]
  %v78 = vld [vmem:[%s0 + $0x1d0] sm:$0xff]
  %v79 = vld [vmem:[%s0 + $0x1d8] sm:$0xff]
  %v80 = vld [vmem:[%s0 + $0x1e0] sm:$0xff]
  %v81 = vld [vmem:[%s0 + $0x1e8] sm:$0xff]
  %v82 = vld [vmem:[%s0 + $0x1f0] sm:$0xff]
  %v83 = vld [vmem:[%s0 + $0x1f8] sm:$0xff]
  %v84 = vld [vmem:[%s0 + $0x200] sm:$0xff]
  %v85 = vld [vmem:[%s0 + $0x208] sm:$0xff]
  %v86 = vld [vmem:[%s0 + $0x210] sm:$0xff]
  %v87 = vld [vmem:[%s0 + $0x218] sm:$0xff]
  %v88 = vld [vmem:[%s0 + $0x220] sm:$0xff]
  %v89 = vld [vmem:[%s0 + $0x228] sm:$0xff]
  %v90 = vld [vmem:[%s0 + $0x230] sm:$0xff]
  %v91 = vld [vmem:[%s0 + $0x238] sm:$0xff]
  %v92 = vld [vmem:[%s0 + $0x240] sm:$0xff]
  %v93 = vld [vmem:[%s0 + $0x248] sm:$0xff]
  %v94 = vld [vmem:[%s0 + $0x250] sm:$0xff]
  %v95 = vld [vmem:[%s0 + $0x258] sm:$0xff]
  %v96 = vld [vmem:[%s0 + $0x260] sm:$0xff]
  %v97 = vld [vmem:[%s0 + $0x268] sm:$0xff]
  %v98 = vld [vmem:[%s0 + $0x270] sm:$0xff]
  %v99 = vld [vmem:[%s0 + $0x278] sm:$0xff]
  %v100 = vld [vmem:[%s0 + $0x280] sm:$0xff]
  %v101 = vld [vmem:[%s0 + $0x288] sm:$0xff]
  %v102 = vld [vmem:[%s0 + $0x290] sm:$0xff]
  %v103 = vld [vmem:[%s0 + $0x298] sm:$0xff]
  %v104 = vld [vmem:[%s0 + $0x2a0] sm:$0xff]
  %v105 = vld [vmem:[%s0 + $0x2a8] sm:$0xff]
  %v106 = vld [vmem:[%s0 + $0x2b0] sm:$0xff]
  %v107 = vld [vmem:[%s0 + $0x2b8] sm:$0xff]
  %v108 = vld [vmem:[%s0 + $0x2c0] sm:$0xff]
  %v109 = vld [vmem:[%s0 + $0x2c8] sm:$0xff]
  %v110 = vld [vmem:[%s0 + $0x2d0] sm:$0xff]
  %v111 = vld [vmem:[%s0 + $0x2d8] sm:$0xff]
  %v112 = vld [vmem:[%s0 + $0x2e0] sm:$0xff]
  %v113 = vld [vmem:[%s0 + $0x2e8] sm:$0xff]
  %v114 = vld [vmem:[%s0 + $0x2f0] sm:$0xff]
  %v115 = vld [vmem:[%s0 + $0x2f8] sm:$0xff]
  %v116 = vld [vmem:[%s0 + $0x300] sm:$0xff]
  %v117 = vld [vmem:[%s0 + $0x308] sm:$0xff]
  %v118 = vld [vmem:[%s0 + $0x310] sm:$0xff]
  %v119 = vld [vmem:[%s0 + $0x318] sm:$0xff]
  %v120 = vld [vmem:[%s1] sm:$0xff]
  %v121 = vld [vmem:[%s1 + $0x8] sm:$0xff]
  %v122 = vld [vmem:[%s1 + $0x10] sm:$0xff]
  %v123 = vld [vmem:[%s1 + $0x18] sm:$0xff]
  %v124 = vld [vmem:[%s1 + $0x20] sm:$0xff]
  %v125 = vld [vmem:[%s1 + $0x28] sm:$0xff]
  %v126 = vld [vmem:[%s1 + $0x30] sm:$0xff]
  %v127 = vld [vmem:[%s1 + $0x38] sm:$0xff]
  %v128 = vld [vmem:[%s1 + $0x40] sm:$0xff]
  %v129 = vld [vmem:[%s1 + $0x48] sm:$0xff]
  %v130 = vld [vmem:[%s1 + $0x50] sm:$0xff]
  %v131 = vld [vmem:[%s1 + $0x58] sm:$0xff]
  %v132 = vld [vmem:[%s1 + $0x60] sm:$0xff]
  %v133 = vld [vmem:[%s1 + $0x68] sm:$0xff]
  %v134 = vld [vmem:[%s1 + $0x70] sm:$0xff]
  %v135 = vld [vmem:[%s1 + $0x78] sm:$0xff]
  %v136 = vld [vmem:[%s1 + $0x80] sm:$0xff]
  %v137 = vld [vmem:[%s1 + $0x88] sm:$0xff]
  %v138 = vld [vmem:[%s1 + $0x90] sm:$0xff]
  %v139 = vld [vmem:[%s1 + $0x98] sm:$0xff]
  %v140 = vld [vmem:[%s1 + $0xa0] sm:$0xff]
  %v141 = vld [vmem:[%s1 + $0xa8] sm:$0xff]
  %v142 = vld [vmem:[%s1 + $0xb0] sm:$0xff]
  %v143 = vld [vmem:[%s1 + $0xb8] sm:$0xff]
  %v144 = vld [vmem:[%s1 + $0xc0] sm:$0xff]
  %v145 = vld [vmem:[%s1 + $0xc8] sm:$0xff]
  %v146 = vld [vmem:[%s1 + $0xd0] sm:$0xff]
  %v147 = vld [vmem:[%s1 + $0xd8] sm:$0xff]
  %v148 = vld [vmem:[%s1 + $0xe0] sm:$0xff]
  %v149 = vld [vmem:[%s1 + $0xe8] sm:$0xff]
  %v150 = vld [vmem:[%s1 + $0xf0] sm:$0xff]
  %v151 = vld [vmem:[%s1 + $0xf8] sm:$0xff]
  %v152 = vld [vmem:[%s1 + $0x100] sm:$0xff]
  %v153 = vld [vmem:[%s1 + $0x108] sm:$0xff]
  %v154 = vld [vmem:[%s1 + $0x110] sm:$0xff]
  %v155 = vld [vmem:[%s1 + $0x118] sm:$0xff]
  %v156 = vld [vmem:[%s1 + $0x120] sm:$0xff]
  %v157 = vld [vmem:[%s1 + $0x128] sm:$0xff]
  %v158 = vld [vmem:[%s1 + $0x130] sm:$0xff]
  %v159 = vld [vmem:[%s1 + $0x138] sm:$0xff]
  %v160 = vld [vmem:[%s1 + $0x140] sm:$0xff]
  %v161 = vld [vmem:[%s1 + $0x148] sm:$0xff]
  %v162 = vld [vmem:[%s1 + $0x150] sm:$0xff]
  %v163 = vld [vmem:[%s1 + $0x158] sm:$0xff]
  %v164 = vld [vmem:[%s1 + $0x160] sm:$0xff]
  %v165 = vld [vmem:[%s1 + $0x168] sm:$0xff]
  %v166 = vld [vmem:[%s1 + $0x170] sm:$0xff]
  %v167 = vld [vmem:[%s1 + $0x178] sm:$0xff]
  %v168 = vld [vmem:[%s1 + $0x180] sm:$0xff]
  %v169 = vld [vmem:[%s1 + $0x188] sm:$0xff]
  %v170 = vld [vmem:[%s1 + $0x190] sm:$0xff]
  %v171 = vld [vmem:[%s1 + $0x198] sm:$0xff]
  %v172 = vld [vmem:[%s1 + $0x1a0] sm:$0xff]
  %v173 = vld [vmem:[%s1 + $0x1a8] sm:$0xff]
  %v174 = vld [vmem:[%s1 + $0x1b0] sm:$0xff]
  %v175 = vld [vmem:[%s1 + $0x1b8] sm:$0xff]
  %v176 = vld [vmem:[%s1 + $0x1c0] sm:$0xff]
  %v177 = vld [vmem:[%s1 + $0x1c8] sm:$0xff]
  %v178 = vld [vmem:[%s1 + $0x1d0] sm:$0xff]
  %v179 = vld [vmem:[%s1 + $0x1d8] sm:$0xff]
  %v180 = vld [vmem:[%s1 + $0x1e0] sm:$0xff]
  %v181 = vld [vmem:[%s1 + $0x1e8] sm:$0xff]
  %v182 = vld [vmem:[%s1 + $0x1f0] sm:$0xff]
  %v183 = vld [vmem:[%s1 + $0x1f8] sm:$0xff]
  %v184 = vld [vmem:[%s1 + $0x200] sm:$0xff]
  %v185 = vld [vmem:[%s1 + $0x208] sm:$0xff]
  %v186 = vld [vmem:[%s1 + $0x210] sm:$0xff]
  %v187 = vld [vmem:[%s1 + $0x218] sm:$0xff]
  %v188 = vld [vmem:[%s1 + $0x220] sm:$0xff]
  %v189 = vld [vmem:[%s1 + $0x228] sm:$0xff]
  %v190 = vld [vmem:[%s1 + $0x230] sm:$0xff]
  %v191 = vld [vmem:[%s1 + $0x238] sm:$0xff]
  %v192 = vld [vmem:[%s2] sm:$0x1]
  %v194 = vlaneseq
  %v195 = vshrl.u32 %v194, 7
  %v196 = vsub.s32 0, %v195
  %v197 = vrot.slane %v192, %v196
  %vm199 = vcmask 523264
  %v201 = vsel %vm199, %v24, 0
  %v204 = vsel %vm199, %v29, 0
  %v207 = vsel %vm199, %v34, 0
  %v210 = vsel %vm199, %v39, 0
  %v213 = vsel %vm199, %v44, 0
  %v216 = vsel %vm199, %v49, 0
  %v219 = vsel %vm199, %v54, 0
  %v222 = vsel %vm199, %v59, 0
  %v225 = vsel %vm199, %v64, 0
  %v228 = vsel %vm199, %v69, 0
  %v231 = vsel %vm199, %v74, 0
  %v234 = vsel %vm199, %v79, 0
  %v237 = vsel %vm199, %v84, 0
  %v240 = vsel %vm199, %v89, 0
  %v243 = vsel %vm199, %v94, 0
  %v246 = vsel %vm199, %v99, 0
  %v249 = vsel %vm199, %v104, 0
  %v252 = vsel %vm199, %v109, 0
  %v255 = vsel %vm199, %v114, 0
  %v258 = vsel %vm199, %v119, 0
  %260 = vmatprep.subr.mxu0 0.0
  %261 = vmatpush1.msra.mxu0 %v135
  %262 = vmatprep.subr.mxu0 0.0
  %263 = vmatpush1.msra.mxu0 %v134
  %264 = vmatprep.subr.mxu0 0.0
  %265 = vmatpush1.msra.mxu0 %v133
  %266 = vmatprep.subr.mxu0 0.0
  %267 = vmatpush1.msra.mxu0 %v132
  %268 = vmatprep.subr.mxu0 0.0
  %269 = vmatpush1.msra.mxu0 %v131
  %270 = vmatprep.subr.mxu0 0.0
  %271 = vmatpush1.msra.mxu0 %v130
  %272 = vmatprep.subr.mxu0 0.0
  %273 = vmatpush1.msra.mxu0 %v129
  %274 = vmatprep.subr.mxu0 0.0
  %275 = vmatpush1.msra.mxu0 %v128
  %276 = vmatprep.subr.mxu0 0.0
  %277 = vmatpush1.msra.mxu0 %v127
  %278 = vmatprep.subr.mxu0 0.0
  %279 = vmatpush1.msra.mxu0 %v126
  %280 = vmatprep.subr.mxu0 0.0
  %281 = vmatpush1.msra.mxu0 %v125
  %282 = vmatprep.subr.mxu0 0.0
  %283 = vmatpush1.msra.mxu0 %v124
  %284 = vmatprep.subr.mxu0 0.0
  %285 = vmatpush1.msra.mxu0 %v123
  %286 = vmatprep.subr.mxu0 0.0
  %287 = vmatpush1.msra.mxu0 %v122
  %288 = vmatprep.subr.mxu0 0.0
  %289 = vmatpush1.msra.mxu0 %v121
  %290 = vmatprep.subr.mxu0 0.0
  %291 = vmatpush1.msra.mxu0 %v120
  %292 = vmatprep.subr.mxu0 0.0
  %293 = vmatpush2.msra.mxu0 %v151
  %294 = vmatprep.subr.mxu0 0.0
  %295 = vmatpush2.msra.mxu0 %v150
  %296 = vmatprep.subr.mxu0 0.0
  %297 = vmatpush2.msra.mxu0 %v149
  %298 = vmatprep.subr.mxu0 0.0
  %299 = vmatpush2.msra.mxu0 %v148
  %300 = vmatprep.subr.mxu0 0.0
  %301 = vmatpush2.msra.mxu0 %v147
  %302 = vmatprep.subr.mxu0 0.0
  %303 = vmatpush2.msra.mxu0 %v146
  %304 = vmatprep.subr.mxu0 0.0
  %305 = vmatpush2.msra.mxu0 %v145
  %306 = vmatprep.subr.mxu0 0.0
  %307 = vmatpush2.msra.mxu0 %v144
  %308 = vmatprep.subr.mxu0 0.0
  %309 = vmatpush2.msra.mxu0 %v143
  %310 = vmatprep.subr.mxu0 0.0
  %311 = vmatpush2.msra.mxu0 %v142
  %312 = vmatprep.subr.mxu0 0.0
  %313 = vmatpush2.msra.mxu0 %v141
  %314 = vmatprep.subr.mxu0 0.0
  %315 = vmatpush2.msra.mxu0 %v140
  %316 = vmatprep.subr.mxu0 0.0
  %317 = vmatpush2.msra.mxu0 %v139
  %318 = vmatprep.subr.mxu0 0.0
  %319 = vmatpush2.msra.mxu0 %v138
  %320 = vmatprep.subr.mxu0 0.0
  %321 = vmatpush2.msra.mxu0 %v137
  %322 = vmatprep.subr.mxu0 0.0
  %323 = vmatpush2.msra.mxu0 %v136
  %324 = vmatprep.mubr.f32.mxu0 %v21
  %325 = vmatmul.mubr.f32.gmra.mxu0 %v20
  %v326 = vpop.f32.mrf.mxu0
  %v327 = vadd.f32 %v197, %v326
  %v328 = vpop.f32.mrf.mxu0
  %329 = vmatprep.mubr.f32.mxu0 %v26
  %330 = vmatmul.mubr.f32.gmra.mxu0 %v25
  %v331 = vpop.f32.mrf.mxu0
  %v332 = vadd.f32 %v197, %v331
  %v333 = vpop.f32.mrf.mxu0
  %334 = vmatprep.mubr.f32.mxu0 %v31
  %335 = vmatmul.mubr.f32.gmra.mxu0 %v30
  %v336 = vpop.f32.mrf.mxu0
  %v337 = vadd.f32 %v197, %v336
  %v338 = vpop.f32.mrf.mxu0
  %339 = vmatprep.mubr.f32.mxu0 %v36
  %340 = vmatmul.mubr.f32.gmra.mxu0 %v35
  %v341 = vpop.f32.mrf.mxu0
  %v342 = vadd.f32 %v197, %v341
  %v343 = vpop.f32.mrf.mxu0
  %344 = vmatprep.mubr.f32.mxu0 %v41
  %345 = vmatmul.mubr.f32.gmra.mxu0 %v40
  %v346 = vpop.f32.mrf.mxu0
  %v347 = vadd.f32 %v197, %v346
  %v348 = vpop.f32.mrf.mxu0
  %349 = vmatprep.mubr.f32.mxu0 %v46
  %350 = vmatmul.mubr.f32.gmra.mxu0 %v45
  %v351 = vpop.f32.mrf.mxu0
  %v352 = vadd.f32 %v197, %v351
  %v353 = vpop.f32.mrf.mxu0
  %354 = vmatprep.mubr.f32.mxu0 %v51
  %355 = vmatmul.mubr.f32.gmra.mxu0 %v50
  %v356 = vpop.f32.mrf.mxu0
  %v357 = vadd.f32 %v197, %v356
  %v358 = vpop.f32.mrf.mxu0
  %359 = vmatprep.mubr.f32.mxu0 %v56
  %360 = vmatmul.mubr.f32.gmra.mxu0 %v55
  %v361 = vpop.f32.mrf.mxu0
  %v362 = vadd.f32 %v197, %v361
  %v363 = vpop.f32.mrf.mxu0
  %364 = vmatprep.mubr.f32.mxu0 %v61
  %365 = vmatmul.mubr.f32.gmra.mxu0 %v60
  %v366 = vpop.f32.mrf.mxu0
  %v367 = vadd.f32 %v197, %v366
  %v368 = vpop.f32.mrf.mxu0
  %369 = vmatprep.mubr.f32.mxu0 %v66
  %370 = vmatmul.mubr.f32.gmra.mxu0 %v65
  %v371 = vpop.f32.mrf.mxu0
  %v372 = vadd.f32 %v197, %v371
  %v373 = vpop.f32.mrf.mxu0
  %374 = vmatprep.mubr.f32.mxu0 %v71
  %375 = vmatmul.mubr.f32.gmra.mxu0 %v70
  %v376 = vpop.f32.mrf.mxu0
  %v377 = vadd.f32 %v197, %v376
  %v378 = vpop.f32.mrf.mxu0
  %379 = vmatprep.mubr.f32.mxu0 %v76
  %380 = vmatmul.mubr.f32.gmra.mxu0 %v75
  %v381 = vpop.f32.mrf.mxu0
  %v382 = vadd.f32 %v197, %v381
  %v383 = vpop.f32.mrf.mxu0
  %384 = vmatprep.mubr.f32.mxu0 %v81
  %385 = vmatmul.mubr.f32.gmra.mxu0 %v80
  %v386 = vpop.f32.mrf.mxu0
  %v387 = vadd.f32 %v197, %v386
  %v388 = vpop.f32.mrf.mxu0
  %389 = vmatprep.mubr.f32.mxu0 %v86
  %390 = vmatmul.mubr.f32.gmra.mxu0 %v85
  %v391 = vpop.f32.mrf.mxu0
  %v392 = vadd.f32 %v197, %v391
  %v393 = vpop.f32.mrf.mxu0
  %394 = vmatprep.mubr.f32.mxu0 %v91
  %395 = vmatmul.mubr.f32.gmra.mxu0 %v90
  %v396 = vpop.f32.mrf.mxu0
  %v397 = vadd.f32 %v197, %v396
  %v398 = vpop.f32.mrf.mxu0
  %399 = vmatprep.mubr.f32.mxu0 %v96
  %400 = vmatmul.mubr.f32.gmra.mxu0 %v95
  %v401 = vpop.f32.mrf.mxu0
  %v402 = vadd.f32 %v197, %v401
  %v403 = vpop.f32.mrf.mxu0
  %404 = vmatprep.mubr.f32.mxu0 %v101
  %405 = vmatmul.mubr.f32.gmra.mxu0 %v100
  %v406 = vpop.f32.mrf.mxu0
  %v407 = vadd.f32 %v197, %v406
  %v408 = vpop.f32.mrf.mxu0
  %409 = vmatprep.mubr.f32.mxu0 %v106
  %410 = vmatmul.mubr.f32.gmra.mxu0 %v105
  %v411 = vpop.f32.mrf.mxu0
  %v412 = vadd.f32 %v197, %v411
  %v413 = vpop.f32.mrf.mxu0
  %414 = vmatprep.mubr.f32.mxu0 %v111
  %415 = vmatmul.mubr.f32.gmra.mxu0 %v110
  %v416 = vpop.f32.mrf.mxu0
  %v417 = vadd.f32 %v197, %v416
  %v418 = vpop.f32.mrf.mxu0
  %419 = vmatprep.mubr.f32.mxu0 %v116
  %420 = vmatmul.mubr.f32.gmra.mxu0 %v115
  %v421 = vpop.f32.mrf.mxu0
  %v422 = vadd.f32 %v197, %v421
  %v423 = vpop.f32.mrf.mxu0
  %424 = vdwg.mxu0
  %425 = vmatprep.subr.mxu0 0.0
  %426 = vmatpush1.msra.mxu0 %v167
  %427 = vmatprep.subr.mxu0 0.0
  %428 = vmatpush1.msra.mxu0 %v166
  %429 = vmatprep.subr.mxu0 0.0
  %430 = vmatpush1.msra.mxu0 %v165
  %431 = vmatprep.subr.mxu0 0.0
  %432 = vmatpush1.msra.mxu0 %v164
  %433 = vmatprep.subr.mxu0 0.0
  %434 = vmatpush1.msra.mxu0 %v163
  %435 = vmatprep.subr.mxu0 0.0
  %436 = vmatpush1.msra.mxu0 %v162
  %437 = vmatprep.subr.mxu0 0.0
  %438 = vmatpush1.msra.mxu0 %v161
  %439 = vmatprep.subr.mxu0 0.0
  %440 = vmatpush1.msra.mxu0 %v160
  %441 = vmatprep.subr.mxu0 0.0
  %442 = vmatpush1.msra.mxu0 %v159
  %443 = vmatprep.subr.mxu0 0.0
  %444 = vmatpush1.msra.mxu0 %v158
  %445 = vmatprep.subr.mxu0 0.0
  %446 = vmatpush1.msra.mxu0 %v157
  %447 = vmatprep.subr.mxu0 0.0
  %448 = vmatpush1.msra.mxu0 %v156
  %449 = vmatprep.subr.mxu0 0.0
  %450 = vmatpush1.msra.mxu0 %v155
  %451 = vmatprep.subr.mxu0 0.0
  %452 = vmatpush1.msra.mxu0 %v154
  %453 = vmatprep.subr.mxu0 0.0
  %454 = vmatpush1.msra.mxu0 %v153
  %455 = vmatprep.subr.mxu0 0.0
  %456 = vmatpush1.msra.mxu0 %v152
  %457 = vmatprep.subr.mxu0 0.0
  %458 = vmatpush2.msra.mxu0 %v183
  %459 = vmatprep.subr.mxu0 0.0
  %460 = vmatpush2.msra.mxu0 %v182
  %461 = vmatprep.subr.mxu0 0.0
  %462 = vmatpush2.msra.mxu0 %v181
  %463 = vmatprep.subr.mxu0 0.0
  %464 = vmatpush2.msra.mxu0 %v180
  %465 = vmatprep.subr.mxu0 0.0
  %466 = vmatpush2.msra.mxu0 %v179
  %467 = vmatprep.subr.mxu0 0.0
  %468 = vmatpush2.msra.mxu0 %v178
  %469 = vmatprep.subr.mxu0 0.0
  %470 = vmatpush2.msra.mxu0 %v177
  %471 = vmatprep.subr.mxu0 0.0
  %472 = vmatpush2.msra.mxu0 %v176
  %473 = vmatprep.subr.mxu0 0.0
  %474 = vmatpush2.msra.mxu0 %v175
  %475 = vmatprep.subr.mxu0 0.0
  %476 = vmatpush2.msra.mxu0 %v174
  %477 = vmatprep.subr.mxu0 0.0
  %478 = vmatpush2.msra.mxu0 %v173
  %479 = vmatprep.subr.mxu0 0.0
  %480 = vmatpush2.msra.mxu0 %v172
  %481 = vmatprep.subr.mxu0 0.0
  %482 = vmatpush2.msra.mxu0 %v171
  %483 = vmatprep.subr.mxu0 0.0
  %484 = vmatpush2.msra.mxu0 %v170
  %485 = vmatprep.subr.mxu0 0.0
  %486 = vmatpush2.msra.mxu0 %v169
  %487 = vmatprep.subr.mxu0 0.0
  %488 = vmatpush2.msra.mxu0 %v168
  %489 = vmatprep.mubr.f32.mxu0 %v23
  %490 = vmatmul.mubr.f32.gmra.mxu0 %v22
  %v491 = vpop.f32.mrf.mxu0
  %v492 = vadd.f32 %v327, %v491
  %v493 = vpop.f32.mrf.mxu0
  %494 = vmatprep.mubr.f32.mxu0 %v28
  %495 = vmatmul.mubr.f32.gmra.mxu0 %v27
  %v496 = vpop.f32.mrf.mxu0
  %v497 = vadd.f32 %v332, %v496
  %v498 = vpop.f32.mrf.mxu0
  %499 = vmatprep.mubr.f32.mxu0 %v33
  %500 = vmatmul.mubr.f32.gmra.mxu0 %v32
  %v501 = vpop.f32.mrf.mxu0
  %v502 = vadd.f32 %v337, %v501
  %v503 = vpop.f32.mrf.mxu0
  %504 = vmatprep.mubr.f32.mxu0 %v38
  %505 = vmatmul.mubr.f32.gmra.mxu0 %v37
  %v506 = vpop.f32.mrf.mxu0
  %v507 = vadd.f32 %v342, %v506
  %v508 = vpop.f32.mrf.mxu0
  %509 = vmatprep.mubr.f32.mxu0 %v43
  %510 = vmatmul.mubr.f32.gmra.mxu0 %v42
  %v511 = vpop.f32.mrf.mxu0
  %v512 = vadd.f32 %v347, %v511
  %v513 = vpop.f32.mrf.mxu0
  %514 = vmatprep.mubr.f32.mxu0 %v48
  %515 = vmatmul.mubr.f32.gmra.mxu0 %v47
  %v516 = vpop.f32.mrf.mxu0
  %v517 = vadd.f32 %v352, %v516
  %v518 = vpop.f32.mrf.mxu0
  %519 = vmatprep.mubr.f32.mxu0 %v53
  %520 = vmatmul.mubr.f32.gmra.mxu0 %v52
  %v521 = vpop.f32.mrf.mxu0
  %v522 = vadd.f32 %v357, %v521
  %v523 = vpop.f32.mrf.mxu0
  %524 = vmatprep.mubr.f32.mxu0 %v58
  %525 = vmatmul.mubr.f32.gmra.mxu0 %v57
  %v526 = vpop.f32.mrf.mxu0
  %v527 = vadd.f32 %v362, %v526
  %v528 = vpop.f32.mrf.mxu0
  %529 = vmatprep.mubr.f32.mxu0 %v63
  %530 = vmatmul.mubr.f32.gmra.mxu0 %v62
  %v531 = vpop.f32.mrf.mxu0
  %v532 = vadd.f32 %v367, %v531
  %v533 = vpop.f32.mrf.mxu0
  %534 = vmatprep.mubr.f32.mxu0 %v68
  %535 = vmatmul.mubr.f32.gmra.mxu0 %v67
  %v536 = vpop.f32.mrf.mxu0
  %v537 = vadd.f32 %v372, %v536
  %v538 = vpop.f32.mrf.mxu0
  %539 = vmatprep.mubr.f32.mxu0 %v73
  %540 = vmatmul.mubr.f32.gmra.mxu0 %v72
  %v541 = vpop.f32.mrf.mxu0
  %v542 = vadd.f32 %v377, %v541
  %v543 = vpop.f32.mrf.mxu0
  %544 = vmatprep.mubr.f32.mxu0 %v78
  %545 = vmatmul.mubr.f32.gmra.mxu0 %v77
  %v546 = vpop.f32.mrf.mxu0
  %v547 = vadd.f32 %v382, %v546
  %v548 = vpop.f32.mrf.mxu0
  %549 = vmatprep.mubr.f32.mxu0 %v83
  %550 = vmatmul.mubr.f32.gmra.mxu0 %v82
  %v551 = vpop.f32.mrf.mxu0
  %v552 = vadd.f32 %v387, %v551
  %v553 = vpop.f32.mrf.mxu0
  %554 = vmatprep.mubr.f32.mxu0 %v88
  %555 = vmatmul.mubr.f32.gmra.mxu0 %v87
  %v556 = vpop.f32.mrf.mxu0
  %v557 = vadd.f32 %v392, %v556
  %v558 = vpop.f32.mrf.mxu0
  %559 = vmatprep.mubr.f32.mxu0 %v93
  %560 = vmatmul.mubr.f32.gmra.mxu0 %v92
  %v561 = vpop.f32.mrf.mxu0
  %v562 = vadd.f32 %v397, %v561
  %v563 = vpop.f32.mrf.mxu0
  %564 = vmatprep.mubr.f32.mxu0 %v98
  %565 = vmatmul.mubr.f32.gmra.mxu0 %v97
  %v566 = vpop.f32.mrf.mxu0
  %v567 = vadd.f32 %v402, %v566
  %v568 = vpop.f32.mrf.mxu0
  %569 = vmatprep.mubr.f32.mxu0 %v103
  %570 = vmatmul.mubr.f32.gmra.mxu0 %v102
  %v571 = vpop.f32.mrf.mxu0
  %v572 = vadd.f32 %v407, %v571
  %v573 = vpop.f32.mrf.mxu0
  %574 = vmatprep.mubr.f32.mxu0 %v108
  %575 = vmatmul.mubr.f32.gmra.mxu0 %v107
  %v576 = vpop.f32.mrf.mxu0
  %v577 = vadd.f32 %v412, %v576
  %v578 = vpop.f32.mrf.mxu0
  %579 = vmatprep.mubr.f32.mxu0 %v113
  %580 = vmatmul.mubr.f32.gmra.mxu0 %v112
  %v581 = vpop.f32.mrf.mxu0
  %v582 = vadd.f32 %v417, %v581
  %v583 = vpop.f32.mrf.mxu0
  %584 = vmatprep.mubr.f32.mxu0 %v118
  %585 = vmatmul.mubr.f32.gmra.mxu0 %v117
  %v586 = vpop.f32.mrf.mxu0
  %v587 = vadd.f32 %v422, %v586
  %v588 = vpop.f32.mrf.mxu0
  %589 = vdwg.mxu0
  %590 = vmatprep.subr.mxu0 0.0
  %591 = vmatpush1.msra.mxu0 0.0
  %592 = vmatprep.subr.mxu0 0.0
  %593 = vmatpush1.msra.mxu0 0.0
  %594 = vmatprep.subr.mxu0 0.0
  %595 = vmatpush1.msra.mxu0 0.0
  %596 = vmatprep.subr.mxu0 0.0
  %597 = vmatpush1.msra.mxu0 0.0
  %598 = vmatprep.subr.mxu0 0.0
  %599 = vmatpush1.msra.mxu0 0.0
  %600 = vmatprep.subr.mxu0 0.0
  %601 = vmatpush1.msra.mxu0 0.0
  %602 = vmatprep.subr.mxu0 0.0
  %603 = vmatpush1.msra.mxu0 0.0
  %604 = vmatprep.subr.mxu0 0.0
  %605 = vmatpush1.msra.mxu0 0.0
  %606 = vmatprep.subr.mxu0 0.0
  %607 = vmatpush1.msra.mxu0 %v191
  %608 = vmatprep.subr.mxu0 0.0
  %609 = vmatpush1.msra.mxu0 %v190
  %610 = vmatprep.subr.mxu0 0.0
  %611 = vmatpush1.msra.mxu0 %v189
  %612 = vmatprep.subr.mxu0 0.0
  %613 = vmatpush1.msra.mxu0 %v188
  %614 = vmatprep.subr.mxu0 0.0
  %615 = vmatpush1.msra.mxu0 %v187
  %616 = vmatprep.subr.mxu0 0.0
  %617 = vmatpush1.msra.mxu0 %v186
  %618 = vmatprep.subr.mxu0 0.0
  %619 = vmatpush1.msra.mxu0 %v185
  %620 = vmatprep.subr.mxu0 0.0
  %621 = vmatpush1.msra.mxu0 %v184
  %622 = vmatprep.subr.mxu0 0.0
  %623 = vmatpush2.msra.mxu0 0.0
  %624 = vmatprep.subr.mxu0 0.0
  %625 = vmatpush2.msra.mxu0 0.0
  %626 = vmatprep.subr.mxu0 0.0
  %627 = vmatpush2.msra.mxu0 0.0
  %628 = vmatprep.subr.mxu0 0.0
  %629 = vmatpush2.msra.mxu0 0.0
  %630 = vmatprep.subr.mxu0 0.0
  %631 = vmatpush2.msra.mxu0 0.0
  %632 = vmatprep.subr.mxu0 0.0
  %633 = vmatpush2.msra.mxu0 0.0
  %634 = vmatprep.subr.mxu0 0.0
  %635 = vmatpush2.msra.mxu0 0.0
  %636 = vmatprep.subr.mxu0 0.0
  %637 = vmatpush2.msra.mxu0 0.0
  %638 = vmatprep.subr.mxu0 0.0
  %639 = vmatpush2.msra.mxu0 0.0
  %640 = vmatprep.subr.mxu0 0.0
  %641 = vmatpush2.msra.mxu0 0.0
  %642 = vmatprep.subr.mxu0 0.0
  %643 = vmatpush2.msra.mxu0 0.0
  %644 = vmatprep.subr.mxu0 0.0
  %645 = vmatpush2.msra.mxu0 0.0
  %646 = vmatprep.subr.mxu0 0.0
  %647 = vmatpush2.msra.mxu0 0.0
  %648 = vmatprep.subr.mxu0 0.0
  %649 = vmatpush2.msra.mxu0 0.0
  %650 = vmatprep.subr.mxu0 0.0
  %651 = vmatpush2.msra.mxu0 0.0
  %652 = vmatprep.subr.mxu0 0.0
  %653 = vmatpush2.msra.mxu0 0.0
  %654 = vmatprep.mubr.f32.mxu0 0.0
  %655 = vmatmul.mubr.f32.gmra.mxu0 %v201
  %v656 = vpop.f32.mrf.mxu0
  %v657 = vadd.f32 %v492, %v656
  %v658 = vpop.f32.mrf.mxu0
  %659 = vmatprep.mubr.f32.mxu0 0.0
  %660 = vmatmul.mubr.f32.gmra.mxu0 %v204
  %v661 = vpop.f32.mrf.mxu0
  %v662 = vadd.f32 %v497, %v661
  %v663 = vpop.f32.mrf.mxu0
  %664 = vmatprep.mubr.f32.mxu0 0.0
  %665 = vmatmul.mubr.f32.gmra.mxu0 %v207
  %v666 = vpop.f32.mrf.mxu0
  %v667 = vadd.f32 %v502, %v666
  %v668 = vpop.f32.mrf.mxu0
  %669 = vmatprep.mubr.f32.mxu0 0.0
  %670 = vmatmul.mubr.f32.gmra.mxu0 %v210
  %v671 = vpop.f32.mrf.mxu0
  %v672 = vadd.f32 %v507, %v671
  %v673 = vpop.f32.mrf.mxu0
  %674 = vmatprep.mubr.f32.mxu0 0.0
  %675 = vmatmul.mubr.f32.gmra.mxu0 %v213
  %v676 = vpop.f32.mrf.mxu0
  %v677 = vadd.f32 %v512, %v676
  %v678 = vpop.f32.mrf.mxu0
  %679 = vmatprep.mubr.f32.mxu0 0.0
  %680 = vmatmul.mubr.f32.gmra.mxu0 %v216
  %v681 = vpop.f32.mrf.mxu0
  %v682 = vadd.f32 %v517, %v681
  %v683 = vpop.f32.mrf.mxu0
  %684 = vmatprep.mubr.f32.mxu0 0.0
  %685 = vmatmul.mubr.f32.gmra.mxu0 %v219
  %v686 = vpop.f32.mrf.mxu0
  %v687 = vadd.f32 %v522, %v686
  %v688 = vpop.f32.mrf.mxu0
  %689 = vmatprep.mubr.f32.mxu0 0.0
  %690 = vmatmul.mubr.f32.gmra.mxu0 %v222
  %v691 = vpop.f32.mrf.mxu0
  %v692 = vadd.f32 %v527, %v691
  %v693 = vpop.f32.mrf.mxu0
  %694 = vmatprep.mubr.f32.mxu0 0.0
  %695 = vmatmul.mubr.f32.gmra.mxu0 %v225
  %v696 = vpop.f32.mrf.mxu0
  %v697 = vadd.f32 %v532, %v696
  %v698 = vpop.f32.mrf.mxu0
  %699 = vmatprep.mubr.f32.mxu0 0.0
  %700 = vmatmul.mubr.f32.gmra.mxu0 %v228
  %v701 = vpop.f32.mrf.mxu0
  %v702 = vadd.f32 %v537, %v701
  %v703 = vpop.f32.mrf.mxu0
  %704 = vmatprep.mubr.f32.mxu0 0.0
  %705 = vmatmul.mubr.f32.gmra.mxu0 %v231
  %v706 = vpop.f32.mrf.mxu0
  %v707 = vadd.f32 %v542, %v706
  %v708 = vpop.f32.mrf.mxu0
  %709 = vmatprep.mubr.f32.mxu0 0.0
  %710 = vmatmul.mubr.f32.gmra.mxu0 %v234
  %v711 = vpop.f32.mrf.mxu0
  %v712 = vadd.f32 %v547, %v711
  %v713 = vpop.f32.mrf.mxu0
  %714 = vmatprep.mubr.f32.mxu0 0.0
  %715 = vmatmul.mubr.f32.gmra.mxu0 %v237
  %v716 = vpop.f32.mrf.mxu0
  %v717 = vadd.f32 %v552, %v716
  %v718 = vpop.f32.mrf.mxu0
  %719 = vmatprep.mubr.f32.mxu0 0.0
  %720 = vmatmul.mubr.f32.gmra.mxu0 %v240
  %v721 = vpop.f32.mrf.mxu0
  %v722 = vadd.f32 %v557, %v721
  %v723 = vpop.f32.mrf.mxu0
  %724 = vmatprep.mubr.f32.mxu0 0.0
  %725 = vmatmul.mubr.f32.gmra.mxu0 %v243
  %v726 = vpop.f32.mrf.mxu0
  %v727 = vadd.f32 %v562, %v726
  %v728 = vpop.f32.mrf.mxu0
  %729 = vmatprep.mubr.f32.mxu0 0.0
  %730 = vmatmul.mubr.f32.gmra.mxu0 %v246
  %v731 = vpop.f32.mrf.mxu0
  %v732 = vadd.f32 %v567, %v731
  %v733 = vpop.f32.mrf.mxu0
  %734 = vmatprep.mubr.f32.mxu0 0.0
  %735 = vmatmul.mubr.f32.gmra.mxu0 %v249
  %v736 = vpop.f32.mrf.mxu0
  %v737 = vadd.f32 %v572, %v736
  %v738 = vpop.f32.mrf.mxu0
  %739 = vmatprep.mubr.f32.mxu0 0.0
  %740 = vmatmul.mubr.f32.gmra.mxu0 %v252
  %v741 = vpop.f32.mrf.mxu0
  %v742 = vadd.f32 %v577, %v741
  %v743 = vpop.f32.mrf.mxu0
  %744 = vmatprep.mubr.f32.mxu0 0.0
  %745 = vmatmul.mubr.f32.gmra.mxu0 %v255
  %v746 = vpop.f32.mrf.mxu0
  %v747 = vadd.f32 %v582, %v746
  %v748 = vpop.f32.mrf.mxu0
  %749 = vmatprep.mubr.f32.mxu0 0.0
  %750 = vmatmul.mubr.f32.gmra.mxu0 %v258
  %v751 = vpop.f32.mrf.mxu0
  %v752 = vadd.f32 %v587, %v751
  %v753 = vpop.f32.mrf.mxu0
  %754 = vdwg.mxu0
  %v755 = vld [vmem:[%s3] sm:$0x1]
  %v756 = vld [vmem:[%s4] sm:$0x1]
  %v757 = vadd.f32 %v657, %v662
  %v758 = vadd.f32 %v757, %v667
  %v759 = vadd.f32 %v758, %v672
  %v760 = vadd.f32 %v759, %v677
  %v761 = vadd.f32 %v760, %v682
  %v762 = vadd.f32 %v761, %v687
  %v763 = vadd.f32 %v762, %v692
  %v764 = vadd.f32 %v763, %v697
  %v765 = vadd.f32 %v764, %v702
  %v766 = vadd.f32 %v765, %v707
  %v767 = vadd.f32 %v766, %v712
  %v768 = vadd.f32 %v767, %v717
  %v769 = vadd.f32 %v768, %v722
  %v770 = vadd.f32 %v769, %v727
  %v771 = vadd.f32 %v770, %v732
  %v772 = vadd.f32 %v771, %v737
  %v773 = vadd.f32 %v772, %v742
  %v774 = vadd.f32 %v773, %v747
  %v775 = vadd.f32 %v774, %v752
  %v776 = vrot.slane %v775, 4
  %v777 = vadd.f32 %v775, %v776
  %v778 = vrot.slane %v777, 2
  %v779 = vadd.f32 %v777, %v778
  %v780 = vrot.slane %v779, 1
  %v781 = vadd.f32 %v779, %v780
  %v782 = vmul.f32 %v781, 0.00625
  %v783 = vsub.f32 %v657, %v782
  %v784 = vsub.f32 %v662, %v782
  %v785 = vsub.f32 %v667, %v782
  %v786 = vsub.f32 %v672, %v782
  %v787 = vsub.f32 %v677, %v782
  %v788 = vsub.f32 %v682, %v782
  %v789 = vsub.f32 %v687, %v782
  %v790 = vsub.f32 %v692, %v782
  %v791 = vsub.f32 %v697, %v782
  %v792 = vsub.f32 %v702, %v782
  %v793 = vsub.f32 %v707, %v782
  %v794 = vsub.f32 %v712, %v782
  %v795 = vsub.f32 %v717, %v782
  %v796 = vsub.f32 %v722, %v782
  %v797 = vsub.f32 %v727, %v782
  %v798 = vsub.f32 %v732, %v782
  %v799 = vsub.f32 %v737, %v782
  %v800 = vsub.f32 %v742, %v782
  %v801 = vsub.f32 %v747, %v782
  %v802 = vsub.f32 %v752, %v782
  %v803 = vmul.f32 %v783, %v783
  %v804 = vmul.f32 %v784, %v784
  %v805 = vmul.f32 %v785, %v785
  %v806 = vmul.f32 %v786, %v786
  %v807 = vmul.f32 %v787, %v787
  %v808 = vmul.f32 %v788, %v788
  %v809 = vmul.f32 %v789, %v789
  %v810 = vmul.f32 %v790, %v790
  %v811 = vmul.f32 %v791, %v791
  %v812 = vmul.f32 %v792, %v792
  %v813 = vmul.f32 %v793, %v793
  %v814 = vmul.f32 %v794, %v794
  %v815 = vmul.f32 %v795, %v795
  %v816 = vmul.f32 %v796, %v796
  %v817 = vmul.f32 %v797, %v797
  %v818 = vmul.f32 %v798, %v798
  %v819 = vmul.f32 %v799, %v799
  %v820 = vmul.f32 %v800, %v800
  %v821 = vmul.f32 %v801, %v801
  %v822 = vmul.f32 %v802, %v802
  %v823 = vadd.f32 %v803, %v804
  %v824 = vadd.f32 %v823, %v805
  %v825 = vadd.f32 %v824, %v806
  %v826 = vadd.f32 %v825, %v807
  %v827 = vadd.f32 %v826, %v808
  %v828 = vadd.f32 %v827, %v809
  %v829 = vadd.f32 %v828, %v810
  %v830 = vadd.f32 %v829, %v811
  %v831 = vadd.f32 %v830, %v812
  %v832 = vadd.f32 %v831, %v813
  %v833 = vadd.f32 %v832, %v814
  %v834 = vadd.f32 %v833, %v815
  %v835 = vadd.f32 %v834, %v816
  %v836 = vadd.f32 %v835, %v817
  %v837 = vadd.f32 %v836, %v818
  %v838 = vadd.f32 %v837, %v819
  %v839 = vadd.f32 %v838, %v820
  %v840 = vadd.f32 %v839, %v821
  %v841 = vadd.f32 %v840, %v822
  %v842 = vrot.slane %v841, 4
  %v843 = vadd.f32 %v841, %v842
  %v844 = vrot.slane %v843, 2
  %v845 = vadd.f32 %v843, %v844
  %v846 = vrot.slane %v845, 1
  %v847 = vadd.f32 %v845, %v846
  %v848 = vmul.f32 %v847, 0.00625
  %v849 = vadd.f32 %v848, 1e-05
  %v850 = vrsqrt.pop %v849
  %v851 = vmul.f32 %v755, %v850
  %v853 = vlaneseq
  %v854 = vshrl.u32 %v853, 7
  %v855 = vsub.s32 0, %v854
  %v856 = vrot.slane %v851, %v855
  %v858 = vmul.f32 %v783, %v856
  %v859 = vmul.f32 %v784, %v856
  %v860 = vmul.f32 %v785, %v856
  %v861 = vmul.f32 %v786, %v856
  %v862 = vmul.f32 %v787, %v856
  %v863 = vmul.f32 %v788, %v856
  %v864 = vmul.f32 %v789, %v856
  %v865 = vmul.f32 %v790, %v856
  %v866 = vmul.f32 %v791, %v856
  %v867 = vmul.f32 %v792, %v856
  %v868 = vmul.f32 %v793, %v856
  %v869 = vmul.f32 %v794, %v856
  %v870 = vmul.f32 %v795, %v856
  %v871 = vmul.f32 %v796, %v856
  %v872 = vmul.f32 %v797, %v856
  %v873 = vmul.f32 %v798, %v856
  %v874 = vmul.f32 %v799, %v856
  %v875 = vmul.f32 %v800, %v856
  %v876 = vmul.f32 %v801, %v856
  %v877 = vmul.f32 %v802, %v856
  %v879 = vlaneseq
  %v880 = vshrl.u32 %v879, 7
  %v881 = vsub.s32 0, %v880
  %v882 = vrot.slane %v756, %v881
  %v884 = vadd.f32 %v858, %v882
  %v885 = vadd.f32 %v859, %v882
  %v886 = vadd.f32 %v860, %v882
  %v887 = vadd.f32 %v861, %v882
  %v888 = vadd.f32 %v862, %v882
  %v889 = vadd.f32 %v863, %v882
  %v890 = vadd.f32 %v864, %v882
  %v891 = vadd.f32 %v865, %v882
  %v892 = vadd.f32 %v866, %v882
  %v893 = vadd.f32 %v867, %v882
  %v894 = vadd.f32 %v868, %v882
  %v895 = vadd.f32 %v869, %v882
  %v896 = vadd.f32 %v870, %v882
  %v897 = vadd.f32 %v871, %v882
  %v898 = vadd.f32 %v872, %v882
  %v899 = vadd.f32 %v873, %v882
  %v900 = vadd.f32 %v874, %v882
  %v901 = vadd.f32 %v875, %v882
  %v902 = vadd.f32 %v876, %v882
  %v903 = vadd.f32 %v877, %v882
  %vm904 = vcmp.gt.f32.partialorder %v884, 0.0
  %vm905 = vcmp.gt.f32.partialorder %v885, 0.0
  %vm906 = vcmp.gt.f32.partialorder %v886, 0.0
  %vm907 = vcmp.gt.f32.partialorder %v887, 0.0
  %vm908 = vcmp.gt.f32.partialorder %v888, 0.0
  %vm909 = vcmp.gt.f32.partialorder %v889, 0.0
  %vm910 = vcmp.gt.f32.partialorder %v890, 0.0
  %vm911 = vcmp.gt.f32.partialorder %v891, 0.0
  %vm912 = vcmp.gt.f32.partialorder %v892, 0.0
  %vm913 = vcmp.gt.f32.partialorder %v893, 0.0
  %vm914 = vcmp.gt.f32.partialorder %v894, 0.0
  %vm915 = vcmp.gt.f32.partialorder %v895, 0.0
  %vm916 = vcmp.gt.f32.partialorder %v896, 0.0
  %vm917 = vcmp.gt.f32.partialorder %v897, 0.0
  %vm918 = vcmp.gt.f32.partialorder %v898, 0.0
  %vm919 = vcmp.gt.f32.partialorder %v899, 0.0
  %vm920 = vcmp.gt.f32.partialorder %v900, 0.0
  %vm921 = vcmp.gt.f32.partialorder %v901, 0.0
  %vm922 = vcmp.gt.f32.partialorder %v902, 0.0
  %vm923 = vcmp.gt.f32.partialorder %v903, 0.0
  %v924 = vmul.f32 %v884, 0.05
  %v925 = vmul.f32 %v885, 0.05
  %v926 = vmul.f32 %v886, 0.05
  %v927 = vmul.f32 %v887, 0.05
  %v928 = vmul.f32 %v888, 0.05
  %v929 = vmul.f32 %v889, 0.05
  %v930 = vmul.f32 %v890, 0.05
  %v931 = vmul.f32 %v891, 0.05
  %v932 = vmul.f32 %v892, 0.05
  %v933 = vmul.f32 %v893, 0.05
  %v934 = vmul.f32 %v894, 0.05
  %v935 = vmul.f32 %v895, 0.05
  %v936 = vmul.f32 %v896, 0.05
  %v937 = vmul.f32 %v897, 0.05
  %v938 = vmul.f32 %v898, 0.05
  %v939 = vmul.f32 %v899, 0.05
  %v940 = vmul.f32 %v900, 0.05
  %v941 = vmul.f32 %v901, 0.05
  %v942 = vmul.f32 %v902, 0.05
  %v943 = vmul.f32 %v903, 0.05
  %v944 = vsel %vm904, %v884, %v924
  %v945 = vsel %vm905, %v885, %v925
  %v946 = vsel %vm906, %v886, %v926
  %v947 = vsel %vm907, %v887, %v927
  %v948 = vsel %vm908, %v888, %v928
  %v949 = vsel %vm909, %v889, %v929
  %v950 = vsel %vm910, %v890, %v930
  %v951 = vsel %vm911, %v891, %v931
  %v952 = vsel %vm912, %v892, %v932
  %v953 = vsel %vm913, %v893, %v933
  %v954 = vsel %vm914, %v894, %v934
  %v955 = vsel %vm915, %v895, %v935
  %v956 = vsel %vm916, %v896, %v936
  %v957 = vsel %vm917, %v897, %v937
  %v958 = vsel %vm918, %v898, %v938
  %v959 = vsel %vm919, %v899, %v939
  %v960 = vsel %vm920, %v900, %v940
  %v961 = vsel %vm921, %v901, %v941
  %v962 = vsel %vm922, %v902, %v942
  %v963 = vsel %vm923, %v903, %v943
  %964 = vst [vmem:[%s5] sm:$0xff] %v944
  %965 = vst [vmem:[%s5 + $0x8] sm:$0xff] %v945
  %966 = vst [vmem:[%s5 + $0x10] sm:$0xff] %v946
  %967 = vst [vmem:[%s5 + $0x18] sm:$0xff] %v947
  %968 = vst [vmem:[%s5 + $0x20] sm:$0xff] %v948
  %969 = vst [vmem:[%s5 + $0x28] sm:$0xff] %v949
  %970 = vst [vmem:[%s5 + $0x30] sm:$0xff] %v950
  %971 = vst [vmem:[%s5 + $0x38] sm:$0xff] %v951
  %972 = vst [vmem:[%s5 + $0x40] sm:$0xff] %v952
  %973 = vst [vmem:[%s5 + $0x48] sm:$0xff] %v953
  %974 = vst [vmem:[%s5 + $0x50] sm:$0xff] %v954
  %975 = vst [vmem:[%s5 + $0x58] sm:$0xff] %v955
  %976 = vst [vmem:[%s5 + $0x60] sm:$0xff] %v956
  %977 = vst [vmem:[%s5 + $0x68] sm:$0xff] %v957
  %978 = vst [vmem:[%s5 + $0x70] sm:$0xff] %v958
  %979 = vst [vmem:[%s5 + $0x78] sm:$0xff] %v959
  %980 = vst [vmem:[%s5 + $0x80] sm:$0xff] %v960
  %981 = vst [vmem:[%s5 + $0x88] sm:$0xff] %v961
  %982 = vst [vmem:[%s5 + $0x90] sm:$0xff] %v962
  %983 = vst [vmem:[%s5 + $0x98] sm:$0xff] %v963
  // Predicated region
  $region22: #{keynet_forward.8} parent=0 // pred_check
    _
  $region23: #{keynet_forward.8} parent=0 // pred_check_branch
    %985 = sbr.rel (0) target = $region25
  $region24: #{keynet_forward.8} parent=0 // pred_region
    _
  $region25: #{keynet_forward.8} parent=0 // pred_fallthru
    _
  // Predicated region
  $region26: #{keynet_forward.8} parent=0 // pred_check
    _
  $region27: #{keynet_forward.8} parent=0 // pred_check_branch
    %987 = sbr.rel (0) target = $region29
  $region28: #{keynet_forward.8} parent=0 // pred_region
    _
  $region29: #{keynet_forward.8} parent=0 // pred_fallthru
    _

// kernel: keynet_forward.9
$region0: #{keynet_forward.9}
  #allocation0 [shape = 'u32[]', space=smem, size = 0x4, offset = 0x4, fixed_abs, tag = 'smem constant byte address 0x4 - core index']
  #allocation1 [shape = 'u32[144,128]{1,0:T(1,128)}', space=vmem, size = 0x12000, scoped, tag = 'internal scratch']
  %s0 = inlined_call_operand.vmem [shape: f32[160,1152], index: 0, kind: input, shape index: {}]
  %s1 = inlined_call_operand.vmem [shape: f32[1152,22], index: 1, kind: input, shape index: {}]
  %s2 = inlined_call_operand.vmem [shape: f32[1,22], index: 2, kind: input, shape index: {}]
  %s3 = inlined_call_operand.vmem [shape: f32[1,22], index: 3, kind: input, shape index: {}]
  %s4 = inlined_call_operand.vmem [shape: f32[1,22], index: 4, kind: input, shape index: {}]
  %s5 = inlined_call_operand.vmem [shape: f32[160,22], index: 5, kind: output, shape index: {}]
  %s6 = sld [smem:[#allocation0]]
  $region30: #{keynet_forward.9} parent=0
    _
  %s8 = ssub.s32 1, %s6
  %s9 = scalar_select 0, %s8, %s6
  // Predicated region
  $region2: #{keynet_forward.9} parent=0 // pred_check
    _
  $region3: #{keynet_forward.9} parent=0 // pred_check_branch
    %11 = sbr.rel (0) target = $region5
  $region4: #{keynet_forward.9} parent=0 // pred_region
    _
  $region5: #{keynet_forward.9} parent=0 // pred_fallthru
    _
  // Predicated region
  $region6: #{keynet_forward.9} parent=0 // pred_check
    _
  $region7: #{keynet_forward.9} parent=0 // pred_check_branch
    %13 = sbr.rel (0) target = $region9
  $region8: #{keynet_forward.9} parent=0 // pred_region
    _
  $region9: #{keynet_forward.9} parent=0 // pred_fallthru
    _
  // Predicated region
  $region10: #{keynet_forward.9} parent=0 // pred_check
    _
  $region11: #{keynet_forward.9} parent=0 // pred_check_branch
    %15 = sbr.rel (0) target = $region13
  $region12: #{keynet_forward.9} parent=0 // pred_region
    _
  $region13: #{keynet_forward.9} parent=0 // pred_fallthru
    _
  // Predicated region
  $region14: #{keynet_forward.9} parent=0 // pred_check
    _
  $region15: #{keynet_forward.9} parent=0 // pred_check_branch
    %17 = sbr.rel (0) target = $region17
  $region16: #{keynet_forward.9} parent=0 // pred_region
    _
  $region17: #{keynet_forward.9} parent=0 // pred_fallthru
    _
  // Predicated region
  $region18: #{keynet_forward.9} parent=0 // pred_check
    _
  $region19: #{keynet_forward.9} parent=0 // pred_check_branch
    %19 = sbr.rel (0) target = $region21
  $region20: #{keynet_forward.9} parent=0 // pred_region
    _
  $region21: #{keynet_forward.9} parent=0 // pred_fallthru
    _
  %v20 = vld [vmem:[%s0] sm:$0xff]
  %v21 = vld [vmem:[%s0 + $0x8] sm:$0xff]
  %v22 = vld [vmem:[%s0 + $0x10] sm:$0xff]
  %v23 = vld [vmem:[%s0 + $0x18] sm:$0xff]
  %v24 = vld [vmem:[%s0 + $0x20] sm:$0xff]
  %v25 = vld [vmem:[%s0 + $0x28] sm:$0xff]
  %v26 = vld [vmem:[%s0 + $0x30] sm:$0xff]
  %v27 = vld [vmem:[%s0 + $0x38] sm:$0xff]
  %v28 = vld [vmem:[%s0 + $0x40] sm:$0xff]
  %v29 = vld [vmem:[%s0 + $0x48] sm:$0xff]
  %v30 = vld [vmem:[%s0 + $0x50] sm:$0xff]
  %v31 = vld [vmem:[%s0 + $0x58] sm:$0xff]
  %v32 = vld [vmem:[%s0 + $0x60] sm:$0xff]
  %v33 = vld [vmem:[%s0 + $0x68] sm:$0xff]
  %v34 = vld [vmem:[%s0 + $0x70] sm:$0xff]
  %v35 = vld [vmem:[%s0 + $0x78] sm:$0xff]
  %v36 = vld [vmem:[%s0 + $0x80] sm:$0xff]
  %v37 = vld [vmem:[%s0 + $0x88] sm:$0xff]
  %v38 = vld [vmem:[%s0 + $0x90] sm:$0xff]
  %v39 = vld [vmem:[%s0 + $0x98] sm:$0xff]
  %v40 = vld [vmem:[%s0 + $0xa0] sm:$0xff]
  %v41 = vld [vmem:[%s0 + $0xa8] sm:$0xff]
  %v42 = vld [vmem:[%s0 + $0xb0] sm:$0xff]
  %v43 = vld [vmem:[%s0 + $0xb8] sm:$0xff]
  %v44 = vld [vmem:[%s0 + $0xc0] sm:$0xff]
  %v45 = vld [vmem:[%s0 + $0xc8] sm:$0xff]
  %v46 = vld [vmem:[%s0 + $0xd0] sm:$0xff]
  %v47 = vld [vmem:[%s0 + $0xd8] sm:$0xff]
  %v48 = vld [vmem:[%s0 + $0xe0] sm:$0xff]
  %v49 = vld [vmem:[%s0 + $0xe8] sm:$0xff]
  %v50 = vld [vmem:[%s0 + $0xf0] sm:$0xff]
  %v51 = vld [vmem:[%s0 + $0xf8] sm:$0xff]
  %v52 = vld [vmem:[%s0 + $0x100] sm:$0xff]
  %v53 = vld [vmem:[%s0 + $0x108] sm:$0xff]
  %v54 = vld [vmem:[%s0 + $0x110] sm:$0xff]
  %v55 = vld [vmem:[%s0 + $0x118] sm:$0xff]
  %v56 = vld [vmem:[%s0 + $0x120] sm:$0xff]
  %v57 = vld [vmem:[%s0 + $0x128] sm:$0xff]
  %v58 = vld [vmem:[%s0 + $0x130] sm:$0xff]
  %v59 = vld [vmem:[%s0 + $0x138] sm:$0xff]
  %v60 = vld [vmem:[%s0 + $0x140] sm:$0xff]
  %v61 = vld [vmem:[%s0 + $0x148] sm:$0xff]
  %v62 = vld [vmem:[%s0 + $0x150] sm:$0xff]
  %v63 = vld [vmem:[%s0 + $0x158] sm:$0xff]
  %v64 = vld [vmem:[%s0 + $0x160] sm:$0xff]
  %v65 = vld [vmem:[%s0 + $0x168] sm:$0xff]
  %v66 = vld [vmem:[%s0 + $0x170] sm:$0xff]
  %v67 = vld [vmem:[%s0 + $0x178] sm:$0xff]
  %v68 = vld [vmem:[%s0 + $0x180] sm:$0xff]
  %v69 = vld [vmem:[%s0 + $0x188] sm:$0xff]
  %v70 = vld [vmem:[%s0 + $0x190] sm:$0xff]
  %v71 = vld [vmem:[%s0 + $0x198] sm:$0xff]
  %v72 = vld [vmem:[%s0 + $0x1a0] sm:$0xff]
  %v73 = vld [vmem:[%s0 + $0x1a8] sm:$0xff]
  %v74 = vld [vmem:[%s0 + $0x1b0] sm:$0xff]
  %v75 = vld [vmem:[%s0 + $0x1b8] sm:$0xff]
  %v76 = vld [vmem:[%s0 + $0x1c0] sm:$0xff]
  %v77 = vld [vmem:[%s0 + $0x1c8] sm:$0xff]
  %v78 = vld [vmem:[%s0 + $0x1d0] sm:$0xff]
  %v79 = vld [vmem:[%s0 + $0x1d8] sm:$0xff]
  %v80 = vld [vmem:[%s0 + $0x1e0] sm:$0xff]
  %v81 = vld [vmem:[%s0 + $0x1e8] sm:$0xff]
  %v82 = vld [vmem:[%s0 + $0x1f0] sm:$0xff]
  %v83 = vld [vmem:[%s0 + $0x1f8] sm:$0xff]
  %v84 = vld [vmem:[%s0 + $0x200] sm:$0xff]
  %v85 = vld [vmem:[%s0 + $0x208] sm:$0xff]
  %v86 = vld [vmem:[%s0 + $0x210] sm:$0xff]
  %v87 = vld [vmem:[%s0 + $0x218] sm:$0xff]
  %v88 = vld [vmem:[%s0 + $0x220] sm:$0xff]
  %v89 = vld [vmem:[%s0 + $0x228] sm:$0xff]
  %v90 = vld [vmem:[%s0 + $0x230] sm:$0xff]
  %v91 = vld [vmem:[%s0 + $0x238] sm:$0xff]
  %v92 = vld [vmem:[%s0 + $0x240] sm:$0xff]
  %v93 = vld [vmem:[%s0 + $0x248] sm:$0xff]
  %v94 = vld [vmem:[%s0 + $0x250] sm:$0xff]
  %v95 = vld [vmem:[%s0 + $0x258] sm:$0xff]
  %v96 = vld [vmem:[%s0 + $0x260] sm:$0xff]
  %v97 = vld [vmem:[%s0 + $0x268] sm:$0xff]
  %v98 = vld [vmem:[%s0 + $0x270] sm:$0xff]
  %v99 = vld [vmem:[%s0 + $0x278] sm:$0xff]
  %v100 = vld [vmem:[%s0 + $0x280] sm:$0xff]
  %v101 = vld [vmem:[%s0 + $0x288] sm:$0xff]
  %v102 = vld [vmem:[%s0 + $0x290] sm:$0xff]
  %v103 = vld [vmem:[%s0 + $0x298] sm:$0xff]
  %v104 = vld [vmem:[%s0 + $0x2a0] sm:$0xff]
  %v105 = vld [vmem:[%s0 + $0x2a8] sm:$0xff]
  %v106 = vld [vmem:[%s0 + $0x2b0] sm:$0xff]
  %v107 = vld [vmem:[%s0 + $0x2b8] sm:$0xff]
  %v108 = vld [vmem:[%s0 + $0x2c0] sm:$0xff]
  %v109 = vld [vmem:[%s0 + $0x2c8] sm:$0xff]
  %v110 = vld [vmem:[%s0 + $0x2d0] sm:$0xff]
  %v111 = vld [vmem:[%s0 + $0x2d8] sm:$0xff]
  %v112 = vld [vmem:[%s0 + $0x2e0] sm:$0xff]
  %v113 = vld [vmem:[%s0 + $0x2e8] sm:$0xff]
  %v114 = vld [vmem:[%s0 + $0x2f0] sm:$0xff]
  %v115 = vld [vmem:[%s0 + $0x2f8] sm:$0xff]
  %v116 = vld [vmem:[%s0 + $0x300] sm:$0xff]
  %v117 = vld [vmem:[%s0 + $0x308] sm:$0xff]
  %v118 = vld [vmem:[%s0 + $0x310] sm:$0xff]
  %v119 = vld [vmem:[%s0 + $0x318] sm:$0xff]
  %v120 = vld [vmem:[%s0 + $0x320] sm:$0xff]
  %v121 = vld [vmem:[%s0 + $0x328] sm:$0xff]
  %v122 = vld [vmem:[%s0 + $0x330] sm:$0xff]
  %v123 = vld [vmem:[%s0 + $0x338] sm:$0xff]
  %v124 = vld [vmem:[%s0 + $0x340] sm:$0xff]
  %v125 = vld [vmem:[%s0 + $0x348] sm:$0xff]
  %v126 = vld [vmem:[%s0 + $0x350] sm:$0xff]
  %v127 = vld [vmem:[%s0 + $0x358] sm:$0xff]
  %v128 = vld [vmem:[%s0 + $0x360] sm:$0xff]
  %v129 = vld [vmem:[%s0 + $0x368] sm:$0xff]
  %v130 = vld [vmem:[%s0 + $0x370] sm:$0xff]
  %v131 = vld [vmem:[%s0 + $0x378] sm:$0xff]
  %v132 = vld [vmem:[%s0 + $0x380] sm:$0xff]
  %v133 = vld [vmem:[%s0 + $0x388] sm:$0xff]
  %v134 = vld [vmem:[%s0 + $0x390] sm:$0xff]
  %v135 = vld [vmem:[%s0 + $0x398] sm:$0xff]
  %v136 = vld [vmem:[%s0 + $0x3a0] sm:$0xff]
  %v137 = vld [vmem:[%s0 + $0x3a8] sm:$0xff]
  %v138 = vld [vmem:[%s0 + $0x3b0] sm:$0xff]
  %v139 = vld [vmem:[%s0 + $0x3b8] sm:$0xff]
  %v140 = vld [vmem:[%s0 + $0x3c0] sm:$0xff]
  %v141 = vld [vmem:[%s0 + $0x3c8] sm:$0xff]
  %v142 = vld [vmem:[%s0 + $0x3d0] sm:$0xff]
  %v143 = vld [vmem:[%s0 + $0x3d8] sm:$0xff]
  %v144 = vld [vmem:[%s0 + $0x3e0] sm:$0xff]
  %v145 = vld [vmem:[%s0 + $0x3e8] sm:$0xff]
  %v146 = vld [vmem:[%s0 + $0x3f0] sm:$0xff]
  %v147 = vld [vmem:[%s0 + $0x3f8] sm:$0xff]
  %v148 = vld [vmem:[%s0 + $0x400] sm:$0xff]
  %v149 = vld [vmem:[%s0 + $0x408] sm:$0xff]
  %v150 = vld [vmem:[%s0 + $0x410] sm:$0xff]
  %v151 = vld [vmem:[%s0 + $0x418] sm:$0xff]
  %v152 = vld [vmem:[%s0 + $0x420] sm:$0xff]
  %v153 = vld [vmem:[%s0 + $0x428] sm:$0xff]
  %v154 = vld [vmem:[%s0 + $0x430] sm:$0xff]
  %v155 = vld [vmem:[%s0 + $0x438] sm:$0xff]
  %v156 = vld [vmem:[%s0 + $0x440] sm:$0xff]
  %v157 = vld [vmem:[%s0 + $0x448] sm:$0xff]
  %v158 = vld [vmem:[%s0 + $0x450] sm:$0xff]
  %v159 = vld [vmem:[%s0 + $0x458] sm:$0xff]
  %v160 = vld [vmem:[%s0 + $0x460] sm:$0xff]
  %v161 = vld [vmem:[%s0 + $0x468] sm:$0xff]
  %v162 = vld [vmem:[%s0 + $0x470] sm:$0xff]
  %v163 = vld [vmem:[%s0 + $0x478] sm:$0xff]
  %v164 = vld [vmem:[%s0 + $0x480] sm:$0xff]
  %v165 = vld [vmem:[%s0 + $0x488] sm:$0xff]
  %v166 = vld [vmem:[%s0 + $0x490] sm:$0xff]
  %v167 = vld [vmem:[%s0 + $0x498] sm:$0xff]
  %v168 = vld [vmem:[%s0 + $0x4a0] sm:$0xff]
  %v169 = vld [vmem:[%s0 + $0x4a8] sm:$0xff]
  %v170 = vld [vmem:[%s0 + $0x4b0] sm:$0xff]
  %v171 = vld [vmem:[%s0 + $0x4b8] sm:$0xff]
  %v172 = vld [vmem:[%s0 + $0x4c0] sm:$0xff]
  %v173 = vld [vmem:[%s0 + $0x4c8] sm:$0xff]
  %v174 = vld [vmem:[%s0 + $0x4d0] sm:$0xff]
  %v175 = vld [vmem:[%s0 + $0x4d8] sm:$0xff]
  %v176 = vld [vmem:[%s0 + $0x4e0] sm:$0xff]
  %v177 = vld [vmem:[%s0 + $0x4e8] sm:$0xff]
  %v178 = vld [vmem:[%s0 + $0x4f0] sm:$0xff]
  %v179 = vld [vmem:[%s0 + $0x4f8] sm:$0xff]
  %v180 = vld [vmem:[%s0 + $0x500] sm:$0xff]
  %v181 = vld [vmem:[%s0 + $0x508] sm:$0xff]
  %v182 = vld [vmem:[%s0 + $0x510] sm:$0xff]
  %v183 = vld [vmem:[%s0 + $0x518] sm:$0xff]
  %v184 = vld [vmem:[%s0 + $0x520] sm:$0xff]
  %v185 = vld [vmem:[%s0 + $0x528] sm:$0xff]
  %v186 = vld [vmem:[%s0 + $0x530] sm:$0xff]
  %v187 = vld [vmem:[%s0 + $0x538] sm:$0xff]
  %v188 = vld [vmem:[%s0 + $0x540] sm:$0xff]
  %v189 = vld [vmem:[%s0 + $0x548] sm:$0xff]
  %v190 = vld [vmem:[%s0 + $0x550] sm:$0xff]
  %v191 = vld [vmem:[%s0 + $0x558] sm:$0xff]
  %v192 = vld [vmem:[%s0 + $0x560] sm:$0xff]
  %v193 = vld [vmem:[%s0 + $0x568] sm:$0xff]
  %v194 = vld [vmem:[%s0 + $0x570] sm:$0xff]
  %v195 = vld [vmem:[%s0 + $0x578] sm:$0xff]
  %v196 = vld [vmem:[%s0 + $0x580] sm:$0xff]
  %v197 = vld [vmem:[%s0 + $0x588] sm:$0xff]
  %v198 = vld [vmem:[%s0 + $0x590] sm:$0xff]
  %v199 = vld [vmem:[%s0 + $0x598] sm:$0xff]
  %v200 = vld [vmem:[%s1] sm:$0xff]
  %v201 = vld [vmem:[%s1 + $0x8] sm:$0xff]
  %v202 = vld [vmem:[%s1 + $0x10] sm:$0xff]
  %v203 = vld [vmem:[%s1 + $0x18] sm:$0xff]
  %v204 = vld [vmem:[%s1 + $0x20] sm:$0xff]
  %v205 = vld [vmem:[%s1 + $0x28] sm:$0xff]
  %v206 = vld [vmem:[%s1 + $0x30] sm:$0xff]
  %v207 = vld [vmem:[%s1 + $0x38] sm:$0xff]
  %v208 = vld [vmem:[%s1 + $0x40] sm:$0xff]
  %v209 = vld [vmem:[%s1 + $0x48] sm:$0xff]
  %v210 = vld [vmem:[%s1 + $0x50] sm:$0xff]
  %v211 = vld [vmem:[%s1 + $0x58] sm:$0xff]
  %v212 = vld [vmem:[%s1 + $0x60] sm:$0xff]
  %v213 = vld [vmem:[%s1 + $0x68] sm:$0xff]
  %v214 = vld [vmem:[%s1 + $0x70] sm:$0xff]
  %v215 = vld [vmem:[%s1 + $0x78] sm:$0xff]
  %v216 = vld [vmem:[%s1 + $0x80] sm:$0xff]
  %v217 = vld [vmem:[%s1 + $0x88] sm:$0xff]
  %v218 = vld [vmem:[%s1 + $0x90] sm:$0xff]
  %v219 = vld [vmem:[%s1 + $0x98] sm:$0xff]
  %v220 = vld [vmem:[%s1 + $0xa0] sm:$0xff]
  %v221 = vld [vmem:[%s1 + $0xa8] sm:$0xff]
  %v222 = vld [vmem:[%s1 + $0xb0] sm:$0xff]
  %v223 = vld [vmem:[%s1 + $0xb8] sm:$0xff]
  %v224 = vld [vmem:[%s1 + $0xc0] sm:$0xff]
  %v225 = vld [vmem:[%s1 + $0xc8] sm:$0xff]
  %v226 = vld [vmem:[%s1 + $0xd0] sm:$0xff]
  %v227 = vld [vmem:[%s1 + $0xd8] sm:$0xff]
  %v228 = vld [vmem:[%s1 + $0xe0] sm:$0xff]
  %v229 = vld [vmem:[%s1 + $0xe8] sm:$0xff]
  %v230 = vld [vmem:[%s1 + $0xf0] sm:$0xff]
  %v231 = vld [vmem:[%s1 + $0xf8] sm:$0xff]
  %v232 = vld [vmem:[%s1 + $0x100] sm:$0xff]
  %v233 = vld [vmem:[%s1 + $0x108] sm:$0xff]
  %v234 = vld [vmem:[%s1 + $0x110] sm:$0xff]
  %v235 = vld [vmem:[%s1 + $0x118] sm:$0xff]
  %v236 = vld [vmem:[%s1 + $0x120] sm:$0xff]
  %v237 = vld [vmem:[%s1 + $0x128] sm:$0xff]
  %v238 = vld [vmem:[%s1 + $0x130] sm:$0xff]
  %v239 = vld [vmem:[%s1 + $0x138] sm:$0xff]
  %v240 = vld [vmem:[%s1 + $0x140] sm:$0xff]
  %v241 = vld [vmem:[%s1 + $0x148] sm:$0xff]
  %v242 = vld [vmem:[%s1 + $0x150] sm:$0xff]
  %v243 = vld [vmem:[%s1 + $0x158] sm:$0xff]
  %v244 = vld [vmem:[%s1 + $0x160] sm:$0xff]
  %v245 = vld [vmem:[%s1 + $0x168] sm:$0xff]
  %v246 = vld [vmem:[%s1 + $0x170] sm:$0xff]
  %v247 = vld [vmem:[%s1 + $0x178] sm:$0xff]
  %v248 = vld [vmem:[%s1 + $0x180] sm:$0xff]
  %v249 = vld [vmem:[%s1 + $0x188] sm:$0xff]
  %v250 = vld [vmem:[%s1 + $0x190] sm:$0xff]
  %v251 = vld [vmem:[%s1 + $0x198] sm:$0xff]
  %v252 = vld [vmem:[%s1 + $0x1a0] sm:$0xff]
  %v253 = vld [vmem:[%s1 + $0x1a8] sm:$0xff]
  %v254 = vld [vmem:[%s1 + $0x1b0] sm:$0xff]
  %v255 = vld [vmem:[%s1 + $0x1b8] sm:$0xff]
  %v256 = vld [vmem:[%s1 + $0x1c0] sm:$0xff]
  %v257 = vld [vmem:[%s1 + $0x1c8] sm:$0xff]
  %v258 = vld [vmem:[%s1 + $0x1d0] sm:$0xff]
  %v259 = vld [vmem:[%s1 + $0x1d8] sm:$0xff]
  %v260 = vld [vmem:[%s1 + $0x1e0] sm:$0xff]
  %v261 = vld [vmem:[%s1 + $0x1e8] sm:$0xff]
  %v262 = vld [vmem:[%s1 + $0x1f0] sm:$0xff]
  %v263 = vld [vmem:[%s1 + $0x1f8] sm:$0xff]
  %v264 = vld [vmem:[%s1 + $0x200] sm:$0xff]
  %v265 = vld [vmem:[%s1 + $0x208] sm:$0xff]
  %v266 = vld [vmem:[%s1 + $0x210] sm:$0xff]
  %v267 = vld [vmem:[%s1 + $0x218] sm:$0xff]
  %v268 = vld [vmem:[%s1 + $0x220] sm:$0xff]
  %v269 = vld [vmem:[%s1 + $0x228] sm:$0xff]
  %v270 = vld [vmem:[%s1 + $0x230] sm:$0xff]
  %v271 = vld [vmem:[%s1 + $0x238] sm:$0xff]
  %v272 = vld [vmem:[%s1 + $0x240] sm:$0xff]
  %v273 = vld [vmem:[%s1 + $0x248] sm:$0xff]
  %v274 = vld [vmem:[%s1 + $0x250] sm:$0xff]
  %v275 = vld [vmem:[%s1 + $0x258] sm:$0xff]
  %v276 = vld [vmem:[%s1 + $0x260] sm:$0xff]
  %v277 = vld [vmem:[%s1 + $0x268] sm:$0xff]
  %v278 = vld [vmem:[%s1 + $0x270] sm:$0xff]
  %v279 = vld [vmem:[%s1 + $0x278] sm:$0xff]
  %v280 = vld [vmem:[%s1 + $0x280] sm:$0xff]
  %v281 = vld [vmem:[%s1 + $0x288] sm:$0xff]
  %v282 = vld [vmem:[%s1 + $0x290] sm:$0xff]
  %v283 = vld [vmem:[%s1 + $0x298] sm:$0xff]
  %v284 = vld [vmem:[%s1 + $0x2a0] sm:$0xff]
  %v285 = vld [vmem:[%s1 + $0x2a8] sm:$0xff]
  %v286 = vld [vmem:[%s1 + $0x2b0] sm:$0xff]
  %v287 = vld [vmem:[%s1 + $0x2b8] sm:$0xff]
  %v288 = vld [vmem:[%s1 + $0x2c0] sm:$0xff]
  %v289 = vld [vmem:[%s1 + $0x2c8] sm:$0xff]
  %v290 = vld [vmem:[%s1 + $0x2d0] sm:$0xff]
  %v291 = vld [vmem:[%s1 + $0x2d8] sm:$0xff]
  %v292 = vld [vmem:[%s1 + $0x2e0] sm:$0xff]
  %v293 = vld [vmem:[%s1 + $0x2e8] sm:$0xff]
  %v294 = vld [vmem:[%s1 + $0x2f0] sm:$0xff]
  %v295 = vld [vmem:[%s1 + $0x2f8] sm:$0xff]
  %v296 = vld [vmem:[%s1 + $0x300] sm:$0xff]
  %v297 = vld [vmem:[%s1 + $0x308] sm:$0xff]
  %v298 = vld [vmem:[%s1 + $0x310] sm:$0xff]
  %v299 = vld [vmem:[%s1 + $0x318] sm:$0xff]
  %v300 = vld [vmem:[%s1 + $0x320] sm:$0xff]
  %v301 = vld [vmem:[%s1 + $0x328] sm:$0xff]
  %v302 = vld [vmem:[%s1 + $0x330] sm:$0xff]
  %v303 = vld [vmem:[%s1 + $0x338] sm:$0xff]
  %v304 = vld [vmem:[%s1 + $0x340] sm:$0xff]
  %v305 = vld [vmem:[%s1 + $0x348] sm:$0xff]
  %v306 = vld [vmem:[%s1 + $0x350] sm:$0xff]
  %v307 = vld [vmem:[%s1 + $0x358] sm:$0xff]
  %v308 = vld [vmem:[%s1 + $0x360] sm:$0xff]
  %v309 = vld [vmem:[%s1 + $0x368] sm:$0xff]
  %v310 = vld [vmem:[%s1 + $0x370] sm:$0xff]
  %v311 = vld [vmem:[%s1 + $0x378] sm:$0xff]
  %v312 = vld [vmem:[%s1 + $0x380] sm:$0xff]
  %v313 = vld [vmem:[%s1 + $0x388] sm:$0xff]
  %v314 = vld [vmem:[%s1 + $0x390] sm:$0xff]
  %v315 = vld [vmem:[%s1 + $0x398] sm:$0xff]
  %v316 = vld [vmem:[%s1 + $0x3a0] sm:$0xff]
  %v317 = vld [vmem:[%s1 + $0x3a8] sm:$0xff]
  %v318 = vld [vmem:[%s1 + $0x3b0] sm:$0xff]
  %v319 = vld [vmem:[%s1 + $0x3b8] sm:$0xff]
  %v320 = vld [vmem:[%s1 + $0x3c0] sm:$0xff]
  %v321 = vld [vmem:[%s1 + $0x3c8] sm:$0xff]
  %v322 = vld [vmem:[%s1 + $0x3d0] sm:$0xff]
  %v323 = vld [vmem:[%s1 + $0x3d8] sm:$0xff]
  %v324 = vld [vmem:[%s1 + $0x3e0] sm:$0xff]
  %v325 = vld [vmem:[%s1 + $0x3e8] sm:$0xff]
  %v326 = vld [vmem:[%s1 + $0x3f0] sm:$0xff]
  %v327 = vld [vmem:[%s1 + $0x3f8] sm:$0xff]
  %v328 = vld [vmem:[%s1 + $0x400] sm:$0xff]
  %v329 = vld [vmem:[%s1 + $0x408] sm:$0xff]
  %v330 = vld [vmem:[%s1 + $0x410] sm:$0xff]
  %v331 = vld [vmem:[%s1 + $0x418] sm:$0xff]
  %v332 = vld [vmem:[%s1 + $0x420] sm:$0xff]
  %v333 = vld [vmem:[%s1 + $0x428] sm:$0xff]
  %v334 = vld [vmem:[%s1 + $0x430] sm:$0xff]
  %v335 = vld [vmem:[%s1 + $0x438] sm:$0xff]
  %v336 = vld [vmem:[%s1 + $0x440] sm:$0xff]
  %v337 = vld [vmem:[%s1 + $0x448] sm:$0xff]
  %v338 = vld [vmem:[%s1 + $0x450] sm:$0xff]
  %v339 = vld [vmem:[%s1 + $0x458] sm:$0xff]
  %v340 = vld [vmem:[%s1 + $0x460] sm:$0xff]
  %v341 = vld [vmem:[%s1 + $0x468] sm:$0xff]
  %v342 = vld [vmem:[%s1 + $0x470] sm:$0xff]
  %v343 = vld [vmem:[%s1 + $0x478] sm:$0xff]
  %v344 = vld [vmem:[%s2] sm:$0x1]
  %v346 = vlaneseq
  %v347 = vshrl.u32 %v346, 7
  %v348 = vsub.s32 0, %v347
  %v349 = vrot.slane %v344, %v348
  %351 = vmatprep.subr.mxu0 0.0
  %352 = vmatpush1.msra.mxu0 %v215
  %353 = vmatprep.subr.mxu0 0.0
  %354 = vmatpush1.msra.mxu0 %v214
  %355 = vmatprep.subr.mxu0 0.0
  %356 = vmatpush1.msra.mxu0 %v213
  %357 = vmatprep.subr.mxu0 0.0
  %358 = vmatpush1.msra.mxu0 %v212
  %359 = vmatprep.subr.mxu0 0.0
  %360 = vmatpush1.msra.mxu0 %v211
  %361 = vmatprep.subr.mxu0 0.0
  %362 = vmatpush1.msra.mxu0 %v210
  %363 = vmatprep.subr.mxu0 0.0
  %364 = vmatpush1.msra.mxu0 %v209
  %365 = vmatprep.subr.mxu0 0.0
  %366 = vmatpush1.msra.mxu0 %v208
  %367 = vmatprep.subr.mxu0 0.0
  %368 = vmatpush1.msra.mxu0 %v207
  %369 = vmatprep.subr.mxu0 0.0
  %370 = vmatpush1.msra.mxu0 %v206
  %371 = vmatprep.subr.mxu0 0.0
  %372 = vmatpush1.msra.mxu0 %v205
  %373 = vmatprep.subr.mxu0 0.0
  %374 = vmatpush1.msra.mxu0 %v204
  %375 = vmatprep.subr.mxu0 0.0
  %376 = vmatpush1.msra.mxu0 %v203
  %377 = vmatprep.subr.mxu0 0.0
  %378 = vmatpush1.msra.mxu0 %v202
  %379 = vmatprep.subr.mxu0 0.0
  %380 = vmatpush1.msra.mxu0 %v201
  %381 = vmatprep.subr.mxu0 0.0
  %382 = vmatpush1.msra.mxu0 %v200
  %383 = vmatprep.subr.mxu0 0.0
  %384 = vmatpush2.msra.mxu0 %v231
  %385 = vmatprep.subr.mxu0 0.0
  %386 = vmatpush2.msra.mxu0 %v230
  %387 = vmatprep.subr.mxu0 0.0
  %388 = vmatpush2.msra.mxu0 %v229
  %389 = vmatprep.subr.mxu0 0.0
  %390 = vmatpush2.msra.mxu0 %v228
  %391 = vmatprep.subr.mxu0 0.0
  %392 = vmatpush2.msra.mxu0 %v227
  %393 = vmatprep.subr.mxu0 0.0
  %394 = vmatpush2.msra.mxu0 %v226
  %395 = vmatprep.subr.mxu0 0.0
  %396 = vmatpush2.msra.mxu0 %v225
  %397 = vmatprep.subr.mxu0 0.0
  %398 = vmatpush2.msra.mxu0 %v224
  %399 = vmatprep.subr.mxu0 0.0
  %400 = vmatpush2.msra.mxu0 %v223
  %401 = vmatprep.subr.mxu0 0.0
  %402 = vmatpush2.msra.mxu0 %v222
  %403 = vmatprep.subr.mxu0 0.0
  %404 = vmatpush2.msra.mxu0 %v221
  %405 = vmatprep.subr.mxu0 0.0
  %406 = vmatpush2.msra.mxu0 %v220
  %407 = vmatprep.subr.mxu0 0.0
  %408 = vmatpush2.msra.mxu0 %v219
  %409 = vmatprep.subr.mxu0 0.0
  %410 = vmatpush2.msra.mxu0 %v218
  %411 = vmatprep.subr.mxu0 0.0
  %412 = vmatpush2.msra.mxu0 %v217
  %413 = vmatprep.subr.mxu0 0.0
  %414 = vmatpush2.msra.mxu0 %v216
  %415 = vmatprep.mubr.f32.mxu0 %v21
  %416 = vmatmul.mubr.f32.gmra.mxu0 %v20
  %v417 = vpop.f32.mrf.mxu0
  %v418 = vadd.f32 %v349, %v417
  %v419 = vpop.f32.mrf.mxu0
  %420 = vmatprep.mubr.f32.mxu0 %v30
  %421 = vmatmul.mubr.f32.gmra.mxu0 %v29
  %v422 = vpop.f32.mrf.mxu0
  %v423 = vadd.f32 %v349, %v422
  %v424 = vpop.f32.mrf.mxu0
  %425 = vmatprep.mubr.f32.mxu0 %v39
  %426 = vmatmul.mubr.f32.gmra.mxu0 %v38
  %v427 = vpop.f32.mrf.mxu0
  %v428 = vadd.f32 %v349, %v427
  %v429 = vpop.f32.mrf.mxu0
  %430 = vmatprep.mubr.f32.mxu0 %v48
  %431 = vmatmul.mubr.f32.gmra.mxu0 %v47
  %v432 = vpop.f32.mrf.mxu0
  %v433 = vadd.f32 %v349, %v432
  %v434 = vpop.f32.mrf.mxu0
  %435 = vmatprep.mubr.f32.mxu0 %v57
  %436 = vmatmul.mubr.f32.gmra.mxu0 %v56
  %v437 = vpop.f32.mrf.mxu0
  %v438 = vadd.f32 %v349, %v437
  %v439 = vpop.f32.mrf.mxu0
  %440 = vmatprep.mubr.f32.mxu0 %v66
  %441 = vmatmul.mubr.f32.gmra.mxu0 %v65
  %v442 = vpop.f32.mrf.mxu0
  %v443 = vadd.f32 %v349, %v442
  %v444 = vpop.f32.mrf.mxu0
  %445 = vmatprep.mubr.f32.mxu0 %v75
  %446 = vmatmul.mubr.f32.gmra.mxu0 %v74
  %v447 = vpop.f32.mrf.mxu0
  %v448 = vadd.f32 %v349, %v447
  %v449 = vpop.f32.mrf.mxu0
  %450 = vmatprep.mubr.f32.mxu0 %v84
  %451 = vmatmul.mubr.f32.gmra.mxu0 %v83
  %v452 = vpop.f32.mrf.mxu0
  %v453 = vadd.f32 %v349, %v452
  %v454 = vpop.f32.mrf.mxu0
  %455 = vmatprep.mubr.f32.mxu0 %v93
  %456 = vmatmul.mubr.f32.gmra.mxu0 %v92
  %v457 = vpop.f32.mrf.mxu0
  %v458 = vadd.f32 %v349, %v457
  %v459 = vpop.f32.mrf.mxu0
  %460 = vmatprep.mubr.f32.mxu0 %v102
  %461 = vmatmul.mubr.f32.gmra.mxu0 %v101
  %v462 = vpop.f32.mrf.mxu0
  %v463 = vadd.f32 %v349, %v462
  %v464 = vpop.f32.mrf.mxu0
  %465 = vmatprep.mubr.f32.mxu0 %v111
  %466 = vmatmul.mubr.f32.gmra.mxu0 %v110
  %v467 = vpop.f32.mrf.mxu0
  %v468 = vadd.f32 %v349, %v467
  %v469 = vpop.f32.mrf.mxu0
  %470 = vmatprep.mubr.f32.mxu0 %v120
  %471 = vmatmul.mubr.f32.gmra.mxu0 %v119
  %v472 = vpop.f32.mrf.mxu0
  %v473 = vadd.f32 %v349, %v472
  %v474 = vpop.f32.mrf.mxu0
  %475 = vmatprep.mubr.f32.mxu0 %v129
  %476 = vmatmul.mubr.f32.gmra.mxu0 %v128
  %v477 = vpop.f32.mrf.mxu0
  %v478 = vadd.f32 %v349, %v477
  %v479 = vpop.f32.mrf.mxu0
  %480 = vmatprep.mubr.f32.mxu0 %v138
  %481 = vmatmul.mubr.f32.gmra.mxu0 %v137
  %v482 = vpop.f32.mrf.mxu0
  %v483 = vadd.f32 %v349, %v482
  %v484 = vpop.f32.mrf.mxu0
  %485 = vmatprep.mubr.f32.mxu0 %v147
  %486 = vmatmul.mubr.f32.gmra.mxu0 %v146
  %v487 = vpop.f32.mrf.mxu0
  %v488 = vadd.f32 %v349, %v487
  %v489 = vpop.f32.mrf.mxu0
  %490 = vmatprep.mubr.f32.mxu0 %v156
  %491 = vmatmul.mubr.f32.gmra.mxu0 %v155
  %v492 = vpop.f32.mrf.mxu0
  %v493 = vadd.f32 %v349, %v492
  %v494 = vpop.f32.mrf.mxu0
  %495 = vmatprep.mubr.f32.mxu0 %v165
  %496 = vmatmul.mubr.f32.gmra.mxu0 %v164
  %v497 = vpop.f32.mrf.mxu0
  %v498 = vadd.f32 %v349, %v497
  %v499 = vpop.f32.mrf.mxu0
  %500 = vmatprep.mubr.f32.mxu0 %v174
  %501 = vmatmul.mubr.f32.gmra.mxu0 %v173
  %v502 = vpop.f32.mrf.mxu0
  %v503 = vadd.f32 %v349, %v502
  %v504 = vpop.f32.mrf.mxu0
  %505 = vmatprep.mubr.f32.mxu0 %v183
  %506 = vmatmul.mubr.f32.gmra.mxu0 %v182
  %v507 = vpop.f32.mrf.mxu0
  %v508 = vadd.f32 %v349, %v507
  %v509 = vpop.f32.mrf.mxu0
  %510 = vmatprep.mubr.f32.mxu0 %v192
  %511 = vmatmul.mubr.f32.gmra.mxu0 %v191
  %v512 = vpop.f32.mrf.mxu0
  %v513 = vadd.f32 %v349, %v512
  %v514 = vpop.f32.mrf.mxu0
  %515 = vdwg.mxu0
  %516 = vmatprep.subr.mxu0 0.0
  %517 = vmatpush1.msra.mxu0 %v247
  %518 = vmatprep.subr.mxu0 0.0
  %519 = vmatpush1.msra.mxu0 %v246
  %520 = vmatprep.subr.mxu0 0.0
  %521 = vmatpush1.msra.mxu0 %v245
  %522 = vmatprep.subr.mxu0 0.0
  %523 = vmatpush1.msra.mxu0 %v244
  %524 = vmatprep.subr.mxu0 0.0
  %525 = vmatpush1.msra.mxu0 %v243
  %526 = vmatprep.subr.mxu0 0.0
  %527 = vmatpush1.msra.mxu0 %v242
  %528 = vmatprep.subr.mxu0 0.0
  %529 = vmatpush1.msra.mxu0 %v241
  %530 = vmatprep.subr.mxu0 0.0
  %531 = vmatpush1.msra.mxu0 %v240
  %532 = vmatprep.subr.mxu0 0.0
  %533 = vmatpush1.msra.mxu0 %v239
  %534 = vmatprep.subr.mxu0 0.0
  %535 = vmatpush1.msra.mxu0 %v238
  %536 = vmatprep.subr.mxu0 0.0
  %537 = vmatpush1.msra.mxu0 %v237
  %538 = vmatprep.subr.mxu0 0.0
  %539 = vmatpush1.msra.mxu0 %v236
  %540 = vmatprep.subr.mxu0 0.0
  %541 = vmatpush1.msra.mxu0 %v235
  %542 = vmatprep.subr.mxu0 0.0
  %543 = vmatpush1.msra.mxu0 %v234
  %544 = vmatprep.subr.mxu0 0.0
  %545 = vmatpush1.msra.mxu0 %v233
  %546 = vmatprep.subr.mxu0 0.0
  %547 = vmatpush1.msra.mxu0 %v232
  %548 = vmatprep.subr.mxu0 0.0
  %549 = vmatpush2.msra.mxu0 %v263
  %550 = vmatprep.subr.mxu0 0.0
  %551 = vmatpush2.msra.mxu0 %v262
  %552 = vmatprep.subr.mxu0 0.0
  %553 = vmatpush2.msra.mxu0 %v261
  %554 = vmatprep.subr.mxu0 0.0
  %555 = vmatpush2.msra.mxu0 %v260
  %556 = vmatprep.subr.mxu0 0.0
  %557 = vmatpush2.msra.mxu0 %v259
  %558 = vmatprep.subr.mxu0 0.0
  %559 = vmatpush2.msra.mxu0 %v258
  %560 = vmatprep.subr.mxu0 0.0
  %561 = vmatpush2.msra.mxu0 %v257
  %562 = vmatprep.subr.mxu0 0.0
  %563 = vmatpush2.msra.mxu0 %v256
  %564 = vmatprep.subr.mxu0 0.0
  %565 = vmatpush2.msra.mxu0 %v255
  %566 = vmatprep.subr.mxu0 0.0
  %567 = vmatpush2.msra.mxu0 %v254
  %568 = vmatprep.subr.mxu0 0.0
  %569 = vmatpush2.msra.mxu0 %v253
  %570 = vmatprep.subr.mxu0 0.0
  %571 = vmatpush2.msra.mxu0 %v252
  %572 = vmatprep.subr.mxu0 0.0
  %573 = vmatpush2.msra.mxu0 %v251
  %574 = vmatprep.subr.mxu0 0.0
  %575 = vmatpush2.msra.mxu0 %v250
  %576 = vmatprep.subr.mxu0 0.0
  %577 = vmatpush2.msra.mxu0 %v249
  %578 = vmatprep.subr.mxu0 0.0
  %579 = vmatpush2.msra.mxu0 %v248
  %580 = vmatprep.mubr.f32.mxu0 %v23
  %581 = vmatmul.mubr.f32.gmra.mxu0 %v22
  %v582 = vpop.f32.mrf.mxu0
  %v583 = vadd.f32 %v418, %v582
  %v584 = vpop.f32.mrf.mxu0
  %585 = vmatprep.mubr.f32.mxu0 %v32
  %586 = vmatmul.mubr.f32.gmra.mxu0 %v31
  %v587 = vpop.f32.mrf.mxu0
  %v588 = vadd.f32 %v423, %v587
  %v589 = vpop.f32.mrf.mxu0
  %590 = vmatprep.mubr.f32.mxu0 %v41
  %591 = vmatmul.mubr.f32.gmra.mxu0 %v40
  %v592 = vpop.f32.mrf.mxu0
  %v593 = vadd.f32 %v428, %v592
  %v594 = vpop.f32.mrf.mxu0
  %595 = vmatprep.mubr.f32.mxu0 %v50
  %596 = vmatmul.mubr.f32.gmra.mxu0 %v49
  %v597 = vpop.f32.mrf.mxu0
  %v598 = vadd.f32 %v433, %v597
  %v599 = vpop.f32.mrf.mxu0
  %600 = vmatprep.mubr.f32.mxu0 %v59
  %601 = vmatmul.mubr.f32.gmra.mxu0 %v58
  %v602 = vpop.f32.mrf.mxu0
  %v603 = vadd.f32 %v438, %v602
  %v604 = vpop.f32.mrf.mxu0
  %605 = vmatprep.mubr.f32.mxu0 %v68
  %606 = vmatmul.mubr.f32.gmra.mxu0 %v67
  %v607 = vpop.f32.mrf.mxu0
  %v608 = vadd.f32 %v443, %v607
  %v609 = vpop.f32.mrf.mxu0
  %610 = vmatprep.mubr.f32.mxu0 %v77
  %611 = vmatmul.mubr.f32.gmra.mxu0 %v76
  %v612 = vpop.f32.mrf.mxu0
  %v613 = vadd.f32 %v448, %v612
  %v614 = vpop.f32.mrf.mxu0
  %615 = vmatprep.mubr.f32.mxu0 %v86
  %616 = vmatmul.mubr.f32.gmra.mxu0 %v85
  %v617 = vpop.f32.mrf.mxu0
  %v618 = vadd.f32 %v453, %v617
  %v619 = vpop.f32.mrf.mxu0
  %620 = vmatprep.mubr.f32.mxu0 %v95
  %621 = vmatmul.mubr.f32.gmra.mxu0 %v94
  %v622 = vpop.f32.mrf.mxu0
  %v623 = vadd.f32 %v458, %v622
  %v624 = vpop.f32.mrf.mxu0
  %625 = vmatprep.mubr.f32.mxu0 %v104
  %626 = vmatmul.mubr.f32.gmra.mxu0 %v103
  %v627 = vpop.f32.mrf.mxu0
  %v628 = vadd.f32 %v463, %v627
  %v629 = vpop.f32.mrf.mxu0
  %630 = vmatprep.mubr.f32.mxu0 %v113
  %631 = vmatmul.mubr.f32.gmra.mxu0 %v112
  %v632 = vpop.f32.mrf.mxu0
  %v633 = vadd.f32 %v468, %v632
  %v634 = vpop.f32.mrf.mxu0
  %635 = vmatprep.mubr.f32.mxu0 %v122
  %636 = vmatmul.mubr.f32.gmra.mxu0 %v121
  %v637 = vpop.f32.mrf.mxu0
  %v638 = vadd.f32 %v473, %v637
  %v639 = vpop.f32.mrf.mxu0
  %640 = vmatprep.mubr.f32.mxu0 %v131
  %641 = vmatmul.mubr.f32.gmra.mxu0 %v130
  %v642 = vpop.f32.mrf.mxu0
  %v643 = vadd.f32 %v478, %v642
  %v644 = vpop.f32.mrf.mxu0
  %645 = vmatprep.mubr.f32.mxu0 %v140
  %646 = vmatmul.mubr.f32.gmra.mxu0 %v139
  %v647 = vpop.f32.mrf.mxu0
  %v648 = vadd.f32 %v483, %v647
  %v649 = vpop.f32.mrf.mxu0
  %650 = vmatprep.mubr.f32.mxu0 %v149
  %651 = vmatmul.mubr.f32.gmra.mxu0 %v148
  %v652 = vpop.f32.mrf.mxu0
  %v653 = vadd.f32 %v488, %v652
  %v654 = vpop.f32.mrf.mxu0
  %655 = vmatprep.mubr.f32.mxu0 %v158
  %656 = vmatmul.mubr.f32.gmra.mxu0 %v157
  %v657 = vpop.f32.mrf.mxu0
  %v658 = vadd.f32 %v493, %v657
  %v659 = vpop.f32.mrf.mxu0
  %660 = vmatprep.mubr.f32.mxu0 %v167
  %661 = vmatmul.mubr.f32.gmra.mxu0 %v166
  %v662 = vpop.f32.mrf.mxu0
  %v663 = vadd.f32 %v498, %v662
  %v664 = vpop.f32.mrf.mxu0
  %665 = vmatprep.mubr.f32.mxu0 %v176
  %666 = vmatmul.mubr.f32.gmra.mxu0 %v175
  %v667 = vpop.f32.mrf.mxu0
  %v668 = vadd.f32 %v503, %v667
  %v669 = vpop.f32.mrf.mxu0
  %670 = vmatprep.mubr.f32.mxu0 %v185
  %671 = vmatmul.mubr.f32.gmra.mxu0 %v184
  %v672 = vpop.f32.mrf.mxu0
  %v673 = vadd.f32 %v508, %v672
  %v674 = vpop.f32.mrf.mxu0
  %675 = vmatprep.mubr.f32.mxu0 %v194
  %676 = vmatmul.mubr.f32.gmra.mxu0 %v193
  %v677 = vpop.f32.mrf.mxu0
  %v678 = vadd.f32 %v513, %v677
  %v679 = vpop.f32.mrf.mxu0
  %680 = vdwg.mxu0
  %681 = vmatprep.subr.mxu0 0.0
  %682 = vmatpush1.msra.mxu0 %v279
  %683 = vmatprep.subr.mxu0 0.0
  %684 = vmatpush1.msra.mxu0 %v278
  %685 = vmatprep.subr.mxu0 0.0
  %686 = vmatpush1.msra.mxu0 %v277
  %687 = vmatprep.subr.mxu0 0.0
  %688 = vmatpush1.msra.mxu0 %v276
  %689 = vmatprep.subr.mxu0 0.0
  %690 = vmatpush1.msra.mxu0 %v275
  %691 = vmatprep.subr.mxu0 0.0
  %692 = vmatpush1.msra.mxu0 %v274
  %693 = vmatprep.subr.mxu0 0.0
  %694 = vmatpush1.msra.mxu0 %v273
  %695 = vmatprep.subr.mxu0 0.0
  %696 = vmatpush1.msra.mxu0 %v272
  %697 = vmatprep.subr.mxu0 0.0
  %698 = vmatpush1.msra.mxu0 %v271
  %699 = vmatprep.subr.mxu0 0.0
  %700 = vmatpush1.msra.mxu0 %v270
  %701 = vmatprep.subr.mxu0 0.0
  %702 = vmatpush1.msra.mxu0 %v269
  %703 = vmatprep.subr.mxu0 0.0
  %704 = vmatpush1.msra.mxu0 %v268
  %705 = vmatprep.subr.mxu0 0.0
  %706 = vmatpush1.msra.mxu0 %v267
  %707 = vmatprep.subr.mxu0 0.0
  %708 = vmatpush1.msra.mxu0 %v266
  %709 = vmatprep.subr.mxu0 0.0
  %710 = vmatpush1.msra.mxu0 %v265
  %711 = vmatprep.subr.mxu0 0.0
  %712 = vmatpush1.msra.mxu0 %v264
  %713 = vmatprep.subr.mxu0 0.0
  %714 = vmatpush2.msra.mxu0 %v295
  %715 = vmatprep.subr.mxu0 0.0
  %716 = vmatpush2.msra.mxu0 %v294
  %717 = vmatprep.subr.mxu0 0.0
  %718 = vmatpush2.msra.mxu0 %v293
  %719 = vmatprep.subr.mxu0 0.0
  %720 = vmatpush2.msra.mxu0 %v292
  %721 = vmatprep.subr.mxu0 0.0
  %722 = vmatpush2.msra.mxu0 %v291
  %723 = vmatprep.subr.mxu0 0.0
  %724 = vmatpush2.msra.mxu0 %v290
  %725 = vmatprep.subr.mxu0 0.0
  %726 = vmatpush2.msra.mxu0 %v289
  %727 = vmatprep.subr.mxu0 0.0
  %728 = vmatpush2.msra.mxu0 %v288
  %729 = vmatprep.subr.mxu0 0.0
  %730 = vmatpush2.msra.mxu0 %v287
  %731 = vmatprep.subr.mxu0 0.0
  %732 = vmatpush2.msra.mxu0 %v286
  %733 = vmatprep.subr.mxu0 0.0
  %734 = vmatpush2.msra.mxu0 %v285
  %735 = vmatprep.subr.mxu0 0.0
  %736 = vmatpush2.msra.mxu0 %v284
  %737 = vmatprep.subr.mxu0 0.0
  %738 = vmatpush2.msra.mxu0 %v283
  %739 = vmatprep.subr.mxu0 0.0
  %740 = vmatpush2.msra.mxu0 %v282
  %741 = vmatprep.subr.mxu0 0.0
  %742 = vmatpush2.msra.mxu0 %v281
  %743 = vmatprep.subr.mxu0 0.0
  %744 = vmatpush2.msra.mxu0 %v280
  %745 = vmatprep.mubr.f32.mxu0 %v25
  %746 = vmatmul.mubr.f32.gmra.mxu0 %v24
  %v747 = vpop.f32.mrf.mxu0
  %v748 = vadd.f32 %v583, %v747
  %v749 = vpop.f32.mrf.mxu0
  %750 = vmatprep.mubr.f32.mxu0 %v34
  %751 = vmatmul.mubr.f32.gmra.mxu0 %v33
  %v752 = vpop.f32.mrf.mxu0
  %v753 = vadd.f32 %v588, %v752
  %v754 = vpop.f32.mrf.mxu0
  %755 = vmatprep.mubr.f32.mxu0 %v43
  %756 = vmatmul.mubr.f32.gmra.mxu0 %v42
  %v757 = vpop.f32.mrf.mxu0
  %v758 = vadd.f32 %v593, %v757
  %v759 = vpop.f32.mrf.mxu0
  %760 = vmatprep.mubr.f32.mxu0 %v52
  %761 = vmatmul.mubr.f32.gmra.mxu0 %v51
  %v762 = vpop.f32.mrf.mxu0
  %v763 = vadd.f32 %v598, %v762
  %v764 = vpop.f32.mrf.mxu0
  %765 = vmatprep.mubr.f32.mxu0 %v61
  %766 = vmatmul.mubr.f32.gmra.mxu0 %v60
  %v767 = vpop.f32.mrf.mxu0
  %v768 = vadd.f32 %v603, %v767
  %v769 = vpop.f32.mrf.mxu0
  %770 = vmatprep.mubr.f32.mxu0 %v70
  %771 = vmatmul.mubr.f32.gmra.mxu0 %v69
  %v772 = vpop.f32.mrf.mxu0
  %v773 = vadd.f32 %v608, %v772
  %v774 = vpop.f32.mrf.mxu0
  %775 = vmatprep.mubr.f32.mxu0 %v79
  %776 = vmatmul.mubr.f32.gmra.mxu0 %v78
  %v777 = vpop.f32.mrf.mxu0
  %v778 = vadd.f32 %v613, %v777
  %v779 = vpop.f32.mrf.mxu0
  %780 = vmatprep.mubr.f32.mxu0 %v88
  %781 = vmatmul.mubr.f32.gmra.mxu0 %v87
  %v782 = vpop.f32.mrf.mxu0
  %v783 = vadd.f32 %v618, %v782
  %v784 = vpop.f32.mrf.mxu0
  %785 = vmatprep.mubr.f32.mxu0 %v97
  %786 = vmatmul.mubr.f32.gmra.mxu0 %v96
  %v787 = vpop.f32.mrf.mxu0
  %v788 = vadd.f32 %v623, %v787
  %v789 = vpop.f32.mrf.mxu0
  %790 = vmatprep.mubr.f32.mxu0 %v106
  %791 = vmatmul.mubr.f32.gmra.mxu0 %v105
  %v792 = vpop.f32.mrf.mxu0
  %v793 = vadd.f32 %v628, %v792
  %v794 = vpop.f32.mrf.mxu0
  %795 = vmatprep.mubr.f32.mxu0 %v115
  %796 = vmatmul.mubr.f32.gmra.mxu0 %v114
  %v797 = vpop.f32.mrf.mxu0
  %v798 = vadd.f32 %v633, %v797
  %v799 = vpop.f32.mrf.mxu0
  %800 = vmatprep.mubr.f32.mxu0 %v124
  %801 = vmatmul.mubr.f32.gmra.mxu0 %v123
  %v802 = vpop.f32.mrf.mxu0
  %v803 = vadd.f32 %v638, %v802
  %v804 = vpop.f32.mrf.mxu0
  %805 = vmatprep.mubr.f32.mxu0 %v133
  %806 = vmatmul.mubr.f32.gmra.mxu0 %v132
  %v807 = vpop.f32.mrf.mxu0
  %v808 = vadd.f32 %v643, %v807
  %v809 = vpop.f32.mrf.mxu0
  %810 = vmatprep.mubr.f32.mxu0 %v142
  %811 = vmatmul.mubr.f32.gmra.mxu0 %v141
  %v812 = vpop.f32.mrf.mxu0
  %v813 = vadd.f32 %v648, %v812
  %v814 = vpop.f32.mrf.mxu0
  %815 = vmatprep.mubr.f32.mxu0 %v151
  %816 = vmatmul.mubr.f32.gmra.mxu0 %v150
  %v817 = vpop.f32.mrf.mxu0
  %v818 = vadd.f32 %v653, %v817
  %v819 = vpop.f32.mrf.mxu0
  %820 = vmatprep.mubr.f32.mxu0 %v160
  %821 = vmatmul.mubr.f32.gmra.mxu0 %v159
  %v822 = vpop.f32.mrf.mxu0
  %v823 = vadd.f32 %v658, %v822
  %v824 = vpop.f32.mrf.mxu0
  %825 = vmatprep.mubr.f32.mxu0 %v169
  %826 = vmatmul.mubr.f32.gmra.mxu0 %v168
  %v827 = vpop.f32.mrf.mxu0
  %v828 = vadd.f32 %v663, %v827
  %v829 = vpop.f32.mrf.mxu0
  %830 = vmatprep.mubr.f32.mxu0 %v178
  %831 = vmatmul.mubr.f32.gmra.mxu0 %v177
  %v832 = vpop.f32.mrf.mxu0
  %v833 = vadd.f32 %v668, %v832
  %v834 = vpop.f32.mrf.mxu0
  %835 = vmatprep.mubr.f32.mxu0 %v187
  %836 = vmatmul.mubr.f32.gmra.mxu0 %v186
  %v837 = vpop.f32.mrf.mxu0
  %v838 = vadd.f32 %v673, %v837
  %v839 = vpop.f32.mrf.mxu0
  %840 = vmatprep.mubr.f32.mxu0 %v196
  %841 = vmatmul.mubr.f32.gmra.mxu0 %v195
  %v842 = vpop.f32.mrf.mxu0
  %v843 = vadd.f32 %v678, %v842
  %v844 = vpop.f32.mrf.mxu0
  %845 = vdwg.mxu0
  %846 = vmatprep.subr.mxu0 0.0
  %847 = vmatpush1.msra.mxu0 %v311
  %848 = vmatprep.subr.mxu0 0.0
  %849 = vmatpush1.msra.mxu0 %v310
  %850 = vmatprep.subr.mxu0 0.0
  %851 = vmatpush1.msra.mxu0 %v309
  %852 = vmatprep.subr.mxu0 0.0
  %853 = vmatpush1.msra.mxu0 %v308
  %854 = vmatprep.subr.mxu0 0.0
  %855 = vmatpush1.msra.mxu0 %v307
  %856 = vmatprep.subr.mxu0 0.0
  %857 = vmatpush1.msra.mxu0 %v306
  %858 = vmatprep.subr.mxu0 0.0
  %859 = vmatpush1.msra.mxu0 %v305
  %860 = vmatprep.subr.mxu0 0.0
  %861 = vmatpush1.msra.mxu0 %v304
  %862 = vmatprep.subr.mxu0 0.0
  %863 = vmatpush1.msra.mxu0 %v303
  %864 = vmatprep.subr.mxu0 0.0
  %865 = vmatpush1.msra.mxu0 %v302
  %866 = vmatprep.subr.mxu0 0.0
  %867 = vmatpush1.msra.mxu0 %v301
  %868 = vmatprep.subr.mxu0 0.0
  %869 = vmatpush1.msra.mxu0 %v300
  %870 = vmatprep.subr.mxu0 0.0
  %871 = vmatpush1.msra.mxu0 %v299
  %872 = vmatprep.subr.mxu0 0.0
  %873 = vmatpush1.msra.mxu0 %v298
  %874 = vmatprep.subr.mxu0 0.0
  %875 = vmatpush1.msra.mxu0 %v297
  %876 = vmatprep.subr.mxu0 0.0
  %877 = vmatpush1.msra.mxu0 %v296
  %878 = vmatprep.subr.mxu0 0.0
  %879 = vmatpush2.msra.mxu0 %v327
  %880 = vmatprep.subr.mxu0 0.0
  %881 = vmatpush2.msra.mxu0 %v326
  %882 = vmatprep.subr.mxu0 0.0
  %883 = vmatpush2.msra.mxu0 %v325
  %884 = vmatprep.subr.mxu0 0.0
  %885 = vmatpush2.msra.mxu0 %v324
  %886 = vmatprep.subr.mxu0 0.0
  %887 = vmatpush2.msra.mxu0 %v323
  %888 = vmatprep.subr.mxu0 0.0
  %889 = vmatpush2.msra.mxu0 %v322
  %890 = vmatprep.subr.mxu0 0.0
  %891 = vmatpush2.msra.mxu0 %v321
  %892 = vmatprep.subr.mxu0 0.0
  %893 = vmatpush2.msra.mxu0 %v320
  %894 = vmatprep.subr.mxu0 0.0
  %895 = vmatpush2.msra.mxu0 %v319
  %896 = vmatprep.subr.mxu0 0.0
  %897 = vmatpush2.msra.mxu0 %v318
  %898 = vmatprep.subr.mxu0 0.0
  %899 = vmatpush2.msra.mxu0 %v317
  %900 = vmatprep.subr.mxu0 0.0
  %901 = vmatpush2.msra.mxu0 %v316
  %902 = vmatprep.subr.mxu0 0.0
  %903 = vmatpush2.msra.mxu0 %v315
  %904 = vmatprep.subr.mxu0 0.0
  %905 = vmatpush2.msra.mxu0 %v314
  %906 = vmatprep.subr.mxu0 0.0
  %907 = vmatpush2.msra.mxu0 %v313
  %908 = vmatprep.subr.mxu0 0.0
  %909 = vmatpush2.msra.mxu0 %v312
  %910 = vmatprep.mubr.f32.mxu0 %v27
  %911 = vmatmul.mubr.f32.gmra.mxu0 %v26
  %v912 = vpop.f32.mrf.mxu0
  %v913 = vadd.f32 %v748, %v912
  %v914 = vpop.f32.mrf.mxu0
  %915 = vmatprep.mubr.f32.mxu0 %v36
  %916 = vmatmul.mubr.f32.gmra.mxu0 %v35
  %v917 = vpop.f32.mrf.mxu0
  %v918 = vadd.f32 %v753, %v917
  %v919 = vpop.f32.mrf.mxu0
  %920 = vmatprep.mubr.f32.mxu0 %v45
  %921 = vmatmul.mubr.f32.gmra.mxu0 %v44
  %v922 = vpop.f32.mrf.mxu0
  %v923 = vadd.f32 %v758, %v922
  %v924 = vpop.f32.mrf.mxu0
  %925 = vmatprep.mubr.f32.mxu0 %v54
  %926 = vmatmul.mubr.f32.gmra.mxu0 %v53
  %v927 = vpop.f32.mrf.mxu0
  %v928 = vadd.f32 %v763, %v927
  %v929 = vpop.f32.mrf.mxu0
  %930 = vmatprep.mubr.f32.mxu0 %v63
  %931 = vmatmul.mubr.f32.gmra.mxu0 %v62
  %v932 = vpop.f32.mrf.mxu0
  %v933 = vadd.f32 %v768, %v932
  %v934 = vpop.f32.mrf.mxu0
  %935 = vmatprep.mubr.f32.mxu0 %v72
  %936 = vmatmul.mubr.f32.gmra.mxu0 %v71
  %v937 = vpop.f32.mrf.mxu0
  %v938 = vadd.f32 %v773, %v937
  %v939 = vpop.f32.mrf.mxu0
  %940 = vmatprep.mubr.f32.mxu0 %v81
  %941 = vmatmul.mubr.f32.gmra.mxu0 %v80
  %v942 = vpop.f32.mrf.mxu0
  %v943 = vadd.f32 %v778, %v942
  %v944 = vpop.f32.mrf.mxu0
  %945 = vmatprep.mubr.f32.mxu0 %v90
  %946 = vmatmul.mubr.f32.gmra.mxu0 %v89
  %v947 = vpop.f32.mrf.mxu0
  %v948 = vadd.f32 %v783, %v947
  %v949 = vpop.f32.mrf.mxu0
  %950 = vmatprep.mubr.f32.mxu0 %v99
  %951 = vmatmul.mubr.f32.gmra.mxu0 %v98
  %v952 = vpop.f32.mrf.mxu0
  %v953 = vadd.f32 %v788, %v952
  %v954 = vpop.f32.mrf.mxu0
  %955 = vmatprep.mubr.f32.mxu0 %v108
  %956 = vmatmul.mubr.f32.gmra.mxu0 %v107
  %v957 = vpop.f32.mrf.mxu0
  %v958 = vadd.f32 %v793, %v957
  %v959 = vpop.f32.mrf.mxu0
  %960 = vmatprep.mubr.f32.mxu0 %v117
  %961 = vmatmul.mubr.f32.gmra.mxu0 %v116
  %v962 = vpop.f32.mrf.mxu0
  %v963 = vadd.f32 %v798, %v962
  %v964 = vpop.f32.mrf.mxu0
  %965 = vmatprep.mubr.f32.mxu0 %v126
  %966 = vmatmul.mubr.f32.gmra.mxu0 %v125
  %v967 = vpop.f32.mrf.mxu0
  %v968 = vadd.f32 %v803, %v967
  %v969 = vpop.f32.mrf.mxu0
  %970 = vmatprep.mubr.f32.mxu0 %v135
  %971 = vmatmul.mubr.f32.gmra.mxu0 %v134
  %v972 = vpop.f32.mrf.mxu0
  %v973 = vadd.f32 %v808, %v972
  %v974 = vpop.f32.mrf.mxu0
  %975 = vmatprep.mubr.f32.mxu0 %v144
  %976 = vmatmul.mubr.f32.gmra.mxu0 %v143
  %v977 = vpop.f32.mrf.mxu0
  %v978 = vadd.f32 %v813, %v977
  %v979 = vpop.f32.mrf.mxu0
  %980 = vmatprep.mubr.f32.mxu0 %v153
  %981 = vmatmul.mubr.f32.gmra.mxu0 %v152
  %v982 = vpop.f32.mrf.mxu0
  %v983 = vadd.f32 %v818, %v982
  %v984 = vpop.f32.mrf.mxu0
  %985 = vmatprep.mubr.f32.mxu0 %v162
  %986 = vmatmul.mubr.f32.gmra.mxu0 %v161
  %v987 = vpop.f32.mrf.mxu0
  %v988 = vadd.f32 %v823, %v987
  %v989 = vpop.f32.mrf.mxu0
  %990 = vmatprep.mubr.f32.mxu0 %v171
  %991 = vmatmul.mubr.f32.gmra.mxu0 %v170
  %v992 = vpop.f32.mrf.mxu0
  %v993 = vadd.f32 %v828, %v992
  %v994 = vpop.f32.mrf.mxu0
  %995 = vmatprep.mubr.f32.mxu0 %v180
  %996 = vmatmul.mubr.f32.gmra.mxu0 %v179
  %v997 = vpop.f32.mrf.mxu0
  %v998 = vadd.f32 %v833, %v997
  %v999 = vpop.f32.mrf.mxu0
  %1000 = vmatprep.mubr.f32.mxu0 %v189
  %1001 = vmatmul.mubr.f32.gmra.mxu0 %v188
  %v1002 = vpop.f32.mrf.mxu0
  %v1003 = vadd.f32 %v838, %v1002
  %v1004 = vpop.f32.mrf.mxu0
  %1005 = vmatprep.mubr.f32.mxu0 %v198
  %1006 = vmatmul.mubr.f32.gmra.mxu0 %v197
  %v1007 = vpop.f32.mrf.mxu0
  %v1008 = vadd.f32 %v843, %v1007
  %v1009 = vpop.f32.mrf.mxu0
  %1010 = vdwg.mxu0
  %1011 = vmatprep.subr.mxu0 0.0
  %1012 = vmatpush1.msra.mxu0 %v343
  %1013 = vmatprep.subr.mxu0 0.0
  %1014 = vmatpush1.msra.mxu0 %v342
  %1015 = vmatprep.subr.mxu0 0.0
  %1016 = vmatpush1.msra.mxu0 %v341
  %1017 = vmatprep.subr.mxu0 0.0
  %1018 = vmatpush1.msra.mxu0 %v340
  %1019 = vmatprep.subr.mxu0 0.0
  %1020 = vmatpush1.msra.mxu0 %v339
  %1021 = vmatprep.subr.mxu0 0.0
  %1022 = vmatpush1.msra.mxu0 %v338
  %1023 = vmatprep.subr.mxu0 0.0
  %1024 = vmatpush1.msra.mxu0 %v337
  %1025 = vmatprep.subr.mxu0 0.0
  %1026 = vmatpush1.msra.mxu0 %v336
  %1027 = vmatprep.subr.mxu0 0.0
  %1028 = vmatpush1.msra.mxu0 %v335
  %1029 = vmatprep.subr.mxu0 0.0
  %1030 = vmatpush1.msra.mxu0 %v334
  %1031 = vmatprep.subr.mxu0 0.0
  %1032 = vmatpush1.msra.mxu0 %v333
  %1033 = vmatprep.subr.mxu0 0.0
  %1034 = vmatpush1.msra.mxu0 %v332
  %1035 = vmatprep.subr.mxu0 0.0
  %1036 = vmatpush1.msra.mxu0 %v331
  %1037 = vmatprep.subr.mxu0 0.0
  %1038 = vmatpush1.msra.mxu0 %v330
  %1039 = vmatprep.subr.mxu0 0.0
  %1040 = vmatpush1.msra.mxu0 %v329
  %1041 = vmatprep.subr.mxu0 0.0
  %1042 = vmatpush1.msra.mxu0 %v328
  %1043 = vmatprep.subr.mxu0 0.0
  %1044 = vmatpush2.msra.mxu0 0.0
  %1045 = vmatprep.subr.mxu0 0.0
  %1046 = vmatpush2.msra.mxu0 0.0
  %1047 = vmatprep.subr.mxu0 0.0
  %1048 = vmatpush2.msra.mxu0 0.0
  %1049 = vmatprep.subr.mxu0 0.0
  %1050 = vmatpush2.msra.mxu0 0.0
  %1051 = vmatprep.subr.mxu0 0.0
  %1052 = vmatpush2.msra.mxu0 0.0
  %1053 = vmatprep.subr.mxu0 0.0
  %1054 = vmatpush2.msra.mxu0 0.0
  %1055 = vmatprep.subr.mxu0 0.0
  %1056 = vmatpush2.msra.mxu0 0.0
  %1057 = vmatprep.subr.mxu0 0.0
  %1058 = vmatpush2.msra.mxu0 0.0
  %1059 = vmatprep.subr.mxu0 0.0
  %1060 = vmatpush2.msra.mxu0 0.0
  %1061 = vmatprep.subr.mxu0 0.0
  %1062 = vmatpush2.msra.mxu0 0.0
  %1063 = vmatprep.subr.mxu0 0.0
  %1064 = vmatpush2.msra.mxu0 0.0
  %1065 = vmatprep.subr.mxu0 0.0
  %1066 = vmatpush2.msra.mxu0 0.0
  %1067 = vmatprep.subr.mxu0 0.0
  %1068 = vmatpush2.msra.mxu0 0.0
  %1069 = vmatprep.subr.mxu0 0.0
  %1070 = vmatpush2.msra.mxu0 0.0
  %1071 = vmatprep.subr.mxu0 0.0
  %1072 = vmatpush2.msra.mxu0 0.0
  %1073 = vmatprep.subr.mxu0 0.0
  %1074 = vmatpush2.msra.mxu0 0.0
  %1075 = vmatprep.mubr.f32.mxu0 0.0
  %1076 = vmatmul.mubr.f32.gmra.mxu0 %v28
  %v1077 = vpop.f32.mrf.mxu0
  %v1078 = vadd.f32 %v913, %v1077
  %v1079 = vpop.f32.mrf.mxu0
  %1080 = vmatprep.mubr.f32.mxu0 0.0
  %1081 = vmatmul.mubr.f32.gmra.mxu0 %v37
  %v1082 = vpop.f32.mrf.mxu0
  %v1083 = vadd.f32 %v918, %v1082
  %v1084 = vpop.f32.mrf.mxu0
  %1085 = vmatprep.mubr.f32.mxu0 0.0
  %1086 = vmatmul.mubr.f32.gmra.mxu0 %v46
  %v1087 = vpop.f32.mrf.mxu0
  %v1088 = vadd.f32 %v923, %v1087
  %v1089 = vpop.f32.mrf.mxu0
  %1090 = vmatprep.mubr.f32.mxu0 0.0
  %1091 = vmatmul.mubr.f32.gmra.mxu0 %v55
  %v1092 = vpop.f32.mrf.mxu0
  %v1093 = vadd.f32 %v928, %v1092
  %v1094 = vpop.f32.mrf.mxu0
  %1095 = vmatprep.mubr.f32.mxu0 0.0
  %1096 = vmatmul.mubr.f32.gmra.mxu0 %v64
  %v1097 = vpop.f32.mrf.mxu0
  %v1098 = vadd.f32 %v933, %v1097
  %v1099 = vpop.f32.mrf.mxu0
  %1100 = vmatprep.mubr.f32.mxu0 0.0
  %1101 = vmatmul.mubr.f32.gmra.mxu0 %v73
  %v1102 = vpop.f32.mrf.mxu0
  %v1103 = vadd.f32 %v938, %v1102
  %v1104 = vpop.f32.mrf.mxu0
  %1105 = vmatprep.mubr.f32.mxu0 0.0
  %1106 = vmatmul.mubr.f32.gmra.mxu0 %v82
  %v1107 = vpop.f32.mrf.mxu0
  %v1108 = vadd.f32 %v943, %v1107
  %v1109 = vpop.f32.mrf.mxu0
  %1110 = vmatprep.mubr.f32.mxu0 0.0
  %1111 = vmatmul.mubr.f32.gmra.mxu0 %v91
  %v1112 = vpop.f32.mrf.mxu0
  %v1113 = vadd.f32 %v948, %v1112
  %v1114 = vpop.f32.mrf.mxu0
  %1115 = vmatprep.mubr.f32.mxu0 0.0
  %1116 = vmatmul.mubr.f32.gmra.mxu0 %v100
  %v1117 = vpop.f32.mrf.mxu0
  %v1118 = vadd.f32 %v953, %v1117
  %v1119 = vpop.f32.mrf.mxu0
  %1120 = vmatprep.mubr.f32.mxu0 0.0
  %1121 = vmatmul.mubr.f32.gmra.mxu0 %v109
  %v1122 = vpop.f32.mrf.mxu0
  %v1123 = vadd.f32 %v958, %v1122
  %v1124 = vpop.f32.mrf.mxu0
  %1125 = vmatprep.mubr.f32.mxu0 0.0
  %1126 = vmatmul.mubr.f32.gmra.mxu0 %v118
  %v1127 = vpop.f32.mrf.mxu0
  %v1128 = vadd.f32 %v963, %v1127
  %v1129 = vpop.f32.mrf.mxu0
  %1130 = vmatprep.mubr.f32.mxu0 0.0
  %1131 = vmatmul.mubr.f32.gmra.mxu0 %v127
  %v1132 = vpop.f32.mrf.mxu0
  %v1133 = vadd.f32 %v968, %v1132
  %v1134 = vpop.f32.mrf.mxu0
  %1135 = vmatprep.mubr.f32.mxu0 0.0
  %1136 = vmatmul.mubr.f32.gmra.mxu0 %v136
  %v1137 = vpop.f32.mrf.mxu0
  %v1138 = vadd.f32 %v973, %v1137
  %v1139 = vpop.f32.mrf.mxu0
  %1140 = vmatprep.mubr.f32.mxu0 0.0
  %1141 = vmatmul.mubr.f32.gmra.mxu0 %v145
  %v1142 = vpop.f32.mrf.mxu0
  %v1143 = vadd.f32 %v978, %v1142
  %v1144 = vpop.f32.mrf.mxu0
  %1145 = vmatprep.mubr.f32.mxu0 0.0
  %1146 = vmatmul.mubr.f32.gmra.mxu0 %v154
  %v1147 = vpop.f32.mrf.mxu0
  %v1148 = vadd.f32 %v983, %v1147
  %v1149 = vpop.f32.mrf.mxu0
  %1150 = vmatprep.mubr.f32.mxu0 0.0
  %1151 = vmatmul.mubr.f32.gmra.mxu0 %v163
  %v1152 = vpop.f32.mrf.mxu0
  %v1153 = vadd.f32 %v988, %v1152
  %v1154 = vpop.f32.mrf.mxu0
  %1155 = vmatprep.mubr.f32.mxu0 0.0
  %1156 = vmatmul.mubr.f32.gmra.mxu0 %v172
  %v1157 = vpop.f32.mrf.mxu0
  %v1158 = vadd.f32 %v993, %v1157
  %v1159 = vpop.f32.mrf.mxu0
  %1160 = vmatprep.mubr.f32.mxu0 0.0
  %1161 = vmatmul.mubr.f32.gmra.mxu0 %v181
  %v1162 = vpop.f32.mrf.mxu0
  %v1163 = vadd.f32 %v998, %v1162
  %v1164 = vpop.f32.mrf.mxu0
  %1165 = vmatprep.mubr.f32.mxu0 0.0
  %1166 = vmatmul.mubr.f32.gmra.mxu0 %v190
  %v1167 = vpop.f32.mrf.mxu0
  %v1168 = vadd.f32 %v1003, %v1167
  %v1169 = vpop.f32.mrf.mxu0
  %1170 = vmatprep.mubr.f32.mxu0 0.0
  %1171 = vmatmul.mubr.f32.gmra.mxu0 %v199
  %v1172 = vpop.f32.mrf.mxu0
  %v1173 = vadd.f32 %v1008, %v1172
  %v1174 = vpop.f32.mrf.mxu0
  %1175 = vdwg.mxu0
  %v1176 = vld [vmem:[%s3] sm:$0x1]
  %v1177 = vld [vmem:[%s4] sm:$0x1]
  %vm1178 = vcmask 179200
  %v1179 = vsel %vm1178, %v1078, 0.0
  %v1180 = vsel %vm1178, %v1083, 0.0
  %v1181 = vadd.f32 %v1179, %v1180
  %v1182 = vsel %vm1178, %v1088, 0.0
  %v1183 = vadd.f32 %v1181, %v1182
  %v1184 = vsel %vm1178, %v1093, 0.0
  %v1185 = vadd.f32 %v1183, %v1184
  %v1186 = vsel %vm1178, %v1098, 0.0
  %v1187 = vadd.f32 %v1185, %v1186
  %v1188 = vsel %vm1178, %v1103, 0.0
  %v1189 = vadd.f32 %v1187, %v1188
  %v1190 = vsel %vm1178, %v1108, 0.0
  %v1191 = vadd.f32 %v1189, %v1190
  %v1192 = vsel %vm1178, %v1113, 0.0
  %v1193 = vadd.f32 %v1191, %v1192
  %v1194 = vsel %vm1178, %v1118, 0.0
  %v1195 = vadd.f32 %v1193, %v1194
  %v1196 = vsel %vm1178, %v1123, 0.0
  %v1197 = vadd.f32 %v1195, %v1196
  %v1198 = vsel %vm1178, %v1128, 0.0
  %v1199 = vadd.f32 %v1197, %v1198
  %v1200 = vsel %vm1178, %v1133, 0.0
  %v1201 = vadd.f32 %v1199, %v1200
  %v1202 = vsel %vm1178, %v1138, 0.0
  %v1203 = vadd.f32 %v1201, %v1202
  %v1204 = vsel %vm1178, %v1143, 0.0
  %v1205 = vadd.f32 %v1203, %v1204
  %v1206 = vsel %vm1178, %v1148, 0.0
  %v1207 = vadd.f32 %v1205, %v1206
  %v1208 = vsel %vm1178, %v1153, 0.0
  %v1209 = vadd.f32 %v1207, %v1208
  %v1210 = vsel %vm1178, %v1158, 0.0
  %v1211 = vadd.f32 %v1209, %v1210
  %v1212 = vsel %vm1178, %v1163, 0.0
  %v1213 = vadd.f32 %v1211, %v1212
  %v1214 = vsel %vm1178, %v1168, 0.0
  %v1215 = vadd.f32 %v1213, %v1214
  %v1216 = vsel %vm1178, %v1173, 0.0
  %v1217 = vadd.f32 %v1215, %v1216
  %v1218 = vrot.slane %v1217, 4
  %v1219 = vadd.f32 %v1217, %v1218
  %v1220 = vrot.slane %v1219, 2
  %v1221 = vadd.f32 %v1219, %v1220
  %v1222 = vrot.slane %v1221, 1
  %v1223 = vadd.f32 %v1221, %v1222
  %v1224 = vmul.f32 %v1223, 0.00625
  %v1225 = vsub.f32 %v1078, %v1224
  %v1226 = vsub.f32 %v1083, %v1224
  %v1227 = vsub.f32 %v1088, %v1224
  %v1228 = vsub.f32 %v1093, %v1224
  %v1229 = vsub.f32 %v1098, %v1224
  %v1230 = vsub.f32 %v1103, %v1224
  %v1231 = vsub.f32 %v1108, %v1224
  %v1232 = vsub.f32 %v1113, %v1224
  %v1233 = vsub.f32 %v1118, %v1224
  %v1234 = vsub.f32 %v1123, %v1224
  %v1235 = vsub.f32 %v1128, %v1224
  %v1236 = vsub.f32 %v1133, %v1224
  %v1237 = vsub.f32 %v1138, %v1224
  %v1238 = vsub.f32 %v1143, %v1224
  %v1239 = vsub.f32 %v1148, %v1224
  %v1240 = vsub.f32 %v1153, %v1224
  %v1241 = vsub.f32 %v1158, %v1224
  %v1242 = vsub.f32 %v1163, %v1224
  %v1243 = vsub.f32 %v1168, %v1224
  %v1244 = vsub.f32 %v1173, %v1224
  %v1245 = vmul.f32 %v1225, %v1225
  %v1246 = vmul.f32 %v1226, %v1226
  %v1247 = vmul.f32 %v1227, %v1227
  %v1248 = vmul.f32 %v1228, %v1228
  %v1249 = vmul.f32 %v1229, %v1229
  %v1250 = vmul.f32 %v1230, %v1230
  %v1251 = vmul.f32 %v1231, %v1231
  %v1252 = vmul.f32 %v1232, %v1232
  %v1253 = vmul.f32 %v1233, %v1233
  %v1254 = vmul.f32 %v1234, %v1234
  %v1255 = vmul.f32 %v1235, %v1235
  %v1256 = vmul.f32 %v1236, %v1236
  %v1257 = vmul.f32 %v1237, %v1237
  %v1258 = vmul.f32 %v1238, %v1238
  %v1259 = vmul.f32 %v1239, %v1239
  %v1260 = vmul.f32 %v1240, %v1240
  %v1261 = vmul.f32 %v1241, %v1241
  %v1262 = vmul.f32 %v1242, %v1242
  %v1263 = vmul.f32 %v1243, %v1243
  %v1264 = vmul.f32 %v1244, %v1244
  %v1265 = vsel %vm1178, %v1245, 0.0
  %v1266 = vsel %vm1178, %v1246, 0.0
  %v1267 = vadd.f32 %v1265, %v1266
  %v1268 = vsel %vm1178, %v1247, 0.0
  %v1269 = vadd.f32 %v1267, %v1268
  %v1270 = vsel %vm1178, %v1248, 0.0
  %v1271 = vadd.f32 %v1269, %v1270
  %v1272 = vsel %vm1178, %v1249, 0.0
  %v1273 = vadd.f32 %v1271, %v1272
  %v1274 = vsel %vm1178, %v1250, 0.0
  %v1275 = vadd.f32 %v1273, %v1274
  %v1276 = vsel %vm1178, %v1251, 0.0
  %v1277 = vadd.f32 %v1275, %v1276
  %v1278 = vsel %vm1178, %v1252, 0.0
  %v1279 = vadd.f32 %v1277, %v1278
  %v1280 = vsel %vm1178, %v1253, 0.0
  %v1281 = vadd.f32 %v1279, %v1280
  %v1282 = vsel %vm1178, %v1254, 0.0
  %v1283 = vadd.f32 %v1281, %v1282
  %v1284 = vsel %vm1178, %v1255, 0.0
  %v1285 = vadd.f32 %v1283, %v1284
  %v1286 = vsel %vm1178, %v1256, 0.0
  %v1287 = vadd.f32 %v1285, %v1286
  %v1288 = vsel %vm1178, %v1257, 0.0
  %v1289 = vadd.f32 %v1287, %v1288
  %v1290 = vsel %vm1178, %v1258, 0.0
  %v1291 = vadd.f32 %v1289, %v1290
  %v1292 = vsel %vm1178, %v1259, 0.0
  %v1293 = vadd.f32 %v1291, %v1292
  %v1294 = vsel %vm1178, %v1260, 0.0
  %v1295 = vadd.f32 %v1293, %v1294
  %v1296 = vsel %vm1178, %v1261, 0.0
  %v1297 = vadd.f32 %v1295, %v1296
  %v1298 = vsel %vm1178, %v1262, 0.0
  %v1299 = vadd.f32 %v1297, %v1298
  %v1300 = vsel %vm1178, %v1263, 0.0
  %v1301 = vadd.f32 %v1299, %v1300
  %v1302 = vsel %vm1178, %v1264, 0.0
  %v1303 = vadd.f32 %v1301, %v1302
  %v1304 = vrot.slane %v1303, 4
  %v1305 = vadd.f32 %v1303, %v1304
  %v1306 = vrot.slane %v1305, 2
  %v1307 = vadd.f32 %v1305, %v1306
  %v1308 = vrot.slane %v1307, 1
  %v1309 = vadd.f32 %v1307, %v1308
  %v1310 = vmul.f32 %v1309, 0.00625
  %v1311 = vadd.f32 %v1310, 1e-05
  %v1312 = vrsqrt.pop %v1311
  %v1313 = vmul.f32 %v1176, %v1312
  %v1315 = vlaneseq
  %v1316 = vshrl.u32 %v1315, 7
  %v1317 = vsub.s32 0, %v1316
  %v1318 = vrot.slane %v1313, %v1317
  %v1320 = vmul.f32 %v1225, %v1318
  %v1321 = vmul.f32 %v1226, %v1318
  %v1322 = vmul.f32 %v1227, %v1318
  %v1323 = vmul.f32 %v1228, %v1318
  %v1324 = vmul.f32 %v1229, %v1318
  %v1325 = vmul.f32 %v1230, %v1318
  %v1326 = vmul.f32 %v1231, %v1318
  %v1327 = vmul.f32 %v1232, %v1318
  %v1328 = vmul.f32 %v1233, %v1318
  %v1329 = vmul.f32 %v1234, %v1318
  %v1330 = vmul.f32 %v1235, %v1318
  %v1331 = vmul.f32 %v1236, %v1318
  %v1332 = vmul.f32 %v1237, %v1318
  %v1333 = vmul.f32 %v1238, %v1318
  %v1334 = vmul.f32 %v1239, %v1318
  %v1335 = vmul.f32 %v1240, %v1318
  %v1336 = vmul.f32 %v1241, %v1318
  %v1337 = vmul.f32 %v1242, %v1318
  %v1338 = vmul.f32 %v1243, %v1318
  %v1339 = vmul.f32 %v1244, %v1318
  %v1341 = vlaneseq
  %v1342 = vshrl.u32 %v1341, 7
  %v1343 = vsub.s32 0, %v1342
  %v1344 = vrot.slane %v1177, %v1343
  %v1346 = vadd.f32 %v1320, %v1344
  %v1347 = vadd.f32 %v1321, %v1344
  %v1348 = vadd.f32 %v1322, %v1344
  %v1349 = vadd.f32 %v1323, %v1344
  %v1350 = vadd.f32 %v1324, %v1344
  %v1351 = vadd.f32 %v1325, %v1344
  %v1352 = vadd.f32 %v1326, %v1344
  %v1353 = vadd.f32 %v1327, %v1344
  %v1354 = vadd.f32 %v1328, %v1344
  %v1355 = vadd.f32 %v1329, %v1344
  %v1356 = vadd.f32 %v1330, %v1344
  %v1357 = vadd.f32 %v1331, %v1344
  %v1358 = vadd.f32 %v1332, %v1344
  %v1359 = vadd.f32 %v1333, %v1344
  %v1360 = vadd.f32 %v1334, %v1344
  %v1361 = vadd.f32 %v1335, %v1344
  %v1362 = vadd.f32 %v1336, %v1344
  %v1363 = vadd.f32 %v1337, %v1344
  %v1364 = vadd.f32 %v1338, %v1344
  %v1365 = vadd.f32 %v1339, %v1344
  %vm1366 = vcmp.gt.f32.partialorder %v1346, 0.0
  %vm1367 = vcmp.gt.f32.partialorder %v1347, 0.0
  %vm1368 = vcmp.gt.f32.partialorder %v1348, 0.0
  %vm1369 = vcmp.gt.f32.partialorder %v1349, 0.0
  %vm1370 = vcmp.gt.f32.partialorder %v1350, 0.0
  %vm1371 = vcmp.gt.f32.partialorder %v1351, 0.0
  %vm1372 = vcmp.gt.f32.partialorder %v1352, 0.0
  %vm1373 = vcmp.gt.f32.partialorder %v1353, 0.0
  %vm1374 = vcmp.gt.f32.partialorder %v1354, 0.0
  %vm1375 = vcmp.gt.f32.partialorder %v1355, 0.0
  %vm1376 = vcmp.gt.f32.partialorder %v1356, 0.0
  %vm1377 = vcmp.gt.f32.partialorder %v1357, 0.0
  %vm1378 = vcmp.gt.f32.partialorder %v1358, 0.0
  %vm1379 = vcmp.gt.f32.partialorder %v1359, 0.0
  %vm1380 = vcmp.gt.f32.partialorder %v1360, 0.0
  %vm1381 = vcmp.gt.f32.partialorder %v1361, 0.0
  %vm1382 = vcmp.gt.f32.partialorder %v1362, 0.0
  %vm1383 = vcmp.gt.f32.partialorder %v1363, 0.0
  %vm1384 = vcmp.gt.f32.partialorder %v1364, 0.0
  %vm1385 = vcmp.gt.f32.partialorder %v1365, 0.0
  %v1386 = vmul.f32 %v1346, 0.05
  %v1387 = vmul.f32 %v1347, 0.05
  %v1388 = vmul.f32 %v1348, 0.05
  %v1389 = vmul.f32 %v1349, 0.05
  %v1390 = vmul.f32 %v1350, 0.05
  %v1391 = vmul.f32 %v1351, 0.05
  %v1392 = vmul.f32 %v1352, 0.05
  %v1393 = vmul.f32 %v1353, 0.05
  %v1394 = vmul.f32 %v1354, 0.05
  %v1395 = vmul.f32 %v1355, 0.05
  %v1396 = vmul.f32 %v1356, 0.05
  %v1397 = vmul.f32 %v1357, 0.05
  %v1398 = vmul.f32 %v1358, 0.05
  %v1399 = vmul.f32 %v1359, 0.05
  %v1400 = vmul.f32 %v1360, 0.05
  %v1401 = vmul.f32 %v1361, 0.05
  %v1402 = vmul.f32 %v1362, 0.05
  %v1403 = vmul.f32 %v1363, 0.05
  %v1404 = vmul.f32 %v1364, 0.05
  %v1405 = vmul.f32 %v1365, 0.05
  %v1406 = vsel %vm1366, %v1346, %v1386
  %v1407 = vsel %vm1367, %v1347, %v1387
  %v1408 = vsel %vm1368, %v1348, %v1388
  %v1409 = vsel %vm1369, %v1349, %v1389
  %v1410 = vsel %vm1370, %v1350, %v1390
  %v1411 = vsel %vm1371, %v1351, %v1391
  %v1412 = vsel %vm1372, %v1352, %v1392
  %v1413 = vsel %vm1373, %v1353, %v1393
  %v1414 = vsel %vm1374, %v1354, %v1394
  %v1415 = vsel %vm1375, %v1355, %v1395
  %v1416 = vsel %vm1376, %v1356, %v1396
  %v1417 = vsel %vm1377, %v1357, %v1397
  %v1418 = vsel %vm1378, %v1358, %v1398
  %v1419 = vsel %vm1379, %v1359, %v1399
  %v1420 = vsel %vm1380, %v1360, %v1400
  %v1421 = vsel %vm1381, %v1361, %v1401
  %v1422 = vsel %vm1382, %v1362, %v1402
  %v1423 = vsel %vm1383, %v1363, %v1403
  %v1424 = vsel %vm1384, %v1364, %v1404
  %v1425 = vsel %vm1385, %v1365, %v1405
  %1426 = vst.msk [vmem:[%s5] sm:$0xff] %vm1178, %v1406
  %1427 = vst.msk [vmem:[%s5 + $0x8] sm:$0xff] %vm1178, %v1407
  %1428 = vst.msk [vmem:[%s5 + $0x10] sm:$0xff] %vm1178, %v1408
  %1429 = vst.msk [vmem:[%s5 + $0x18] sm:$0xff] %vm1178, %v1409
  %1430 = vst.msk [vmem:[%s5 + $0x20] sm:$0xff] %vm1178, %v1410
  %1431 = vst.msk [vmem:[%s5 + $0x28] sm:$0xff] %vm1178, %v1411
  %1432 = vst.msk [vmem:[%s5 + $0x30] sm:$0xff] %vm1178, %v1412
  %1433 = vst.msk [vmem:[%s5 + $0x38] sm:$0xff] %vm1178, %v1413
  %1434 = vst.msk [vmem:[%s5 + $0x40] sm:$0xff] %vm1178, %v1414
  %1435 = vst.msk [vmem:[%s5 + $0x48] sm:$0xff] %vm1178, %v1415
  %1436 = vst.msk [vmem:[%s5 + $0x50] sm:$0xff] %vm1178, %v1416
  %1437 = vst.msk [vmem:[%s5 + $0x58] sm:$0xff] %vm1178, %v1417
  %1438 = vst.msk [vmem:[%s5 + $0x60] sm:$0xff] %vm1178, %v1418
  %1439 = vst.msk [vmem:[%s5 + $0x68] sm:$0xff] %vm1178, %v1419
  %1440 = vst.msk [vmem:[%s5 + $0x70] sm:$0xff] %vm1178, %v1420
  %1441 = vst.msk [vmem:[%s5 + $0x78] sm:$0xff] %vm1178, %v1421
  %1442 = vst.msk [vmem:[%s5 + $0x80] sm:$0xff] %vm1178, %v1422
  %1443 = vst.msk [vmem:[%s5 + $0x88] sm:$0xff] %vm1178, %v1423
  %1444 = vst.msk [vmem:[%s5 + $0x90] sm:$0xff] %vm1178, %v1424
  %1445 = vst.msk [vmem:[%s5 + $0x98] sm:$0xff] %vm1178, %v1425
  // Predicated region
  $region22: #{keynet_forward.9} parent=0 // pred_check
    _
  $region23: #{keynet_forward.9} parent=0 // pred_check_branch
    %1447 = sbr.rel (0) target = $region25
  $region24: #{keynet_forward.9} parent=0 // pred_region
    _
  $region25: #{keynet_forward.9} parent=0 // pred_fallthru
    _
  // Predicated region
  $region26: #{keynet_forward.9} parent=0 // pred_check
    _
  $region27: #{keynet_forward.9} parent=0 // pred_check_branch
    %1449 = sbr.rel (0) target = $region29
  $region28: #{keynet_forward.9} parent=0 // pred_region
    _
  $region29: #{keynet_forward.9} parent=0 // pred_fallthru
    _

</llo_original>
